<compile_context>
chip_gen: v6e
topology: v6e:2x2x1
jax: 0.10.0
libtpu: 0.0.40
codegen_flags: <defaults>
</compile_context>

<pallas_src>
import functools

import jax
import jax.numpy as jnp
from jax.experimental import pallas as pl
from jax.experimental.pallas import tpu as pltpu


# ------------------------------ fused forward kernel ------------------------------
def _cnn_fused_kernel(x1_ref, w1_ref, b1_ref, w2_ref, b2_ref, w3_ref, b3_ref,
                      wf1_ref, bf1_ref, wf2_ref, bf2_ref, out_ref,
                      p2_ref, p3_ref, *, H, W):
    # x1_ref : (bn, H*W, 27) bf16   stage-1 im2col patches (hoisted to wrapper)
    # w1_ref : (27, 32) bf16        conv1 weight, im2col layout
    # w2/w3  : (3,3,Cin,Cout) bf16  HWIO
    # wf1_ref: (Hf*Wf*128, 64) bf16 torch channel-major flatten pre-folded
    # wf2_ref: (64, num_classes) bf16
    # biases : (1, C) f32
    # out_ref: (bn, num_classes) f32
    # p2/p3  : (bn, h+2, w+2, Cin) f32 halo scratch for stages 2/3
    bn = x1_ref.shape[0]
    k1 = x1_ref.shape[2]
    c1 = w1_ref.shape[1]
    Hf, Wf = H // 8, W // 8

    # ---- stage 1: conv1 as a single GEMM (im2col done in the wrapper) + ReLU + pool
    patches = x1_ref[...].reshape(bn * H * W, k1)                       # bf16
    a1 = jnp.dot(patches, w1_ref[...], preferred_element_type=jnp.float32)
    z = jnp.maximum(a1 + b1_ref[...], 0.0).reshape(bn * H, W, c1)
    z = jnp.max(z.reshape(bn * H, W // 2, 2, c1), axis=2)               # pool W
    z = jnp.max(z.reshape(bn * (H // 2), 2, W // 2, c1), axis=1)        # pool H
    y = z.reshape(bn, H // 2, W // 2, c1)                               # (bn,H/2,W/2,32)

    # ---- stages 2 & 3: 3x3 conv via halo scratch + 9-tap GEMM accumulation
    def conv_relu_pool(yin, p_ref, w_ref, b_ref, h, w):
        cin, cout = w_ref.shape[2], w_ref.shape[3]
        # zero only the 1-px halo ring; interior is fully overwritten below
        zrow = jnp.zeros((bn, 1, w + 2, cin), jnp.float32)
        zcol = jnp.zeros((bn, h, 1, cin), jnp.float32)
        p_ref[:, 0:1, :, :] = zrow
        p_ref[:, h + 1:h + 2, :, :] = zrow
        p_ref[:, 1:h + 1, 0:1, :] = zcol
        p_ref[:, 1:h + 1, w + 1:w + 2, :] = zcol
        p_ref[:, 1:h + 1, 1:w + 1, :] = yin
        xp = p_ref[...]                                                 # (bn,h+2,w+2,cin)
        acc = jnp.zeros((bn * h * w, cout), jnp.float32)
        for dy in range(3):
            for dx in range(3):
                tap = xp[:, dy:dy + h, dx:dx + w, :].reshape(bn * h * w, cin)
                acc = acc + jnp.dot(tap.astype(jnp.bfloat16), w_ref[dy, dx],
                                    preferred_element_type=jnp.float32)
        zz = jnp.maximum(acc + b_ref[...], 0.0).reshape(bn * h, w, cout)
        zz = jnp.max(zz.reshape(bn * h, w // 2, 2, cout), axis=2)        # pool W
        zz = jnp.max(zz.reshape(bn * (h // 2), 2, w // 2, cout), axis=1) # pool H
        return zz.reshape(bn, h // 2, w // 2, cout)

    y = conv_relu_pool(y, p2_ref, w2_ref, b2_ref, H // 2, W // 2)        # (bn,H/4,W/4,64)
    y = conv_relu_pool(y, p3_ref, w3_ref, b3_ref, H // 4, W // 4)        # (bn,Hf,Wf,128)

    # ---- FC1 (+ReLU) as ONE GEMM: lane-aligned flatten (128-wide channel groups)
    feat = jnp.concatenate(
        [y[:, i, j, :] for i in range(Hf) for j in range(Wf)], axis=-1)  # (bn, Hf*Wf*128)
    hid = jnp.maximum(
        jnp.dot(feat.astype(jnp.bfloat16), wf1_ref[...],
                preferred_element_type=jnp.float32) + bf1_ref[...], 0.0)  # (bn, 64)

    # ---- FC2
    out_ref[...] = (jnp.dot(hid.astype(jnp.bfloat16), wf2_ref[...],
                            preferred_element_type=jnp.float32) + bf2_ref[...])


# --------------------------------- batch blocking ----------------------------------
def _pick_batch_block(n):
    """Whole batch per grid step on single-TC chips; 2-way split on v7x (2 TCs)."""
    try:
        kind = jax.devices()[0].device_kind.lower()
    except Exception:
        kind = ""
    is_v7 = any(tag in kind for tag in ("v7", "tpu7", "7x"))
    if is_v7 and n % 2 == 0:
        return n // 2
    return n


# ------------------------------------ wrapper --------------------------------------
def cnn_forward(x_nchw, params, batch_block=None):
    N, _, H, W = x_nchw.shape
    assert H % 8 == 0 and W % 8 == 0
    Hf, Wf = H // 8, W // 8

    c1 = params["w1"].shape[3]          # 32
    c2 = params["w2"].shape[3]          # 64
    c3 = params["w3"].shape[3]          # 128
    n_hidden = params["wf1"].shape[1]   # 64
    n_cls = params["wf2"].shape[1]

    if batch_block is None:
        batch_block = _pick_batch_block(N)
    bn = int(batch_block)
    assert N % bn == 0

    # NCHW -> NHWC, then hoist the stage-1 im2col (zero-pad + 9 shifted slices)
    # into XLA; the kernel does conv1 as a single (bn*H*W, 27)x(27, 32) GEMM.
    x = jnp.transpose(x_nchw, (0, 2, 3, 1))
    xpad = jnp.pad(x, ((0, 0), (1, 1), (1, 1), (0, 0)))
    patches = jnp.concatenate(
        [xpad[:, dy:dy + H, dx:dx + W, :] for dy in range(3) for dx in range(3)],
        axis=-1)                                                 # (N, H, W, 27)
    x1 = patches.reshape(N, H * W, 9 * 3).astype(jnp.bfloat16)

    # MXU inputs in bf16 (f32 accumulation inside the kernel).
    w1 = params["w1"].reshape(9 * 3, c1).astype(jnp.bfloat16)    # HWIO -> (27, 32)
    w2 = params["w2"].astype(jnp.bfloat16)
    w3 = params["w3"].astype(jnp.bfloat16)
    # Fold torch channel-major flatten (idx = c*Hf*Wf + h*Wf + w) into a flat
    # (Hf*Wf*C3, 64) FC1 weight matching the kernel's NHWC flatten.  Free, XLA-side.
    wf1 = (params["wf1"].reshape(c3, Hf, Wf, n_hidden)
           .transpose(1, 2, 0, 3).reshape(Hf * Wf * c3, n_hidden)
           .astype(jnp.bfloat16))
    wf2 = params["wf2"].astype(jnp.bfloat16)

    b1 = params["b1"].reshape(1, c1).astype(jnp.float32)
    b2 = params["b2"].reshape(1, c2).astype(jnp.float32)
    b3 = params["b3"].reshape(1, c3).astype(jnp.float32)
    bf1 = params["bf1"].reshape(1, n_hidden).astype(jnp.float32)
    bf2 = params["bf2"].reshape(1, n_cls).astype(jnp.float32)

    full2 = lambda n: (0, 0)
    full4 = lambda n: (0, 0, 0, 0)

    kernel = functools.partial(_cnn_fused_kernel, H=H, W=W)

    return pl.pallas_call(
        kernel,
        out_shape=jax.ShapeDtypeStruct((N, n_cls), jnp.float32),
        grid=(N // bn,),
        in_specs=[
            pl.BlockSpec((bn, H * W, 9 * 3), lambda n: (n, 0, 0)),
            pl.BlockSpec((9 * 3, c1), full2),
            pl.BlockSpec((1, c1), full2),
            pl.BlockSpec((3, 3, c1, c2), full4),
            pl.BlockSpec((1, c2), full2),
            pl.BlockSpec((3, 3, c2, c3), full4),
            pl.BlockSpec((1, c3), full2),
            pl.BlockSpec((Hf * Wf * c3, n_hidden), full2),
            pl.BlockSpec((1, n_hidden), full2),
            pl.BlockSpec((n_hidden, n_cls), full2),
            pl.BlockSpec((1, n_cls), full2),
        ],
        out_specs=pl.BlockSpec((bn, n_cls), lambda n: (n, 0)),
        scratch_shapes=[
            pltpu.VMEM((bn, H // 2 + 2, W // 2 + 2, c1), jnp.float32),
            pltpu.VMEM((bn, H // 4 + 2, W // 4 + 2, c2), jnp.float32),
        ],
        compiler_params=pltpu.CompilerParams(
            dimension_semantics=("parallel",)),
    )(x1, w1, b1, w2, b2, w3, b3, wf1, bf1, wf2, bf2)


# ------------------------------------ params ---------------------------------------
def init_params(key, spatial, num_classes):
    ks = jax.random.split(key, 5)

    def wn(k, shape, fan_in):
        return jax.random.normal(k, shape, jnp.float32) * (2.0 / fan_in) ** 0.5

    s = spatial // 2 // 2 // 2
    feat = s * s * 128
    return {
        "w1": wn(ks[0], (3, 3, 3, 32), 3 * 9),    "b1": jnp.zeros((32,), jnp.float32),
        "w2": wn(ks[1], (3, 3, 32, 64), 32 * 9),  "b2": jnp.zeros((64,), jnp.float32),
        "w3": wn(ks[2], (3, 3, 64, 128), 64 * 9), "b3": jnp.zeros((128,), jnp.float32),
        "wf1": wn(ks[3], (feat, 64), feat),       "bf1": jnp.zeros((64,), jnp.float32),
        "wf2": wn(ks[4], (64, num_classes), 64),  "bf2": jnp.zeros((num_classes,), jnp.float32),
    }


if __name__ == "__main__":
    num_classes = 2
    spatial = 16                      # input_shape = (3, 16, 16) for the torch module
    key = jax.random.PRNGKey(0)
    kx, kp = jax.random.split(key)
    x = jax.random.normal(kx, (2, 3, spatial, spatial), jnp.float32)   # NCHW like PyTorch
    params = init_params(kp, spatial, num_classes)

    fwd = jax.jit(cnn_forward)
    out = jax.block_until_ready(fwd(x, params))
    assert out.shape == (2, num_classes), out.shape
    print("KERNEL_OK")
</pallas_src>

<mosaic_0001>
module attributes {stable_mosaic.version = 11 : i64} {
  func.func @_cnn_fused_kernel(%arg0: i32, %arg1: memref<2x256x27xbf16, #tpu.memory_space<vmem>>, %arg2: memref<27x32xbf16, #tpu.memory_space<vmem>>, %arg3: memref<1x32xf32, #tpu.memory_space<vmem>>, %arg4: memref<3x3x32x64xbf16, #tpu.memory_space<vmem>>, %arg5: memref<1x64xf32, #tpu.memory_space<vmem>>, %arg6: memref<3x3x64x128xbf16, #tpu.memory_space<vmem>>, %arg7: memref<1x128xf32, #tpu.memory_space<vmem>>, %arg8: memref<512x64xbf16, #tpu.memory_space<vmem>>, %arg9: memref<1x64xf32, #tpu.memory_space<vmem>>, %arg10: memref<64x2xbf16, #tpu.memory_space<vmem>>, %arg11: memref<1x2xf32, #tpu.memory_space<vmem>>, %arg12: memref<2x2xf32, #tpu.memory_space<vmem>>, %arg13: memref<2x10x10x32xf32, #tpu.memory_space<vmem>>, %arg14: memref<2x6x6x64xf32, #tpu.memory_space<vmem>>) attributes {dimension_semantics = [#tpu.dimension_semantics<parallel>], iteration_bounds = array<i64: 1>, scalar_prefetch = 0 : i64, scratch_operands = 2 : i64, tpu.core_type = #tpu.core_type<tc>, window_params = [{transform_indices = @transform_0, window_bounds = array<i64: 2, 256, 27>}, {pipeline_mode = #tpu.pipeline_mode<synchronous>, transform_indices = @transform_1, window_bounds = array<i64: 27, 32>}, {pipeline_mode = #tpu.pipeline_mode<synchronous>, transform_indices = @transform_2, window_bounds = array<i64: 1, 32>}, {pipeline_mode = #tpu.pipeline_mode<synchronous>, transform_indices = @transform_3, window_bounds = array<i64: 3, 3, 32, 64>}, {pipeline_mode = #tpu.pipeline_mode<synchronous>, transform_indices = @transform_4, window_bounds = array<i64: 1, 64>}, {pipeline_mode = #tpu.pipeline_mode<synchronous>, transform_indices = @transform_5, window_bounds = array<i64: 3, 3, 64, 128>}, {pipeline_mode = #tpu.pipeline_mode<synchronous>, transform_indices = @transform_6, window_bounds = array<i64: 1, 128>}, {pipeline_mode = #tpu.pipeline_mode<synchronous>, transform_indices = @transform_7, window_bounds = array<i64: 512, 64>}, {pipeline_mode = #tpu.pipeline_mode<synchronous>, transform_indices = @transform_8, window_bounds = array<i64: 1, 64>}, {pipeline_mode = #tpu.pipeline_mode<synchronous>, transform_indices = @transform_9, window_bounds = array<i64: 64, 2>}, {pipeline_mode = #tpu.pipeline_mode<synchronous>, transform_indices = @transform_10, window_bounds = array<i64: 1, 2>}, {transform_indices = @transform_11, window_bounds = array<i64: 2, 2>}]} {
    %c0 = arith.constant 0 : index
    %c0_0 = arith.constant 0 : index
    %c0_1 = arith.constant 0 : index
    %0 = vector.load %arg1[%c0, %c0_0, %c0_1] : memref<2x256x27xbf16, #tpu.memory_space<vmem>>, vector<2x256x27xbf16>
    %1 = vector.shape_cast %0 : vector<2x256x27xbf16> to vector<512x27xbf16>
    %c0_2 = arith.constant 0 : index
    %c0_3 = arith.constant 0 : index
    %2 = vector.load %arg2[%c0_2, %c0_3] : memref<27x32xbf16, #tpu.memory_space<vmem>>, vector<27x32xbf16>
    %cst = arith.constant dense<0.000000e+00> : vector<512x32xf32>
    %3 = tpu.matmul %1, %2, %cst {dimension_numbers = #tpu.dot_dimension_numbers<[1], [0], [0], [1], [0, 0, 1, 1], [], []>} : vector<512x27xbf16>, vector<27x32xbf16>, vector<512x32xf32> -> vector<512x32xf32>
    %c0_4 = arith.constant 0 : index
    %c0_5 = arith.constant 0 : index
    %4 = vector.load %arg3[%c0_4, %c0_5] : memref<1x32xf32, #tpu.memory_space<vmem>>, vector<1x32xf32>
    %5 = vector.broadcast %4 : vector<1x32xf32> to vector<512x32xf32>
    %6 = arith.addf %3, %5 : vector<512x32xf32>
    %cst_6 = arith.constant 0.000000e+00 : f32
    %7 = vector.broadcast %cst_6 : f32 to vector<512x32xf32>
    %8 = arith.maximumf %6, %7 : vector<512x32xf32>
    %9 = vector.shape_cast %8 : vector<512x32xf32> to vector<32x16x32xf32>
    %10 = vector.shape_cast %9 : vector<32x16x32xf32> to vector<32x8x2x32xf32>
    %cst_7 = arith.constant dense<0xFF800000> : vector<32x8x32xf32>
    %11 = vector.multi_reduction <maximumf>, %10, %cst_7 [2] : vector<32x8x2x32xf32> to vector<32x8x32xf32>
    %12 = vector.shape_cast %11 : vector<32x8x32xf32> to vector<16x2x8x32xf32>
    %cst_8 = arith.constant dense<0xFF800000> : vector<16x8x32xf32>
    %13 = vector.multi_reduction <maximumf>, %12, %cst_8 [1] : vector<16x2x8x32xf32> to vector<16x8x32xf32>
    %14 = vector.shape_cast %13 : vector<16x8x32xf32> to vector<2x8x8x32xf32>
    %cst_9 = arith.constant 0.000000e+00 : f32
    %15 = vector.broadcast %cst_9 : f32 to vector<2x1x10x32xf32>
    %cst_10 = arith.constant 0.000000e+00 : f32
    %16 = vector.broadcast %cst_10 : f32 to vector<2x8x1x32xf32>
    %c0_11 = arith.constant 0 : index
    %c0_12 = arith.constant 0 : index
    %c0_13 = arith.constant 0 : index
    %c0_14 = arith.constant 0 : index
    %17 = vector.load %arg13[%c0_11, %c0_12, %c0_13, %c0_14] : memref<2x10x10x32xf32, #tpu.memory_space<vmem>>, vector<2x1x10x32xf32>
    tpu.vector_store %arg13[%c0_11, %c0_12, %c0_13, %c0_14], %15 {strides = array<i32>} : memref<2x10x10x32xf32, #tpu.memory_space<vmem>>, vector<2x1x10x32xf32>,
    %c0_15 = arith.constant 0 : index
    %c9 = arith.constant 9 : index
    %c0_16 = arith.constant 0 : index
    %c0_17 = arith.constant 0 : index
    %18 = vector.load %arg13[%c0_15, %c9, %c0_16, %c0_17] : memref<2x10x10x32xf32, #tpu.memory_space<vmem>>, vector<2x1x10x32xf32>
    tpu.vector_store %arg13[%c0_15, %c9, %c0_16, %c0_17], %15 {strides = array<i32>} : memref<2x10x10x32xf32, #tpu.memory_space<vmem>>, vector<2x1x10x32xf32>,
    %c0_18 = arith.constant 0 : index
    %c1 = arith.constant 1 : index
    %c0_19 = arith.constant 0 : index
    %c0_20 = arith.constant 0 : index
    %19 = vector.load %arg13[%c0_18, %c1, %c0_19, %c0_20] : memref<2x10x10x32xf32, #tpu.memory_space<vmem>>, vector<2x8x1x32xf32>
    tpu.vector_store %arg13[%c0_18, %c1, %c0_19, %c0_20], %16 {strides = array<i32>} : memref<2x10x10x32xf32, #tpu.memory_space<vmem>>, vector<2x8x1x32xf32>,
    %c0_21 = arith.constant 0 : index
    %c1_22 = arith.constant 1 : index
    %c9_23 = arith.constant 9 : index
    %c0_24 = arith.constant 0 : index
    %20 = vector.load %arg13[%c0_21, %c1_22, %c9_23, %c0_24] : memref<2x10x10x32xf32, #tpu.memory_space<vmem>>, vector<2x8x1x32xf32>
    tpu.vector_store %arg13[%c0_21, %c1_22, %c9_23, %c0_24], %16 {strides = array<i32>} : memref<2x10x10x32xf32, #tpu.memory_space<vmem>>, vector<2x8x1x32xf32>,
    %c0_25 = arith.constant 0 : index
    %c1_26 = arith.constant 1 : index
    %c1_27 = arith.constant 1 : index
    %c0_28 = arith.constant 0 : index
    %21 = vector.load %arg13[%c0_25, %c1_26, %c1_27, %c0_28] : memref<2x10x10x32xf32, #tpu.memory_space<vmem>>, vector<2x8x8x32xf32>
    tpu.vector_store %arg13[%c0_25, %c1_26, %c1_27, %c0_28], %14 {strides = array<i32>} : memref<2x10x10x32xf32, #tpu.memory_space<vmem>>, vector<2x8x8x32xf32>,
    %c0_29 = arith.constant 0 : index
    %c0_30 = arith.constant 0 : index
    %c0_31 = arith.constant 0 : index
    %c0_32 = arith.constant 0 : index
    %22 = vector.load %arg13[%c0_29, %c0_30, %c0_31, %c0_32] : memref<2x10x10x32xf32, #tpu.memory_space<vmem>>, vector<2x10x10x32xf32>
    %cst_33 = arith.constant 0.000000e+00 : f32
    %23 = vector.broadcast %cst_33 : f32 to vector<128x64xf32>
    %24 = vector.extract_strided_slice %22 {offsets = [0, 0, 0, 0], sizes = [2, 8, 8, 32], strides = [1, 1, 1, 1]} : vector<2x10x10x32xf32> to vector<2x8x8x32xf32>
    %25 = vector.shape_cast %24 : vector<2x8x8x32xf32> to vector<128x32xf32>
    %26 = arith.truncf %25 : vector<128x32xf32> to vector<128x32xbf16>
    %c0_34 = arith.constant 0 : index
    %c0_35 = arith.constant 0 : index
    %c0_36 = arith.constant 0 : index
    %c0_37 = arith.constant 0 : index
    %27 = vector.load %arg4[%c0_34, %c0_35, %c0_36, %c0_37] : memref<3x3x32x64xbf16, #tpu.memory_space<vmem>>, vector<1x1x32x64xbf16>
    %28 = vector.shape_cast %27 : vector<1x1x32x64xbf16> to vector<32x64xbf16>
    %cst_38 = arith.constant dense<0.000000e+00> : vector<128x64xf32>
    %29 = tpu.matmul %26, %28, %cst_38 {dimension_numbers = #tpu.dot_dimension_numbers<[1], [0], [0], [1], [0, 0, 1, 1], [], []>} : vector<128x32xbf16>, vector<32x64xbf16>, vector<128x64xf32> -> vector<128x64xf32>
    %30 = arith.addf %23, %29 : vector<128x64xf32>
    %31 = vector.extract_strided_slice %22 {offsets = [0, 0, 1, 0], sizes = [2, 8, 8, 32], strides = [1, 1, 1, 1]} : vector<2x10x10x32xf32> to vector<2x8x8x32xf32>
    %32 = vector.shape_cast %31 : vector<2x8x8x32xf32> to vector<128x32xf32>
    %33 = arith.truncf %32 : vector<128x32xf32> to vector<128x32xbf16>
    %c0_39 = arith.constant 0 : index
    %c1_40 = arith.constant 1 : index
    %c0_41 = arith.constant 0 : index
    %c0_42 = arith.constant 0 : index
    %34 = vector.load %arg4[%c0_39, %c1_40, %c0_41, %c0_42] : memref<3x3x32x64xbf16, #tpu.memory_space<vmem>>, vector<1x1x32x64xbf16>
    %35 = vector.shape_cast %34 : vector<1x1x32x64xbf16> to vector<32x64xbf16>
    %cst_43 = arith.constant dense<0.000000e+00> : vector<128x64xf32>
    %36 = tpu.matmul %33, %35, %cst_43 {dimension_numbers = #tpu.dot_dimension_numbers<[1], [0], [0], [1], [0, 0, 1, 1], [], []>} : vector<128x32xbf16>, vector<32x64xbf16>, vector<128x64xf32> -> vector<128x64xf32>
    %37 = arith.addf %30, %36 : vector<128x64xf32>
    %38 = vector.extract_strided_slice %22 {offsets = [0, 0, 2, 0], sizes = [2, 8, 8, 32], strides = [1, 1, 1, 1]} : vector<2x10x10x32xf32> to vector<2x8x8x32xf32>
    %39 = vector.shape_cast %38 : vector<2x8x8x32xf32> to vector<128x32xf32>
    %40 = arith.truncf %39 : vector<128x32xf32> to vector<128x32xbf16>
    %c0_44 = arith.constant 0 : index
    %c2 = arith.constant 2 : index
    %c0_45 = arith.constant 0 : index
    %c0_46 = arith.constant 0 : index
    %41 = vector.load %arg4[%c0_44, %c2, %c0_45, %c0_46] : memref<3x3x32x64xbf16, #tpu.memory_space<vmem>>, vector<1x1x32x64xbf16>
    %42 = vector.shape_cast %41 : vector<1x1x32x64xbf16> to vector<32x64xbf16>
    %cst_47 = arith.constant dense<0.000000e+00> : vector<128x64xf32>
    %43 = tpu.matmul %40, %42, %cst_47 {dimension_numbers = #tpu.dot_dimension_numbers<[1], [0], [0], [1], [0, 0, 1, 1], [], []>} : vector<128x32xbf16>, vector<32x64xbf16>, vector<128x64xf32> -> vector<128x64xf32>
    %44 = arith.addf %37, %43 : vector<128x64xf32>
    %45 = vector.extract_strided_slice %22 {offsets = [0, 1, 0, 0], sizes = [2, 8, 8, 32], strides = [1, 1, 1, 1]} : vector<2x10x10x32xf32> to vector<2x8x8x32xf32>
    %46 = vector.shape_cast %45 : vector<2x8x8x32xf32> to vector<128x32xf32>
    %47 = arith.truncf %46 : vector<128x32xf32> to vector<128x32xbf16>
    %c1_48 = arith.constant 1 : index
    %c0_49 = arith.constant 0 : index
    %c0_50 = arith.constant 0 : index
    %c0_51 = arith.constant 0 : index
    %48 = vector.load %arg4[%c1_48, %c0_49, %c0_50, %c0_51] : memref<3x3x32x64xbf16, #tpu.memory_space<vmem>>, vector<1x1x32x64xbf16>
    %49 = vector.shape_cast %48 : vector<1x1x32x64xbf16> to vector<32x64xbf16>
    %cst_52 = arith.constant dense<0.000000e+00> : vector<128x64xf32>
    %50 = tpu.matmul %47, %49, %cst_52 {dimension_numbers = #tpu.dot_dimension_numbers<[1], [0], [0], [1], [0, 0, 1, 1], [], []>} : vector<128x32xbf16>, vector<32x64xbf16>, vector<128x64xf32> -> vector<128x64xf32>
    %51 = arith.addf %44, %50 : vector<128x64xf32>
    %52 = vector.extract_strided_slice %22 {offsets = [0, 1, 1, 0], sizes = [2, 8, 8, 32], strides = [1, 1, 1, 1]} : vector<2x10x10x32xf32> to vector<2x8x8x32xf32>
    %53 = vector.shape_cast %52 : vector<2x8x8x32xf32> to vector<128x32xf32>
    %54 = arith.truncf %53 : vector<128x32xf32> to vector<128x32xbf16>
    %c1_53 = arith.constant 1 : index
    %c1_54 = arith.constant 1 : index
    %c0_55 = arith.constant 0 : index
    %c0_56 = arith.constant 0 : index
    %55 = vector.load %arg4[%c1_53, %c1_54, %c0_55, %c0_56] : memref<3x3x32x64xbf16, #tpu.memory_space<vmem>>, vector<1x1x32x64xbf16>
    %56 = vector.shape_cast %55 : vector<1x1x32x64xbf16> to vector<32x64xbf16>
    %cst_57 = arith.constant dense<0.000000e+00> : vector<128x64xf32>
    %57 = tpu.matmul %54, %56, %cst_57 {dimension_numbers = #tpu.dot_dimension_numbers<[1], [0], [0], [1], [0, 0, 1, 1], [], []>} : vector<128x32xbf16>, vector<32x64xbf16>, vector<128x64xf32> -> vector<128x64xf32>
    %58 = arith.addf %51, %57 : vector<128x64xf32>
    %59 = vector.extract_strided_slice %22 {offsets = [0, 1, 2, 0], sizes = [2, 8, 8, 32], strides = [1, 1, 1, 1]} : vector<2x10x10x32xf32> to vector<2x8x8x32xf32>
    %60 = vector.shape_cast %59 : vector<2x8x8x32xf32> to vector<128x32xf32>
    %61 = arith.truncf %60 : vector<128x32xf32> to vector<128x32xbf16>
    %c1_58 = arith.constant 1 : index
    %c2_59 = arith.constant 2 : index
    %c0_60 = arith.constant 0 : index
    %c0_61 = arith.constant 0 : index
    %62 = vector.load %arg4[%c1_58, %c2_59, %c0_60, %c0_61] : memref<3x3x32x64xbf16, #tpu.memory_space<vmem>>, vector<1x1x32x64xbf16>
    %63 = vector.shape_cast %62 : vector<1x1x32x64xbf16> to vector<32x64xbf16>
    %cst_62 = arith.constant dense<0.000000e+00> : vector<128x64xf32>
    %64 = tpu.matmul %61, %63, %cst_62 {dimension_numbers = #tpu.dot_dimension_numbers<[1], [0], [0], [1], [0, 0, 1, 1], [], []>} : vector<128x32xbf16>, vector<32x64xbf16>, vector<128x64xf32> -> vector<128x64xf32>
    %65 = arith.addf %58, %64 : vector<128x64xf32>
    %66 = vector.extract_strided_slice %22 {offsets = [0, 2, 0, 0], sizes = [2, 8, 8, 32], strides = [1, 1, 1, 1]} : vector<2x10x10x32xf32> to vector<2x8x8x32xf32>
    %67 = vector.shape_cast %66 : vector<2x8x8x32xf32> to vector<128x32xf32>
    %68 = arith.truncf %67 : vector<128x32xf32> to vector<128x32xbf16>
    %c2_63 = arith.constant 2 : index
    %c0_64 = arith.constant 0 : index
    %c0_65 = arith.constant 0 : index
    %c0_66 = arith.constant 0 : index
    %69 = vector.load %arg4[%c2_63, %c0_64, %c0_65, %c0_66] : memref<3x3x32x64xbf16, #tpu.memory_space<vmem>>, vector<1x1x32x64xbf16>
    %70 = vector.shape_cast %69 : vector<1x1x32x64xbf16> to vector<32x64xbf16>
    %cst_67 = arith.constant dense<0.000000e+00> : vector<128x64xf32>
    %71 = tpu.matmul %68, %70, %cst_67 {dimension_numbers = #tpu.dot_dimension_numbers<[1], [0], [0], [1], [0, 0, 1, 1], [], []>} : vector<128x32xbf16>, vector<32x64xbf16>, vector<128x64xf32> -> vector<128x64xf32>
    %72 = arith.addf %65, %71 : vector<128x64xf32>
    %73 = vector.extract_strided_slice %22 {offsets = [0, 2, 1, 0], sizes = [2, 8, 8, 32], strides = [1, 1, 1, 1]} : vector<2x10x10x32xf32> to vector<2x8x8x32xf32>
    %74 = vector.shape_cast %73 : vector<2x8x8x32xf32> to vector<128x32xf32>
    %75 = arith.truncf %74 : vector<128x32xf32> to vector<128x32xbf16>
    %c2_68 = arith.constant 2 : index
    %c1_69 = arith.constant 1 : index
    %c0_70 = arith.constant 0 : index
    %c0_71 = arith.constant 0 : index
    %76 = vector.load %arg4[%c2_68, %c1_69, %c0_70, %c0_71] : memref<3x3x32x64xbf16, #tpu.memory_space<vmem>>, vector<1x1x32x64xbf16>
    %77 = vector.shape_cast %76 : vector<1x1x32x64xbf16> to vector<32x64xbf16>
    %cst_72 = arith.constant dense<0.000000e+00> : vector<128x64xf32>
    %78 = tpu.matmul %75, %77, %cst_72 {dimension_numbers = #tpu.dot_dimension_numbers<[1], [0], [0], [1], [0, 0, 1, 1], [], []>} : vector<128x32xbf16>, vector<32x64xbf16>, vector<128x64xf32> -> vector<128x64xf32>
    %79 = arith.addf %72, %78 : vector<128x64xf32>
    %80 = vector.extract_strided_slice %22 {offsets = [0, 2, 2, 0], sizes = [2, 8, 8, 32], strides = [1, 1, 1, 1]} : vector<2x10x10x32xf32> to vector<2x8x8x32xf32>
    %81 = vector.shape_cast %80 : vector<2x8x8x32xf32> to vector<128x32xf32>
    %82 = arith.truncf %81 : vector<128x32xf32> to vector<128x32xbf16>
    %c2_73 = arith.constant 2 : index
    %c2_74 = arith.constant 2 : index
    %c0_75 = arith.constant 0 : index
    %c0_76 = arith.constant 0 : index
    %83 = vector.load %arg4[%c2_73, %c2_74, %c0_75, %c0_76] : memref<3x3x32x64xbf16, #tpu.memory_space<vmem>>, vector<1x1x32x64xbf16>
    %84 = vector.shape_cast %83 : vector<1x1x32x64xbf16> to vector<32x64xbf16>
    %cst_77 = arith.constant dense<0.000000e+00> : vector<128x64xf32>
    %85 = tpu.matmul %82, %84, %cst_77 {dimension_numbers = #tpu.dot_dimension_numbers<[1], [0], [0], [1], [0, 0, 1, 1], [], []>} : vector<128x32xbf16>, vector<32x64xbf16>, vector<128x64xf32> -> vector<128x64xf32>
    %86 = arith.addf %79, %85 : vector<128x64xf32>
    %c0_78 = arith.constant 0 : index
    %c0_79 = arith.constant 0 : index
    %87 = vector.load %arg5[%c0_78, %c0_79] : memref<1x64xf32, #tpu.memory_space<vmem>>, vector<1x64xf32>
    %88 = vector.broadcast %87 : vector<1x64xf32> to vector<128x64xf32>
    %89 = arith.addf %86, %88 : vector<128x64xf32>
    %cst_80 = arith.constant 0.000000e+00 : f32
    %90 = vector.broadcast %cst_80 : f32 to vector<128x64xf32>
    %91 = arith.maximumf %89, %90 : vector<128x64xf32>
    %92 = vector.shape_cast %91 : vector<128x64xf32> to vector<16x8x64xf32>
    %93 = vector.shape_cast %92 : vector<16x8x64xf32> to vector<16x4x2x64xf32>
    %cst_81 = arith.constant dense<0xFF800000> : vector<16x4x64xf32>
    %94 = vector.multi_reduction <maximumf>, %93, %cst_81 [2] : vector<16x4x2x64xf32> to vector<16x4x64xf32>
    %95 = vector.shape_cast %94 : vector<16x4x64xf32> to vector<8x2x4x64xf32>
    %cst_82 = arith.constant dense<0xFF800000> : vector<8x4x64xf32>
    %96 = vector.multi_reduction <maximumf>, %95, %cst_82 [1] : vector<8x2x4x64xf32> to vector<8x4x64xf32>
    %97 = vector.shape_cast %96 : vector<8x4x64xf32> to vector<2x4x4x64xf32>
    %cst_83 = arith.constant 0.000000e+00 : f32
    %98 = vector.broadcast %cst_83 : f32 to vector<2x1x6x64xf32>
    %cst_84 = arith.constant 0.000000e+00 : f32
    %99 = vector.broadcast %cst_84 : f32 to vector<2x4x1x64xf32>
    %c0_85 = arith.constant 0 : index
    %c0_86 = arith.constant 0 : index
    %c0_87 = arith.constant 0 : index
    %c0_88 = arith.constant 0 : index
    %100 = vector.load %arg14[%c0_85, %c0_86, %c0_87, %c0_88] : memref<2x6x6x64xf32, #tpu.memory_space<vmem>>, vector<2x1x6x64xf32>
    tpu.vector_store %arg14[%c0_85, %c0_86, %c0_87, %c0_88], %98 {strides = array<i32>} : memref<2x6x6x64xf32, #tpu.memory_space<vmem>>, vector<2x1x6x64xf32>,
    %c0_89 = arith.constant 0 : index
    %c5 = arith.constant 5 : index
    %c0_90 = arith.constant 0 : index
    %c0_91 = arith.constant 0 : index
    %101 = vector.load %arg14[%c0_89, %c5, %c0_90, %c0_91] : memref<2x6x6x64xf32, #tpu.memory_space<vmem>>, vector<2x1x6x64xf32>
    tpu.vector_store %arg14[%c0_89, %c5, %c0_90, %c0_91], %98 {strides = array<i32>} : memref<2x6x6x64xf32, #tpu.memory_space<vmem>>, vector<2x1x6x64xf32>,
    %c0_92 = arith.constant 0 : index
    %c1_93 = arith.constant 1 : index
    %c0_94 = arith.constant 0 : index
    %c0_95 = arith.constant 0 : index
    %102 = vector.load %arg14[%c0_92, %c1_93, %c0_94, %c0_95] : memref<2x6x6x64xf32, #tpu.memory_space<vmem>>, vector<2x4x1x64xf32>
    tpu.vector_store %arg14[%c0_92, %c1_93, %c0_94, %c0_95], %99 {strides = array<i32>} : memref<2x6x6x64xf32, #tpu.memory_space<vmem>>, vector<2x4x1x64xf32>,
    %c0_96 = arith.constant 0 : index
    %c1_97 = arith.constant 1 : index
    %c5_98 = arith.constant 5 : index
    %c0_99 = arith.constant 0 : index
    %103 = vector.load %arg14[%c0_96, %c1_97, %c5_98, %c0_99] : memref<2x6x6x64xf32, #tpu.memory_space<vmem>>, vector<2x4x1x64xf32>
    tpu.vector_store %arg14[%c0_96, %c1_97, %c5_98, %c0_99], %99 {strides = array<i32>} : memref<2x6x6x64xf32, #tpu.memory_space<vmem>>, vector<2x4x1x64xf32>,
    %c0_100 = arith.constant 0 : index
    %c1_101 = arith.constant 1 : index
    %c1_102 = arith.constant 1 : index
    %c0_103 = arith.constant 0 : index
    %104 = vector.load %arg14[%c0_100, %c1_101, %c1_102, %c0_103] : memref<2x6x6x64xf32, #tpu.memory_space<vmem>>, vector<2x4x4x64xf32>
    tpu.vector_store %arg14[%c0_100, %c1_101, %c1_102, %c0_103], %97 {strides = array<i32>} : memref<2x6x6x64xf32, #tpu.memory_space<vmem>>, vector<2x4x4x64xf32>,
    %c0_104 = arith.constant 0 : index
    %c0_105 = arith.constant 0 : index
    %c0_106 = arith.constant 0 : index
    %c0_107 = arith.constant 0 : index
    %105 = vector.load %arg14[%c0_104, %c0_105, %c0_106, %c0_107] : memref<2x6x6x64xf32, #tpu.memory_space<vmem>>, vector<2x6x6x64xf32>
    %cst_108 = arith.constant 0.000000e+00 : f32
    %106 = vector.broadcast %cst_108 : f32 to vector<32x128xf32>
    %107 = vector.extract_strided_slice %105 {offsets = [0, 0, 0, 0], sizes = [2, 4, 4, 64], strides = [1, 1, 1, 1]} : vector<2x6x6x64xf32> to vector<2x4x4x64xf32>
    %108 = vector.shape_cast %107 : vector<2x4x4x64xf32> to vector<32x64xf32>
    %109 = arith.truncf %108 : vector<32x64xf32> to vector<32x64xbf16>
    %c0_109 = arith.constant 0 : index
    %c0_110 = arith.constant 0 : index
    %c0_111 = arith.constant 0 : index
    %c0_112 = arith.constant 0 : index
    %110 = vector.load %arg6[%c0_109, %c0_110, %c0_111, %c0_112] : memref<3x3x64x128xbf16, #tpu.memory_space<vmem>>, vector<1x1x64x128xbf16>
    %111 = vector.shape_cast %110 : vector<1x1x64x128xbf16> to vector<64x128xbf16>
    %cst_113 = arith.constant dense<0.000000e+00> : vector<32x128xf32>
    %112 = tpu.matmul %109, %111, %cst_113 {dimension_numbers = #tpu.dot_dimension_numbers<[1], [0], [0], [1], [0, 0, 1, 1], [], []>} : vector<32x64xbf16>, vector<64x128xbf16>, vector<32x128xf32> -> vector<32x128xf32>
    %113 = arith.addf %106, %112 : vector<32x128xf32>
    %114 = vector.extract_strided_slice %105 {offsets = [0, 0, 1, 0], sizes = [2, 4, 4, 64], strides = [1, 1, 1, 1]} : vector<2x6x6x64xf32> to vector<2x4x4x64xf32>
    %115 = vector.shape_cast %114 : vector<2x4x4x64xf32> to vector<32x64xf32>
    %116 = arith.truncf %115 : vector<32x64xf32> to vector<32x64xbf16>
    %c0_114 = arith.constant 0 : index
    %c1_115 = arith.constant 1 : index
    %c0_116 = arith.constant 0 : index
    %c0_117 = arith.constant 0 : index
    %117 = vector.load %arg6[%c0_114, %c1_115, %c0_116, %c0_117] : memref<3x3x64x128xbf16, #tpu.memory_space<vmem>>, vector<1x1x64x128xbf16>
    %118 = vector.shape_cast %117 : vector<1x1x64x128xbf16> to vector<64x128xbf16>
    %cst_118 = arith.constant dense<0.000000e+00> : vector<32x128xf32>
    %119 = tpu.matmul %116, %118, %cst_118 {dimension_numbers = #tpu.dot_dimension_numbers<[1], [0], [0], [1], [0, 0, 1, 1], [], []>} : vector<32x64xbf16>, vector<64x128xbf16>, vector<32x128xf32> -> vector<32x128xf32>
    %120 = arith.addf %113, %119 : vector<32x128xf32>
    %121 = vector.extract_strided_slice %105 {offsets = [0, 0, 2, 0], sizes = [2, 4, 4, 64], strides = [1, 1, 1, 1]} : vector<2x6x6x64xf32> to vector<2x4x4x64xf32>
    %122 = vector.shape_cast %121 : vector<2x4x4x64xf32> to vector<32x64xf32>
    %123 = arith.truncf %122 : vector<32x64xf32> to vector<32x64xbf16>
    %c0_119 = arith.constant 0 : index
    %c2_120 = arith.constant 2 : index
    %c0_121 = arith.constant 0 : index
    %c0_122 = arith.constant 0 : index
    %124 = vector.load %arg6[%c0_119, %c2_120, %c0_121, %c0_122] : memref<3x3x64x128xbf16, #tpu.memory_space<vmem>>, vector<1x1x64x128xbf16>
    %125 = vector.shape_cast %124 : vector<1x1x64x128xbf16> to vector<64x128xbf16>
    %cst_123 = arith.constant dense<0.000000e+00> : vector<32x128xf32>
    %126 = tpu.matmul %123, %125, %cst_123 {dimension_numbers = #tpu.dot_dimension_numbers<[1], [0], [0], [1], [0, 0, 1, 1], [], []>} : vector<32x64xbf16>, vector<64x128xbf16>, vector<32x128xf32> -> vector<32x128xf32>
    %127 = arith.addf %120, %126 : vector<32x128xf32>
    %128 = vector.extract_strided_slice %105 {offsets = [0, 1, 0, 0], sizes = [2, 4, 4, 64], strides = [1, 1, 1, 1]} : vector<2x6x6x64xf32> to vector<2x4x4x64xf32>
    %129 = vector.shape_cast %128 : vector<2x4x4x64xf32> to vector<32x64xf32>
    %130 = arith.truncf %129 : vector<32x64xf32> to vector<32x64xbf16>
    %c1_124 = arith.constant 1 : index
    %c0_125 = arith.constant 0 : index
    %c0_126 = arith.constant 0 : index
    %c0_127 = arith.constant 0 : index
    %131 = vector.load %arg6[%c1_124, %c0_125, %c0_126, %c0_127] : memref<3x3x64x128xbf16, #tpu.memory_space<vmem>>, vector<1x1x64x128xbf16>
    %132 = vector.shape_cast %131 : vector<1x1x64x128xbf16> to vector<64x128xbf16>
    %cst_128 = arith.constant dense<0.000000e+00> : vector<32x128xf32>
    %133 = tpu.matmul %130, %132, %cst_128 {dimension_numbers = #tpu.dot_dimension_numbers<[1], [0], [0], [1], [0, 0, 1, 1], [], []>} : vector<32x64xbf16>, vector<64x128xbf16>, vector<32x128xf32> -> vector<32x128xf32>
    %134 = arith.addf %127, %133 : vector<32x128xf32>
    %135 = vector.extract_strided_slice %105 {offsets = [0, 1, 1, 0], sizes = [2, 4, 4, 64], strides = [1, 1, 1, 1]} : vector<2x6x6x64xf32> to vector<2x4x4x64xf32>
    %136 = vector.shape_cast %135 : vector<2x4x4x64xf32> to vector<32x64xf32>
    %137 = arith.truncf %136 : vector<32x64xf32> to vector<32x64xbf16>
    %c1_129 = arith.constant 1 : index
    %c1_130 = arith.constant 1 : index
    %c0_131 = arith.constant 0 : index
    %c0_132 = arith.constant 0 : index
    %138 = vector.load %arg6[%c1_129, %c1_130, %c0_131, %c0_132] : memref<3x3x64x128xbf16, #tpu.memory_space<vmem>>, vector<1x1x64x128xbf16>
    %139 = vector.shape_cast %138 : vector<1x1x64x128xbf16> to vector<64x128xbf16>
    %cst_133 = arith.constant dense<0.000000e+00> : vector<32x128xf32>
    %140 = tpu.matmul %137, %139, %cst_133 {dimension_numbers = #tpu.dot_dimension_numbers<[1], [0], [0], [1], [0, 0, 1, 1], [], []>} : vector<32x64xbf16>, vector<64x128xbf16>, vector<32x128xf32> -> vector<32x128xf32>
    %141 = arith.addf %134, %140 : vector<32x128xf32>
    %142 = vector.extract_strided_slice %105 {offsets = [0, 1, 2, 0], sizes = [2, 4, 4, 64], strides = [1, 1, 1, 1]} : vector<2x6x6x64xf32> to vector<2x4x4x64xf32>
    %143 = vector.shape_cast %142 : vector<2x4x4x64xf32> to vector<32x64xf32>
    %144 = arith.truncf %143 : vector<32x64xf32> to vector<32x64xbf16>
    %c1_134 = arith.constant 1 : index
    %c2_135 = arith.constant 2 : index
    %c0_136 = arith.constant 0 : index
    %c0_137 = arith.constant 0 : index
    %145 = vector.load %arg6[%c1_134, %c2_135, %c0_136, %c0_137] : memref<3x3x64x128xbf16, #tpu.memory_space<vmem>>, vector<1x1x64x128xbf16>
    %146 = vector.shape_cast %145 : vector<1x1x64x128xbf16> to vector<64x128xbf16>
    %cst_138 = arith.constant dense<0.000000e+00> : vector<32x128xf32>
    %147 = tpu.matmul %144, %146, %cst_138 {dimension_numbers = #tpu.dot_dimension_numbers<[1], [0], [0], [1], [0, 0, 1, 1], [], []>} : vector<32x64xbf16>, vector<64x128xbf16>, vector<32x128xf32> -> vector<32x128xf32>
    %148 = arith.addf %141, %147 : vector<32x128xf32>
    %149 = vector.extract_strided_slice %105 {offsets = [0, 2, 0, 0], sizes = [2, 4, 4, 64], strides = [1, 1, 1, 1]} : vector<2x6x6x64xf32> to vector<2x4x4x64xf32>
    %150 = vector.shape_cast %149 : vector<2x4x4x64xf32> to vector<32x64xf32>
    %151 = arith.truncf %150 : vector<32x64xf32> to vector<32x64xbf16>
    %c2_139 = arith.constant 2 : index
    %c0_140 = arith.constant 0 : index
    %c0_141 = arith.constant 0 : index
    %c0_142 = arith.constant 0 : index
    %152 = vector.load %arg6[%c2_139, %c0_140, %c0_141, %c0_142] : memref<3x3x64x128xbf16, #tpu.memory_space<vmem>>, vector<1x1x64x128xbf16>
    %153 = vector.shape_cast %152 : vector<1x1x64x128xbf16> to vector<64x128xbf16>
    %cst_143 = arith.constant dense<0.000000e+00> : vector<32x128xf32>
    %154 = tpu.matmul %151, %153, %cst_143 {dimension_numbers = #tpu.dot_dimension_numbers<[1], [0], [0], [1], [0, 0, 1, 1], [], []>} : vector<32x64xbf16>, vector<64x128xbf16>, vector<32x128xf32> -> vector<32x128xf32>
    %155 = arith.addf %148, %154 : vector<32x128xf32>
    %156 = vector.extract_strided_slice %105 {offsets = [0, 2, 1, 0], sizes = [2, 4, 4, 64], strides = [1, 1, 1, 1]} : vector<2x6x6x64xf32> to vector<2x4x4x64xf32>
    %157 = vector.shape_cast %156 : vector<2x4x4x64xf32> to vector<32x64xf32>
    %158 = arith.truncf %157 : vector<32x64xf32> to vector<32x64xbf16>
    %c2_144 = arith.constant 2 : index
    %c1_145 = arith.constant 1 : index
    %c0_146 = arith.constant 0 : index
    %c0_147 = arith.constant 0 : index
    %159 = vector.load %arg6[%c2_144, %c1_145, %c0_146, %c0_147] : memref<3x3x64x128xbf16, #tpu.memory_space<vmem>>, vector<1x1x64x128xbf16>
    %160 = vector.shape_cast %159 : vector<1x1x64x128xbf16> to vector<64x128xbf16>
    %cst_148 = arith.constant dense<0.000000e+00> : vector<32x128xf32>
    %161 = tpu.matmul %158, %160, %cst_148 {dimension_numbers = #tpu.dot_dimension_numbers<[1], [0], [0], [1], [0, 0, 1, 1], [], []>} : vector<32x64xbf16>, vector<64x128xbf16>, vector<32x128xf32> -> vector<32x128xf32>
    %162 = arith.addf %155, %161 : vector<32x128xf32>
    %163 = vector.extract_strided_slice %105 {offsets = [0, 2, 2, 0], sizes = [2, 4, 4, 64], strides = [1, 1, 1, 1]} : vector<2x6x6x64xf32> to vector<2x4x4x64xf32>
    %164 = vector.shape_cast %163 : vector<2x4x4x64xf32> to vector<32x64xf32>
    %165 = arith.truncf %164 : vector<32x64xf32> to vector<32x64xbf16>
    %c2_149 = arith.constant 2 : index
    %c2_150 = arith.constant 2 : index
    %c0_151 = arith.constant 0 : index
    %c0_152 = arith.constant 0 : index
    %166 = vector.load %arg6[%c2_149, %c2_150, %c0_151, %c0_152] : memref<3x3x64x128xbf16, #tpu.memory_space<vmem>>, vector<1x1x64x128xbf16>
    %167 = vector.shape_cast %166 : vector<1x1x64x128xbf16> to vector<64x128xbf16>
    %cst_153 = arith.constant dense<0.000000e+00> : vector<32x128xf32>
    %168 = tpu.matmul %165, %167, %cst_153 {dimension_numbers = #tpu.dot_dimension_numbers<[1], [0], [0], [1], [0, 0, 1, 1], [], []>} : vector<32x64xbf16>, vector<64x128xbf16>, vector<32x128xf32> -> vector<32x128xf32>
    %169 = arith.addf %162, %168 : vector<32x128xf32>
    %c0_154 = arith.constant 0 : index
    %c0_155 = arith.constant 0 : index
    %170 = vector.load %arg7[%c0_154, %c0_155] : memref<1x128xf32, #tpu.memory_space<vmem>>, vector<1x128xf32>
    %171 = vector.broadcast %170 : vector<1x128xf32> to vector<32x128xf32>
    %172 = arith.addf %169, %171 : vector<32x128xf32>
    %cst_156 = arith.constant 0.000000e+00 : f32
    %173 = vector.broadcast %cst_156 : f32 to vector<32x128xf32>
    %174 = arith.maximumf %172, %173 : vector<32x128xf32>
    %175 = vector.shape_cast %174 : vector<32x128xf32> to vector<8x4x128xf32>
    %176 = vector.shape_cast %175 : vector<8x4x128xf32> to vector<8x2x2x128xf32>
    %cst_157 = arith.constant dense<0xFF800000> : vector<8x2x128xf32>
    %177 = vector.multi_reduction <maximumf>, %176, %cst_157 [2] : vector<8x2x2x128xf32> to vector<8x2x128xf32>
    %178 = vector.shape_cast %177 : vector<8x2x128xf32> to vector<4x2x2x128xf32>
    %cst_158 = arith.constant dense<0xFF800000> : vector<4x2x128xf32>
    %179 = vector.multi_reduction <maximumf>, %178, %cst_158 [1] : vector<4x2x2x128xf32> to vector<4x2x128xf32>
    %180 = vector.shape_cast %179 : vector<4x2x128xf32> to vector<2x2x2x128xf32>
    %181 = vector.extract_strided_slice %180 {offsets = [0, 0, 0, 0], sizes = [2, 1, 1, 128], strides = [1, 1, 1, 1]} : vector<2x2x2x128xf32> to vector<2x1x1x128xf32>
    %182 = vector.shape_cast %181 : vector<2x1x1x128xf32> to vector<2x128xf32>
    %183 = vector.extract_strided_slice %180 {offsets = [0, 0, 1, 0], sizes = [2, 1, 1, 128], strides = [1, 1, 1, 1]} : vector<2x2x2x128xf32> to vector<2x1x1x128xf32>
    %184 = vector.shape_cast %183 : vector<2x1x1x128xf32> to vector<2x128xf32>
    %185 = vector.extract_strided_slice %180 {offsets = [0, 1, 0, 0], sizes = [2, 1, 1, 128], strides = [1, 1, 1, 1]} : vector<2x2x2x128xf32> to vector<2x1x1x128xf32>
    %186 = vector.shape_cast %185 : vector<2x1x1x128xf32> to vector<2x128xf32>
    %187 = vector.extract_strided_slice %180 {offsets = [0, 1, 1, 0], sizes = [2, 1, 1, 128], strides = [1, 1, 1, 1]} : vector<2x2x2x128xf32> to vector<2x1x1x128xf32>
    %188 = vector.shape_cast %187 : vector<2x1x1x128xf32> to vector<2x128xf32>
    %189 = tpu.concatenate %182, %184, %186, %188 in 1 : vector<2x128xf32>, vector<2x128xf32>, vector<2x128xf32>, vector<2x128xf32> -> vector<2x512xf32>
    %190 = arith.truncf %189 : vector<2x512xf32> to vector<2x512xbf16>
    %c0_159 = arith.constant 0 : index
    %c0_160 = arith.constant 0 : index
    %191 = vector.load %arg8[%c0_159, %c0_160] : memref<512x64xbf16, #tpu.memory_space<vmem>>, vector<512x64xbf16>
    %cst_161 = arith.constant dense<0.000000e+00> : vector<2x64xf32>
    %192 = tpu.matmul %190, %191, %cst_161 {dimension_numbers = #tpu.dot_dimension_numbers<[1], [0], [0], [1], [0, 0, 1, 1], [], []>} : vector<2x512xbf16>, vector<512x64xbf16>, vector<2x64xf32> -> vector<2x64xf32>
    %c0_162 = arith.constant 0 : index
    %c0_163 = arith.constant 0 : index
    %193 = vector.load %arg9[%c0_162, %c0_163] : memref<1x64xf32, #tpu.memory_space<vmem>>, vector<1x64xf32>
    %194 = vector.broadcast %193 : vector<1x64xf32> to vector<2x64xf32>
    %195 = arith.addf %192, %194 : vector<2x64xf32>
    %cst_164 = arith.constant 0.000000e+00 : f32
    %196 = vector.broadcast %cst_164 : f32 to vector<2x64xf32>
    %197 = arith.maximumf %195, %196 : vector<2x64xf32>
    %198 = arith.truncf %197 : vector<2x64xf32> to vector<2x64xbf16>
    %c0_165 = arith.constant 0 : index
    %c0_166 = arith.constant 0 : index
    %199 = vector.load %arg10[%c0_165, %c0_166] : memref<64x2xbf16, #tpu.memory_space<vmem>>, vector<64x2xbf16>
    %cst_167 = arith.constant dense<0.000000e+00> : vector<2x2xf32>
    %200 = tpu.matmul %198, %199, %cst_167 {dimension_numbers = #tpu.dot_dimension_numbers<[1], [0], [0], [1], [0, 0, 1, 1], [], []>} : vector<2x64xbf16>, vector<64x2xbf16>, vector<2x2xf32> -> vector<2x2xf32>
    %c0_168 = arith.constant 0 : index
    %c0_169 = arith.constant 0 : index
    %201 = vector.load %arg11[%c0_168, %c0_169] : memref<1x2xf32, #tpu.memory_space<vmem>>, vector<1x2xf32>
    %202 = vector.broadcast %201 : vector<1x2xf32> to vector<2x2xf32>
    %203 = arith.addf %200, %202 : vector<2x2xf32>
    %c0_170 = arith.constant 0 : index
    %c0_171 = arith.constant 0 : index
    %204 = vector.load %arg12[%c0_170, %c0_171] : memref<2x2xf32, #tpu.memory_space<vmem>>, vector<2x2xf32>
    tpu.vector_store %arg12[%c0_170, %c0_171], %203 {strides = array<i32>} : memref<2x2xf32, #tpu.memory_space<vmem>>, vector<2x2xf32>,
    return
  }
  func.func @transform_0(%arg0: i32) -> (i32, i32, i32) {
    %c0_i32 = arith.constant 0 : i32
    %c0_i32_0 = arith.constant 0 : i32
    %c0_i32_1 = arith.constant 0 : i32
    return %arg0, %c0_i32, %c0_i32_0 : i32, i32, i32
  }
  func.func @transform_1(%arg0: i32) -> (i32, i32) {
    %c0_i32 = arith.constant 0 : i32
    %c0_i32_0 = arith.constant 0 : i32
    %c0_i32_1 = arith.constant 0 : i32
    return %c0_i32, %c0_i32_0 : i32, i32
  }
  func.func @transform_2(%arg0: i32) -> (i32, i32) {
    %c0_i32 = arith.constant 0 : i32
    %c0_i32_0 = arith.constant 0 : i32
    %c0_i32_1 = arith.constant 0 : i32
    return %c0_i32, %c0_i32_0 : i32, i32
  }
  func.func @transform_3(%arg0: i32) -> (i32, i32, i32, i32) {
    %c0_i32 = arith.constant 0 : i32
    %c0_i32_0 = arith.constant 0 : i32
    %c0_i32_1 = arith.constant 0 : i32
    %c0_i32_2 = arith.constant 0 : i32
    %c0_i32_3 = arith.constant 0 : i32
    return %c0_i32, %c0_i32_0, %c0_i32_1, %c0_i32_2 : i32, i32, i32, i32
  }
  func.func @transform_4(%arg0: i32) -> (i32, i32) {
    %c0_i32 = arith.constant 0 : i32
    %c0_i32_0 = arith.constant 0 : i32
    %c0_i32_1 = arith.constant 0 : i32
    return %c0_i32, %c0_i32_0 : i32, i32
  }
  func.func @transform_5(%arg0: i32) -> (i32, i32, i32, i32) {
    %c0_i32 = arith.constant 0 : i32
    %c0_i32_0 = arith.constant 0 : i32
    %c0_i32_1 = arith.constant 0 : i32
    %c0_i32_2 = arith.constant 0 : i32
    %c0_i32_3 = arith.constant 0 : i32
    return %c0_i32, %c0_i32_0, %c0_i32_1, %c0_i32_2 : i32, i32, i32, i32
  }
  func.func @transform_6(%arg0: i32) -> (i32, i32) {
    %c0_i32 = arith.constant 0 : i32
    %c0_i32_0 = arith.constant 0 : i32
    %c0_i32_1 = arith.constant 0 : i32
    return %c0_i32, %c0_i32_0 : i32, i32
  }
  func.func @transform_7(%arg0: i32) -> (i32, i32) {
    %c0_i32 = arith.constant 0 : i32
    %c0_i32_0 = arith.constant 0 : i32
    %c0_i32_1 = arith.constant 0 : i32
    return %c0_i32, %c0_i32_0 : i32, i32
  }
  func.func @transform_8(%arg0: i32) -> (i32, i32) {
    %c0_i32 = arith.constant 0 : i32
    %c0_i32_0 = arith.constant 0 : i32
    %c0_i32_1 = arith.constant 0 : i32
    return %c0_i32, %c0_i32_0 : i32, i32
  }
  func.func @transform_9(%arg0: i32) -> (i32, i32) {
    %c0_i32 = arith.constant 0 : i32
    %c0_i32_0 = arith.constant 0 : i32
    %c0_i32_1 = arith.constant 0 : i32
    return %c0_i32, %c0_i32_0 : i32, i32
  }
  func.func @transform_10(%arg0: i32) -> (i32, i32) {
    %c0_i32 = arith.constant 0 : i32
    %c0_i32_0 = arith.constant 0 : i32
    %c0_i32_1 = arith.constant 0 : i32
    return %c0_i32, %c0_i32_0 : i32, i32
  }
  func.func @transform_11(%arg0: i32) -> (i32, i32) {
    %c0_i32 = arith.constant 0 : i32
    %c0_i32_0 = arith.constant 0 : i32
    return %arg0, %c0_i32 : i32, i32
  }
}

</mosaic_0001>

<llo_original>
// kernel: cnn_forward.1
$region0: #{cnn_forward.1}
  #allocation0 [shape = 'u32[]', space=smem, size = 0x4, offset = 0x4, fixed_abs, tag = 'smem constant byte address 0x4 - core index']
  #allocation1 [shape = 'u32[144,128]{1,0:T(1,128)}', space=vmem, size = 0x12000, scoped, tag = 'internal scratch']
  #allocation2 [shape = 'f32[2,10,10,32]{3,2,1,0:T(8,128)}', space=vmem, size = 0x28000, scoped, tag = 'scratch operand']
  #allocation3 [shape = 'f32[2,6,6,64]{3,2,1,0:T(8,128)}', space=vmem, size = 0xc000, scoped, tag = 'scratch operand']
  %s0 = inlined_call_operand.vmem [shape: bf16[2,256,27], index: 0, kind: input, shape index: {}]
  %s1 = inlined_call_operand.vmem [shape: bf16[27,32], index: 1, kind: input, shape index: {}]
  %s2 = inlined_call_operand.vmem [shape: f32[1,32], index: 2, kind: input, shape index: {}]
  %s3 = inlined_call_operand.vmem [shape: bf16[3,3,32,64], index: 3, kind: input, shape index: {}]
  %s4 = inlined_call_operand.vmem [shape: f32[1,64], index: 4, kind: input, shape index: {}]
  %s5 = inlined_call_operand.vmem [shape: bf16[3,3,64,128], index: 5, kind: input, shape index: {}]
  %s6 = inlined_call_operand.vmem [shape: f32[1,128], index: 6, kind: input, shape index: {}]
  %s7 = inlined_call_operand.vmem [shape: bf16[512,64], index: 7, kind: input, shape index: {}]
  %s8 = inlined_call_operand.vmem [shape: f32[1,64], index: 8, kind: input, shape index: {}]
  %s9 = inlined_call_operand.vmem [shape: bf16[64,2], index: 9, kind: input, shape index: {}]
  %s10 = inlined_call_operand.vmem [shape: f32[1,2], index: 10, kind: input, shape index: {}]
  %s11 = inlined_call_operand.hbm [shape: f32[2,2], index: 11, kind: output, shape index: {}]
  %s12 = sld [smem:[#allocation0]]
  $region54: #{cnn_forward.1} parent=0
    _
  %s14 = ssub.s32 1, %s12
  %s15 = scalar_select 0, %s14, %s12
  $region1: #{cnn_forward.1} parent=0
    #allocation4 [shape = 'u8[1024]{0}', space=vmem, size = 0x400, scoped, tag = 'output window, operand 0, single buffered']
    #allocation5 [shape = 's32[1]{0}', space=sflag, size = 0x4, scoped, tag = 'scoped memory for cnn_forward.1']
    %16 = vsyncpa [#allocation5], 0
    // Predicated region
    $region2: #{cnn_forward.1} parent=1 // pred_check
      _
    $region3: #{cnn_forward.1} parent=1 // pred_check_branch
      %18 = sbr.rel (0) target = $region5
    $region4: #{cnn_forward.1} parent=1 // pred_region
      _
    $region5: #{cnn_forward.1} parent=1 // pred_fallthru
      _
    // Predicated region
    $region6: #{cnn_forward.1} parent=1 // pred_check
      _
    $region7: #{cnn_forward.1} parent=1 // pred_check_branch
      %20 = sbr.rel (0) target = $region9
    $region8: #{cnn_forward.1} parent=1 // pred_region
      _
    $region9: #{cnn_forward.1} parent=1 // pred_fallthru
      _
    // Predicated region
    $region10: #{cnn_forward.1} parent=1 // pred_check
      _
    $region11: #{cnn_forward.1} parent=1 // pred_check_branch
      %22 = sbr.rel (0) target = $region13
    $region12: #{cnn_forward.1} parent=1 // pred_region
      _
    $region13: #{cnn_forward.1} parent=1 // pred_fallthru
      _
    // Predicated region
    $region14: #{cnn_forward.1} parent=1 // pred_check
      _
    $region15: #{cnn_forward.1} parent=1 // pred_check_branch
      %24 = sbr.rel (0) target = $region17
    $region16: #{cnn_forward.1} parent=1 // pred_region
      _
    $region17: #{cnn_forward.1} parent=1 // pred_fallthru
      _
    // Predicated region
    $region18: #{cnn_forward.1} parent=1 // pred_check
      _
    $region19: #{cnn_forward.1} parent=1 // pred_check_branch
      %26 = sbr.rel (0) target = $region21
    $region20: #{cnn_forward.1} parent=1 // pred_region
      _
    $region21: #{cnn_forward.1} parent=1 // pred_fallthru
      _
    // Predicated region
    $region22: #{cnn_forward.1} parent=1 // pred_check
      _
    $region23: #{cnn_forward.1} parent=1 // pred_check_branch
      %28 = sbr.rel (0) target = $region25
    $region24: #{cnn_forward.1} parent=1 // pred_region
      _
    $region25: #{cnn_forward.1} parent=1 // pred_fallthru
      _
    // Predicated region
    $region26: #{cnn_forward.1} parent=1 // pred_check
      _
    $region27: #{cnn_forward.1} parent=1 // pred_check_branch
      %30 = sbr.rel (0) target = $region29
    $region28: #{cnn_forward.1} parent=1 // pred_region
      _
    $region29: #{cnn_forward.1} parent=1 // pred_fallthru
      _
    // Predicated region
    $region30: #{cnn_forward.1} parent=1 // pred_check
      _
    $region31: #{cnn_forward.1} parent=1 // pred_check_branch
      %32 = sbr.rel (0) target = $region33
    $region32: #{cnn_forward.1} parent=1 // pred_region
      _
    $region33: #{cnn_forward.1} parent=1 // pred_fallthru
      _
    // Predicated region
    $region34: #{cnn_forward.1} parent=1 // pred_check
      _
    $region35: #{cnn_forward.1} parent=1 // pred_check_branch
      %34 = sbr.rel (0) target = $region37
    $region36: #{cnn_forward.1} parent=1 // pred_region
      _
    $region37: #{cnn_forward.1} parent=1 // pred_fallthru
      _
    // Predicated region
    $region38: #{cnn_forward.1} parent=1 // pred_check
      _
    $region39: #{cnn_forward.1} parent=1 // pred_check_branch
      %36 = sbr.rel (0) target = $region41
    $region40: #{cnn_forward.1} parent=1 // pred_region
      _
    $region41: #{cnn_forward.1} parent=1 // pred_fallthru
      _
    // Predicated region
    $region42: #{cnn_forward.1} parent=1 // pred_check
      _
    $region43: #{cnn_forward.1} parent=1 // pred_check_branch
      %38 = sbr.rel (0) target = $region45
    $region44: #{cnn_forward.1} parent=1 // pred_region
      _
    $region45: #{cnn_forward.1} parent=1 // pred_fallthru
      _
    %v40 = vld [vmem:[%s0] sm:$0xf]
    %v41 = vld [vmem:[%s0 + $0x4] sm:$0xf]
    %v42 = vld [vmem:[%s0 + $0x8] sm:$0xf]
    %v43 = vld [vmem:[%s0 + $0xc] sm:$0xf]
    %v44 = vld [vmem:[%s0 + $0x10] sm:$0xf]
    %v45 = vld [vmem:[%s0 + $0x14] sm:$0xf]
    %v46 = vld [vmem:[%s0 + $0x18] sm:$0xf]
    %v47 = vld [vmem:[%s0 + $0x1c] sm:$0xf]
    %v48 = vld [vmem:[%s0 + $0x20] sm:$0xf]
    %v49 = vld [vmem:[%s0 + $0x24] sm:$0xf]
    %v50 = vld [vmem:[%s0 + $0x28] sm:$0xf]
    %v51 = vld [vmem:[%s0 + $0x2c] sm:$0xf]
    %v52 = vld [vmem:[%s0 + $0x30] sm:$0xf]
    %v53 = vld [vmem:[%s0 + $0x34] sm:$0xf]
    %v54 = vld [vmem:[%s0 + $0x38] sm:$0xf]
    %v55 = vld [vmem:[%s0 + $0x3c] sm:$0xf]
    %v56 = vld [vmem:[%s0 + $0x40] sm:$0xf]
    %v57 = vld [vmem:[%s0 + $0x44] sm:$0xf]
    %v58 = vld [vmem:[%s0 + $0x48] sm:$0xf]
    %v59 = vld [vmem:[%s0 + $0x4c] sm:$0xf]
    %v60 = vld [vmem:[%s0 + $0x50] sm:$0xf]
    %v61 = vld [vmem:[%s0 + $0x54] sm:$0xf]
    %v62 = vld [vmem:[%s0 + $0x58] sm:$0xf]
    %v63 = vld [vmem:[%s0 + $0x5c] sm:$0xf]
    %v64 = vld [vmem:[%s0 + $0x60] sm:$0xf]
    %v65 = vld [vmem:[%s0 + $0x64] sm:$0xf]
    %v66 = vld [vmem:[%s0 + $0x68] sm:$0xf]
    %v67 = vld [vmem:[%s0 + $0x6c] sm:$0xf]
    %v68 = vld [vmem:[%s0 + $0x70] sm:$0xf]
    %v69 = vld [vmem:[%s0 + $0x74] sm:$0xf]
    %v70 = vld [vmem:[%s0 + $0x78] sm:$0xf]
    %v71 = vld [vmem:[%s0 + $0x7c] sm:$0xf]
    %v72 = vld [vmem:[%s0 + $0x80] sm:$0xf]
    %v73 = vld [vmem:[%s0 + $0x84] sm:$0xf]
    %v74 = vld [vmem:[%s0 + $0x88] sm:$0xf]
    %v75 = vld [vmem:[%s0 + $0x8c] sm:$0xf]
    %v76 = vld [vmem:[%s0 + $0x90] sm:$0xf]
    %v77 = vld [vmem:[%s0 + $0x94] sm:$0xf]
    %v78 = vld [vmem:[%s0 + $0x98] sm:$0xf]
    %v79 = vld [vmem:[%s0 + $0x9c] sm:$0xf]
    %v80 = vld [vmem:[%s0 + $0xa0] sm:$0xf]
    %v81 = vld [vmem:[%s0 + $0xa4] sm:$0xf]
    %v82 = vld [vmem:[%s0 + $0xa8] sm:$0xf]
    %v83 = vld [vmem:[%s0 + $0xac] sm:$0xf]
    %v84 = vld [vmem:[%s0 + $0xb0] sm:$0xf]
    %v85 = vld [vmem:[%s0 + $0xb4] sm:$0xf]
    %v86 = vld [vmem:[%s0 + $0xb8] sm:$0xf]
    %v87 = vld [vmem:[%s0 + $0xbc] sm:$0xf]
    %v88 = vld [vmem:[%s0 + $0xc0] sm:$0xf]
    %v89 = vld [vmem:[%s0 + $0xc4] sm:$0xf]
    %v90 = vld [vmem:[%s0 + $0xc8] sm:$0xf]
    %v91 = vld [vmem:[%s0 + $0xcc] sm:$0xf]
    %v92 = vld [vmem:[%s0 + $0xd0] sm:$0xf]
    %v93 = vld [vmem:[%s0 + $0xd4] sm:$0xf]
    %v94 = vld [vmem:[%s0 + $0xd8] sm:$0xf]
    %v95 = vld [vmem:[%s0 + $0xdc] sm:$0xf]
    %v96 = vld [vmem:[%s0 + $0xe0] sm:$0xf]
    %v97 = vld [vmem:[%s0 + $0xe4] sm:$0xf]
    %v98 = vld [vmem:[%s0 + $0xe8] sm:$0xf]
    %v99 = vld [vmem:[%s0 + $0xec] sm:$0xf]
    %v100 = vld [vmem:[%s0 + $0xf0] sm:$0xf]
    %v101 = vld [vmem:[%s0 + $0xf4] sm:$0xf]
    %v102 = vld [vmem:[%s0 + $0xf8] sm:$0xf]
    %v103 = vld [vmem:[%s0 + $0xfc] sm:$0xf]
    %v104 = vld [vmem:[%s1] sm:$0xf]
    %v105 = vld [vmem:[%s1 + $0x4] sm:$0xf]
    %v106 = vld [vmem:[%s1 + $0x8] sm:$0xf]
    %v107 = vld [vmem:[%s1 + $0xc] sm:$0x3]
    %v108 = vld [vmem:[%s2] sm:$0x1]
    %v110 = vlaneseq
    %v111 = vshrl.u32 %v110, 7
    %v112 = vsub.s32 0, %v111
    %v113 = vrot.slane %v108, %v112
    %v179 = vunpack.c.l.b16 %v40
    %v180 = vunpack.c.l.b16 %v41
    %v181 = vunpack.c.l.b16 %v42
    %v182 = vunpack.c.l.b16 %v43
    %v183 = vunpack.c.l.b16 %v44
    %v184 = vunpack.c.l.b16 %v45
    %v185 = vunpack.c.l.b16 %v46
    %v186 = vunpack.c.l.b16 %v47
    %v187 = vunpack.c.l.b16 %v48
    %v188 = vunpack.c.l.b16 %v49
    %v189 = vunpack.c.l.b16 %v50
    %v190 = vunpack.c.l.b16 %v51
    %v191 = vunpack.c.l.b16 %v52
    %v192 = vunpack.c.l.b16 %v53
    %v193 = vunpack.c.l.b16 %v54
    %v194 = vunpack.c.l.b16 %v55
    %v195 = vunpack.c.l.b16 %v56
    %v196 = vunpack.c.l.b16 %v57
    %v197 = vunpack.c.l.b16 %v58
    %v198 = vunpack.c.l.b16 %v59
    %v199 = vunpack.c.l.b16 %v60
    %v200 = vunpack.c.l.b16 %v61
    %v201 = vunpack.c.l.b16 %v62
    %v202 = vunpack.c.l.b16 %v63
    %v203 = vunpack.c.l.b16 %v64
    %v204 = vunpack.c.l.b16 %v65
    %v205 = vunpack.c.l.b16 %v66
    %v206 = vunpack.c.l.b16 %v67
    %v207 = vunpack.c.l.b16 %v68
    %v208 = vunpack.c.l.b16 %v69
    %v209 = vunpack.c.l.b16 %v70
    %v210 = vunpack.c.l.b16 %v71
    %v211 = vunpack.c.l.b16 %v72
    %v212 = vunpack.c.l.b16 %v73
    %v213 = vunpack.c.l.b16 %v74
    %v214 = vunpack.c.l.b16 %v75
    %v215 = vunpack.c.l.b16 %v76
    %v216 = vunpack.c.l.b16 %v77
    %v217 = vunpack.c.l.b16 %v78
    %v218 = vunpack.c.l.b16 %v79
    %v219 = vunpack.c.l.b16 %v80
    %v220 = vunpack.c.l.b16 %v81
    %v221 = vunpack.c.l.b16 %v82
    %v222 = vunpack.c.l.b16 %v83
    %v223 = vunpack.c.l.b16 %v84
    %v224 = vunpack.c.l.b16 %v85
    %v225 = vunpack.c.l.b16 %v86
    %v226 = vunpack.c.l.b16 %v87
    %v227 = vunpack.c.l.b16 %v88
    %v228 = vunpack.c.l.b16 %v89
    %v229 = vunpack.c.l.b16 %v90
    %v230 = vunpack.c.l.b16 %v91
    %v231 = vunpack.c.l.b16 %v92
    %v232 = vunpack.c.l.b16 %v93
    %v233 = vunpack.c.l.b16 %v94
    %v234 = vunpack.c.l.b16 %v95
    %v235 = vunpack.c.l.b16 %v96
    %v236 = vunpack.c.l.b16 %v97
    %v237 = vunpack.c.l.b16 %v98
    %v238 = vunpack.c.l.b16 %v99
    %v239 = vunpack.c.l.b16 %v100
    %v240 = vunpack.c.l.b16 %v101
    %v241 = vunpack.c.l.b16 %v102
    %v242 = vunpack.c.l.b16 %v103
    %v243 = vpack.c.b16 %v180, %v179
    %v244 = vpack.c.b16 %v182, %v181
    %v245 = vpack.c.b16 %v184, %v183
    %v246 = vpack.c.b16 %v186, %v185
    %v247 = vpack.c.b16 %v188, %v187
    %v248 = vpack.c.b16 %v190, %v189
    %v249 = vpack.c.b16 %v192, %v191
    %v250 = vpack.c.b16 %v194, %v193
    %v251 = vpack.c.b16 %v196, %v195
    %v252 = vpack.c.b16 %v198, %v197
    %v253 = vpack.c.b16 %v200, %v199
    %v254 = vpack.c.b16 %v202, %v201
    %v255 = vpack.c.b16 %v204, %v203
    %v256 = vpack.c.b16 %v206, %v205
    %v257 = vpack.c.b16 %v208, %v207
    %v258 = vpack.c.b16 %v210, %v209
    %v259 = vpack.c.b16 %v212, %v211
    %v260 = vpack.c.b16 %v214, %v213
    %v261 = vpack.c.b16 %v216, %v215
    %v262 = vpack.c.b16 %v218, %v217
    %v263 = vpack.c.b16 %v220, %v219
    %v264 = vpack.c.b16 %v222, %v221
    %v265 = vpack.c.b16 %v224, %v223
    %v266 = vpack.c.b16 %v226, %v225
    %v267 = vpack.c.b16 %v228, %v227
    %v268 = vpack.c.b16 %v230, %v229
    %v269 = vpack.c.b16 %v232, %v231
    %v270 = vpack.c.b16 %v234, %v233
    %v271 = vpack.c.b16 %v236, %v235
    %v272 = vpack.c.b16 %v238, %v237
    %v273 = vpack.c.b16 %v240, %v239
    %v274 = vpack.c.b16 %v242, %v241
    %v279 = vunpack.c.l.b16 %v104
    %v280 = vunpack.c.l.b16 %v105
    %v281 = vunpack.c.l.b16 %v106
    %v282 = vunpack.c.l.b16 %v107
    %v283 = vpack.c.b16 %v280, %v279
    %v284 = vpack.c.b16 %v282, %v281
    %vm286 = vcmask 220160
    %v288 = vsel %vm286, %v243, 0
    %v291 = vsel %vm286, %v244, 0
    %v294 = vsel %vm286, %v245, 0
    %v297 = vsel %vm286, %v246, 0
    %v300 = vsel %vm286, %v247, 0
    %v303 = vsel %vm286, %v248, 0
    %v306 = vsel %vm286, %v249, 0
    %v309 = vsel %vm286, %v250, 0
    %v312 = vsel %vm286, %v251, 0
    %v315 = vsel %vm286, %v252, 0
    %v318 = vsel %vm286, %v253, 0
    %v321 = vsel %vm286, %v254, 0
    %v324 = vsel %vm286, %v255, 0
    %v327 = vsel %vm286, %v256, 0
    %v330 = vsel %vm286, %v257, 0
    %v333 = vsel %vm286, %v258, 0
    %v336 = vsel %vm286, %v259, 0
    %v339 = vsel %vm286, %v260, 0
    %v342 = vsel %vm286, %v261, 0
    %v345 = vsel %vm286, %v262, 0
    %v348 = vsel %vm286, %v263, 0
    %v351 = vsel %vm286, %v264, 0
    %v354 = vsel %vm286, %v265, 0
    %v357 = vsel %vm286, %v266, 0
    %v360 = vsel %vm286, %v267, 0
    %v363 = vsel %vm286, %v268, 0
    %v366 = vsel %vm286, %v269, 0
    %v369 = vsel %vm286, %v270, 0
    %v372 = vsel %vm286, %v271, 0
    %v375 = vsel %vm286, %v272, 0
    %v378 = vsel %vm286, %v273, 0
    %v381 = vsel %vm286, %v274, 0
    %vm383 = vcmask 1044480
    %vm384 = vcmask 1045504
    %v385 = vsel %vm383, 4294967295, 65535
    %v386 = vsel %vm384, %v385, 0
    %v388 = vand.u32 %v284, %v386
    %390 = vmatprep.subr.bf16.mxu0 0
    %391 = vmatpush1.bf16.msra.mxu0 0
    %392 = vmatprep.subr.bf16.mxu0 0
    %393 = vmatpush1.bf16.msra.mxu0 0
    %394 = vmatprep.subr.bf16.mxu0 0
    %395 = vmatpush1.bf16.msra.mxu0 0
    %396 = vmatprep.subr.bf16.mxu0 0
    %397 = vmatpush1.bf16.msra.mxu0 0
    %398 = vmatprep.subr.bf16.mxu0 0
    %399 = vmatpush1.bf16.msra.mxu0 0
    %400 = vmatprep.subr.bf16.mxu0 0
    %401 = vmatpush1.bf16.msra.mxu0 0
    %402 = vmatprep.subr.bf16.mxu0 0
    %403 = vmatpush1.bf16.msra.mxu0 %v388
    %404 = vmatprep.subr.bf16.mxu0 0
    %405 = vmatpush1.bf16.msra.mxu0 %v283
    %406 = vmatprep.subr.bf16.mxu0 0
    %407 = vmatpush2.bf16.msra.mxu0 0
    %408 = vmatprep.subr.bf16.mxu0 0
    %409 = vmatpush2.bf16.msra.mxu0 0
    %410 = vmatprep.subr.bf16.mxu0 0
    %411 = vmatpush2.bf16.msra.mxu0 0
    %412 = vmatprep.subr.bf16.mxu0 0
    %413 = vmatpush2.bf16.msra.mxu0 0
    %414 = vmatprep.subr.bf16.mxu0 0
    %415 = vmatpush2.bf16.msra.mxu0 0
    %416 = vmatprep.subr.bf16.mxu0 0
    %417 = vmatpush2.bf16.msra.mxu0 0
    %418 = vmatprep.subr.bf16.mxu0 0
    %419 = vmatpush2.bf16.msra.mxu0 0
    %420 = vmatprep.subr.bf16.mxu0 0
    %421 = vmatpush2.bf16.msra.mxu0 0
    %422 = vmatprep.mubr.bf16.mxu0 0
    %423 = vmatmul.mubr.bf16.gmra.mxu0 %v288
    %v424 = vpop.f32.mrf.mxu0
    %v425 = vadd.f32 %v113, %v424
    %v426 = vpop.f32.mrf.mxu0
    %v427 = vpop.f32.mrf.mxu0
    %v428 = vadd.f32 %v113, %v427
    %v429 = vpop.f32.mrf.mxu0
    %430 = vmatprep.mubr.bf16.mxu0 0
    %431 = vmatmul.mubr.bf16.gmra.mxu0 %v291
    %v432 = vpop.f32.mrf.mxu0
    %v433 = vadd.f32 %v113, %v432
    %v434 = vpop.f32.mrf.mxu0
    %v435 = vpop.f32.mrf.mxu0
    %v436 = vadd.f32 %v113, %v435
    %v437 = vpop.f32.mrf.mxu0
    %438 = vmatprep.mubr.bf16.mxu0 0
    %439 = vmatmul.mubr.bf16.gmra.mxu0 %v294
    %v440 = vpop.f32.mrf.mxu0
    %v441 = vadd.f32 %v113, %v440
    %v442 = vpop.f32.mrf.mxu0
    %v443 = vpop.f32.mrf.mxu0
    %v444 = vadd.f32 %v113, %v443
    %v445 = vpop.f32.mrf.mxu0
    %446 = vmatprep.mubr.bf16.mxu0 0
    %447 = vmatmul.mubr.bf16.gmra.mxu0 %v297
    %v448 = vpop.f32.mrf.mxu0
    %v449 = vadd.f32 %v113, %v448
    %v450 = vpop.f32.mrf.mxu0
    %v451 = vpop.f32.mrf.mxu0
    %v452 = vadd.f32 %v113, %v451
    %v453 = vpop.f32.mrf.mxu0
    %454 = vmatprep.mubr.bf16.mxu0 0
    %455 = vmatmul.mubr.bf16.gmra.mxu0 %v300
    %v456 = vpop.f32.mrf.mxu0
    %v457 = vadd.f32 %v113, %v456
    %v458 = vpop.f32.mrf.mxu0
    %v459 = vpop.f32.mrf.mxu0
    %v460 = vadd.f32 %v113, %v459
    %v461 = vpop.f32.mrf.mxu0
    %462 = vmatprep.mubr.bf16.mxu0 0
    %463 = vmatmul.mubr.bf16.gmra.mxu0 %v303
    %v464 = vpop.f32.mrf.mxu0
    %v465 = vadd.f32 %v113, %v464
    %v466 = vpop.f32.mrf.mxu0
    %v467 = vpop.f32.mrf.mxu0
    %v468 = vadd.f32 %v113, %v467
    %v469 = vpop.f32.mrf.mxu0
    %470 = vmatprep.mubr.bf16.mxu0 0
    %471 = vmatmul.mubr.bf16.gmra.mxu0 %v306
    %v472 = vpop.f32.mrf.mxu0
    %v473 = vadd.f32 %v113, %v472
    %v474 = vpop.f32.mrf.mxu0
    %v475 = vpop.f32.mrf.mxu0
    %v476 = vadd.f32 %v113, %v475
    %v477 = vpop.f32.mrf.mxu0
    %478 = vmatprep.mubr.bf16.mxu0 0
    %479 = vmatmul.mubr.bf16.gmra.mxu0 %v309
    %v480 = vpop.f32.mrf.mxu0
    %v481 = vadd.f32 %v113, %v480
    %v482 = vpop.f32.mrf.mxu0
    %v483 = vpop.f32.mrf.mxu0
    %v484 = vadd.f32 %v113, %v483
    %v485 = vpop.f32.mrf.mxu0
    %486 = vmatprep.mubr.bf16.mxu0 0
    %487 = vmatmul.mubr.bf16.gmra.mxu0 %v312
    %v488 = vpop.f32.mrf.mxu0
    %v489 = vadd.f32 %v113, %v488
    %v490 = vpop.f32.mrf.mxu0
    %v491 = vpop.f32.mrf.mxu0
    %v492 = vadd.f32 %v113, %v491
    %v493 = vpop.f32.mrf.mxu0
    %494 = vmatprep.mubr.bf16.mxu0 0
    %495 = vmatmul.mubr.bf16.gmra.mxu0 %v315
    %v496 = vpop.f32.mrf.mxu0
    %v497 = vadd.f32 %v113, %v496
    %v498 = vpop.f32.mrf.mxu0
    %v499 = vpop.f32.mrf.mxu0
    %v500 = vadd.f32 %v113, %v499
    %v501 = vpop.f32.mrf.mxu0
    %502 = vmatprep.mubr.bf16.mxu0 0
    %503 = vmatmul.mubr.bf16.gmra.mxu0 %v318
    %v504 = vpop.f32.mrf.mxu0
    %v505 = vadd.f32 %v113, %v504
    %v506 = vpop.f32.mrf.mxu0
    %v507 = vpop.f32.mrf.mxu0
    %v508 = vadd.f32 %v113, %v507
    %v509 = vpop.f32.mrf.mxu0
    %510 = vmatprep.mubr.bf16.mxu0 0
    %511 = vmatmul.mubr.bf16.gmra.mxu0 %v321
    %v512 = vpop.f32.mrf.mxu0
    %v513 = vadd.f32 %v113, %v512
    %v514 = vpop.f32.mrf.mxu0
    %v515 = vpop.f32.mrf.mxu0
    %v516 = vadd.f32 %v113, %v515
    %v517 = vpop.f32.mrf.mxu0
    %518 = vmatprep.mubr.bf16.mxu0 0
    %519 = vmatmul.mubr.bf16.gmra.mxu0 %v324
    %v520 = vpop.f32.mrf.mxu0
    %v521 = vadd.f32 %v113, %v520
    %v522 = vpop.f32.mrf.mxu0
    %v523 = vpop.f32.mrf.mxu0
    %v524 = vadd.f32 %v113, %v523
    %v525 = vpop.f32.mrf.mxu0
    %526 = vmatprep.mubr.bf16.mxu0 0
    %527 = vmatmul.mubr.bf16.gmra.mxu0 %v327
    %v528 = vpop.f32.mrf.mxu0
    %v529 = vadd.f32 %v113, %v528
    %v530 = vpop.f32.mrf.mxu0
    %v531 = vpop.f32.mrf.mxu0
    %v532 = vadd.f32 %v113, %v531
    %v533 = vpop.f32.mrf.mxu0
    %534 = vmatprep.mubr.bf16.mxu0 0
    %535 = vmatmul.mubr.bf16.gmra.mxu0 %v330
    %v536 = vpop.f32.mrf.mxu0
    %v537 = vadd.f32 %v113, %v536
    %v538 = vpop.f32.mrf.mxu0
    %v539 = vpop.f32.mrf.mxu0
    %v540 = vadd.f32 %v113, %v539
    %v541 = vpop.f32.mrf.mxu0
    %542 = vmatprep.mubr.bf16.mxu0 0
    %543 = vmatmul.mubr.bf16.gmra.mxu0 %v333
    %v544 = vpop.f32.mrf.mxu0
    %v545 = vadd.f32 %v113, %v544
    %v546 = vpop.f32.mrf.mxu0
    %v547 = vpop.f32.mrf.mxu0
    %v548 = vadd.f32 %v113, %v547
    %v549 = vpop.f32.mrf.mxu0
    %550 = vmatprep.mubr.bf16.mxu0 0
    %551 = vmatmul.mubr.bf16.gmra.mxu0 %v336
    %v552 = vpop.f32.mrf.mxu0
    %v553 = vadd.f32 %v113, %v552
    %v554 = vpop.f32.mrf.mxu0
    %v555 = vpop.f32.mrf.mxu0
    %v556 = vadd.f32 %v113, %v555
    %v557 = vpop.f32.mrf.mxu0
    %558 = vmatprep.mubr.bf16.mxu0 0
    %559 = vmatmul.mubr.bf16.gmra.mxu0 %v339
    %v560 = vpop.f32.mrf.mxu0
    %v561 = vadd.f32 %v113, %v560
    %v562 = vpop.f32.mrf.mxu0
    %v563 = vpop.f32.mrf.mxu0
    %v564 = vadd.f32 %v113, %v563
    %v565 = vpop.f32.mrf.mxu0
    %566 = vmatprep.mubr.bf16.mxu0 0
    %567 = vmatmul.mubr.bf16.gmra.mxu0 %v342
    %v568 = vpop.f32.mrf.mxu0
    %v569 = vadd.f32 %v113, %v568
    %v570 = vpop.f32.mrf.mxu0
    %v571 = vpop.f32.mrf.mxu0
    %v572 = vadd.f32 %v113, %v571
    %v573 = vpop.f32.mrf.mxu0
    %574 = vmatprep.mubr.bf16.mxu0 0
    %575 = vmatmul.mubr.bf16.gmra.mxu0 %v345
    %v576 = vpop.f32.mrf.mxu0
    %v577 = vadd.f32 %v113, %v576
    %v578 = vpop.f32.mrf.mxu0
    %v579 = vpop.f32.mrf.mxu0
    %v580 = vadd.f32 %v113, %v579
    %v581 = vpop.f32.mrf.mxu0
    %582 = vmatprep.mubr.bf16.mxu0 0
    %583 = vmatmul.mubr.bf16.gmra.mxu0 %v348
    %v584 = vpop.f32.mrf.mxu0
    %v585 = vadd.f32 %v113, %v584
    %v586 = vpop.f32.mrf.mxu0
    %v587 = vpop.f32.mrf.mxu0
    %v588 = vadd.f32 %v113, %v587
    %v589 = vpop.f32.mrf.mxu0
    %590 = vmatprep.mubr.bf16.mxu0 0
    %591 = vmatmul.mubr.bf16.gmra.mxu0 %v351
    %v592 = vpop.f32.mrf.mxu0
    %v593 = vadd.f32 %v113, %v592
    %v594 = vpop.f32.mrf.mxu0
    %v595 = vpop.f32.mrf.mxu0
    %v596 = vadd.f32 %v113, %v595
    %v597 = vpop.f32.mrf.mxu0
    %598 = vmatprep.mubr.bf16.mxu0 0
    %599 = vmatmul.mubr.bf16.gmra.mxu0 %v354
    %v600 = vpop.f32.mrf.mxu0
    %v601 = vadd.f32 %v113, %v600
    %v602 = vpop.f32.mrf.mxu0
    %v603 = vpop.f32.mrf.mxu0
    %v604 = vadd.f32 %v113, %v603
    %v605 = vpop.f32.mrf.mxu0
    %606 = vmatprep.mubr.bf16.mxu0 0
    %607 = vmatmul.mubr.bf16.gmra.mxu0 %v357
    %v608 = vpop.f32.mrf.mxu0
    %v609 = vadd.f32 %v113, %v608
    %v610 = vpop.f32.mrf.mxu0
    %v611 = vpop.f32.mrf.mxu0
    %v612 = vadd.f32 %v113, %v611
    %v613 = vpop.f32.mrf.mxu0
    %614 = vmatprep.mubr.bf16.mxu0 0
    %615 = vmatmul.mubr.bf16.gmra.mxu0 %v360
    %v616 = vpop.f32.mrf.mxu0
    %v617 = vadd.f32 %v113, %v616
    %v618 = vpop.f32.mrf.mxu0
    %v619 = vpop.f32.mrf.mxu0
    %v620 = vadd.f32 %v113, %v619
    %v621 = vpop.f32.mrf.mxu0
    %622 = vmatprep.mubr.bf16.mxu0 0
    %623 = vmatmul.mubr.bf16.gmra.mxu0 %v363
    %v624 = vpop.f32.mrf.mxu0
    %v625 = vadd.f32 %v113, %v624
    %v626 = vpop.f32.mrf.mxu0
    %v627 = vpop.f32.mrf.mxu0
    %v628 = vadd.f32 %v113, %v627
    %v629 = vpop.f32.mrf.mxu0
    %630 = vmatprep.mubr.bf16.mxu0 0
    %631 = vmatmul.mubr.bf16.gmra.mxu0 %v366
    %v632 = vpop.f32.mrf.mxu0
    %v633 = vadd.f32 %v113, %v632
    %v634 = vpop.f32.mrf.mxu0
    %v635 = vpop.f32.mrf.mxu0
    %v636 = vadd.f32 %v113, %v635
    %v637 = vpop.f32.mrf.mxu0
    %638 = vmatprep.mubr.bf16.mxu0 0
    %639 = vmatmul.mubr.bf16.gmra.mxu0 %v369
    %v640 = vpop.f32.mrf.mxu0
    %v641 = vadd.f32 %v113, %v640
    %v642 = vpop.f32.mrf.mxu0
    %v643 = vpop.f32.mrf.mxu0
    %v644 = vadd.f32 %v113, %v643
    %v645 = vpop.f32.mrf.mxu0
    %646 = vmatprep.mubr.bf16.mxu0 0
    %647 = vmatmul.mubr.bf16.gmra.mxu0 %v372
    %v648 = vpop.f32.mrf.mxu0
    %v649 = vadd.f32 %v113, %v648
    %v650 = vpop.f32.mrf.mxu0
    %v651 = vpop.f32.mrf.mxu0
    %v652 = vadd.f32 %v113, %v651
    %v653 = vpop.f32.mrf.mxu0
    %654 = vmatprep.mubr.bf16.mxu0 0
    %655 = vmatmul.mubr.bf16.gmra.mxu0 %v375
    %v656 = vpop.f32.mrf.mxu0
    %v657 = vadd.f32 %v113, %v656
    %v658 = vpop.f32.mrf.mxu0
    %v659 = vpop.f32.mrf.mxu0
    %v660 = vadd.f32 %v113, %v659
    %v661 = vpop.f32.mrf.mxu0
    %662 = vmatprep.mubr.bf16.mxu0 0
    %663 = vmatmul.mubr.bf16.gmra.mxu0 %v378
    %v664 = vpop.f32.mrf.mxu0
    %v665 = vadd.f32 %v113, %v664
    %v666 = vpop.f32.mrf.mxu0
    %v667 = vpop.f32.mrf.mxu0
    %v668 = vadd.f32 %v113, %v667
    %v669 = vpop.f32.mrf.mxu0
    %670 = vmatprep.mubr.bf16.mxu0 0
    %671 = vmatmul.mubr.bf16.gmra.mxu0 %v381
    %v672 = vpop.f32.mrf.mxu0
    %v673 = vadd.f32 %v113, %v672
    %v674 = vpop.f32.mrf.mxu0
    %v675 = vpop.f32.mrf.mxu0
    %v676 = vadd.f32 %v113, %v675
    %v677 = vpop.f32.mrf.mxu0
    %678 = vdwg.mxu0
    %v679 = vmax.f32 %v425, 0.0
    %v680 = vmax.f32 %v428, 0.0
    %v681 = vmax.f32 %v433, 0.0
    %v682 = vmax.f32 %v436, 0.0
    %v683 = vmax.f32 %v441, 0.0
    %v684 = vmax.f32 %v444, 0.0
    %v685 = vmax.f32 %v449, 0.0
    %v686 = vmax.f32 %v452, 0.0
    %v687 = vmax.f32 %v457, 0.0
    %v688 = vmax.f32 %v460, 0.0
    %v689 = vmax.f32 %v465, 0.0
    %v690 = vmax.f32 %v468, 0.0
    %v691 = vmax.f32 %v473, 0.0
    %v692 = vmax.f32 %v476, 0.0
    %v693 = vmax.f32 %v481, 0.0
    %v694 = vmax.f32 %v484, 0.0
    %v695 = vmax.f32 %v489, 0.0
    %v696 = vmax.f32 %v492, 0.0
    %v697 = vmax.f32 %v497, 0.0
    %v698 = vmax.f32 %v500, 0.0
    %v699 = vmax.f32 %v505, 0.0
    %v700 = vmax.f32 %v508, 0.0
    %v701 = vmax.f32 %v513, 0.0
    %v702 = vmax.f32 %v516, 0.0
    %v703 = vmax.f32 %v521, 0.0
    %v704 = vmax.f32 %v524, 0.0
    %v705 = vmax.f32 %v529, 0.0
    %v706 = vmax.f32 %v532, 0.0
    %v707 = vmax.f32 %v537, 0.0
    %v708 = vmax.f32 %v540, 0.0
    %v709 = vmax.f32 %v545, 0.0
    %v710 = vmax.f32 %v548, 0.0
    %v711 = vmax.f32 %v553, 0.0
    %v712 = vmax.f32 %v556, 0.0
    %v713 = vmax.f32 %v561, 0.0
    %v714 = vmax.f32 %v564, 0.0
    %v715 = vmax.f32 %v569, 0.0
    %v716 = vmax.f32 %v572, 0.0
    %v717 = vmax.f32 %v577, 0.0
    %v718 = vmax.f32 %v580, 0.0
    %v719 = vmax.f32 %v585, 0.0
    %v720 = vmax.f32 %v588, 0.0
    %v721 = vmax.f32 %v593, 0.0
    %v722 = vmax.f32 %v596, 0.0
    %v723 = vmax.f32 %v601, 0.0
    %v724 = vmax.f32 %v604, 0.0
    %v725 = vmax.f32 %v609, 0.0
    %v726 = vmax.f32 %v612, 0.0
    %v727 = vmax.f32 %v617, 0.0
    %v728 = vmax.f32 %v620, 0.0
    %v729 = vmax.f32 %v625, 0.0
    %v730 = vmax.f32 %v628, 0.0
    %v731 = vmax.f32 %v633, 0.0
    %v732 = vmax.f32 %v636, 0.0
    %v733 = vmax.f32 %v641, 0.0
    %v734 = vmax.f32 %v644, 0.0
    %v735 = vmax.f32 %v649, 0.0
    %v736 = vmax.f32 %v652, 0.0
    %v737 = vmax.f32 %v657, 0.0
    %v738 = vmax.f32 %v660, 0.0
    %v739 = vmax.f32 %v665, 0.0
    %v740 = vmax.f32 %v668, 0.0
    %v741 = vmax.f32 %v673, 0.0
    %v742 = vmax.f32 %v676, 0.0
    %v807 = vcombine.high %v679, %v679
    %v809 = vunpack.c.l.s4 1983009808
    %v810 = vunpack.c.0.s8 %v809
    %v811 = vlaneseq
    %v812 = vshrl.u32 %v811, 7
    %v813 = vsub.s32 %v810, %v812
    %v814 = vrot.slane %v679, %v813
    %v816 = vunpack.c.l.s4 1983009808
    %v817 = vunpack.c.0.s8 %v816
    %v818 = vlaneseq
    %v819 = vshrl.u32 %v818, 7
    %v820 = vsub.s32 %v817, %v819
    %v821 = vrot.slane %v807, %v820
    %v822 = vcombine.high %v814, %v814
    %v823 = vcombine.high %v821, %v821
    %v824 = vcombine.high %v680, %v680
    %v826 = vunpack.c.l.s4 1983009808
    %v827 = vunpack.c.0.s8 %v826
    %v828 = vlaneseq
    %v829 = vshrl.u32 %v828, 7
    %v830 = vsub.s32 %v827, %v829
    %v831 = vrot.slane %v680, %v830
    %v833 = vunpack.c.l.s4 1983009808
    %v834 = vunpack.c.0.s8 %v833
    %v835 = vlaneseq
    %v836 = vshrl.u32 %v835, 7
    %v837 = vsub.s32 %v834, %v836
    %v838 = vrot.slane %v824, %v837
    %v839 = vcombine.high %v831, %v831
    %v840 = vcombine.high %v838, %v838
    %v841 = vcombine.high %v681, %v681
    %v843 = vunpack.c.l.s4 1983009808
    %v844 = vunpack.c.0.s8 %v843
    %v845 = vlaneseq
    %v846 = vshrl.u32 %v845, 7
    %v847 = vsub.s32 %v844, %v846
    %v848 = vrot.slane %v681, %v847
    %v850 = vunpack.c.l.s4 1983009808
    %v851 = vunpack.c.0.s8 %v850
    %v852 = vlaneseq
    %v853 = vshrl.u32 %v852, 7
    %v854 = vsub.s32 %v851, %v853
    %v855 = vrot.slane %v841, %v854
    %v856 = vcombine.high %v848, %v848
    %v857 = vcombine.high %v855, %v855
    %v858 = vcombine.high %v682, %v682
    %v860 = vunpack.c.l.s4 1983009808
    %v861 = vunpack.c.0.s8 %v860
    %v862 = vlaneseq
    %v863 = vshrl.u32 %v862, 7
    %v864 = vsub.s32 %v861, %v863
    %v865 = vrot.slane %v682, %v864
    %v867 = vunpack.c.l.s4 1983009808
    %v868 = vunpack.c.0.s8 %v867
    %v869 = vlaneseq
    %v870 = vshrl.u32 %v869, 7
    %v871 = vsub.s32 %v868, %v870
    %v872 = vrot.slane %v858, %v871
    %v873 = vcombine.high %v865, %v865
    %v874 = vcombine.high %v872, %v872
    %v875 = vcombine.high %v683, %v683
    %v877 = vunpack.c.l.s4 1983009808
    %v878 = vunpack.c.0.s8 %v877
    %v879 = vlaneseq
    %v880 = vshrl.u32 %v879, 7
    %v881 = vsub.s32 %v878, %v880
    %v882 = vrot.slane %v683, %v881
    %v884 = vunpack.c.l.s4 1983009808
    %v885 = vunpack.c.0.s8 %v884
    %v886 = vlaneseq
    %v887 = vshrl.u32 %v886, 7
    %v888 = vsub.s32 %v885, %v887
    %v889 = vrot.slane %v875, %v888
    %v890 = vcombine.high %v882, %v882
    %v891 = vcombine.high %v889, %v889
    %v892 = vcombine.high %v684, %v684
    %v894 = vunpack.c.l.s4 1983009808
    %v895 = vunpack.c.0.s8 %v894
    %v896 = vlaneseq
    %v897 = vshrl.u32 %v896, 7
    %v898 = vsub.s32 %v895, %v897
    %v899 = vrot.slane %v684, %v898
    %v901 = vunpack.c.l.s4 1983009808
    %v902 = vunpack.c.0.s8 %v901
    %v903 = vlaneseq
    %v904 = vshrl.u32 %v903, 7
    %v905 = vsub.s32 %v902, %v904
    %v906 = vrot.slane %v892, %v905
    %v907 = vcombine.high %v899, %v899
    %v908 = vcombine.high %v906, %v906
    %v909 = vcombine.high %v685, %v685
    %v911 = vunpack.c.l.s4 1983009808
    %v912 = vunpack.c.0.s8 %v911
    %v913 = vlaneseq
    %v914 = vshrl.u32 %v913, 7
    %v915 = vsub.s32 %v912, %v914
    %v916 = vrot.slane %v685, %v915
    %v918 = vunpack.c.l.s4 1983009808
    %v919 = vunpack.c.0.s8 %v918
    %v920 = vlaneseq
    %v921 = vshrl.u32 %v920, 7
    %v922 = vsub.s32 %v919, %v921
    %v923 = vrot.slane %v909, %v922
    %v924 = vcombine.high %v916, %v916
    %v925 = vcombine.high %v923, %v923
    %v926 = vcombine.high %v686, %v686
    %v928 = vunpack.c.l.s4 1983009808
    %v929 = vunpack.c.0.s8 %v928
    %v930 = vlaneseq
    %v931 = vshrl.u32 %v930, 7
    %v932 = vsub.s32 %v929, %v931
    %v933 = vrot.slane %v686, %v932
    %v935 = vunpack.c.l.s4 1983009808
    %v936 = vunpack.c.0.s8 %v935
    %v937 = vlaneseq
    %v938 = vshrl.u32 %v937, 7
    %v939 = vsub.s32 %v936, %v938
    %v940 = vrot.slane %v926, %v939
    %v941 = vcombine.high %v933, %v933
    %v942 = vcombine.high %v940, %v940
    %v943 = vcombine.high %v687, %v687
    %v945 = vunpack.c.l.s4 1983009808
    %v946 = vunpack.c.0.s8 %v945
    %v947 = vlaneseq
    %v948 = vshrl.u32 %v947, 7
    %v949 = vsub.s32 %v946, %v948
    %v950 = vrot.slane %v687, %v949
    %v952 = vunpack.c.l.s4 1983009808
    %v953 = vunpack.c.0.s8 %v952
    %v954 = vlaneseq
    %v955 = vshrl.u32 %v954, 7
    %v956 = vsub.s32 %v953, %v955
    %v957 = vrot.slane %v943, %v956
    %v958 = vcombine.high %v950, %v950
    %v959 = vcombine.high %v957, %v957
    %v960 = vcombine.high %v688, %v688
    %v962 = vunpack.c.l.s4 1983009808
    %v963 = vunpack.c.0.s8 %v962
    %v964 = vlaneseq
    %v965 = vshrl.u32 %v964, 7
    %v966 = vsub.s32 %v963, %v965
    %v967 = vrot.slane %v688, %v966
    %v969 = vunpack.c.l.s4 1983009808
    %v970 = vunpack.c.0.s8 %v969
    %v971 = vlaneseq
    %v972 = vshrl.u32 %v971, 7
    %v973 = vsub.s32 %v970, %v972
    %v974 = vrot.slane %v960, %v973
    %v975 = vcombine.high %v967, %v967
    %v976 = vcombine.high %v974, %v974
    %v977 = vcombine.high %v689, %v689
    %v979 = vunpack.c.l.s4 1983009808
    %v980 = vunpack.c.0.s8 %v979
    %v981 = vlaneseq
    %v982 = vshrl.u32 %v981, 7
    %v983 = vsub.s32 %v980, %v982
    %v984 = vrot.slane %v689, %v983
    %v986 = vunpack.c.l.s4 1983009808
    %v987 = vunpack.c.0.s8 %v986
    %v988 = vlaneseq
    %v989 = vshrl.u32 %v988, 7
    %v990 = vsub.s32 %v987, %v989
    %v991 = vrot.slane %v977, %v990
    %v992 = vcombine.high %v984, %v984
    %v993 = vcombine.high %v991, %v991
    %v994 = vcombine.high %v690, %v690
    %v996 = vunpack.c.l.s4 1983009808
    %v997 = vunpack.c.0.s8 %v996
    %v998 = vlaneseq
    %v999 = vshrl.u32 %v998, 7
    %v1000 = vsub.s32 %v997, %v999
    %v1001 = vrot.slane %v690, %v1000
    %v1003 = vunpack.c.l.s4 1983009808
    %v1004 = vunpack.c.0.s8 %v1003
    %v1005 = vlaneseq
    %v1006 = vshrl.u32 %v1005, 7
    %v1007 = vsub.s32 %v1004, %v1006
    %v1008 = vrot.slane %v994, %v1007
    %v1009 = vcombine.high %v1001, %v1001
    %v1010 = vcombine.high %v1008, %v1008
    %v1011 = vcombine.high %v691, %v691
    %v1013 = vunpack.c.l.s4 1983009808
    %v1014 = vunpack.c.0.s8 %v1013
    %v1015 = vlaneseq
    %v1016 = vshrl.u32 %v1015, 7
    %v1017 = vsub.s32 %v1014, %v1016
    %v1018 = vrot.slane %v691, %v1017
    %v1020 = vunpack.c.l.s4 1983009808
    %v1021 = vunpack.c.0.s8 %v1020
    %v1022 = vlaneseq
    %v1023 = vshrl.u32 %v1022, 7
    %v1024 = vsub.s32 %v1021, %v1023
    %v1025 = vrot.slane %v1011, %v1024
    %v1026 = vcombine.high %v1018, %v1018
    %v1027 = vcombine.high %v1025, %v1025
    %v1028 = vcombine.high %v692, %v692
    %v1030 = vunpack.c.l.s4 1983009808
    %v1031 = vunpack.c.0.s8 %v1030
    %v1032 = vlaneseq
    %v1033 = vshrl.u32 %v1032, 7
    %v1034 = vsub.s32 %v1031, %v1033
    %v1035 = vrot.slane %v692, %v1034
    %v1037 = vunpack.c.l.s4 1983009808
    %v1038 = vunpack.c.0.s8 %v1037
    %v1039 = vlaneseq
    %v1040 = vshrl.u32 %v1039, 7
    %v1041 = vsub.s32 %v1038, %v1040
    %v1042 = vrot.slane %v1028, %v1041
    %v1043 = vcombine.high %v1035, %v1035
    %v1044 = vcombine.high %v1042, %v1042
    %v1045 = vcombine.high %v693, %v693
    %v1047 = vunpack.c.l.s4 1983009808
    %v1048 = vunpack.c.0.s8 %v1047
    %v1049 = vlaneseq
    %v1050 = vshrl.u32 %v1049, 7
    %v1051 = vsub.s32 %v1048, %v1050
    %v1052 = vrot.slane %v693, %v1051
    %v1054 = vunpack.c.l.s4 1983009808
    %v1055 = vunpack.c.0.s8 %v1054
    %v1056 = vlaneseq
    %v1057 = vshrl.u32 %v1056, 7
    %v1058 = vsub.s32 %v1055, %v1057
    %v1059 = vrot.slane %v1045, %v1058
    %v1060 = vcombine.high %v1052, %v1052
    %v1061 = vcombine.high %v1059, %v1059
    %v1062 = vcombine.high %v694, %v694
    %v1064 = vunpack.c.l.s4 1983009808
    %v1065 = vunpack.c.0.s8 %v1064
    %v1066 = vlaneseq
    %v1067 = vshrl.u32 %v1066, 7
    %v1068 = vsub.s32 %v1065, %v1067
    %v1069 = vrot.slane %v694, %v1068
    %v1071 = vunpack.c.l.s4 1983009808
    %v1072 = vunpack.c.0.s8 %v1071
    %v1073 = vlaneseq
    %v1074 = vshrl.u32 %v1073, 7
    %v1075 = vsub.s32 %v1072, %v1074
    %v1076 = vrot.slane %v1062, %v1075
    %v1077 = vcombine.high %v1069, %v1069
    %v1078 = vcombine.high %v1076, %v1076
    %v1079 = vcombine.high %v695, %v695
    %v1081 = vunpack.c.l.s4 1983009808
    %v1082 = vunpack.c.0.s8 %v1081
    %v1083 = vlaneseq
    %v1084 = vshrl.u32 %v1083, 7
    %v1085 = vsub.s32 %v1082, %v1084
    %v1086 = vrot.slane %v695, %v1085
    %v1088 = vunpack.c.l.s4 1983009808
    %v1089 = vunpack.c.0.s8 %v1088
    %v1090 = vlaneseq
    %v1091 = vshrl.u32 %v1090, 7
    %v1092 = vsub.s32 %v1089, %v1091
    %v1093 = vrot.slane %v1079, %v1092
    %v1094 = vcombine.high %v1086, %v1086
    %v1095 = vcombine.high %v1093, %v1093
    %v1096 = vcombine.high %v696, %v696
    %v1098 = vunpack.c.l.s4 1983009808
    %v1099 = vunpack.c.0.s8 %v1098
    %v1100 = vlaneseq
    %v1101 = vshrl.u32 %v1100, 7
    %v1102 = vsub.s32 %v1099, %v1101
    %v1103 = vrot.slane %v696, %v1102
    %v1105 = vunpack.c.l.s4 1983009808
    %v1106 = vunpack.c.0.s8 %v1105
    %v1107 = vlaneseq
    %v1108 = vshrl.u32 %v1107, 7
    %v1109 = vsub.s32 %v1106, %v1108
    %v1110 = vrot.slane %v1096, %v1109
    %v1111 = vcombine.high %v1103, %v1103
    %v1112 = vcombine.high %v1110, %v1110
    %v1113 = vcombine.high %v697, %v697
    %v1115 = vunpack.c.l.s4 1983009808
    %v1116 = vunpack.c.0.s8 %v1115
    %v1117 = vlaneseq
    %v1118 = vshrl.u32 %v1117, 7
    %v1119 = vsub.s32 %v1116, %v1118
    %v1120 = vrot.slane %v697, %v1119
    %v1122 = vunpack.c.l.s4 1983009808
    %v1123 = vunpack.c.0.s8 %v1122
    %v1124 = vlaneseq
    %v1125 = vshrl.u32 %v1124, 7
    %v1126 = vsub.s32 %v1123, %v1125
    %v1127 = vrot.slane %v1113, %v1126
    %v1128 = vcombine.high %v1120, %v1120
    %v1129 = vcombine.high %v1127, %v1127
    %v1130 = vcombine.high %v698, %v698
    %v1132 = vunpack.c.l.s4 1983009808
    %v1133 = vunpack.c.0.s8 %v1132
    %v1134 = vlaneseq
    %v1135 = vshrl.u32 %v1134, 7
    %v1136 = vsub.s32 %v1133, %v1135
    %v1137 = vrot.slane %v698, %v1136
    %v1139 = vunpack.c.l.s4 1983009808
    %v1140 = vunpack.c.0.s8 %v1139
    %v1141 = vlaneseq
    %v1142 = vshrl.u32 %v1141, 7
    %v1143 = vsub.s32 %v1140, %v1142
    %v1144 = vrot.slane %v1130, %v1143
    %v1145 = vcombine.high %v1137, %v1137
    %v1146 = vcombine.high %v1144, %v1144
    %v1147 = vcombine.high %v699, %v699
    %v1149 = vunpack.c.l.s4 1983009808
    %v1150 = vunpack.c.0.s8 %v1149
    %v1151 = vlaneseq
    %v1152 = vshrl.u32 %v1151, 7
    %v1153 = vsub.s32 %v1150, %v1152
    %v1154 = vrot.slane %v699, %v1153
    %v1156 = vunpack.c.l.s4 1983009808
    %v1157 = vunpack.c.0.s8 %v1156
    %v1158 = vlaneseq
    %v1159 = vshrl.u32 %v1158, 7
    %v1160 = vsub.s32 %v1157, %v1159
    %v1161 = vrot.slane %v1147, %v1160
    %v1162 = vcombine.high %v1154, %v1154
    %v1163 = vcombine.high %v1161, %v1161
    %v1164 = vcombine.high %v700, %v700
    %v1166 = vunpack.c.l.s4 1983009808
    %v1167 = vunpack.c.0.s8 %v1166
    %v1168 = vlaneseq
    %v1169 = vshrl.u32 %v1168, 7
    %v1170 = vsub.s32 %v1167, %v1169
    %v1171 = vrot.slane %v700, %v1170
    %v1173 = vunpack.c.l.s4 1983009808
    %v1174 = vunpack.c.0.s8 %v1173
    %v1175 = vlaneseq
    %v1176 = vshrl.u32 %v1175, 7
    %v1177 = vsub.s32 %v1174, %v1176
    %v1178 = vrot.slane %v1164, %v1177
    %v1179 = vcombine.high %v1171, %v1171
    %v1180 = vcombine.high %v1178, %v1178
    %v1181 = vcombine.high %v701, %v701
    %v1183 = vunpack.c.l.s4 1983009808
    %v1184 = vunpack.c.0.s8 %v1183
    %v1185 = vlaneseq
    %v1186 = vshrl.u32 %v1185, 7
    %v1187 = vsub.s32 %v1184, %v1186
    %v1188 = vrot.slane %v701, %v1187
    %v1190 = vunpack.c.l.s4 1983009808
    %v1191 = vunpack.c.0.s8 %v1190
    %v1192 = vlaneseq
    %v1193 = vshrl.u32 %v1192, 7
    %v1194 = vsub.s32 %v1191, %v1193
    %v1195 = vrot.slane %v1181, %v1194
    %v1196 = vcombine.high %v1188, %v1188
    %v1197 = vcombine.high %v1195, %v1195
    %v1198 = vcombine.high %v702, %v702
    %v1200 = vunpack.c.l.s4 1983009808
    %v1201 = vunpack.c.0.s8 %v1200
    %v1202 = vlaneseq
    %v1203 = vshrl.u32 %v1202, 7
    %v1204 = vsub.s32 %v1201, %v1203
    %v1205 = vrot.slane %v702, %v1204
    %v1207 = vunpack.c.l.s4 1983009808
    %v1208 = vunpack.c.0.s8 %v1207
    %v1209 = vlaneseq
    %v1210 = vshrl.u32 %v1209, 7
    %v1211 = vsub.s32 %v1208, %v1210
    %v1212 = vrot.slane %v1198, %v1211
    %v1213 = vcombine.high %v1205, %v1205
    %v1214 = vcombine.high %v1212, %v1212
    %v1215 = vcombine.high %v703, %v703
    %v1217 = vunpack.c.l.s4 1983009808
    %v1218 = vunpack.c.0.s8 %v1217
    %v1219 = vlaneseq
    %v1220 = vshrl.u32 %v1219, 7
    %v1221 = vsub.s32 %v1218, %v1220
    %v1222 = vrot.slane %v703, %v1221
    %v1224 = vunpack.c.l.s4 1983009808
    %v1225 = vunpack.c.0.s8 %v1224
    %v1226 = vlaneseq
    %v1227 = vshrl.u32 %v1226, 7
    %v1228 = vsub.s32 %v1225, %v1227
    %v1229 = vrot.slane %v1215, %v1228
    %v1230 = vcombine.high %v1222, %v1222
    %v1231 = vcombine.high %v1229, %v1229
    %v1232 = vcombine.high %v704, %v704
    %v1234 = vunpack.c.l.s4 1983009808
    %v1235 = vunpack.c.0.s8 %v1234
    %v1236 = vlaneseq
    %v1237 = vshrl.u32 %v1236, 7
    %v1238 = vsub.s32 %v1235, %v1237
    %v1239 = vrot.slane %v704, %v1238
    %v1241 = vunpack.c.l.s4 1983009808
    %v1242 = vunpack.c.0.s8 %v1241
    %v1243 = vlaneseq
    %v1244 = vshrl.u32 %v1243, 7
    %v1245 = vsub.s32 %v1242, %v1244
    %v1246 = vrot.slane %v1232, %v1245
    %v1247 = vcombine.high %v1239, %v1239
    %v1248 = vcombine.high %v1246, %v1246
    %v1249 = vcombine.high %v705, %v705
    %v1251 = vunpack.c.l.s4 1983009808
    %v1252 = vunpack.c.0.s8 %v1251
    %v1253 = vlaneseq
    %v1254 = vshrl.u32 %v1253, 7
    %v1255 = vsub.s32 %v1252, %v1254
    %v1256 = vrot.slane %v705, %v1255
    %v1258 = vunpack.c.l.s4 1983009808
    %v1259 = vunpack.c.0.s8 %v1258
    %v1260 = vlaneseq
    %v1261 = vshrl.u32 %v1260, 7
    %v1262 = vsub.s32 %v1259, %v1261
    %v1263 = vrot.slane %v1249, %v1262
    %v1264 = vcombine.high %v1256, %v1256
    %v1265 = vcombine.high %v1263, %v1263
    %v1266 = vcombine.high %v706, %v706
    %v1268 = vunpack.c.l.s4 1983009808
    %v1269 = vunpack.c.0.s8 %v1268
    %v1270 = vlaneseq
    %v1271 = vshrl.u32 %v1270, 7
    %v1272 = vsub.s32 %v1269, %v1271
    %v1273 = vrot.slane %v706, %v1272
    %v1275 = vunpack.c.l.s4 1983009808
    %v1276 = vunpack.c.0.s8 %v1275
    %v1277 = vlaneseq
    %v1278 = vshrl.u32 %v1277, 7
    %v1279 = vsub.s32 %v1276, %v1278
    %v1280 = vrot.slane %v1266, %v1279
    %v1281 = vcombine.high %v1273, %v1273
    %v1282 = vcombine.high %v1280, %v1280
    %v1283 = vcombine.high %v707, %v707
    %v1285 = vunpack.c.l.s4 1983009808
    %v1286 = vunpack.c.0.s8 %v1285
    %v1287 = vlaneseq
    %v1288 = vshrl.u32 %v1287, 7
    %v1289 = vsub.s32 %v1286, %v1288
    %v1290 = vrot.slane %v707, %v1289
    %v1292 = vunpack.c.l.s4 1983009808
    %v1293 = vunpack.c.0.s8 %v1292
    %v1294 = vlaneseq
    %v1295 = vshrl.u32 %v1294, 7
    %v1296 = vsub.s32 %v1293, %v1295
    %v1297 = vrot.slane %v1283, %v1296
    %v1298 = vcombine.high %v1290, %v1290
    %v1299 = vcombine.high %v1297, %v1297
    %v1300 = vcombine.high %v708, %v708
    %v1302 = vunpack.c.l.s4 1983009808
    %v1303 = vunpack.c.0.s8 %v1302
    %v1304 = vlaneseq
    %v1305 = vshrl.u32 %v1304, 7
    %v1306 = vsub.s32 %v1303, %v1305
    %v1307 = vrot.slane %v708, %v1306
    %v1309 = vunpack.c.l.s4 1983009808
    %v1310 = vunpack.c.0.s8 %v1309
    %v1311 = vlaneseq
    %v1312 = vshrl.u32 %v1311, 7
    %v1313 = vsub.s32 %v1310, %v1312
    %v1314 = vrot.slane %v1300, %v1313
    %v1315 = vcombine.high %v1307, %v1307
    %v1316 = vcombine.high %v1314, %v1314
    %v1317 = vcombine.high %v709, %v709
    %v1319 = vunpack.c.l.s4 1983009808
    %v1320 = vunpack.c.0.s8 %v1319
    %v1321 = vlaneseq
    %v1322 = vshrl.u32 %v1321, 7
    %v1323 = vsub.s32 %v1320, %v1322
    %v1324 = vrot.slane %v709, %v1323
    %v1326 = vunpack.c.l.s4 1983009808
    %v1327 = vunpack.c.0.s8 %v1326
    %v1328 = vlaneseq
    %v1329 = vshrl.u32 %v1328, 7
    %v1330 = vsub.s32 %v1327, %v1329
    %v1331 = vrot.slane %v1317, %v1330
    %v1332 = vcombine.high %v1324, %v1324
    %v1333 = vcombine.high %v1331, %v1331
    %v1334 = vcombine.high %v710, %v710
    %v1336 = vunpack.c.l.s4 1983009808
    %v1337 = vunpack.c.0.s8 %v1336
    %v1338 = vlaneseq
    %v1339 = vshrl.u32 %v1338, 7
    %v1340 = vsub.s32 %v1337, %v1339
    %v1341 = vrot.slane %v710, %v1340
    %v1343 = vunpack.c.l.s4 1983009808
    %v1344 = vunpack.c.0.s8 %v1343
    %v1345 = vlaneseq
    %v1346 = vshrl.u32 %v1345, 7
    %v1347 = vsub.s32 %v1344, %v1346
    %v1348 = vrot.slane %v1334, %v1347
    %v1349 = vcombine.high %v1341, %v1341
    %v1350 = vcombine.high %v1348, %v1348
    %v1351 = vcombine.high %v711, %v711
    %v1353 = vunpack.c.l.s4 1983009808
    %v1354 = vunpack.c.0.s8 %v1353
    %v1355 = vlaneseq
    %v1356 = vshrl.u32 %v1355, 7
    %v1357 = vsub.s32 %v1354, %v1356
    %v1358 = vrot.slane %v711, %v1357
    %v1360 = vunpack.c.l.s4 1983009808
    %v1361 = vunpack.c.0.s8 %v1360
    %v1362 = vlaneseq
    %v1363 = vshrl.u32 %v1362, 7
    %v1364 = vsub.s32 %v1361, %v1363
    %v1365 = vrot.slane %v1351, %v1364
    %v1366 = vcombine.high %v1358, %v1358
    %v1367 = vcombine.high %v1365, %v1365
    %v1368 = vcombine.high %v712, %v712
    %v1370 = vunpack.c.l.s4 1983009808
    %v1371 = vunpack.c.0.s8 %v1370
    %v1372 = vlaneseq
    %v1373 = vshrl.u32 %v1372, 7
    %v1374 = vsub.s32 %v1371, %v1373
    %v1375 = vrot.slane %v712, %v1374
    %v1377 = vunpack.c.l.s4 1983009808
    %v1378 = vunpack.c.0.s8 %v1377
    %v1379 = vlaneseq
    %v1380 = vshrl.u32 %v1379, 7
    %v1381 = vsub.s32 %v1378, %v1380
    %v1382 = vrot.slane %v1368, %v1381
    %v1383 = vcombine.high %v1375, %v1375
    %v1384 = vcombine.high %v1382, %v1382
    %v1385 = vcombine.high %v713, %v713
    %v1387 = vunpack.c.l.s4 1983009808
    %v1388 = vunpack.c.0.s8 %v1387
    %v1389 = vlaneseq
    %v1390 = vshrl.u32 %v1389, 7
    %v1391 = vsub.s32 %v1388, %v1390
    %v1392 = vrot.slane %v713, %v1391
    %v1394 = vunpack.c.l.s4 1983009808
    %v1395 = vunpack.c.0.s8 %v1394
    %v1396 = vlaneseq
    %v1397 = vshrl.u32 %v1396, 7
    %v1398 = vsub.s32 %v1395, %v1397
    %v1399 = vrot.slane %v1385, %v1398
    %v1400 = vcombine.high %v1392, %v1392
    %v1401 = vcombine.high %v1399, %v1399
    %v1402 = vcombine.high %v714, %v714
    %v1404 = vunpack.c.l.s4 1983009808
    %v1405 = vunpack.c.0.s8 %v1404
    %v1406 = vlaneseq
    %v1407 = vshrl.u32 %v1406, 7
    %v1408 = vsub.s32 %v1405, %v1407
    %v1409 = vrot.slane %v714, %v1408
    %v1411 = vunpack.c.l.s4 1983009808
    %v1412 = vunpack.c.0.s8 %v1411
    %v1413 = vlaneseq
    %v1414 = vshrl.u32 %v1413, 7
    %v1415 = vsub.s32 %v1412, %v1414
    %v1416 = vrot.slane %v1402, %v1415
    %v1417 = vcombine.high %v1409, %v1409
    %v1418 = vcombine.high %v1416, %v1416
    %v1419 = vcombine.high %v715, %v715
    %v1421 = vunpack.c.l.s4 1983009808
    %v1422 = vunpack.c.0.s8 %v1421
    %v1423 = vlaneseq
    %v1424 = vshrl.u32 %v1423, 7
    %v1425 = vsub.s32 %v1422, %v1424
    %v1426 = vrot.slane %v715, %v1425
    %v1428 = vunpack.c.l.s4 1983009808
    %v1429 = vunpack.c.0.s8 %v1428
    %v1430 = vlaneseq
    %v1431 = vshrl.u32 %v1430, 7
    %v1432 = vsub.s32 %v1429, %v1431
    %v1433 = vrot.slane %v1419, %v1432
    %v1434 = vcombine.high %v1426, %v1426
    %v1435 = vcombine.high %v1433, %v1433
    %v1436 = vcombine.high %v716, %v716
    %v1438 = vunpack.c.l.s4 1983009808
    %v1439 = vunpack.c.0.s8 %v1438
    %v1440 = vlaneseq
    %v1441 = vshrl.u32 %v1440, 7
    %v1442 = vsub.s32 %v1439, %v1441
    %v1443 = vrot.slane %v716, %v1442
    %v1445 = vunpack.c.l.s4 1983009808
    %v1446 = vunpack.c.0.s8 %v1445
    %v1447 = vlaneseq
    %v1448 = vshrl.u32 %v1447, 7
    %v1449 = vsub.s32 %v1446, %v1448
    %v1450 = vrot.slane %v1436, %v1449
    %v1451 = vcombine.high %v1443, %v1443
    %v1452 = vcombine.high %v1450, %v1450
    %v1453 = vcombine.high %v717, %v717
    %v1455 = vunpack.c.l.s4 1983009808
    %v1456 = vunpack.c.0.s8 %v1455
    %v1457 = vlaneseq
    %v1458 = vshrl.u32 %v1457, 7
    %v1459 = vsub.s32 %v1456, %v1458
    %v1460 = vrot.slane %v717, %v1459
    %v1462 = vunpack.c.l.s4 1983009808
    %v1463 = vunpack.c.0.s8 %v1462
    %v1464 = vlaneseq
    %v1465 = vshrl.u32 %v1464, 7
    %v1466 = vsub.s32 %v1463, %v1465
    %v1467 = vrot.slane %v1453, %v1466
    %v1468 = vcombine.high %v1460, %v1460
    %v1469 = vcombine.high %v1467, %v1467
    %v1470 = vcombine.high %v718, %v718
    %v1472 = vunpack.c.l.s4 1983009808
    %v1473 = vunpack.c.0.s8 %v1472
    %v1474 = vlaneseq
    %v1475 = vshrl.u32 %v1474, 7
    %v1476 = vsub.s32 %v1473, %v1475
    %v1477 = vrot.slane %v718, %v1476
    %v1479 = vunpack.c.l.s4 1983009808
    %v1480 = vunpack.c.0.s8 %v1479
    %v1481 = vlaneseq
    %v1482 = vshrl.u32 %v1481, 7
    %v1483 = vsub.s32 %v1480, %v1482
    %v1484 = vrot.slane %v1470, %v1483
    %v1485 = vcombine.high %v1477, %v1477
    %v1486 = vcombine.high %v1484, %v1484
    %v1487 = vcombine.high %v719, %v719
    %v1489 = vunpack.c.l.s4 1983009808
    %v1490 = vunpack.c.0.s8 %v1489
    %v1491 = vlaneseq
    %v1492 = vshrl.u32 %v1491, 7
    %v1493 = vsub.s32 %v1490, %v1492
    %v1494 = vrot.slane %v719, %v1493
    %v1496 = vunpack.c.l.s4 1983009808
    %v1497 = vunpack.c.0.s8 %v1496
    %v1498 = vlaneseq
    %v1499 = vshrl.u32 %v1498, 7
    %v1500 = vsub.s32 %v1497, %v1499
    %v1501 = vrot.slane %v1487, %v1500
    %v1502 = vcombine.high %v1494, %v1494
    %v1503 = vcombine.high %v1501, %v1501
    %v1504 = vcombine.high %v720, %v720
    %v1506 = vunpack.c.l.s4 1983009808
    %v1507 = vunpack.c.0.s8 %v1506
    %v1508 = vlaneseq
    %v1509 = vshrl.u32 %v1508, 7
    %v1510 = vsub.s32 %v1507, %v1509
    %v1511 = vrot.slane %v720, %v1510
    %v1513 = vunpack.c.l.s4 1983009808
    %v1514 = vunpack.c.0.s8 %v1513
    %v1515 = vlaneseq
    %v1516 = vshrl.u32 %v1515, 7
    %v1517 = vsub.s32 %v1514, %v1516
    %v1518 = vrot.slane %v1504, %v1517
    %v1519 = vcombine.high %v1511, %v1511
    %v1520 = vcombine.high %v1518, %v1518
    %v1521 = vcombine.high %v721, %v721
    %v1523 = vunpack.c.l.s4 1983009808
    %v1524 = vunpack.c.0.s8 %v1523
    %v1525 = vlaneseq
    %v1526 = vshrl.u32 %v1525, 7
    %v1527 = vsub.s32 %v1524, %v1526
    %v1528 = vrot.slane %v721, %v1527
    %v1530 = vunpack.c.l.s4 1983009808
    %v1531 = vunpack.c.0.s8 %v1530
    %v1532 = vlaneseq
    %v1533 = vshrl.u32 %v1532, 7
    %v1534 = vsub.s32 %v1531, %v1533
    %v1535 = vrot.slane %v1521, %v1534
    %v1536 = vcombine.high %v1528, %v1528
    %v1537 = vcombine.high %v1535, %v1535
    %v1538 = vcombine.high %v722, %v722
    %v1540 = vunpack.c.l.s4 1983009808
    %v1541 = vunpack.c.0.s8 %v1540
    %v1542 = vlaneseq
    %v1543 = vshrl.u32 %v1542, 7
    %v1544 = vsub.s32 %v1541, %v1543
    %v1545 = vrot.slane %v722, %v1544
    %v1547 = vunpack.c.l.s4 1983009808
    %v1548 = vunpack.c.0.s8 %v1547
    %v1549 = vlaneseq
    %v1550 = vshrl.u32 %v1549, 7
    %v1551 = vsub.s32 %v1548, %v1550
    %v1552 = vrot.slane %v1538, %v1551
    %v1553 = vcombine.high %v1545, %v1545
    %v1554 = vcombine.high %v1552, %v1552
    %v1555 = vcombine.high %v723, %v723
    %v1557 = vunpack.c.l.s4 1983009808
    %v1558 = vunpack.c.0.s8 %v1557
    %v1559 = vlaneseq
    %v1560 = vshrl.u32 %v1559, 7
    %v1561 = vsub.s32 %v1558, %v1560
    %v1562 = vrot.slane %v723, %v1561
    %v1564 = vunpack.c.l.s4 1983009808
    %v1565 = vunpack.c.0.s8 %v1564
    %v1566 = vlaneseq
    %v1567 = vshrl.u32 %v1566, 7
    %v1568 = vsub.s32 %v1565, %v1567
    %v1569 = vrot.slane %v1555, %v1568
    %v1570 = vcombine.high %v1562, %v1562
    %v1571 = vcombine.high %v1569, %v1569
    %v1572 = vcombine.high %v724, %v724
    %v1574 = vunpack.c.l.s4 1983009808
    %v1575 = vunpack.c.0.s8 %v1574
    %v1576 = vlaneseq
    %v1577 = vshrl.u32 %v1576, 7
    %v1578 = vsub.s32 %v1575, %v1577
    %v1579 = vrot.slane %v724, %v1578
    %v1581 = vunpack.c.l.s4 1983009808
    %v1582 = vunpack.c.0.s8 %v1581
    %v1583 = vlaneseq
    %v1584 = vshrl.u32 %v1583, 7
    %v1585 = vsub.s32 %v1582, %v1584
    %v1586 = vrot.slane %v1572, %v1585
    %v1587 = vcombine.high %v1579, %v1579
    %v1588 = vcombine.high %v1586, %v1586
    %v1589 = vcombine.high %v725, %v725
    %v1591 = vunpack.c.l.s4 1983009808
    %v1592 = vunpack.c.0.s8 %v1591
    %v1593 = vlaneseq
    %v1594 = vshrl.u32 %v1593, 7
    %v1595 = vsub.s32 %v1592, %v1594
    %v1596 = vrot.slane %v725, %v1595
    %v1598 = vunpack.c.l.s4 1983009808
    %v1599 = vunpack.c.0.s8 %v1598
    %v1600 = vlaneseq
    %v1601 = vshrl.u32 %v1600, 7
    %v1602 = vsub.s32 %v1599, %v1601
    %v1603 = vrot.slane %v1589, %v1602
    %v1604 = vcombine.high %v1596, %v1596
    %v1605 = vcombine.high %v1603, %v1603
    %v1606 = vcombine.high %v726, %v726
    %v1608 = vunpack.c.l.s4 1983009808
    %v1609 = vunpack.c.0.s8 %v1608
    %v1610 = vlaneseq
    %v1611 = vshrl.u32 %v1610, 7
    %v1612 = vsub.s32 %v1609, %v1611
    %v1613 = vrot.slane %v726, %v1612
    %v1615 = vunpack.c.l.s4 1983009808
    %v1616 = vunpack.c.0.s8 %v1615
    %v1617 = vlaneseq
    %v1618 = vshrl.u32 %v1617, 7
    %v1619 = vsub.s32 %v1616, %v1618
    %v1620 = vrot.slane %v1606, %v1619
    %v1621 = vcombine.high %v1613, %v1613
    %v1622 = vcombine.high %v1620, %v1620
    %v1623 = vcombine.high %v727, %v727
    %v1625 = vunpack.c.l.s4 1983009808
    %v1626 = vunpack.c.0.s8 %v1625
    %v1627 = vlaneseq
    %v1628 = vshrl.u32 %v1627, 7
    %v1629 = vsub.s32 %v1626, %v1628
    %v1630 = vrot.slane %v727, %v1629
    %v1632 = vunpack.c.l.s4 1983009808
    %v1633 = vunpack.c.0.s8 %v1632
    %v1634 = vlaneseq
    %v1635 = vshrl.u32 %v1634, 7
    %v1636 = vsub.s32 %v1633, %v1635
    %v1637 = vrot.slane %v1623, %v1636
    %v1638 = vcombine.high %v1630, %v1630
    %v1639 = vcombine.high %v1637, %v1637
    %v1640 = vcombine.high %v728, %v728
    %v1642 = vunpack.c.l.s4 1983009808
    %v1643 = vunpack.c.0.s8 %v1642
    %v1644 = vlaneseq
    %v1645 = vshrl.u32 %v1644, 7
    %v1646 = vsub.s32 %v1643, %v1645
    %v1647 = vrot.slane %v728, %v1646
    %v1649 = vunpack.c.l.s4 1983009808
    %v1650 = vunpack.c.0.s8 %v1649
    %v1651 = vlaneseq
    %v1652 = vshrl.u32 %v1651, 7
    %v1653 = vsub.s32 %v1650, %v1652
    %v1654 = vrot.slane %v1640, %v1653
    %v1655 = vcombine.high %v1647, %v1647
    %v1656 = vcombine.high %v1654, %v1654
    %v1657 = vcombine.high %v729, %v729
    %v1659 = vunpack.c.l.s4 1983009808
    %v1660 = vunpack.c.0.s8 %v1659
    %v1661 = vlaneseq
    %v1662 = vshrl.u32 %v1661, 7
    %v1663 = vsub.s32 %v1660, %v1662
    %v1664 = vrot.slane %v729, %v1663
    %v1666 = vunpack.c.l.s4 1983009808
    %v1667 = vunpack.c.0.s8 %v1666
    %v1668 = vlaneseq
    %v1669 = vshrl.u32 %v1668, 7
    %v1670 = vsub.s32 %v1667, %v1669
    %v1671 = vrot.slane %v1657, %v1670
    %v1672 = vcombine.high %v1664, %v1664
    %v1673 = vcombine.high %v1671, %v1671
    %v1674 = vcombine.high %v730, %v730
    %v1676 = vunpack.c.l.s4 1983009808
    %v1677 = vunpack.c.0.s8 %v1676
    %v1678 = vlaneseq
    %v1679 = vshrl.u32 %v1678, 7
    %v1680 = vsub.s32 %v1677, %v1679
    %v1681 = vrot.slane %v730, %v1680
    %v1683 = vunpack.c.l.s4 1983009808
    %v1684 = vunpack.c.0.s8 %v1683
    %v1685 = vlaneseq
    %v1686 = vshrl.u32 %v1685, 7
    %v1687 = vsub.s32 %v1684, %v1686
    %v1688 = vrot.slane %v1674, %v1687
    %v1689 = vcombine.high %v1681, %v1681
    %v1690 = vcombine.high %v1688, %v1688
    %v1691 = vcombine.high %v731, %v731
    %v1693 = vunpack.c.l.s4 1983009808
    %v1694 = vunpack.c.0.s8 %v1693
    %v1695 = vlaneseq
    %v1696 = vshrl.u32 %v1695, 7
    %v1697 = vsub.s32 %v1694, %v1696
    %v1698 = vrot.slane %v731, %v1697
    %v1700 = vunpack.c.l.s4 1983009808
    %v1701 = vunpack.c.0.s8 %v1700
    %v1702 = vlaneseq
    %v1703 = vshrl.u32 %v1702, 7
    %v1704 = vsub.s32 %v1701, %v1703
    %v1705 = vrot.slane %v1691, %v1704
    %v1706 = vcombine.high %v1698, %v1698
    %v1707 = vcombine.high %v1705, %v1705
    %v1708 = vcombine.high %v732, %v732
    %v1710 = vunpack.c.l.s4 1983009808
    %v1711 = vunpack.c.0.s8 %v1710
    %v1712 = vlaneseq
    %v1713 = vshrl.u32 %v1712, 7
    %v1714 = vsub.s32 %v1711, %v1713
    %v1715 = vrot.slane %v732, %v1714
    %v1717 = vunpack.c.l.s4 1983009808
    %v1718 = vunpack.c.0.s8 %v1717
    %v1719 = vlaneseq
    %v1720 = vshrl.u32 %v1719, 7
    %v1721 = vsub.s32 %v1718, %v1720
    %v1722 = vrot.slane %v1708, %v1721
    %v1723 = vcombine.high %v1715, %v1715
    %v1724 = vcombine.high %v1722, %v1722
    %v1725 = vcombine.high %v733, %v733
    %v1727 = vunpack.c.l.s4 1983009808
    %v1728 = vunpack.c.0.s8 %v1727
    %v1729 = vlaneseq
    %v1730 = vshrl.u32 %v1729, 7
    %v1731 = vsub.s32 %v1728, %v1730
    %v1732 = vrot.slane %v733, %v1731
    %v1734 = vunpack.c.l.s4 1983009808
    %v1735 = vunpack.c.0.s8 %v1734
    %v1736 = vlaneseq
    %v1737 = vshrl.u32 %v1736, 7
    %v1738 = vsub.s32 %v1735, %v1737
    %v1739 = vrot.slane %v1725, %v1738
    %v1740 = vcombine.high %v1732, %v1732
    %v1741 = vcombine.high %v1739, %v1739
    %v1742 = vcombine.high %v734, %v734
    %v1744 = vunpack.c.l.s4 1983009808
    %v1745 = vunpack.c.0.s8 %v1744
    %v1746 = vlaneseq
    %v1747 = vshrl.u32 %v1746, 7
    %v1748 = vsub.s32 %v1745, %v1747
    %v1749 = vrot.slane %v734, %v1748
    %v1751 = vunpack.c.l.s4 1983009808
    %v1752 = vunpack.c.0.s8 %v1751
    %v1753 = vlaneseq
    %v1754 = vshrl.u32 %v1753, 7
    %v1755 = vsub.s32 %v1752, %v1754
    %v1756 = vrot.slane %v1742, %v1755
    %v1757 = vcombine.high %v1749, %v1749
    %v1758 = vcombine.high %v1756, %v1756
    %v1759 = vcombine.high %v735, %v735
    %v1761 = vunpack.c.l.s4 1983009808
    %v1762 = vunpack.c.0.s8 %v1761
    %v1763 = vlaneseq
    %v1764 = vshrl.u32 %v1763, 7
    %v1765 = vsub.s32 %v1762, %v1764
    %v1766 = vrot.slane %v735, %v1765
    %v1768 = vunpack.c.l.s4 1983009808
    %v1769 = vunpack.c.0.s8 %v1768
    %v1770 = vlaneseq
    %v1771 = vshrl.u32 %v1770, 7
    %v1772 = vsub.s32 %v1769, %v1771
    %v1773 = vrot.slane %v1759, %v1772
    %v1774 = vcombine.high %v1766, %v1766
    %v1775 = vcombine.high %v1773, %v1773
    %v1776 = vcombine.high %v736, %v736
    %v1778 = vunpack.c.l.s4 1983009808
    %v1779 = vunpack.c.0.s8 %v1778
    %v1780 = vlaneseq
    %v1781 = vshrl.u32 %v1780, 7
    %v1782 = vsub.s32 %v1779, %v1781
    %v1783 = vrot.slane %v736, %v1782
    %v1785 = vunpack.c.l.s4 1983009808
    %v1786 = vunpack.c.0.s8 %v1785
    %v1787 = vlaneseq
    %v1788 = vshrl.u32 %v1787, 7
    %v1789 = vsub.s32 %v1786, %v1788
    %v1790 = vrot.slane %v1776, %v1789
    %v1791 = vcombine.high %v1783, %v1783
    %v1792 = vcombine.high %v1790, %v1790
    %v1793 = vcombine.high %v737, %v737
    %v1795 = vunpack.c.l.s4 1983009808
    %v1796 = vunpack.c.0.s8 %v1795
    %v1797 = vlaneseq
    %v1798 = vshrl.u32 %v1797, 7
    %v1799 = vsub.s32 %v1796, %v1798
    %v1800 = vrot.slane %v737, %v1799
    %v1802 = vunpack.c.l.s4 1983009808
    %v1803 = vunpack.c.0.s8 %v1802
    %v1804 = vlaneseq
    %v1805 = vshrl.u32 %v1804, 7
    %v1806 = vsub.s32 %v1803, %v1805
    %v1807 = vrot.slane %v1793, %v1806
    %v1808 = vcombine.high %v1800, %v1800
    %v1809 = vcombine.high %v1807, %v1807
    %v1810 = vcombine.high %v738, %v738
    %v1812 = vunpack.c.l.s4 1983009808
    %v1813 = vunpack.c.0.s8 %v1812
    %v1814 = vlaneseq
    %v1815 = vshrl.u32 %v1814, 7
    %v1816 = vsub.s32 %v1813, %v1815
    %v1817 = vrot.slane %v738, %v1816
    %v1819 = vunpack.c.l.s4 1983009808
    %v1820 = vunpack.c.0.s8 %v1819
    %v1821 = vlaneseq
    %v1822 = vshrl.u32 %v1821, 7
    %v1823 = vsub.s32 %v1820, %v1822
    %v1824 = vrot.slane %v1810, %v1823
    %v1825 = vcombine.high %v1817, %v1817
    %v1826 = vcombine.high %v1824, %v1824
    %v1827 = vcombine.high %v739, %v739
    %v1829 = vunpack.c.l.s4 1983009808
    %v1830 = vunpack.c.0.s8 %v1829
    %v1831 = vlaneseq
    %v1832 = vshrl.u32 %v1831, 7
    %v1833 = vsub.s32 %v1830, %v1832
    %v1834 = vrot.slane %v739, %v1833
    %v1836 = vunpack.c.l.s4 1983009808
    %v1837 = vunpack.c.0.s8 %v1836
    %v1838 = vlaneseq
    %v1839 = vshrl.u32 %v1838, 7
    %v1840 = vsub.s32 %v1837, %v1839
    %v1841 = vrot.slane %v1827, %v1840
    %v1842 = vcombine.high %v1834, %v1834
    %v1843 = vcombine.high %v1841, %v1841
    %v1844 = vcombine.high %v740, %v740
    %v1846 = vunpack.c.l.s4 1983009808
    %v1847 = vunpack.c.0.s8 %v1846
    %v1848 = vlaneseq
    %v1849 = vshrl.u32 %v1848, 7
    %v1850 = vsub.s32 %v1847, %v1849
    %v1851 = vrot.slane %v740, %v1850
    %v1853 = vunpack.c.l.s4 1983009808
    %v1854 = vunpack.c.0.s8 %v1853
    %v1855 = vlaneseq
    %v1856 = vshrl.u32 %v1855, 7
    %v1857 = vsub.s32 %v1854, %v1856
    %v1858 = vrot.slane %v1844, %v1857
    %v1859 = vcombine.high %v1851, %v1851
    %v1860 = vcombine.high %v1858, %v1858
    %v1861 = vcombine.high %v741, %v741
    %v1863 = vunpack.c.l.s4 1983009808
    %v1864 = vunpack.c.0.s8 %v1863
    %v1865 = vlaneseq
    %v1866 = vshrl.u32 %v1865, 7
    %v1867 = vsub.s32 %v1864, %v1866
    %v1868 = vrot.slane %v741, %v1867
    %v1870 = vunpack.c.l.s4 1983009808
    %v1871 = vunpack.c.0.s8 %v1870
    %v1872 = vlaneseq
    %v1873 = vshrl.u32 %v1872, 7
    %v1874 = vsub.s32 %v1871, %v1873
    %v1875 = vrot.slane %v1861, %v1874
    %v1876 = vcombine.high %v1868, %v1868
    %v1877 = vcombine.high %v1875, %v1875
    %v1878 = vcombine.high %v742, %v742
    %v1880 = vunpack.c.l.s4 1983009808
    %v1881 = vunpack.c.0.s8 %v1880
    %v1882 = vlaneseq
    %v1883 = vshrl.u32 %v1882, 7
    %v1884 = vsub.s32 %v1881, %v1883
    %v1885 = vrot.slane %v742, %v1884
    %v1887 = vunpack.c.l.s4 1983009808
    %v1888 = vunpack.c.0.s8 %v1887
    %v1889 = vlaneseq
    %v1890 = vshrl.u32 %v1889, 7
    %v1891 = vsub.s32 %v1888, %v1890
    %v1892 = vrot.slane %v1878, %v1891
    %v1893 = vcombine.high %v1885, %v1885
    %v1894 = vcombine.high %v1892, %v1892
    %vm2151 = vcmask 254976
    %v2152 = vsel %vm2151, %v814, -inf
    %v2153 = vrot.slane %v2152, 4
    %v2154 = vmax.f32 %v2152, %v2153
    %v2155 = vrot.slane %v2154, 2
    %v2156 = vmax.f32 %v2154, %v2155
    %v2157 = vrot.slane %v2156, 1
    %v2158 = vmax.f32 %v2156, %v2157
    %v2159 = vsel %vm2151, %v822, -inf
    %v2160 = vrot.slane %v2159, 4
    %v2161 = vmax.f32 %v2159, %v2160
    %v2162 = vrot.slane %v2161, 2
    %v2163 = vmax.f32 %v2161, %v2162
    %v2164 = vrot.slane %v2163, 1
    %v2165 = vmax.f32 %v2163, %v2164
    %v2166 = vsel %vm2151, %v821, -inf
    %v2167 = vrot.slane %v2166, 4
    %v2168 = vmax.f32 %v2166, %v2167
    %v2169 = vrot.slane %v2168, 2
    %v2170 = vmax.f32 %v2168, %v2169
    %v2171 = vrot.slane %v2170, 1
    %v2172 = vmax.f32 %v2170, %v2171
    %v2173 = vsel %vm2151, %v823, -inf
    %v2174 = vrot.slane %v2173, 4
    %v2175 = vmax.f32 %v2173, %v2174
    %v2176 = vrot.slane %v2175, 2
    %v2177 = vmax.f32 %v2175, %v2176
    %v2178 = vrot.slane %v2177, 1
    %v2179 = vmax.f32 %v2177, %v2178
    %v2180 = vsel %vm2151, %v831, -inf
    %v2181 = vrot.slane %v2180, 4
    %v2182 = vmax.f32 %v2180, %v2181
    %v2183 = vrot.slane %v2182, 2
    %v2184 = vmax.f32 %v2182, %v2183
    %v2185 = vrot.slane %v2184, 1
    %v2186 = vmax.f32 %v2184, %v2185
    %v2187 = vsel %vm2151, %v839, -inf
    %v2188 = vrot.slane %v2187, 4
    %v2189 = vmax.f32 %v2187, %v2188
    %v2190 = vrot.slane %v2189, 2
    %v2191 = vmax.f32 %v2189, %v2190
    %v2192 = vrot.slane %v2191, 1
    %v2193 = vmax.f32 %v2191, %v2192
    %v2194 = vsel %vm2151, %v838, -inf
    %v2195 = vrot.slane %v2194, 4
    %v2196 = vmax.f32 %v2194, %v2195
    %v2197 = vrot.slane %v2196, 2
    %v2198 = vmax.f32 %v2196, %v2197
    %v2199 = vrot.slane %v2198, 1
    %v2200 = vmax.f32 %v2198, %v2199
    %v2201 = vsel %vm2151, %v840, -inf
    %v2202 = vrot.slane %v2201, 4
    %v2203 = vmax.f32 %v2201, %v2202
    %v2204 = vrot.slane %v2203, 2
    %v2205 = vmax.f32 %v2203, %v2204
    %v2206 = vrot.slane %v2205, 1
    %v2207 = vmax.f32 %v2205, %v2206
    %v2208 = vsel %vm2151, %v848, -inf
    %v2209 = vrot.slane %v2208, 4
    %v2210 = vmax.f32 %v2208, %v2209
    %v2211 = vrot.slane %v2210, 2
    %v2212 = vmax.f32 %v2210, %v2211
    %v2213 = vrot.slane %v2212, 1
    %v2214 = vmax.f32 %v2212, %v2213
    %v2215 = vsel %vm2151, %v856, -inf
    %v2216 = vrot.slane %v2215, 4
    %v2217 = vmax.f32 %v2215, %v2216
    %v2218 = vrot.slane %v2217, 2
    %v2219 = vmax.f32 %v2217, %v2218
    %v2220 = vrot.slane %v2219, 1
    %v2221 = vmax.f32 %v2219, %v2220
    %v2222 = vsel %vm2151, %v855, -inf
    %v2223 = vrot.slane %v2222, 4
    %v2224 = vmax.f32 %v2222, %v2223
    %v2225 = vrot.slane %v2224, 2
    %v2226 = vmax.f32 %v2224, %v2225
    %v2227 = vrot.slane %v2226, 1
    %v2228 = vmax.f32 %v2226, %v2227
    %v2229 = vsel %vm2151, %v857, -inf
    %v2230 = vrot.slane %v2229, 4
    %v2231 = vmax.f32 %v2229, %v2230
    %v2232 = vrot.slane %v2231, 2
    %v2233 = vmax.f32 %v2231, %v2232
    %v2234 = vrot.slane %v2233, 1
    %v2235 = vmax.f32 %v2233, %v2234
    %v2236 = vsel %vm2151, %v865, -inf
    %v2237 = vrot.slane %v2236, 4
    %v2238 = vmax.f32 %v2236, %v2237
    %v2239 = vrot.slane %v2238, 2
    %v2240 = vmax.f32 %v2238, %v2239
    %v2241 = vrot.slane %v2240, 1
    %v2242 = vmax.f32 %v2240, %v2241
    %v2243 = vsel %vm2151, %v873, -inf
    %v2244 = vrot.slane %v2243, 4
    %v2245 = vmax.f32 %v2243, %v2244
    %v2246 = vrot.slane %v2245, 2
    %v2247 = vmax.f32 %v2245, %v2246
    %v2248 = vrot.slane %v2247, 1
    %v2249 = vmax.f32 %v2247, %v2248
    %v2250 = vsel %vm2151, %v872, -inf
    %v2251 = vrot.slane %v2250, 4
    %v2252 = vmax.f32 %v2250, %v2251
    %v2253 = vrot.slane %v2252, 2
    %v2254 = vmax.f32 %v2252, %v2253
    %v2255 = vrot.slane %v2254, 1
    %v2256 = vmax.f32 %v2254, %v2255
    %v2257 = vsel %vm2151, %v874, -inf
    %v2258 = vrot.slane %v2257, 4
    %v2259 = vmax.f32 %v2257, %v2258
    %v2260 = vrot.slane %v2259, 2
    %v2261 = vmax.f32 %v2259, %v2260
    %v2262 = vrot.slane %v2261, 1
    %v2263 = vmax.f32 %v2261, %v2262
    %v2264 = vsel %vm2151, %v882, -inf
    %v2265 = vrot.slane %v2264, 4
    %v2266 = vmax.f32 %v2264, %v2265
    %v2267 = vrot.slane %v2266, 2
    %v2268 = vmax.f32 %v2266, %v2267
    %v2269 = vrot.slane %v2268, 1
    %v2270 = vmax.f32 %v2268, %v2269
    %v2271 = vsel %vm2151, %v890, -inf
    %v2272 = vrot.slane %v2271, 4
    %v2273 = vmax.f32 %v2271, %v2272
    %v2274 = vrot.slane %v2273, 2
    %v2275 = vmax.f32 %v2273, %v2274
    %v2276 = vrot.slane %v2275, 1
    %v2277 = vmax.f32 %v2275, %v2276
    %v2278 = vsel %vm2151, %v889, -inf
    %v2279 = vrot.slane %v2278, 4
    %v2280 = vmax.f32 %v2278, %v2279
    %v2281 = vrot.slane %v2280, 2
    %v2282 = vmax.f32 %v2280, %v2281
    %v2283 = vrot.slane %v2282, 1
    %v2284 = vmax.f32 %v2282, %v2283
    %v2285 = vsel %vm2151, %v891, -inf
    %v2286 = vrot.slane %v2285, 4
    %v2287 = vmax.f32 %v2285, %v2286
    %v2288 = vrot.slane %v2287, 2
    %v2289 = vmax.f32 %v2287, %v2288
    %v2290 = vrot.slane %v2289, 1
    %v2291 = vmax.f32 %v2289, %v2290
    %v2292 = vsel %vm2151, %v899, -inf
    %v2293 = vrot.slane %v2292, 4
    %v2294 = vmax.f32 %v2292, %v2293
    %v2295 = vrot.slane %v2294, 2
    %v2296 = vmax.f32 %v2294, %v2295
    %v2297 = vrot.slane %v2296, 1
    %v2298 = vmax.f32 %v2296, %v2297
    %v2299 = vsel %vm2151, %v907, -inf
    %v2300 = vrot.slane %v2299, 4
    %v2301 = vmax.f32 %v2299, %v2300
    %v2302 = vrot.slane %v2301, 2
    %v2303 = vmax.f32 %v2301, %v2302
    %v2304 = vrot.slane %v2303, 1
    %v2305 = vmax.f32 %v2303, %v2304
    %v2306 = vsel %vm2151, %v906, -inf
    %v2307 = vrot.slane %v2306, 4
    %v2308 = vmax.f32 %v2306, %v2307
    %v2309 = vrot.slane %v2308, 2
    %v2310 = vmax.f32 %v2308, %v2309
    %v2311 = vrot.slane %v2310, 1
    %v2312 = vmax.f32 %v2310, %v2311
    %v2313 = vsel %vm2151, %v908, -inf
    %v2314 = vrot.slane %v2313, 4
    %v2315 = vmax.f32 %v2313, %v2314
    %v2316 = vrot.slane %v2315, 2
    %v2317 = vmax.f32 %v2315, %v2316
    %v2318 = vrot.slane %v2317, 1
    %v2319 = vmax.f32 %v2317, %v2318
    %v2320 = vsel %vm2151, %v916, -inf
    %v2321 = vrot.slane %v2320, 4
    %v2322 = vmax.f32 %v2320, %v2321
    %v2323 = vrot.slane %v2322, 2
    %v2324 = vmax.f32 %v2322, %v2323
    %v2325 = vrot.slane %v2324, 1
    %v2326 = vmax.f32 %v2324, %v2325
    %v2327 = vsel %vm2151, %v924, -inf
    %v2328 = vrot.slane %v2327, 4
    %v2329 = vmax.f32 %v2327, %v2328
    %v2330 = vrot.slane %v2329, 2
    %v2331 = vmax.f32 %v2329, %v2330
    %v2332 = vrot.slane %v2331, 1
    %v2333 = vmax.f32 %v2331, %v2332
    %v2334 = vsel %vm2151, %v923, -inf
    %v2335 = vrot.slane %v2334, 4
    %v2336 = vmax.f32 %v2334, %v2335
    %v2337 = vrot.slane %v2336, 2
    %v2338 = vmax.f32 %v2336, %v2337
    %v2339 = vrot.slane %v2338, 1
    %v2340 = vmax.f32 %v2338, %v2339
    %v2341 = vsel %vm2151, %v925, -inf
    %v2342 = vrot.slane %v2341, 4
    %v2343 = vmax.f32 %v2341, %v2342
    %v2344 = vrot.slane %v2343, 2
    %v2345 = vmax.f32 %v2343, %v2344
    %v2346 = vrot.slane %v2345, 1
    %v2347 = vmax.f32 %v2345, %v2346
    %v2348 = vsel %vm2151, %v933, -inf
    %v2349 = vrot.slane %v2348, 4
    %v2350 = vmax.f32 %v2348, %v2349
    %v2351 = vrot.slane %v2350, 2
    %v2352 = vmax.f32 %v2350, %v2351
    %v2353 = vrot.slane %v2352, 1
    %v2354 = vmax.f32 %v2352, %v2353
    %v2355 = vsel %vm2151, %v941, -inf
    %v2356 = vrot.slane %v2355, 4
    %v2357 = vmax.f32 %v2355, %v2356
    %v2358 = vrot.slane %v2357, 2
    %v2359 = vmax.f32 %v2357, %v2358
    %v2360 = vrot.slane %v2359, 1
    %v2361 = vmax.f32 %v2359, %v2360
    %v2362 = vsel %vm2151, %v940, -inf
    %v2363 = vrot.slane %v2362, 4
    %v2364 = vmax.f32 %v2362, %v2363
    %v2365 = vrot.slane %v2364, 2
    %v2366 = vmax.f32 %v2364, %v2365
    %v2367 = vrot.slane %v2366, 1
    %v2368 = vmax.f32 %v2366, %v2367
    %v2369 = vsel %vm2151, %v942, -inf
    %v2370 = vrot.slane %v2369, 4
    %v2371 = vmax.f32 %v2369, %v2370
    %v2372 = vrot.slane %v2371, 2
    %v2373 = vmax.f32 %v2371, %v2372
    %v2374 = vrot.slane %v2373, 1
    %v2375 = vmax.f32 %v2373, %v2374
    %v2376 = vsel %vm2151, %v950, -inf
    %v2377 = vrot.slane %v2376, 4
    %v2378 = vmax.f32 %v2376, %v2377
    %v2379 = vrot.slane %v2378, 2
    %v2380 = vmax.f32 %v2378, %v2379
    %v2381 = vrot.slane %v2380, 1
    %v2382 = vmax.f32 %v2380, %v2381
    %v2383 = vsel %vm2151, %v958, -inf
    %v2384 = vrot.slane %v2383, 4
    %v2385 = vmax.f32 %v2383, %v2384
    %v2386 = vrot.slane %v2385, 2
    %v2387 = vmax.f32 %v2385, %v2386
    %v2388 = vrot.slane %v2387, 1
    %v2389 = vmax.f32 %v2387, %v2388
    %v2390 = vsel %vm2151, %v957, -inf
    %v2391 = vrot.slane %v2390, 4
    %v2392 = vmax.f32 %v2390, %v2391
    %v2393 = vrot.slane %v2392, 2
    %v2394 = vmax.f32 %v2392, %v2393
    %v2395 = vrot.slane %v2394, 1
    %v2396 = vmax.f32 %v2394, %v2395
    %v2397 = vsel %vm2151, %v959, -inf
    %v2398 = vrot.slane %v2397, 4
    %v2399 = vmax.f32 %v2397, %v2398
    %v2400 = vrot.slane %v2399, 2
    %v2401 = vmax.f32 %v2399, %v2400
    %v2402 = vrot.slane %v2401, 1
    %v2403 = vmax.f32 %v2401, %v2402
    %v2404 = vsel %vm2151, %v967, -inf
    %v2405 = vrot.slane %v2404, 4
    %v2406 = vmax.f32 %v2404, %v2405
    %v2407 = vrot.slane %v2406, 2
    %v2408 = vmax.f32 %v2406, %v2407
    %v2409 = vrot.slane %v2408, 1
    %v2410 = vmax.f32 %v2408, %v2409
    %v2411 = vsel %vm2151, %v975, -inf
    %v2412 = vrot.slane %v2411, 4
    %v2413 = vmax.f32 %v2411, %v2412
    %v2414 = vrot.slane %v2413, 2
    %v2415 = vmax.f32 %v2413, %v2414
    %v2416 = vrot.slane %v2415, 1
    %v2417 = vmax.f32 %v2415, %v2416
    %v2418 = vsel %vm2151, %v974, -inf
    %v2419 = vrot.slane %v2418, 4
    %v2420 = vmax.f32 %v2418, %v2419
    %v2421 = vrot.slane %v2420, 2
    %v2422 = vmax.f32 %v2420, %v2421
    %v2423 = vrot.slane %v2422, 1
    %v2424 = vmax.f32 %v2422, %v2423
    %v2425 = vsel %vm2151, %v976, -inf
    %v2426 = vrot.slane %v2425, 4
    %v2427 = vmax.f32 %v2425, %v2426
    %v2428 = vrot.slane %v2427, 2
    %v2429 = vmax.f32 %v2427, %v2428
    %v2430 = vrot.slane %v2429, 1
    %v2431 = vmax.f32 %v2429, %v2430
    %v2432 = vsel %vm2151, %v984, -inf
    %v2433 = vrot.slane %v2432, 4
    %v2434 = vmax.f32 %v2432, %v2433
    %v2435 = vrot.slane %v2434, 2
    %v2436 = vmax.f32 %v2434, %v2435
    %v2437 = vrot.slane %v2436, 1
    %v2438 = vmax.f32 %v2436, %v2437
    %v2439 = vsel %vm2151, %v992, -inf
    %v2440 = vrot.slane %v2439, 4
    %v2441 = vmax.f32 %v2439, %v2440
    %v2442 = vrot.slane %v2441, 2
    %v2443 = vmax.f32 %v2441, %v2442
    %v2444 = vrot.slane %v2443, 1
    %v2445 = vmax.f32 %v2443, %v2444
    %v2446 = vsel %vm2151, %v991, -inf
    %v2447 = vrot.slane %v2446, 4
    %v2448 = vmax.f32 %v2446, %v2447
    %v2449 = vrot.slane %v2448, 2
    %v2450 = vmax.f32 %v2448, %v2449
    %v2451 = vrot.slane %v2450, 1
    %v2452 = vmax.f32 %v2450, %v2451
    %v2453 = vsel %vm2151, %v993, -inf
    %v2454 = vrot.slane %v2453, 4
    %v2455 = vmax.f32 %v2453, %v2454
    %v2456 = vrot.slane %v2455, 2
    %v2457 = vmax.f32 %v2455, %v2456
    %v2458 = vrot.slane %v2457, 1
    %v2459 = vmax.f32 %v2457, %v2458
    %v2460 = vsel %vm2151, %v1001, -inf
    %v2461 = vrot.slane %v2460, 4
    %v2462 = vmax.f32 %v2460, %v2461
    %v2463 = vrot.slane %v2462, 2
    %v2464 = vmax.f32 %v2462, %v2463
    %v2465 = vrot.slane %v2464, 1
    %v2466 = vmax.f32 %v2464, %v2465
    %v2467 = vsel %vm2151, %v1009, -inf
    %v2468 = vrot.slane %v2467, 4
    %v2469 = vmax.f32 %v2467, %v2468
    %v2470 = vrot.slane %v2469, 2
    %v2471 = vmax.f32 %v2469, %v2470
    %v2472 = vrot.slane %v2471, 1
    %v2473 = vmax.f32 %v2471, %v2472
    %v2474 = vsel %vm2151, %v1008, -inf
    %v2475 = vrot.slane %v2474, 4
    %v2476 = vmax.f32 %v2474, %v2475
    %v2477 = vrot.slane %v2476, 2
    %v2478 = vmax.f32 %v2476, %v2477
    %v2479 = vrot.slane %v2478, 1
    %v2480 = vmax.f32 %v2478, %v2479
    %v2481 = vsel %vm2151, %v1010, -inf
    %v2482 = vrot.slane %v2481, 4
    %v2483 = vmax.f32 %v2481, %v2482
    %v2484 = vrot.slane %v2483, 2
    %v2485 = vmax.f32 %v2483, %v2484
    %v2486 = vrot.slane %v2485, 1
    %v2487 = vmax.f32 %v2485, %v2486
    %v2488 = vsel %vm2151, %v1018, -inf
    %v2489 = vrot.slane %v2488, 4
    %v2490 = vmax.f32 %v2488, %v2489
    %v2491 = vrot.slane %v2490, 2
    %v2492 = vmax.f32 %v2490, %v2491
    %v2493 = vrot.slane %v2492, 1
    %v2494 = vmax.f32 %v2492, %v2493
    %v2495 = vsel %vm2151, %v1026, -inf
    %v2496 = vrot.slane %v2495, 4
    %v2497 = vmax.f32 %v2495, %v2496
    %v2498 = vrot.slane %v2497, 2
    %v2499 = vmax.f32 %v2497, %v2498
    %v2500 = vrot.slane %v2499, 1
    %v2501 = vmax.f32 %v2499, %v2500
    %v2502 = vsel %vm2151, %v1025, -inf
    %v2503 = vrot.slane %v2502, 4
    %v2504 = vmax.f32 %v2502, %v2503
    %v2505 = vrot.slane %v2504, 2
    %v2506 = vmax.f32 %v2504, %v2505
    %v2507 = vrot.slane %v2506, 1
    %v2508 = vmax.f32 %v2506, %v2507
    %v2509 = vsel %vm2151, %v1027, -inf
    %v2510 = vrot.slane %v2509, 4
    %v2511 = vmax.f32 %v2509, %v2510
    %v2512 = vrot.slane %v2511, 2
    %v2513 = vmax.f32 %v2511, %v2512
    %v2514 = vrot.slane %v2513, 1
    %v2515 = vmax.f32 %v2513, %v2514
    %v2516 = vsel %vm2151, %v1035, -inf
    %v2517 = vrot.slane %v2516, 4
    %v2518 = vmax.f32 %v2516, %v2517
    %v2519 = vrot.slane %v2518, 2
    %v2520 = vmax.f32 %v2518, %v2519
    %v2521 = vrot.slane %v2520, 1
    %v2522 = vmax.f32 %v2520, %v2521
    %v2523 = vsel %vm2151, %v1043, -inf
    %v2524 = vrot.slane %v2523, 4
    %v2525 = vmax.f32 %v2523, %v2524
    %v2526 = vrot.slane %v2525, 2
    %v2527 = vmax.f32 %v2525, %v2526
    %v2528 = vrot.slane %v2527, 1
    %v2529 = vmax.f32 %v2527, %v2528
    %v2530 = vsel %vm2151, %v1042, -inf
    %v2531 = vrot.slane %v2530, 4
    %v2532 = vmax.f32 %v2530, %v2531
    %v2533 = vrot.slane %v2532, 2
    %v2534 = vmax.f32 %v2532, %v2533
    %v2535 = vrot.slane %v2534, 1
    %v2536 = vmax.f32 %v2534, %v2535
    %v2537 = vsel %vm2151, %v1044, -inf
    %v2538 = vrot.slane %v2537, 4
    %v2539 = vmax.f32 %v2537, %v2538
    %v2540 = vrot.slane %v2539, 2
    %v2541 = vmax.f32 %v2539, %v2540
    %v2542 = vrot.slane %v2541, 1
    %v2543 = vmax.f32 %v2541, %v2542
    %v2544 = vsel %vm2151, %v1052, -inf
    %v2545 = vrot.slane %v2544, 4
    %v2546 = vmax.f32 %v2544, %v2545
    %v2547 = vrot.slane %v2546, 2
    %v2548 = vmax.f32 %v2546, %v2547
    %v2549 = vrot.slane %v2548, 1
    %v2550 = vmax.f32 %v2548, %v2549
    %v2551 = vsel %vm2151, %v1060, -inf
    %v2552 = vrot.slane %v2551, 4
    %v2553 = vmax.f32 %v2551, %v2552
    %v2554 = vrot.slane %v2553, 2
    %v2555 = vmax.f32 %v2553, %v2554
    %v2556 = vrot.slane %v2555, 1
    %v2557 = vmax.f32 %v2555, %v2556
    %v2558 = vsel %vm2151, %v1059, -inf
    %v2559 = vrot.slane %v2558, 4
    %v2560 = vmax.f32 %v2558, %v2559
    %v2561 = vrot.slane %v2560, 2
    %v2562 = vmax.f32 %v2560, %v2561
    %v2563 = vrot.slane %v2562, 1
    %v2564 = vmax.f32 %v2562, %v2563
    %v2565 = vsel %vm2151, %v1061, -inf
    %v2566 = vrot.slane %v2565, 4
    %v2567 = vmax.f32 %v2565, %v2566
    %v2568 = vrot.slane %v2567, 2
    %v2569 = vmax.f32 %v2567, %v2568
    %v2570 = vrot.slane %v2569, 1
    %v2571 = vmax.f32 %v2569, %v2570
    %v2572 = vsel %vm2151, %v1069, -inf
    %v2573 = vrot.slane %v2572, 4
    %v2574 = vmax.f32 %v2572, %v2573
    %v2575 = vrot.slane %v2574, 2
    %v2576 = vmax.f32 %v2574, %v2575
    %v2577 = vrot.slane %v2576, 1
    %v2578 = vmax.f32 %v2576, %v2577
    %v2579 = vsel %vm2151, %v1077, -inf
    %v2580 = vrot.slane %v2579, 4
    %v2581 = vmax.f32 %v2579, %v2580
    %v2582 = vrot.slane %v2581, 2
    %v2583 = vmax.f32 %v2581, %v2582
    %v2584 = vrot.slane %v2583, 1
    %v2585 = vmax.f32 %v2583, %v2584
    %v2586 = vsel %vm2151, %v1076, -inf
    %v2587 = vrot.slane %v2586, 4
    %v2588 = vmax.f32 %v2586, %v2587
    %v2589 = vrot.slane %v2588, 2
    %v2590 = vmax.f32 %v2588, %v2589
    %v2591 = vrot.slane %v2590, 1
    %v2592 = vmax.f32 %v2590, %v2591
    %v2593 = vsel %vm2151, %v1078, -inf
    %v2594 = vrot.slane %v2593, 4
    %v2595 = vmax.f32 %v2593, %v2594
    %v2596 = vrot.slane %v2595, 2
    %v2597 = vmax.f32 %v2595, %v2596
    %v2598 = vrot.slane %v2597, 1
    %v2599 = vmax.f32 %v2597, %v2598
    %v2600 = vsel %vm2151, %v1086, -inf
    %v2601 = vrot.slane %v2600, 4
    %v2602 = vmax.f32 %v2600, %v2601
    %v2603 = vrot.slane %v2602, 2
    %v2604 = vmax.f32 %v2602, %v2603
    %v2605 = vrot.slane %v2604, 1
    %v2606 = vmax.f32 %v2604, %v2605
    %v2607 = vsel %vm2151, %v1094, -inf
    %v2608 = vrot.slane %v2607, 4
    %v2609 = vmax.f32 %v2607, %v2608
    %v2610 = vrot.slane %v2609, 2
    %v2611 = vmax.f32 %v2609, %v2610
    %v2612 = vrot.slane %v2611, 1
    %v2613 = vmax.f32 %v2611, %v2612
    %v2614 = vsel %vm2151, %v1093, -inf
    %v2615 = vrot.slane %v2614, 4
    %v2616 = vmax.f32 %v2614, %v2615
    %v2617 = vrot.slane %v2616, 2
    %v2618 = vmax.f32 %v2616, %v2617
    %v2619 = vrot.slane %v2618, 1
    %v2620 = vmax.f32 %v2618, %v2619
    %v2621 = vsel %vm2151, %v1095, -inf
    %v2622 = vrot.slane %v2621, 4
    %v2623 = vmax.f32 %v2621, %v2622
    %v2624 = vrot.slane %v2623, 2
    %v2625 = vmax.f32 %v2623, %v2624
    %v2626 = vrot.slane %v2625, 1
    %v2627 = vmax.f32 %v2625, %v2626
    %v2628 = vsel %vm2151, %v1103, -inf
    %v2629 = vrot.slane %v2628, 4
    %v2630 = vmax.f32 %v2628, %v2629
    %v2631 = vrot.slane %v2630, 2
    %v2632 = vmax.f32 %v2630, %v2631
    %v2633 = vrot.slane %v2632, 1
    %v2634 = vmax.f32 %v2632, %v2633
    %v2635 = vsel %vm2151, %v1111, -inf
    %v2636 = vrot.slane %v2635, 4
    %v2637 = vmax.f32 %v2635, %v2636
    %v2638 = vrot.slane %v2637, 2
    %v2639 = vmax.f32 %v2637, %v2638
    %v2640 = vrot.slane %v2639, 1
    %v2641 = vmax.f32 %v2639, %v2640
    %v2642 = vsel %vm2151, %v1110, -inf
    %v2643 = vrot.slane %v2642, 4
    %v2644 = vmax.f32 %v2642, %v2643
    %v2645 = vrot.slane %v2644, 2
    %v2646 = vmax.f32 %v2644, %v2645
    %v2647 = vrot.slane %v2646, 1
    %v2648 = vmax.f32 %v2646, %v2647
    %v2649 = vsel %vm2151, %v1112, -inf
    %v2650 = vrot.slane %v2649, 4
    %v2651 = vmax.f32 %v2649, %v2650
    %v2652 = vrot.slane %v2651, 2
    %v2653 = vmax.f32 %v2651, %v2652
    %v2654 = vrot.slane %v2653, 1
    %v2655 = vmax.f32 %v2653, %v2654
    %v2656 = vsel %vm2151, %v1120, -inf
    %v2657 = vrot.slane %v2656, 4
    %v2658 = vmax.f32 %v2656, %v2657
    %v2659 = vrot.slane %v2658, 2
    %v2660 = vmax.f32 %v2658, %v2659
    %v2661 = vrot.slane %v2660, 1
    %v2662 = vmax.f32 %v2660, %v2661
    %v2663 = vsel %vm2151, %v1128, -inf
    %v2664 = vrot.slane %v2663, 4
    %v2665 = vmax.f32 %v2663, %v2664
    %v2666 = vrot.slane %v2665, 2
    %v2667 = vmax.f32 %v2665, %v2666
    %v2668 = vrot.slane %v2667, 1
    %v2669 = vmax.f32 %v2667, %v2668
    %v2670 = vsel %vm2151, %v1127, -inf
    %v2671 = vrot.slane %v2670, 4
    %v2672 = vmax.f32 %v2670, %v2671
    %v2673 = vrot.slane %v2672, 2
    %v2674 = vmax.f32 %v2672, %v2673
    %v2675 = vrot.slane %v2674, 1
    %v2676 = vmax.f32 %v2674, %v2675
    %v2677 = vsel %vm2151, %v1129, -inf
    %v2678 = vrot.slane %v2677, 4
    %v2679 = vmax.f32 %v2677, %v2678
    %v2680 = vrot.slane %v2679, 2
    %v2681 = vmax.f32 %v2679, %v2680
    %v2682 = vrot.slane %v2681, 1
    %v2683 = vmax.f32 %v2681, %v2682
    %v2684 = vsel %vm2151, %v1137, -inf
    %v2685 = vrot.slane %v2684, 4
    %v2686 = vmax.f32 %v2684, %v2685
    %v2687 = vrot.slane %v2686, 2
    %v2688 = vmax.f32 %v2686, %v2687
    %v2689 = vrot.slane %v2688, 1
    %v2690 = vmax.f32 %v2688, %v2689
    %v2691 = vsel %vm2151, %v1145, -inf
    %v2692 = vrot.slane %v2691, 4
    %v2693 = vmax.f32 %v2691, %v2692
    %v2694 = vrot.slane %v2693, 2
    %v2695 = vmax.f32 %v2693, %v2694
    %v2696 = vrot.slane %v2695, 1
    %v2697 = vmax.f32 %v2695, %v2696
    %v2698 = vsel %vm2151, %v1144, -inf
    %v2699 = vrot.slane %v2698, 4
    %v2700 = vmax.f32 %v2698, %v2699
    %v2701 = vrot.slane %v2700, 2
    %v2702 = vmax.f32 %v2700, %v2701
    %v2703 = vrot.slane %v2702, 1
    %v2704 = vmax.f32 %v2702, %v2703
    %v2705 = vsel %vm2151, %v1146, -inf
    %v2706 = vrot.slane %v2705, 4
    %v2707 = vmax.f32 %v2705, %v2706
    %v2708 = vrot.slane %v2707, 2
    %v2709 = vmax.f32 %v2707, %v2708
    %v2710 = vrot.slane %v2709, 1
    %v2711 = vmax.f32 %v2709, %v2710
    %v2712 = vsel %vm2151, %v1154, -inf
    %v2713 = vrot.slane %v2712, 4
    %v2714 = vmax.f32 %v2712, %v2713
    %v2715 = vrot.slane %v2714, 2
    %v2716 = vmax.f32 %v2714, %v2715
    %v2717 = vrot.slane %v2716, 1
    %v2718 = vmax.f32 %v2716, %v2717
    %v2719 = vsel %vm2151, %v1162, -inf
    %v2720 = vrot.slane %v2719, 4
    %v2721 = vmax.f32 %v2719, %v2720
    %v2722 = vrot.slane %v2721, 2
    %v2723 = vmax.f32 %v2721, %v2722
    %v2724 = vrot.slane %v2723, 1
    %v2725 = vmax.f32 %v2723, %v2724
    %v2726 = vsel %vm2151, %v1161, -inf
    %v2727 = vrot.slane %v2726, 4
    %v2728 = vmax.f32 %v2726, %v2727
    %v2729 = vrot.slane %v2728, 2
    %v2730 = vmax.f32 %v2728, %v2729
    %v2731 = vrot.slane %v2730, 1
    %v2732 = vmax.f32 %v2730, %v2731
    %v2733 = vsel %vm2151, %v1163, -inf
    %v2734 = vrot.slane %v2733, 4
    %v2735 = vmax.f32 %v2733, %v2734
    %v2736 = vrot.slane %v2735, 2
    %v2737 = vmax.f32 %v2735, %v2736
    %v2738 = vrot.slane %v2737, 1
    %v2739 = vmax.f32 %v2737, %v2738
    %v2740 = vsel %vm2151, %v1171, -inf
    %v2741 = vrot.slane %v2740, 4
    %v2742 = vmax.f32 %v2740, %v2741
    %v2743 = vrot.slane %v2742, 2
    %v2744 = vmax.f32 %v2742, %v2743
    %v2745 = vrot.slane %v2744, 1
    %v2746 = vmax.f32 %v2744, %v2745
    %v2747 = vsel %vm2151, %v1179, -inf
    %v2748 = vrot.slane %v2747, 4
    %v2749 = vmax.f32 %v2747, %v2748
    %v2750 = vrot.slane %v2749, 2
    %v2751 = vmax.f32 %v2749, %v2750
    %v2752 = vrot.slane %v2751, 1
    %v2753 = vmax.f32 %v2751, %v2752
    %v2754 = vsel %vm2151, %v1178, -inf
    %v2755 = vrot.slane %v2754, 4
    %v2756 = vmax.f32 %v2754, %v2755
    %v2757 = vrot.slane %v2756, 2
    %v2758 = vmax.f32 %v2756, %v2757
    %v2759 = vrot.slane %v2758, 1
    %v2760 = vmax.f32 %v2758, %v2759
    %v2761 = vsel %vm2151, %v1180, -inf
    %v2762 = vrot.slane %v2761, 4
    %v2763 = vmax.f32 %v2761, %v2762
    %v2764 = vrot.slane %v2763, 2
    %v2765 = vmax.f32 %v2763, %v2764
    %v2766 = vrot.slane %v2765, 1
    %v2767 = vmax.f32 %v2765, %v2766
    %v2768 = vsel %vm2151, %v1188, -inf
    %v2769 = vrot.slane %v2768, 4
    %v2770 = vmax.f32 %v2768, %v2769
    %v2771 = vrot.slane %v2770, 2
    %v2772 = vmax.f32 %v2770, %v2771
    %v2773 = vrot.slane %v2772, 1
    %v2774 = vmax.f32 %v2772, %v2773
    %v2775 = vsel %vm2151, %v1196, -inf
    %v2776 = vrot.slane %v2775, 4
    %v2777 = vmax.f32 %v2775, %v2776
    %v2778 = vrot.slane %v2777, 2
    %v2779 = vmax.f32 %v2777, %v2778
    %v2780 = vrot.slane %v2779, 1
    %v2781 = vmax.f32 %v2779, %v2780
    %v2782 = vsel %vm2151, %v1195, -inf
    %v2783 = vrot.slane %v2782, 4
    %v2784 = vmax.f32 %v2782, %v2783
    %v2785 = vrot.slane %v2784, 2
    %v2786 = vmax.f32 %v2784, %v2785
    %v2787 = vrot.slane %v2786, 1
    %v2788 = vmax.f32 %v2786, %v2787
    %v2789 = vsel %vm2151, %v1197, -inf
    %v2790 = vrot.slane %v2789, 4
    %v2791 = vmax.f32 %v2789, %v2790
    %v2792 = vrot.slane %v2791, 2
    %v2793 = vmax.f32 %v2791, %v2792
    %v2794 = vrot.slane %v2793, 1
    %v2795 = vmax.f32 %v2793, %v2794
    %v2796 = vsel %vm2151, %v1205, -inf
    %v2797 = vrot.slane %v2796, 4
    %v2798 = vmax.f32 %v2796, %v2797
    %v2799 = vrot.slane %v2798, 2
    %v2800 = vmax.f32 %v2798, %v2799
    %v2801 = vrot.slane %v2800, 1
    %v2802 = vmax.f32 %v2800, %v2801
    %v2803 = vsel %vm2151, %v1213, -inf
    %v2804 = vrot.slane %v2803, 4
    %v2805 = vmax.f32 %v2803, %v2804
    %v2806 = vrot.slane %v2805, 2
    %v2807 = vmax.f32 %v2805, %v2806
    %v2808 = vrot.slane %v2807, 1
    %v2809 = vmax.f32 %v2807, %v2808
    %v2810 = vsel %vm2151, %v1212, -inf
    %v2811 = vrot.slane %v2810, 4
    %v2812 = vmax.f32 %v2810, %v2811
    %v2813 = vrot.slane %v2812, 2
    %v2814 = vmax.f32 %v2812, %v2813
    %v2815 = vrot.slane %v2814, 1
    %v2816 = vmax.f32 %v2814, %v2815
    %v2817 = vsel %vm2151, %v1214, -inf
    %v2818 = vrot.slane %v2817, 4
    %v2819 = vmax.f32 %v2817, %v2818
    %v2820 = vrot.slane %v2819, 2
    %v2821 = vmax.f32 %v2819, %v2820
    %v2822 = vrot.slane %v2821, 1
    %v2823 = vmax.f32 %v2821, %v2822
    %v2824 = vsel %vm2151, %v1222, -inf
    %v2825 = vrot.slane %v2824, 4
    %v2826 = vmax.f32 %v2824, %v2825
    %v2827 = vrot.slane %v2826, 2
    %v2828 = vmax.f32 %v2826, %v2827
    %v2829 = vrot.slane %v2828, 1
    %v2830 = vmax.f32 %v2828, %v2829
    %v2831 = vsel %vm2151, %v1230, -inf
    %v2832 = vrot.slane %v2831, 4
    %v2833 = vmax.f32 %v2831, %v2832
    %v2834 = vrot.slane %v2833, 2
    %v2835 = vmax.f32 %v2833, %v2834
    %v2836 = vrot.slane %v2835, 1
    %v2837 = vmax.f32 %v2835, %v2836
    %v2838 = vsel %vm2151, %v1229, -inf
    %v2839 = vrot.slane %v2838, 4
    %v2840 = vmax.f32 %v2838, %v2839
    %v2841 = vrot.slane %v2840, 2
    %v2842 = vmax.f32 %v2840, %v2841
    %v2843 = vrot.slane %v2842, 1
    %v2844 = vmax.f32 %v2842, %v2843
    %v2845 = vsel %vm2151, %v1231, -inf
    %v2846 = vrot.slane %v2845, 4
    %v2847 = vmax.f32 %v2845, %v2846
    %v2848 = vrot.slane %v2847, 2
    %v2849 = vmax.f32 %v2847, %v2848
    %v2850 = vrot.slane %v2849, 1
    %v2851 = vmax.f32 %v2849, %v2850
    %v2852 = vsel %vm2151, %v1239, -inf
    %v2853 = vrot.slane %v2852, 4
    %v2854 = vmax.f32 %v2852, %v2853
    %v2855 = vrot.slane %v2854, 2
    %v2856 = vmax.f32 %v2854, %v2855
    %v2857 = vrot.slane %v2856, 1
    %v2858 = vmax.f32 %v2856, %v2857
    %v2859 = vsel %vm2151, %v1247, -inf
    %v2860 = vrot.slane %v2859, 4
    %v2861 = vmax.f32 %v2859, %v2860
    %v2862 = vrot.slane %v2861, 2
    %v2863 = vmax.f32 %v2861, %v2862
    %v2864 = vrot.slane %v2863, 1
    %v2865 = vmax.f32 %v2863, %v2864
    %v2866 = vsel %vm2151, %v1246, -inf
    %v2867 = vrot.slane %v2866, 4
    %v2868 = vmax.f32 %v2866, %v2867
    %v2869 = vrot.slane %v2868, 2
    %v2870 = vmax.f32 %v2868, %v2869
    %v2871 = vrot.slane %v2870, 1
    %v2872 = vmax.f32 %v2870, %v2871
    %v2873 = vsel %vm2151, %v1248, -inf
    %v2874 = vrot.slane %v2873, 4
    %v2875 = vmax.f32 %v2873, %v2874
    %v2876 = vrot.slane %v2875, 2
    %v2877 = vmax.f32 %v2875, %v2876
    %v2878 = vrot.slane %v2877, 1
    %v2879 = vmax.f32 %v2877, %v2878
    %v2880 = vsel %vm2151, %v1256, -inf
    %v2881 = vrot.slane %v2880, 4
    %v2882 = vmax.f32 %v2880, %v2881
    %v2883 = vrot.slane %v2882, 2
    %v2884 = vmax.f32 %v2882, %v2883
    %v2885 = vrot.slane %v2884, 1
    %v2886 = vmax.f32 %v2884, %v2885
    %v2887 = vsel %vm2151, %v1264, -inf
    %v2888 = vrot.slane %v2887, 4
    %v2889 = vmax.f32 %v2887, %v2888
    %v2890 = vrot.slane %v2889, 2
    %v2891 = vmax.f32 %v2889, %v2890
    %v2892 = vrot.slane %v2891, 1
    %v2893 = vmax.f32 %v2891, %v2892
    %v2894 = vsel %vm2151, %v1263, -inf
    %v2895 = vrot.slane %v2894, 4
    %v2896 = vmax.f32 %v2894, %v2895
    %v2897 = vrot.slane %v2896, 2
    %v2898 = vmax.f32 %v2896, %v2897
    %v2899 = vrot.slane %v2898, 1
    %v2900 = vmax.f32 %v2898, %v2899
    %v2901 = vsel %vm2151, %v1265, -inf
    %v2902 = vrot.slane %v2901, 4
    %v2903 = vmax.f32 %v2901, %v2902
    %v2904 = vrot.slane %v2903, 2
    %v2905 = vmax.f32 %v2903, %v2904
    %v2906 = vrot.slane %v2905, 1
    %v2907 = vmax.f32 %v2905, %v2906
    %v2908 = vsel %vm2151, %v1273, -inf
    %v2909 = vrot.slane %v2908, 4
    %v2910 = vmax.f32 %v2908, %v2909
    %v2911 = vrot.slane %v2910, 2
    %v2912 = vmax.f32 %v2910, %v2911
    %v2913 = vrot.slane %v2912, 1
    %v2914 = vmax.f32 %v2912, %v2913
    %v2915 = vsel %vm2151, %v1281, -inf
    %v2916 = vrot.slane %v2915, 4
    %v2917 = vmax.f32 %v2915, %v2916
    %v2918 = vrot.slane %v2917, 2
    %v2919 = vmax.f32 %v2917, %v2918
    %v2920 = vrot.slane %v2919, 1
    %v2921 = vmax.f32 %v2919, %v2920
    %v2922 = vsel %vm2151, %v1280, -inf
    %v2923 = vrot.slane %v2922, 4
    %v2924 = vmax.f32 %v2922, %v2923
    %v2925 = vrot.slane %v2924, 2
    %v2926 = vmax.f32 %v2924, %v2925
    %v2927 = vrot.slane %v2926, 1
    %v2928 = vmax.f32 %v2926, %v2927
    %v2929 = vsel %vm2151, %v1282, -inf
    %v2930 = vrot.slane %v2929, 4
    %v2931 = vmax.f32 %v2929, %v2930
    %v2932 = vrot.slane %v2931, 2
    %v2933 = vmax.f32 %v2931, %v2932
    %v2934 = vrot.slane %v2933, 1
    %v2935 = vmax.f32 %v2933, %v2934
    %v2936 = vsel %vm2151, %v1290, -inf
    %v2937 = vrot.slane %v2936, 4
    %v2938 = vmax.f32 %v2936, %v2937
    %v2939 = vrot.slane %v2938, 2
    %v2940 = vmax.f32 %v2938, %v2939
    %v2941 = vrot.slane %v2940, 1
    %v2942 = vmax.f32 %v2940, %v2941
    %v2943 = vsel %vm2151, %v1298, -inf
    %v2944 = vrot.slane %v2943, 4
    %v2945 = vmax.f32 %v2943, %v2944
    %v2946 = vrot.slane %v2945, 2
    %v2947 = vmax.f32 %v2945, %v2946
    %v2948 = vrot.slane %v2947, 1
    %v2949 = vmax.f32 %v2947, %v2948
    %v2950 = vsel %vm2151, %v1297, -inf
    %v2951 = vrot.slane %v2950, 4
    %v2952 = vmax.f32 %v2950, %v2951
    %v2953 = vrot.slane %v2952, 2
    %v2954 = vmax.f32 %v2952, %v2953
    %v2955 = vrot.slane %v2954, 1
    %v2956 = vmax.f32 %v2954, %v2955
    %v2957 = vsel %vm2151, %v1299, -inf
    %v2958 = vrot.slane %v2957, 4
    %v2959 = vmax.f32 %v2957, %v2958
    %v2960 = vrot.slane %v2959, 2
    %v2961 = vmax.f32 %v2959, %v2960
    %v2962 = vrot.slane %v2961, 1
    %v2963 = vmax.f32 %v2961, %v2962
    %v2964 = vsel %vm2151, %v1307, -inf
    %v2965 = vrot.slane %v2964, 4
    %v2966 = vmax.f32 %v2964, %v2965
    %v2967 = vrot.slane %v2966, 2
    %v2968 = vmax.f32 %v2966, %v2967
    %v2969 = vrot.slane %v2968, 1
    %v2970 = vmax.f32 %v2968, %v2969
    %v2971 = vsel %vm2151, %v1315, -inf
    %v2972 = vrot.slane %v2971, 4
    %v2973 = vmax.f32 %v2971, %v2972
    %v2974 = vrot.slane %v2973, 2
    %v2975 = vmax.f32 %v2973, %v2974
    %v2976 = vrot.slane %v2975, 1
    %v2977 = vmax.f32 %v2975, %v2976
    %v2978 = vsel %vm2151, %v1314, -inf
    %v2979 = vrot.slane %v2978, 4
    %v2980 = vmax.f32 %v2978, %v2979
    %v2981 = vrot.slane %v2980, 2
    %v2982 = vmax.f32 %v2980, %v2981
    %v2983 = vrot.slane %v2982, 1
    %v2984 = vmax.f32 %v2982, %v2983
    %v2985 = vsel %vm2151, %v1316, -inf
    %v2986 = vrot.slane %v2985, 4
    %v2987 = vmax.f32 %v2985, %v2986
    %v2988 = vrot.slane %v2987, 2
    %v2989 = vmax.f32 %v2987, %v2988
    %v2990 = vrot.slane %v2989, 1
    %v2991 = vmax.f32 %v2989, %v2990
    %v2992 = vsel %vm2151, %v1324, -inf
    %v2993 = vrot.slane %v2992, 4
    %v2994 = vmax.f32 %v2992, %v2993
    %v2995 = vrot.slane %v2994, 2
    %v2996 = vmax.f32 %v2994, %v2995
    %v2997 = vrot.slane %v2996, 1
    %v2998 = vmax.f32 %v2996, %v2997
    %v2999 = vsel %vm2151, %v1332, -inf
    %v3000 = vrot.slane %v2999, 4
    %v3001 = vmax.f32 %v2999, %v3000
    %v3002 = vrot.slane %v3001, 2
    %v3003 = vmax.f32 %v3001, %v3002
    %v3004 = vrot.slane %v3003, 1
    %v3005 = vmax.f32 %v3003, %v3004
    %v3006 = vsel %vm2151, %v1331, -inf
    %v3007 = vrot.slane %v3006, 4
    %v3008 = vmax.f32 %v3006, %v3007
    %v3009 = vrot.slane %v3008, 2
    %v3010 = vmax.f32 %v3008, %v3009
    %v3011 = vrot.slane %v3010, 1
    %v3012 = vmax.f32 %v3010, %v3011
    %v3013 = vsel %vm2151, %v1333, -inf
    %v3014 = vrot.slane %v3013, 4
    %v3015 = vmax.f32 %v3013, %v3014
    %v3016 = vrot.slane %v3015, 2
    %v3017 = vmax.f32 %v3015, %v3016
    %v3018 = vrot.slane %v3017, 1
    %v3019 = vmax.f32 %v3017, %v3018
    %v3020 = vsel %vm2151, %v1341, -inf
    %v3021 = vrot.slane %v3020, 4
    %v3022 = vmax.f32 %v3020, %v3021
    %v3023 = vrot.slane %v3022, 2
    %v3024 = vmax.f32 %v3022, %v3023
    %v3025 = vrot.slane %v3024, 1
    %v3026 = vmax.f32 %v3024, %v3025
    %v3027 = vsel %vm2151, %v1349, -inf
    %v3028 = vrot.slane %v3027, 4
    %v3029 = vmax.f32 %v3027, %v3028
    %v3030 = vrot.slane %v3029, 2
    %v3031 = vmax.f32 %v3029, %v3030
    %v3032 = vrot.slane %v3031, 1
    %v3033 = vmax.f32 %v3031, %v3032
    %v3034 = vsel %vm2151, %v1348, -inf
    %v3035 = vrot.slane %v3034, 4
    %v3036 = vmax.f32 %v3034, %v3035
    %v3037 = vrot.slane %v3036, 2
    %v3038 = vmax.f32 %v3036, %v3037
    %v3039 = vrot.slane %v3038, 1
    %v3040 = vmax.f32 %v3038, %v3039
    %v3041 = vsel %vm2151, %v1350, -inf
    %v3042 = vrot.slane %v3041, 4
    %v3043 = vmax.f32 %v3041, %v3042
    %v3044 = vrot.slane %v3043, 2
    %v3045 = vmax.f32 %v3043, %v3044
    %v3046 = vrot.slane %v3045, 1
    %v3047 = vmax.f32 %v3045, %v3046
    %v3048 = vsel %vm2151, %v1358, -inf
    %v3049 = vrot.slane %v3048, 4
    %v3050 = vmax.f32 %v3048, %v3049
    %v3051 = vrot.slane %v3050, 2
    %v3052 = vmax.f32 %v3050, %v3051
    %v3053 = vrot.slane %v3052, 1
    %v3054 = vmax.f32 %v3052, %v3053
    %v3055 = vsel %vm2151, %v1366, -inf
    %v3056 = vrot.slane %v3055, 4
    %v3057 = vmax.f32 %v3055, %v3056
    %v3058 = vrot.slane %v3057, 2
    %v3059 = vmax.f32 %v3057, %v3058
    %v3060 = vrot.slane %v3059, 1
    %v3061 = vmax.f32 %v3059, %v3060
    %v3062 = vsel %vm2151, %v1365, -inf
    %v3063 = vrot.slane %v3062, 4
    %v3064 = vmax.f32 %v3062, %v3063
    %v3065 = vrot.slane %v3064, 2
    %v3066 = vmax.f32 %v3064, %v3065
    %v3067 = vrot.slane %v3066, 1
    %v3068 = vmax.f32 %v3066, %v3067
    %v3069 = vsel %vm2151, %v1367, -inf
    %v3070 = vrot.slane %v3069, 4
    %v3071 = vmax.f32 %v3069, %v3070
    %v3072 = vrot.slane %v3071, 2
    %v3073 = vmax.f32 %v3071, %v3072
    %v3074 = vrot.slane %v3073, 1
    %v3075 = vmax.f32 %v3073, %v3074
    %v3076 = vsel %vm2151, %v1375, -inf
    %v3077 = vrot.slane %v3076, 4
    %v3078 = vmax.f32 %v3076, %v3077
    %v3079 = vrot.slane %v3078, 2
    %v3080 = vmax.f32 %v3078, %v3079
    %v3081 = vrot.slane %v3080, 1
    %v3082 = vmax.f32 %v3080, %v3081
    %v3083 = vsel %vm2151, %v1383, -inf
    %v3084 = vrot.slane %v3083, 4
    %v3085 = vmax.f32 %v3083, %v3084
    %v3086 = vrot.slane %v3085, 2
    %v3087 = vmax.f32 %v3085, %v3086
    %v3088 = vrot.slane %v3087, 1
    %v3089 = vmax.f32 %v3087, %v3088
    %v3090 = vsel %vm2151, %v1382, -inf
    %v3091 = vrot.slane %v3090, 4
    %v3092 = vmax.f32 %v3090, %v3091
    %v3093 = vrot.slane %v3092, 2
    %v3094 = vmax.f32 %v3092, %v3093
    %v3095 = vrot.slane %v3094, 1
    %v3096 = vmax.f32 %v3094, %v3095
    %v3097 = vsel %vm2151, %v1384, -inf
    %v3098 = vrot.slane %v3097, 4
    %v3099 = vmax.f32 %v3097, %v3098
    %v3100 = vrot.slane %v3099, 2
    %v3101 = vmax.f32 %v3099, %v3100
    %v3102 = vrot.slane %v3101, 1
    %v3103 = vmax.f32 %v3101, %v3102
    %v3104 = vsel %vm2151, %v1392, -inf
    %v3105 = vrot.slane %v3104, 4
    %v3106 = vmax.f32 %v3104, %v3105
    %v3107 = vrot.slane %v3106, 2
    %v3108 = vmax.f32 %v3106, %v3107
    %v3109 = vrot.slane %v3108, 1
    %v3110 = vmax.f32 %v3108, %v3109
    %v3111 = vsel %vm2151, %v1400, -inf
    %v3112 = vrot.slane %v3111, 4
    %v3113 = vmax.f32 %v3111, %v3112
    %v3114 = vrot.slane %v3113, 2
    %v3115 = vmax.f32 %v3113, %v3114
    %v3116 = vrot.slane %v3115, 1
    %v3117 = vmax.f32 %v3115, %v3116
    %v3118 = vsel %vm2151, %v1399, -inf
    %v3119 = vrot.slane %v3118, 4
    %v3120 = vmax.f32 %v3118, %v3119
    %v3121 = vrot.slane %v3120, 2
    %v3122 = vmax.f32 %v3120, %v3121
    %v3123 = vrot.slane %v3122, 1
    %v3124 = vmax.f32 %v3122, %v3123
    %v3125 = vsel %vm2151, %v1401, -inf
    %v3126 = vrot.slane %v3125, 4
    %v3127 = vmax.f32 %v3125, %v3126
    %v3128 = vrot.slane %v3127, 2
    %v3129 = vmax.f32 %v3127, %v3128
    %v3130 = vrot.slane %v3129, 1
    %v3131 = vmax.f32 %v3129, %v3130
    %v3132 = vsel %vm2151, %v1409, -inf
    %v3133 = vrot.slane %v3132, 4
    %v3134 = vmax.f32 %v3132, %v3133
    %v3135 = vrot.slane %v3134, 2
    %v3136 = vmax.f32 %v3134, %v3135
    %v3137 = vrot.slane %v3136, 1
    %v3138 = vmax.f32 %v3136, %v3137
    %v3139 = vsel %vm2151, %v1417, -inf
    %v3140 = vrot.slane %v3139, 4
    %v3141 = vmax.f32 %v3139, %v3140
    %v3142 = vrot.slane %v3141, 2
    %v3143 = vmax.f32 %v3141, %v3142
    %v3144 = vrot.slane %v3143, 1
    %v3145 = vmax.f32 %v3143, %v3144
    %v3146 = vsel %vm2151, %v1416, -inf
    %v3147 = vrot.slane %v3146, 4
    %v3148 = vmax.f32 %v3146, %v3147
    %v3149 = vrot.slane %v3148, 2
    %v3150 = vmax.f32 %v3148, %v3149
    %v3151 = vrot.slane %v3150, 1
    %v3152 = vmax.f32 %v3150, %v3151
    %v3153 = vsel %vm2151, %v1418, -inf
    %v3154 = vrot.slane %v3153, 4
    %v3155 = vmax.f32 %v3153, %v3154
    %v3156 = vrot.slane %v3155, 2
    %v3157 = vmax.f32 %v3155, %v3156
    %v3158 = vrot.slane %v3157, 1
    %v3159 = vmax.f32 %v3157, %v3158
    %v3160 = vsel %vm2151, %v1426, -inf
    %v3161 = vrot.slane %v3160, 4
    %v3162 = vmax.f32 %v3160, %v3161
    %v3163 = vrot.slane %v3162, 2
    %v3164 = vmax.f32 %v3162, %v3163
    %v3165 = vrot.slane %v3164, 1
    %v3166 = vmax.f32 %v3164, %v3165
    %v3167 = vsel %vm2151, %v1434, -inf
    %v3168 = vrot.slane %v3167, 4
    %v3169 = vmax.f32 %v3167, %v3168
    %v3170 = vrot.slane %v3169, 2
    %v3171 = vmax.f32 %v3169, %v3170
    %v3172 = vrot.slane %v3171, 1
    %v3173 = vmax.f32 %v3171, %v3172
    %v3174 = vsel %vm2151, %v1433, -inf
    %v3175 = vrot.slane %v3174, 4
    %v3176 = vmax.f32 %v3174, %v3175
    %v3177 = vrot.slane %v3176, 2
    %v3178 = vmax.f32 %v3176, %v3177
    %v3179 = vrot.slane %v3178, 1
    %v3180 = vmax.f32 %v3178, %v3179
    %v3181 = vsel %vm2151, %v1435, -inf
    %v3182 = vrot.slane %v3181, 4
    %v3183 = vmax.f32 %v3181, %v3182
    %v3184 = vrot.slane %v3183, 2
    %v3185 = vmax.f32 %v3183, %v3184
    %v3186 = vrot.slane %v3185, 1
    %v3187 = vmax.f32 %v3185, %v3186
    %v3188 = vsel %vm2151, %v1443, -inf
    %v3189 = vrot.slane %v3188, 4
    %v3190 = vmax.f32 %v3188, %v3189
    %v3191 = vrot.slane %v3190, 2
    %v3192 = vmax.f32 %v3190, %v3191
    %v3193 = vrot.slane %v3192, 1
    %v3194 = vmax.f32 %v3192, %v3193
    %v3195 = vsel %vm2151, %v1451, -inf
    %v3196 = vrot.slane %v3195, 4
    %v3197 = vmax.f32 %v3195, %v3196
    %v3198 = vrot.slane %v3197, 2
    %v3199 = vmax.f32 %v3197, %v3198
    %v3200 = vrot.slane %v3199, 1
    %v3201 = vmax.f32 %v3199, %v3200
    %v3202 = vsel %vm2151, %v1450, -inf
    %v3203 = vrot.slane %v3202, 4
    %v3204 = vmax.f32 %v3202, %v3203
    %v3205 = vrot.slane %v3204, 2
    %v3206 = vmax.f32 %v3204, %v3205
    %v3207 = vrot.slane %v3206, 1
    %v3208 = vmax.f32 %v3206, %v3207
    %v3209 = vsel %vm2151, %v1452, -inf
    %v3210 = vrot.slane %v3209, 4
    %v3211 = vmax.f32 %v3209, %v3210
    %v3212 = vrot.slane %v3211, 2
    %v3213 = vmax.f32 %v3211, %v3212
    %v3214 = vrot.slane %v3213, 1
    %v3215 = vmax.f32 %v3213, %v3214
    %v3216 = vsel %vm2151, %v1460, -inf
    %v3217 = vrot.slane %v3216, 4
    %v3218 = vmax.f32 %v3216, %v3217
    %v3219 = vrot.slane %v3218, 2
    %v3220 = vmax.f32 %v3218, %v3219
    %v3221 = vrot.slane %v3220, 1
    %v3222 = vmax.f32 %v3220, %v3221
    %v3223 = vsel %vm2151, %v1468, -inf
    %v3224 = vrot.slane %v3223, 4
    %v3225 = vmax.f32 %v3223, %v3224
    %v3226 = vrot.slane %v3225, 2
    %v3227 = vmax.f32 %v3225, %v3226
    %v3228 = vrot.slane %v3227, 1
    %v3229 = vmax.f32 %v3227, %v3228
    %v3230 = vsel %vm2151, %v1467, -inf
    %v3231 = vrot.slane %v3230, 4
    %v3232 = vmax.f32 %v3230, %v3231
    %v3233 = vrot.slane %v3232, 2
    %v3234 = vmax.f32 %v3232, %v3233
    %v3235 = vrot.slane %v3234, 1
    %v3236 = vmax.f32 %v3234, %v3235
    %v3237 = vsel %vm2151, %v1469, -inf
    %v3238 = vrot.slane %v3237, 4
    %v3239 = vmax.f32 %v3237, %v3238
    %v3240 = vrot.slane %v3239, 2
    %v3241 = vmax.f32 %v3239, %v3240
    %v3242 = vrot.slane %v3241, 1
    %v3243 = vmax.f32 %v3241, %v3242
    %v3244 = vsel %vm2151, %v1477, -inf
    %v3245 = vrot.slane %v3244, 4
    %v3246 = vmax.f32 %v3244, %v3245
    %v3247 = vrot.slane %v3246, 2
    %v3248 = vmax.f32 %v3246, %v3247
    %v3249 = vrot.slane %v3248, 1
    %v3250 = vmax.f32 %v3248, %v3249
    %v3251 = vsel %vm2151, %v1485, -inf
    %v3252 = vrot.slane %v3251, 4
    %v3253 = vmax.f32 %v3251, %v3252
    %v3254 = vrot.slane %v3253, 2
    %v3255 = vmax.f32 %v3253, %v3254
    %v3256 = vrot.slane %v3255, 1
    %v3257 = vmax.f32 %v3255, %v3256
    %v3258 = vsel %vm2151, %v1484, -inf
    %v3259 = vrot.slane %v3258, 4
    %v3260 = vmax.f32 %v3258, %v3259
    %v3261 = vrot.slane %v3260, 2
    %v3262 = vmax.f32 %v3260, %v3261
    %v3263 = vrot.slane %v3262, 1
    %v3264 = vmax.f32 %v3262, %v3263
    %v3265 = vsel %vm2151, %v1486, -inf
    %v3266 = vrot.slane %v3265, 4
    %v3267 = vmax.f32 %v3265, %v3266
    %v3268 = vrot.slane %v3267, 2
    %v3269 = vmax.f32 %v3267, %v3268
    %v3270 = vrot.slane %v3269, 1
    %v3271 = vmax.f32 %v3269, %v3270
    %v3272 = vsel %vm2151, %v1494, -inf
    %v3273 = vrot.slane %v3272, 4
    %v3274 = vmax.f32 %v3272, %v3273
    %v3275 = vrot.slane %v3274, 2
    %v3276 = vmax.f32 %v3274, %v3275
    %v3277 = vrot.slane %v3276, 1
    %v3278 = vmax.f32 %v3276, %v3277
    %v3279 = vsel %vm2151, %v1502, -inf
    %v3280 = vrot.slane %v3279, 4
    %v3281 = vmax.f32 %v3279, %v3280
    %v3282 = vrot.slane %v3281, 2
    %v3283 = vmax.f32 %v3281, %v3282
    %v3284 = vrot.slane %v3283, 1
    %v3285 = vmax.f32 %v3283, %v3284
    %v3286 = vsel %vm2151, %v1501, -inf
    %v3287 = vrot.slane %v3286, 4
    %v3288 = vmax.f32 %v3286, %v3287
    %v3289 = vrot.slane %v3288, 2
    %v3290 = vmax.f32 %v3288, %v3289
    %v3291 = vrot.slane %v3290, 1
    %v3292 = vmax.f32 %v3290, %v3291
    %v3293 = vsel %vm2151, %v1503, -inf
    %v3294 = vrot.slane %v3293, 4
    %v3295 = vmax.f32 %v3293, %v3294
    %v3296 = vrot.slane %v3295, 2
    %v3297 = vmax.f32 %v3295, %v3296
    %v3298 = vrot.slane %v3297, 1
    %v3299 = vmax.f32 %v3297, %v3298
    %v3300 = vsel %vm2151, %v1511, -inf
    %v3301 = vrot.slane %v3300, 4
    %v3302 = vmax.f32 %v3300, %v3301
    %v3303 = vrot.slane %v3302, 2
    %v3304 = vmax.f32 %v3302, %v3303
    %v3305 = vrot.slane %v3304, 1
    %v3306 = vmax.f32 %v3304, %v3305
    %v3307 = vsel %vm2151, %v1519, -inf
    %v3308 = vrot.slane %v3307, 4
    %v3309 = vmax.f32 %v3307, %v3308
    %v3310 = vrot.slane %v3309, 2
    %v3311 = vmax.f32 %v3309, %v3310
    %v3312 = vrot.slane %v3311, 1
    %v3313 = vmax.f32 %v3311, %v3312
    %v3314 = vsel %vm2151, %v1518, -inf
    %v3315 = vrot.slane %v3314, 4
    %v3316 = vmax.f32 %v3314, %v3315
    %v3317 = vrot.slane %v3316, 2
    %v3318 = vmax.f32 %v3316, %v3317
    %v3319 = vrot.slane %v3318, 1
    %v3320 = vmax.f32 %v3318, %v3319
    %v3321 = vsel %vm2151, %v1520, -inf
    %v3322 = vrot.slane %v3321, 4
    %v3323 = vmax.f32 %v3321, %v3322
    %v3324 = vrot.slane %v3323, 2
    %v3325 = vmax.f32 %v3323, %v3324
    %v3326 = vrot.slane %v3325, 1
    %v3327 = vmax.f32 %v3325, %v3326
    %v3328 = vsel %vm2151, %v1528, -inf
    %v3329 = vrot.slane %v3328, 4
    %v3330 = vmax.f32 %v3328, %v3329
    %v3331 = vrot.slane %v3330, 2
    %v3332 = vmax.f32 %v3330, %v3331
    %v3333 = vrot.slane %v3332, 1
    %v3334 = vmax.f32 %v3332, %v3333
    %v3335 = vsel %vm2151, %v1536, -inf
    %v3336 = vrot.slane %v3335, 4
    %v3337 = vmax.f32 %v3335, %v3336
    %v3338 = vrot.slane %v3337, 2
    %v3339 = vmax.f32 %v3337, %v3338
    %v3340 = vrot.slane %v3339, 1
    %v3341 = vmax.f32 %v3339, %v3340
    %v3342 = vsel %vm2151, %v1535, -inf
    %v3343 = vrot.slane %v3342, 4
    %v3344 = vmax.f32 %v3342, %v3343
    %v3345 = vrot.slane %v3344, 2
    %v3346 = vmax.f32 %v3344, %v3345
    %v3347 = vrot.slane %v3346, 1
    %v3348 = vmax.f32 %v3346, %v3347
    %v3349 = vsel %vm2151, %v1537, -inf
    %v3350 = vrot.slane %v3349, 4
    %v3351 = vmax.f32 %v3349, %v3350
    %v3352 = vrot.slane %v3351, 2
    %v3353 = vmax.f32 %v3351, %v3352
    %v3354 = vrot.slane %v3353, 1
    %v3355 = vmax.f32 %v3353, %v3354
    %v3356 = vsel %vm2151, %v1545, -inf
    %v3357 = vrot.slane %v3356, 4
    %v3358 = vmax.f32 %v3356, %v3357
    %v3359 = vrot.slane %v3358, 2
    %v3360 = vmax.f32 %v3358, %v3359
    %v3361 = vrot.slane %v3360, 1
    %v3362 = vmax.f32 %v3360, %v3361
    %v3363 = vsel %vm2151, %v1553, -inf
    %v3364 = vrot.slane %v3363, 4
    %v3365 = vmax.f32 %v3363, %v3364
    %v3366 = vrot.slane %v3365, 2
    %v3367 = vmax.f32 %v3365, %v3366
    %v3368 = vrot.slane %v3367, 1
    %v3369 = vmax.f32 %v3367, %v3368
    %v3370 = vsel %vm2151, %v1552, -inf
    %v3371 = vrot.slane %v3370, 4
    %v3372 = vmax.f32 %v3370, %v3371
    %v3373 = vrot.slane %v3372, 2
    %v3374 = vmax.f32 %v3372, %v3373
    %v3375 = vrot.slane %v3374, 1
    %v3376 = vmax.f32 %v3374, %v3375
    %v3377 = vsel %vm2151, %v1554, -inf
    %v3378 = vrot.slane %v3377, 4
    %v3379 = vmax.f32 %v3377, %v3378
    %v3380 = vrot.slane %v3379, 2
    %v3381 = vmax.f32 %v3379, %v3380
    %v3382 = vrot.slane %v3381, 1
    %v3383 = vmax.f32 %v3381, %v3382
    %v3384 = vsel %vm2151, %v1562, -inf
    %v3385 = vrot.slane %v3384, 4
    %v3386 = vmax.f32 %v3384, %v3385
    %v3387 = vrot.slane %v3386, 2
    %v3388 = vmax.f32 %v3386, %v3387
    %v3389 = vrot.slane %v3388, 1
    %v3390 = vmax.f32 %v3388, %v3389
    %v3391 = vsel %vm2151, %v1570, -inf
    %v3392 = vrot.slane %v3391, 4
    %v3393 = vmax.f32 %v3391, %v3392
    %v3394 = vrot.slane %v3393, 2
    %v3395 = vmax.f32 %v3393, %v3394
    %v3396 = vrot.slane %v3395, 1
    %v3397 = vmax.f32 %v3395, %v3396
    %v3398 = vsel %vm2151, %v1569, -inf
    %v3399 = vrot.slane %v3398, 4
    %v3400 = vmax.f32 %v3398, %v3399
    %v3401 = vrot.slane %v3400, 2
    %v3402 = vmax.f32 %v3400, %v3401
    %v3403 = vrot.slane %v3402, 1
    %v3404 = vmax.f32 %v3402, %v3403
    %v3405 = vsel %vm2151, %v1571, -inf
    %v3406 = vrot.slane %v3405, 4
    %v3407 = vmax.f32 %v3405, %v3406
    %v3408 = vrot.slane %v3407, 2
    %v3409 = vmax.f32 %v3407, %v3408
    %v3410 = vrot.slane %v3409, 1
    %v3411 = vmax.f32 %v3409, %v3410
    %v3412 = vsel %vm2151, %v1579, -inf
    %v3413 = vrot.slane %v3412, 4
    %v3414 = vmax.f32 %v3412, %v3413
    %v3415 = vrot.slane %v3414, 2
    %v3416 = vmax.f32 %v3414, %v3415
    %v3417 = vrot.slane %v3416, 1
    %v3418 = vmax.f32 %v3416, %v3417
    %v3419 = vsel %vm2151, %v1587, -inf
    %v3420 = vrot.slane %v3419, 4
    %v3421 = vmax.f32 %v3419, %v3420
    %v3422 = vrot.slane %v3421, 2
    %v3423 = vmax.f32 %v3421, %v3422
    %v3424 = vrot.slane %v3423, 1
    %v3425 = vmax.f32 %v3423, %v3424
    %v3426 = vsel %vm2151, %v1586, -inf
    %v3427 = vrot.slane %v3426, 4
    %v3428 = vmax.f32 %v3426, %v3427
    %v3429 = vrot.slane %v3428, 2
    %v3430 = vmax.f32 %v3428, %v3429
    %v3431 = vrot.slane %v3430, 1
    %v3432 = vmax.f32 %v3430, %v3431
    %v3433 = vsel %vm2151, %v1588, -inf
    %v3434 = vrot.slane %v3433, 4
    %v3435 = vmax.f32 %v3433, %v3434
    %v3436 = vrot.slane %v3435, 2
    %v3437 = vmax.f32 %v3435, %v3436
    %v3438 = vrot.slane %v3437, 1
    %v3439 = vmax.f32 %v3437, %v3438
    %v3440 = vsel %vm2151, %v1596, -inf
    %v3441 = vrot.slane %v3440, 4
    %v3442 = vmax.f32 %v3440, %v3441
    %v3443 = vrot.slane %v3442, 2
    %v3444 = vmax.f32 %v3442, %v3443
    %v3445 = vrot.slane %v3444, 1
    %v3446 = vmax.f32 %v3444, %v3445
    %v3447 = vsel %vm2151, %v1604, -inf
    %v3448 = vrot.slane %v3447, 4
    %v3449 = vmax.f32 %v3447, %v3448
    %v3450 = vrot.slane %v3449, 2
    %v3451 = vmax.f32 %v3449, %v3450
    %v3452 = vrot.slane %v3451, 1
    %v3453 = vmax.f32 %v3451, %v3452
    %v3454 = vsel %vm2151, %v1603, -inf
    %v3455 = vrot.slane %v3454, 4
    %v3456 = vmax.f32 %v3454, %v3455
    %v3457 = vrot.slane %v3456, 2
    %v3458 = vmax.f32 %v3456, %v3457
    %v3459 = vrot.slane %v3458, 1
    %v3460 = vmax.f32 %v3458, %v3459
    %v3461 = vsel %vm2151, %v1605, -inf
    %v3462 = vrot.slane %v3461, 4
    %v3463 = vmax.f32 %v3461, %v3462
    %v3464 = vrot.slane %v3463, 2
    %v3465 = vmax.f32 %v3463, %v3464
    %v3466 = vrot.slane %v3465, 1
    %v3467 = vmax.f32 %v3465, %v3466
    %v3468 = vsel %vm2151, %v1613, -inf
    %v3469 = vrot.slane %v3468, 4
    %v3470 = vmax.f32 %v3468, %v3469
    %v3471 = vrot.slane %v3470, 2
    %v3472 = vmax.f32 %v3470, %v3471
    %v3473 = vrot.slane %v3472, 1
    %v3474 = vmax.f32 %v3472, %v3473
    %v3475 = vsel %vm2151, %v1621, -inf
    %v3476 = vrot.slane %v3475, 4
    %v3477 = vmax.f32 %v3475, %v3476
    %v3478 = vrot.slane %v3477, 2
    %v3479 = vmax.f32 %v3477, %v3478
    %v3480 = vrot.slane %v3479, 1
    %v3481 = vmax.f32 %v3479, %v3480
    %v3482 = vsel %vm2151, %v1620, -inf
    %v3483 = vrot.slane %v3482, 4
    %v3484 = vmax.f32 %v3482, %v3483
    %v3485 = vrot.slane %v3484, 2
    %v3486 = vmax.f32 %v3484, %v3485
    %v3487 = vrot.slane %v3486, 1
    %v3488 = vmax.f32 %v3486, %v3487
    %v3489 = vsel %vm2151, %v1622, -inf
    %v3490 = vrot.slane %v3489, 4
    %v3491 = vmax.f32 %v3489, %v3490
    %v3492 = vrot.slane %v3491, 2
    %v3493 = vmax.f32 %v3491, %v3492
    %v3494 = vrot.slane %v3493, 1
    %v3495 = vmax.f32 %v3493, %v3494
    %v3496 = vsel %vm2151, %v1630, -inf
    %v3497 = vrot.slane %v3496, 4
    %v3498 = vmax.f32 %v3496, %v3497
    %v3499 = vrot.slane %v3498, 2
    %v3500 = vmax.f32 %v3498, %v3499
    %v3501 = vrot.slane %v3500, 1
    %v3502 = vmax.f32 %v3500, %v3501
    %v3503 = vsel %vm2151, %v1638, -inf
    %v3504 = vrot.slane %v3503, 4
    %v3505 = vmax.f32 %v3503, %v3504
    %v3506 = vrot.slane %v3505, 2
    %v3507 = vmax.f32 %v3505, %v3506
    %v3508 = vrot.slane %v3507, 1
    %v3509 = vmax.f32 %v3507, %v3508
    %v3510 = vsel %vm2151, %v1637, -inf
    %v3511 = vrot.slane %v3510, 4
    %v3512 = vmax.f32 %v3510, %v3511
    %v3513 = vrot.slane %v3512, 2
    %v3514 = vmax.f32 %v3512, %v3513
    %v3515 = vrot.slane %v3514, 1
    %v3516 = vmax.f32 %v3514, %v3515
    %v3517 = vsel %vm2151, %v1639, -inf
    %v3518 = vrot.slane %v3517, 4
    %v3519 = vmax.f32 %v3517, %v3518
    %v3520 = vrot.slane %v3519, 2
    %v3521 = vmax.f32 %v3519, %v3520
    %v3522 = vrot.slane %v3521, 1
    %v3523 = vmax.f32 %v3521, %v3522
    %v3524 = vsel %vm2151, %v1647, -inf
    %v3525 = vrot.slane %v3524, 4
    %v3526 = vmax.f32 %v3524, %v3525
    %v3527 = vrot.slane %v3526, 2
    %v3528 = vmax.f32 %v3526, %v3527
    %v3529 = vrot.slane %v3528, 1
    %v3530 = vmax.f32 %v3528, %v3529
    %v3531 = vsel %vm2151, %v1655, -inf
    %v3532 = vrot.slane %v3531, 4
    %v3533 = vmax.f32 %v3531, %v3532
    %v3534 = vrot.slane %v3533, 2
    %v3535 = vmax.f32 %v3533, %v3534
    %v3536 = vrot.slane %v3535, 1
    %v3537 = vmax.f32 %v3535, %v3536
    %v3538 = vsel %vm2151, %v1654, -inf
    %v3539 = vrot.slane %v3538, 4
    %v3540 = vmax.f32 %v3538, %v3539
    %v3541 = vrot.slane %v3540, 2
    %v3542 = vmax.f32 %v3540, %v3541
    %v3543 = vrot.slane %v3542, 1
    %v3544 = vmax.f32 %v3542, %v3543
    %v3545 = vsel %vm2151, %v1656, -inf
    %v3546 = vrot.slane %v3545, 4
    %v3547 = vmax.f32 %v3545, %v3546
    %v3548 = vrot.slane %v3547, 2
    %v3549 = vmax.f32 %v3547, %v3548
    %v3550 = vrot.slane %v3549, 1
    %v3551 = vmax.f32 %v3549, %v3550
    %v3552 = vsel %vm2151, %v1664, -inf
    %v3553 = vrot.slane %v3552, 4
    %v3554 = vmax.f32 %v3552, %v3553
    %v3555 = vrot.slane %v3554, 2
    %v3556 = vmax.f32 %v3554, %v3555
    %v3557 = vrot.slane %v3556, 1
    %v3558 = vmax.f32 %v3556, %v3557
    %v3559 = vsel %vm2151, %v1672, -inf
    %v3560 = vrot.slane %v3559, 4
    %v3561 = vmax.f32 %v3559, %v3560
    %v3562 = vrot.slane %v3561, 2
    %v3563 = vmax.f32 %v3561, %v3562
    %v3564 = vrot.slane %v3563, 1
    %v3565 = vmax.f32 %v3563, %v3564
    %v3566 = vsel %vm2151, %v1671, -inf
    %v3567 = vrot.slane %v3566, 4
    %v3568 = vmax.f32 %v3566, %v3567
    %v3569 = vrot.slane %v3568, 2
    %v3570 = vmax.f32 %v3568, %v3569
    %v3571 = vrot.slane %v3570, 1
    %v3572 = vmax.f32 %v3570, %v3571
    %v3573 = vsel %vm2151, %v1673, -inf
    %v3574 = vrot.slane %v3573, 4
    %v3575 = vmax.f32 %v3573, %v3574
    %v3576 = vrot.slane %v3575, 2
    %v3577 = vmax.f32 %v3575, %v3576
    %v3578 = vrot.slane %v3577, 1
    %v3579 = vmax.f32 %v3577, %v3578
    %v3580 = vsel %vm2151, %v1681, -inf
    %v3581 = vrot.slane %v3580, 4
    %v3582 = vmax.f32 %v3580, %v3581
    %v3583 = vrot.slane %v3582, 2
    %v3584 = vmax.f32 %v3582, %v3583
    %v3585 = vrot.slane %v3584, 1
    %v3586 = vmax.f32 %v3584, %v3585
    %v3587 = vsel %vm2151, %v1689, -inf
    %v3588 = vrot.slane %v3587, 4
    %v3589 = vmax.f32 %v3587, %v3588
    %v3590 = vrot.slane %v3589, 2
    %v3591 = vmax.f32 %v3589, %v3590
    %v3592 = vrot.slane %v3591, 1
    %v3593 = vmax.f32 %v3591, %v3592
    %v3594 = vsel %vm2151, %v1688, -inf
    %v3595 = vrot.slane %v3594, 4
    %v3596 = vmax.f32 %v3594, %v3595
    %v3597 = vrot.slane %v3596, 2
    %v3598 = vmax.f32 %v3596, %v3597
    %v3599 = vrot.slane %v3598, 1
    %v3600 = vmax.f32 %v3598, %v3599
    %v3601 = vsel %vm2151, %v1690, -inf
    %v3602 = vrot.slane %v3601, 4
    %v3603 = vmax.f32 %v3601, %v3602
    %v3604 = vrot.slane %v3603, 2
    %v3605 = vmax.f32 %v3603, %v3604
    %v3606 = vrot.slane %v3605, 1
    %v3607 = vmax.f32 %v3605, %v3606
    %v3608 = vsel %vm2151, %v1698, -inf
    %v3609 = vrot.slane %v3608, 4
    %v3610 = vmax.f32 %v3608, %v3609
    %v3611 = vrot.slane %v3610, 2
    %v3612 = vmax.f32 %v3610, %v3611
    %v3613 = vrot.slane %v3612, 1
    %v3614 = vmax.f32 %v3612, %v3613
    %v3615 = vsel %vm2151, %v1706, -inf
    %v3616 = vrot.slane %v3615, 4
    %v3617 = vmax.f32 %v3615, %v3616
    %v3618 = vrot.slane %v3617, 2
    %v3619 = vmax.f32 %v3617, %v3618
    %v3620 = vrot.slane %v3619, 1
    %v3621 = vmax.f32 %v3619, %v3620
    %v3622 = vsel %vm2151, %v1705, -inf
    %v3623 = vrot.slane %v3622, 4
    %v3624 = vmax.f32 %v3622, %v3623
    %v3625 = vrot.slane %v3624, 2
    %v3626 = vmax.f32 %v3624, %v3625
    %v3627 = vrot.slane %v3626, 1
    %v3628 = vmax.f32 %v3626, %v3627
    %v3629 = vsel %vm2151, %v1707, -inf
    %v3630 = vrot.slane %v3629, 4
    %v3631 = vmax.f32 %v3629, %v3630
    %v3632 = vrot.slane %v3631, 2
    %v3633 = vmax.f32 %v3631, %v3632
    %v3634 = vrot.slane %v3633, 1
    %v3635 = vmax.f32 %v3633, %v3634
    %v3636 = vsel %vm2151, %v1715, -inf
    %v3637 = vrot.slane %v3636, 4
    %v3638 = vmax.f32 %v3636, %v3637
    %v3639 = vrot.slane %v3638, 2
    %v3640 = vmax.f32 %v3638, %v3639
    %v3641 = vrot.slane %v3640, 1
    %v3642 = vmax.f32 %v3640, %v3641
    %v3643 = vsel %vm2151, %v1723, -inf
    %v3644 = vrot.slane %v3643, 4
    %v3645 = vmax.f32 %v3643, %v3644
    %v3646 = vrot.slane %v3645, 2
    %v3647 = vmax.f32 %v3645, %v3646
    %v3648 = vrot.slane %v3647, 1
    %v3649 = vmax.f32 %v3647, %v3648
    %v3650 = vsel %vm2151, %v1722, -inf
    %v3651 = vrot.slane %v3650, 4
    %v3652 = vmax.f32 %v3650, %v3651
    %v3653 = vrot.slane %v3652, 2
    %v3654 = vmax.f32 %v3652, %v3653
    %v3655 = vrot.slane %v3654, 1
    %v3656 = vmax.f32 %v3654, %v3655
    %v3657 = vsel %vm2151, %v1724, -inf
    %v3658 = vrot.slane %v3657, 4
    %v3659 = vmax.f32 %v3657, %v3658
    %v3660 = vrot.slane %v3659, 2
    %v3661 = vmax.f32 %v3659, %v3660
    %v3662 = vrot.slane %v3661, 1
    %v3663 = vmax.f32 %v3661, %v3662
    %v3664 = vsel %vm2151, %v1732, -inf
    %v3665 = vrot.slane %v3664, 4
    %v3666 = vmax.f32 %v3664, %v3665
    %v3667 = vrot.slane %v3666, 2
    %v3668 = vmax.f32 %v3666, %v3667
    %v3669 = vrot.slane %v3668, 1
    %v3670 = vmax.f32 %v3668, %v3669
    %v3671 = vsel %vm2151, %v1740, -inf
    %v3672 = vrot.slane %v3671, 4
    %v3673 = vmax.f32 %v3671, %v3672
    %v3674 = vrot.slane %v3673, 2
    %v3675 = vmax.f32 %v3673, %v3674
    %v3676 = vrot.slane %v3675, 1
    %v3677 = vmax.f32 %v3675, %v3676
    %v3678 = vsel %vm2151, %v1739, -inf
    %v3679 = vrot.slane %v3678, 4
    %v3680 = vmax.f32 %v3678, %v3679
    %v3681 = vrot.slane %v3680, 2
    %v3682 = vmax.f32 %v3680, %v3681
    %v3683 = vrot.slane %v3682, 1
    %v3684 = vmax.f32 %v3682, %v3683
    %v3685 = vsel %vm2151, %v1741, -inf
    %v3686 = vrot.slane %v3685, 4
    %v3687 = vmax.f32 %v3685, %v3686
    %v3688 = vrot.slane %v3687, 2
    %v3689 = vmax.f32 %v3687, %v3688
    %v3690 = vrot.slane %v3689, 1
    %v3691 = vmax.f32 %v3689, %v3690
    %v3692 = vsel %vm2151, %v1749, -inf
    %v3693 = vrot.slane %v3692, 4
    %v3694 = vmax.f32 %v3692, %v3693
    %v3695 = vrot.slane %v3694, 2
    %v3696 = vmax.f32 %v3694, %v3695
    %v3697 = vrot.slane %v3696, 1
    %v3698 = vmax.f32 %v3696, %v3697
    %v3699 = vsel %vm2151, %v1757, -inf
    %v3700 = vrot.slane %v3699, 4
    %v3701 = vmax.f32 %v3699, %v3700
    %v3702 = vrot.slane %v3701, 2
    %v3703 = vmax.f32 %v3701, %v3702
    %v3704 = vrot.slane %v3703, 1
    %v3705 = vmax.f32 %v3703, %v3704
    %v3706 = vsel %vm2151, %v1756, -inf
    %v3707 = vrot.slane %v3706, 4
    %v3708 = vmax.f32 %v3706, %v3707
    %v3709 = vrot.slane %v3708, 2
    %v3710 = vmax.f32 %v3708, %v3709
    %v3711 = vrot.slane %v3710, 1
    %v3712 = vmax.f32 %v3710, %v3711
    %v3713 = vsel %vm2151, %v1758, -inf
    %v3714 = vrot.slane %v3713, 4
    %v3715 = vmax.f32 %v3713, %v3714
    %v3716 = vrot.slane %v3715, 2
    %v3717 = vmax.f32 %v3715, %v3716
    %v3718 = vrot.slane %v3717, 1
    %v3719 = vmax.f32 %v3717, %v3718
    %v3720 = vsel %vm2151, %v1766, -inf
    %v3721 = vrot.slane %v3720, 4
    %v3722 = vmax.f32 %v3720, %v3721
    %v3723 = vrot.slane %v3722, 2
    %v3724 = vmax.f32 %v3722, %v3723
    %v3725 = vrot.slane %v3724, 1
    %v3726 = vmax.f32 %v3724, %v3725
    %v3727 = vsel %vm2151, %v1774, -inf
    %v3728 = vrot.slane %v3727, 4
    %v3729 = vmax.f32 %v3727, %v3728
    %v3730 = vrot.slane %v3729, 2
    %v3731 = vmax.f32 %v3729, %v3730
    %v3732 = vrot.slane %v3731, 1
    %v3733 = vmax.f32 %v3731, %v3732
    %v3734 = vsel %vm2151, %v1773, -inf
    %v3735 = vrot.slane %v3734, 4
    %v3736 = vmax.f32 %v3734, %v3735
    %v3737 = vrot.slane %v3736, 2
    %v3738 = vmax.f32 %v3736, %v3737
    %v3739 = vrot.slane %v3738, 1
    %v3740 = vmax.f32 %v3738, %v3739
    %v3741 = vsel %vm2151, %v1775, -inf
    %v3742 = vrot.slane %v3741, 4
    %v3743 = vmax.f32 %v3741, %v3742
    %v3744 = vrot.slane %v3743, 2
    %v3745 = vmax.f32 %v3743, %v3744
    %v3746 = vrot.slane %v3745, 1
    %v3747 = vmax.f32 %v3745, %v3746
    %v3748 = vsel %vm2151, %v1783, -inf
    %v3749 = vrot.slane %v3748, 4
    %v3750 = vmax.f32 %v3748, %v3749
    %v3751 = vrot.slane %v3750, 2
    %v3752 = vmax.f32 %v3750, %v3751
    %v3753 = vrot.slane %v3752, 1
    %v3754 = vmax.f32 %v3752, %v3753
    %v3755 = vsel %vm2151, %v1791, -inf
    %v3756 = vrot.slane %v3755, 4
    %v3757 = vmax.f32 %v3755, %v3756
    %v3758 = vrot.slane %v3757, 2
    %v3759 = vmax.f32 %v3757, %v3758
    %v3760 = vrot.slane %v3759, 1
    %v3761 = vmax.f32 %v3759, %v3760
    %v3762 = vsel %vm2151, %v1790, -inf
    %v3763 = vrot.slane %v3762, 4
    %v3764 = vmax.f32 %v3762, %v3763
    %v3765 = vrot.slane %v3764, 2
    %v3766 = vmax.f32 %v3764, %v3765
    %v3767 = vrot.slane %v3766, 1
    %v3768 = vmax.f32 %v3766, %v3767
    %v3769 = vsel %vm2151, %v1792, -inf
    %v3770 = vrot.slane %v3769, 4
    %v3771 = vmax.f32 %v3769, %v3770
    %v3772 = vrot.slane %v3771, 2
    %v3773 = vmax.f32 %v3771, %v3772
    %v3774 = vrot.slane %v3773, 1
    %v3775 = vmax.f32 %v3773, %v3774
    %v3776 = vsel %vm2151, %v1800, -inf
    %v3777 = vrot.slane %v3776, 4
    %v3778 = vmax.f32 %v3776, %v3777
    %v3779 = vrot.slane %v3778, 2
    %v3780 = vmax.f32 %v3778, %v3779
    %v3781 = vrot.slane %v3780, 1
    %v3782 = vmax.f32 %v3780, %v3781
    %v3783 = vsel %vm2151, %v1808, -inf
    %v3784 = vrot.slane %v3783, 4
    %v3785 = vmax.f32 %v3783, %v3784
    %v3786 = vrot.slane %v3785, 2
    %v3787 = vmax.f32 %v3785, %v3786
    %v3788 = vrot.slane %v3787, 1
    %v3789 = vmax.f32 %v3787, %v3788
    %v3790 = vsel %vm2151, %v1807, -inf
    %v3791 = vrot.slane %v3790, 4
    %v3792 = vmax.f32 %v3790, %v3791
    %v3793 = vrot.slane %v3792, 2
    %v3794 = vmax.f32 %v3792, %v3793
    %v3795 = vrot.slane %v3794, 1
    %v3796 = vmax.f32 %v3794, %v3795
    %v3797 = vsel %vm2151, %v1809, -inf
    %v3798 = vrot.slane %v3797, 4
    %v3799 = vmax.f32 %v3797, %v3798
    %v3800 = vrot.slane %v3799, 2
    %v3801 = vmax.f32 %v3799, %v3800
    %v3802 = vrot.slane %v3801, 1
    %v3803 = vmax.f32 %v3801, %v3802
    %v3804 = vsel %vm2151, %v1817, -inf
    %v3805 = vrot.slane %v3804, 4
    %v3806 = vmax.f32 %v3804, %v3805
    %v3807 = vrot.slane %v3806, 2
    %v3808 = vmax.f32 %v3806, %v3807
    %v3809 = vrot.slane %v3808, 1
    %v3810 = vmax.f32 %v3808, %v3809
    %v3811 = vsel %vm2151, %v1825, -inf
    %v3812 = vrot.slane %v3811, 4
    %v3813 = vmax.f32 %v3811, %v3812
    %v3814 = vrot.slane %v3813, 2
    %v3815 = vmax.f32 %v3813, %v3814
    %v3816 = vrot.slane %v3815, 1
    %v3817 = vmax.f32 %v3815, %v3816
    %v3818 = vsel %vm2151, %v1824, -inf
    %v3819 = vrot.slane %v3818, 4
    %v3820 = vmax.f32 %v3818, %v3819
    %v3821 = vrot.slane %v3820, 2
    %v3822 = vmax.f32 %v3820, %v3821
    %v3823 = vrot.slane %v3822, 1
    %v3824 = vmax.f32 %v3822, %v3823
    %v3825 = vsel %vm2151, %v1826, -inf
    %v3826 = vrot.slane %v3825, 4
    %v3827 = vmax.f32 %v3825, %v3826
    %v3828 = vrot.slane %v3827, 2
    %v3829 = vmax.f32 %v3827, %v3828
    %v3830 = vrot.slane %v3829, 1
    %v3831 = vmax.f32 %v3829, %v3830
    %v3832 = vsel %vm2151, %v1834, -inf
    %v3833 = vrot.slane %v3832, 4
    %v3834 = vmax.f32 %v3832, %v3833
    %v3835 = vrot.slane %v3834, 2
    %v3836 = vmax.f32 %v3834, %v3835
    %v3837 = vrot.slane %v3836, 1
    %v3838 = vmax.f32 %v3836, %v3837
    %v3839 = vsel %vm2151, %v1842, -inf
    %v3840 = vrot.slane %v3839, 4
    %v3841 = vmax.f32 %v3839, %v3840
    %v3842 = vrot.slane %v3841, 2
    %v3843 = vmax.f32 %v3841, %v3842
    %v3844 = vrot.slane %v3843, 1
    %v3845 = vmax.f32 %v3843, %v3844
    %v3846 = vsel %vm2151, %v1841, -inf
    %v3847 = vrot.slane %v3846, 4
    %v3848 = vmax.f32 %v3846, %v3847
    %v3849 = vrot.slane %v3848, 2
    %v3850 = vmax.f32 %v3848, %v3849
    %v3851 = vrot.slane %v3850, 1
    %v3852 = vmax.f32 %v3850, %v3851
    %v3853 = vsel %vm2151, %v1843, -inf
    %v3854 = vrot.slane %v3853, 4
    %v3855 = vmax.f32 %v3853, %v3854
    %v3856 = vrot.slane %v3855, 2
    %v3857 = vmax.f32 %v3855, %v3856
    %v3858 = vrot.slane %v3857, 1
    %v3859 = vmax.f32 %v3857, %v3858
    %v3860 = vsel %vm2151, %v1851, -inf
    %v3861 = vrot.slane %v3860, 4
    %v3862 = vmax.f32 %v3860, %v3861
    %v3863 = vrot.slane %v3862, 2
    %v3864 = vmax.f32 %v3862, %v3863
    %v3865 = vrot.slane %v3864, 1
    %v3866 = vmax.f32 %v3864, %v3865
    %v3867 = vsel %vm2151, %v1859, -inf
    %v3868 = vrot.slane %v3867, 4
    %v3869 = vmax.f32 %v3867, %v3868
    %v3870 = vrot.slane %v3869, 2
    %v3871 = vmax.f32 %v3869, %v3870
    %v3872 = vrot.slane %v3871, 1
    %v3873 = vmax.f32 %v3871, %v3872
    %v3874 = vsel %vm2151, %v1858, -inf
    %v3875 = vrot.slane %v3874, 4
    %v3876 = vmax.f32 %v3874, %v3875
    %v3877 = vrot.slane %v3876, 2
    %v3878 = vmax.f32 %v3876, %v3877
    %v3879 = vrot.slane %v3878, 1
    %v3880 = vmax.f32 %v3878, %v3879
    %v3881 = vsel %vm2151, %v1860, -inf
    %v3882 = vrot.slane %v3881, 4
    %v3883 = vmax.f32 %v3881, %v3882
    %v3884 = vrot.slane %v3883, 2
    %v3885 = vmax.f32 %v3883, %v3884
    %v3886 = vrot.slane %v3885, 1
    %v3887 = vmax.f32 %v3885, %v3886
    %v3888 = vsel %vm2151, %v1868, -inf
    %v3889 = vrot.slane %v3888, 4
    %v3890 = vmax.f32 %v3888, %v3889
    %v3891 = vrot.slane %v3890, 2
    %v3892 = vmax.f32 %v3890, %v3891
    %v3893 = vrot.slane %v3892, 1
    %v3894 = vmax.f32 %v3892, %v3893
    %v3895 = vsel %vm2151, %v1876, -inf
    %v3896 = vrot.slane %v3895, 4
    %v3897 = vmax.f32 %v3895, %v3896
    %v3898 = vrot.slane %v3897, 2
    %v3899 = vmax.f32 %v3897, %v3898
    %v3900 = vrot.slane %v3899, 1
    %v3901 = vmax.f32 %v3899, %v3900
    %v3902 = vsel %vm2151, %v1875, -inf
    %v3903 = vrot.slane %v3902, 4
    %v3904 = vmax.f32 %v3902, %v3903
    %v3905 = vrot.slane %v3904, 2
    %v3906 = vmax.f32 %v3904, %v3905
    %v3907 = vrot.slane %v3906, 1
    %v3908 = vmax.f32 %v3906, %v3907
    %v3909 = vsel %vm2151, %v1877, -inf
    %v3910 = vrot.slane %v3909, 4
    %v3911 = vmax.f32 %v3909, %v3910
    %v3912 = vrot.slane %v3911, 2
    %v3913 = vmax.f32 %v3911, %v3912
    %v3914 = vrot.slane %v3913, 1
    %v3915 = vmax.f32 %v3913, %v3914
    %v3916 = vsel %vm2151, %v1885, -inf
    %v3917 = vrot.slane %v3916, 4
    %v3918 = vmax.f32 %v3916, %v3917
    %v3919 = vrot.slane %v3918, 2
    %v3920 = vmax.f32 %v3918, %v3919
    %v3921 = vrot.slane %v3920, 1
    %v3922 = vmax.f32 %v3920, %v3921
    %v3923 = vsel %vm2151, %v1893, -inf
    %v3924 = vrot.slane %v3923, 4
    %v3925 = vmax.f32 %v3923, %v3924
    %v3926 = vrot.slane %v3925, 2
    %v3927 = vmax.f32 %v3925, %v3926
    %v3928 = vrot.slane %v3927, 1
    %v3929 = vmax.f32 %v3927, %v3928
    %v3930 = vsel %vm2151, %v1892, -inf
    %v3931 = vrot.slane %v3930, 4
    %v3932 = vmax.f32 %v3930, %v3931
    %v3933 = vrot.slane %v3932, 2
    %v3934 = vmax.f32 %v3932, %v3933
    %v3935 = vrot.slane %v3934, 1
    %v3936 = vmax.f32 %v3934, %v3935
    %v3937 = vsel %vm2151, %v1894, -inf
    %v3938 = vrot.slane %v3937, 4
    %v3939 = vmax.f32 %v3937, %v3938
    %v3940 = vrot.slane %v3939, 2
    %v3941 = vmax.f32 %v3939, %v3940
    %v3942 = vrot.slane %v3941, 1
    %v3943 = vmax.f32 %v3941, %v3942
    %vm3944 = vcmask 261120
    %v3945 = vsel %vm3944, %v2158, -inf
    %v3946 = vsel %vm3944, %v2214, -inf
    %v3947 = vmax.f32 %v3945, %v3946
    %v3948 = vsel %vm3944, %v2165, -inf
    %v3949 = vsel %vm3944, %v2221, -inf
    %v3950 = vmax.f32 %v3948, %v3949
    %v3951 = vsel %vm3944, %v2172, -inf
    %v3952 = vsel %vm3944, %v2228, -inf
    %v3953 = vmax.f32 %v3951, %v3952
    %v3954 = vsel %vm3944, %v2179, -inf
    %v3955 = vsel %vm3944, %v2235, -inf
    %v3956 = vmax.f32 %v3954, %v3955
    %v3957 = vsel %vm3944, %v2186, -inf
    %v3958 = vsel %vm3944, %v2242, -inf
    %v3959 = vmax.f32 %v3957, %v3958
    %v3960 = vsel %vm3944, %v2193, -inf
    %v3961 = vsel %vm3944, %v2249, -inf
    %v3962 = vmax.f32 %v3960, %v3961
    %v3963 = vsel %vm3944, %v2200, -inf
    %v3964 = vsel %vm3944, %v2256, -inf
    %v3965 = vmax.f32 %v3963, %v3964
    %v3966 = vsel %vm3944, %v2207, -inf
    %v3967 = vsel %vm3944, %v2263, -inf
    %v3968 = vmax.f32 %v3966, %v3967
    %v3969 = vsel %vm3944, %v2270, -inf
    %v3970 = vsel %vm3944, %v2326, -inf
    %v3971 = vmax.f32 %v3969, %v3970
    %v3972 = vsel %vm3944, %v2277, -inf
    %v3973 = vsel %vm3944, %v2333, -inf
    %v3974 = vmax.f32 %v3972, %v3973
    %v3975 = vsel %vm3944, %v2284, -inf
    %v3976 = vsel %vm3944, %v2340, -inf
    %v3977 = vmax.f32 %v3975, %v3976
    %v3978 = vsel %vm3944, %v2291, -inf
    %v3979 = vsel %vm3944, %v2347, -inf
    %v3980 = vmax.f32 %v3978, %v3979
    %v3981 = vsel %vm3944, %v2298, -inf
    %v3982 = vsel %vm3944, %v2354, -inf
    %v3983 = vmax.f32 %v3981, %v3982
    %v3984 = vsel %vm3944, %v2305, -inf
    %v3985 = vsel %vm3944, %v2361, -inf
    %v3986 = vmax.f32 %v3984, %v3985
    %v3987 = vsel %vm3944, %v2312, -inf
    %v3988 = vsel %vm3944, %v2368, -inf
    %v3989 = vmax.f32 %v3987, %v3988
    %v3990 = vsel %vm3944, %v2319, -inf
    %v3991 = vsel %vm3944, %v2375, -inf
    %v3992 = vmax.f32 %v3990, %v3991
    %v3993 = vsel %vm3944, %v2382, -inf
    %v3994 = vsel %vm3944, %v2438, -inf
    %v3995 = vmax.f32 %v3993, %v3994
    %v3996 = vsel %vm3944, %v2389, -inf
    %v3997 = vsel %vm3944, %v2445, -inf
    %v3998 = vmax.f32 %v3996, %v3997
    %v3999 = vsel %vm3944, %v2396, -inf
    %v4000 = vsel %vm3944, %v2452, -inf
    %v4001 = vmax.f32 %v3999, %v4000
    %v4002 = vsel %vm3944, %v2403, -inf
    %v4003 = vsel %vm3944, %v2459, -inf
    %v4004 = vmax.f32 %v4002, %v4003
    %v4005 = vsel %vm3944, %v2410, -inf
    %v4006 = vsel %vm3944, %v2466, -inf
    %v4007 = vmax.f32 %v4005, %v4006
    %v4008 = vsel %vm3944, %v2417, -inf
    %v4009 = vsel %vm3944, %v2473, -inf
    %v4010 = vmax.f32 %v4008, %v4009
    %v4011 = vsel %vm3944, %v2424, -inf
    %v4012 = vsel %vm3944, %v2480, -inf
    %v4013 = vmax.f32 %v4011, %v4012
    %v4014 = vsel %vm3944, %v2431, -inf
    %v4015 = vsel %vm3944, %v2487, -inf
    %v4016 = vmax.f32 %v4014, %v4015
    %v4017 = vsel %vm3944, %v2494, -inf
    %v4018 = vsel %vm3944, %v2550, -inf
    %v4019 = vmax.f32 %v4017, %v4018
    %v4020 = vsel %vm3944, %v2501, -inf
    %v4021 = vsel %vm3944, %v2557, -inf
    %v4022 = vmax.f32 %v4020, %v4021
    %v4023 = vsel %vm3944, %v2508, -inf
    %v4024 = vsel %vm3944, %v2564, -inf
    %v4025 = vmax.f32 %v4023, %v4024
    %v4026 = vsel %vm3944, %v2515, -inf
    %v4027 = vsel %vm3944, %v2571, -inf
    %v4028 = vmax.f32 %v4026, %v4027
    %v4029 = vsel %vm3944, %v2522, -inf
    %v4030 = vsel %vm3944, %v2578, -inf
    %v4031 = vmax.f32 %v4029, %v4030
    %v4032 = vsel %vm3944, %v2529, -inf
    %v4033 = vsel %vm3944, %v2585, -inf
    %v4034 = vmax.f32 %v4032, %v4033
    %v4035 = vsel %vm3944, %v2536, -inf
    %v4036 = vsel %vm3944, %v2592, -inf
    %v4037 = vmax.f32 %v4035, %v4036
    %v4038 = vsel %vm3944, %v2543, -inf
    %v4039 = vsel %vm3944, %v2599, -inf
    %v4040 = vmax.f32 %v4038, %v4039
    %v4041 = vsel %vm3944, %v2606, -inf
    %v4042 = vsel %vm3944, %v2662, -inf
    %v4043 = vmax.f32 %v4041, %v4042
    %v4044 = vsel %vm3944, %v2613, -inf
    %v4045 = vsel %vm3944, %v2669, -inf
    %v4046 = vmax.f32 %v4044, %v4045
    %v4047 = vsel %vm3944, %v2620, -inf
    %v4048 = vsel %vm3944, %v2676, -inf
    %v4049 = vmax.f32 %v4047, %v4048
    %v4050 = vsel %vm3944, %v2627, -inf
    %v4051 = vsel %vm3944, %v2683, -inf
    %v4052 = vmax.f32 %v4050, %v4051
    %v4053 = vsel %vm3944, %v2634, -inf
    %v4054 = vsel %vm3944, %v2690, -inf
    %v4055 = vmax.f32 %v4053, %v4054
    %v4056 = vsel %vm3944, %v2641, -inf
    %v4057 = vsel %vm3944, %v2697, -inf
    %v4058 = vmax.f32 %v4056, %v4057
    %v4059 = vsel %vm3944, %v2648, -inf
    %v4060 = vsel %vm3944, %v2704, -inf
    %v4061 = vmax.f32 %v4059, %v4060
    %v4062 = vsel %vm3944, %v2655, -inf
    %v4063 = vsel %vm3944, %v2711, -inf
    %v4064 = vmax.f32 %v4062, %v4063
    %v4065 = vsel %vm3944, %v2718, -inf
    %v4066 = vsel %vm3944, %v2774, -inf
    %v4067 = vmax.f32 %v4065, %v4066
    %v4068 = vsel %vm3944, %v2725, -inf
    %v4069 = vsel %vm3944, %v2781, -inf
    %v4070 = vmax.f32 %v4068, %v4069
    %v4071 = vsel %vm3944, %v2732, -inf
    %v4072 = vsel %vm3944, %v2788, -inf
    %v4073 = vmax.f32 %v4071, %v4072
    %v4074 = vsel %vm3944, %v2739, -inf
    %v4075 = vsel %vm3944, %v2795, -inf
    %v4076 = vmax.f32 %v4074, %v4075
    %v4077 = vsel %vm3944, %v2746, -inf
    %v4078 = vsel %vm3944, %v2802, -inf
    %v4079 = vmax.f32 %v4077, %v4078
    %v4080 = vsel %vm3944, %v2753, -inf
    %v4081 = vsel %vm3944, %v2809, -inf
    %v4082 = vmax.f32 %v4080, %v4081
    %v4083 = vsel %vm3944, %v2760, -inf
    %v4084 = vsel %vm3944, %v2816, -inf
    %v4085 = vmax.f32 %v4083, %v4084
    %v4086 = vsel %vm3944, %v2767, -inf
    %v4087 = vsel %vm3944, %v2823, -inf
    %v4088 = vmax.f32 %v4086, %v4087
    %v4089 = vsel %vm3944, %v2830, -inf
    %v4090 = vsel %vm3944, %v2886, -inf
    %v4091 = vmax.f32 %v4089, %v4090
    %v4092 = vsel %vm3944, %v2837, -inf
    %v4093 = vsel %vm3944, %v2893, -inf
    %v4094 = vmax.f32 %v4092, %v4093
    %v4095 = vsel %vm3944, %v2844, -inf
    %v4096 = vsel %vm3944, %v2900, -inf
    %v4097 = vmax.f32 %v4095, %v4096
    %v4098 = vsel %vm3944, %v2851, -inf
    %v4099 = vsel %vm3944, %v2907, -inf
    %v4100 = vmax.f32 %v4098, %v4099
    %v4101 = vsel %vm3944, %v2858, -inf
    %v4102 = vsel %vm3944, %v2914, -inf
    %v4103 = vmax.f32 %v4101, %v4102
    %v4104 = vsel %vm3944, %v2865, -inf
    %v4105 = vsel %vm3944, %v2921, -inf
    %v4106 = vmax.f32 %v4104, %v4105
    %v4107 = vsel %vm3944, %v2872, -inf
    %v4108 = vsel %vm3944, %v2928, -inf
    %v4109 = vmax.f32 %v4107, %v4108
    %v4110 = vsel %vm3944, %v2879, -inf
    %v4111 = vsel %vm3944, %v2935, -inf
    %v4112 = vmax.f32 %v4110, %v4111
    %v4113 = vsel %vm3944, %v2942, -inf
    %v4114 = vsel %vm3944, %v2998, -inf
    %v4115 = vmax.f32 %v4113, %v4114
    %v4116 = vsel %vm3944, %v2949, -inf
    %v4117 = vsel %vm3944, %v3005, -inf
    %v4118 = vmax.f32 %v4116, %v4117
    %v4119 = vsel %vm3944, %v2956, -inf
    %v4120 = vsel %vm3944, %v3012, -inf
    %v4121 = vmax.f32 %v4119, %v4120
    %v4122 = vsel %vm3944, %v2963, -inf
    %v4123 = vsel %vm3944, %v3019, -inf
    %v4124 = vmax.f32 %v4122, %v4123
    %v4125 = vsel %vm3944, %v2970, -inf
    %v4126 = vsel %vm3944, %v3026, -inf
    %v4127 = vmax.f32 %v4125, %v4126
    %v4128 = vsel %vm3944, %v2977, -inf
    %v4129 = vsel %vm3944, %v3033, -inf
    %v4130 = vmax.f32 %v4128, %v4129
    %v4131 = vsel %vm3944, %v2984, -inf
    %v4132 = vsel %vm3944, %v3040, -inf
    %v4133 = vmax.f32 %v4131, %v4132
    %v4134 = vsel %vm3944, %v2991, -inf
    %v4135 = vsel %vm3944, %v3047, -inf
    %v4136 = vmax.f32 %v4134, %v4135
    %v4137 = vsel %vm3944, %v3054, -inf
    %v4138 = vsel %vm3944, %v3110, -inf
    %v4139 = vmax.f32 %v4137, %v4138
    %v4140 = vsel %vm3944, %v3061, -inf
    %v4141 = vsel %vm3944, %v3117, -inf
    %v4142 = vmax.f32 %v4140, %v4141
    %v4143 = vsel %vm3944, %v3068, -inf
    %v4144 = vsel %vm3944, %v3124, -inf
    %v4145 = vmax.f32 %v4143, %v4144
    %v4146 = vsel %vm3944, %v3075, -inf
    %v4147 = vsel %vm3944, %v3131, -inf
    %v4148 = vmax.f32 %v4146, %v4147
    %v4149 = vsel %vm3944, %v3082, -inf
    %v4150 = vsel %vm3944, %v3138, -inf
    %v4151 = vmax.f32 %v4149, %v4150
    %v4152 = vsel %vm3944, %v3089, -inf
    %v4153 = vsel %vm3944, %v3145, -inf
    %v4154 = vmax.f32 %v4152, %v4153
    %v4155 = vsel %vm3944, %v3096, -inf
    %v4156 = vsel %vm3944, %v3152, -inf
    %v4157 = vmax.f32 %v4155, %v4156
    %v4158 = vsel %vm3944, %v3103, -inf
    %v4159 = vsel %vm3944, %v3159, -inf
    %v4160 = vmax.f32 %v4158, %v4159
    %v4161 = vsel %vm3944, %v3166, -inf
    %v4162 = vsel %vm3944, %v3222, -inf
    %v4163 = vmax.f32 %v4161, %v4162
    %v4164 = vsel %vm3944, %v3173, -inf
    %v4165 = vsel %vm3944, %v3229, -inf
    %v4166 = vmax.f32 %v4164, %v4165
    %v4167 = vsel %vm3944, %v3180, -inf
    %v4168 = vsel %vm3944, %v3236, -inf
    %v4169 = vmax.f32 %v4167, %v4168
    %v4170 = vsel %vm3944, %v3187, -inf
    %v4171 = vsel %vm3944, %v3243, -inf
    %v4172 = vmax.f32 %v4170, %v4171
    %v4173 = vsel %vm3944, %v3194, -inf
    %v4174 = vsel %vm3944, %v3250, -inf
    %v4175 = vmax.f32 %v4173, %v4174
    %v4176 = vsel %vm3944, %v3201, -inf
    %v4177 = vsel %vm3944, %v3257, -inf
    %v4178 = vmax.f32 %v4176, %v4177
    %v4179 = vsel %vm3944, %v3208, -inf
    %v4180 = vsel %vm3944, %v3264, -inf
    %v4181 = vmax.f32 %v4179, %v4180
    %v4182 = vsel %vm3944, %v3215, -inf
    %v4183 = vsel %vm3944, %v3271, -inf
    %v4184 = vmax.f32 %v4182, %v4183
    %v4185 = vsel %vm3944, %v3278, -inf
    %v4186 = vsel %vm3944, %v3334, -inf
    %v4187 = vmax.f32 %v4185, %v4186
    %v4188 = vsel %vm3944, %v3285, -inf
    %v4189 = vsel %vm3944, %v3341, -inf
    %v4190 = vmax.f32 %v4188, %v4189
    %v4191 = vsel %vm3944, %v3292, -inf
    %v4192 = vsel %vm3944, %v3348, -inf
    %v4193 = vmax.f32 %v4191, %v4192
    %v4194 = vsel %vm3944, %v3299, -inf
    %v4195 = vsel %vm3944, %v3355, -inf
    %v4196 = vmax.f32 %v4194, %v4195
    %v4197 = vsel %vm3944, %v3306, -inf
    %v4198 = vsel %vm3944, %v3362, -inf
    %v4199 = vmax.f32 %v4197, %v4198
    %v4200 = vsel %vm3944, %v3313, -inf
    %v4201 = vsel %vm3944, %v3369, -inf
    %v4202 = vmax.f32 %v4200, %v4201
    %v4203 = vsel %vm3944, %v3320, -inf
    %v4204 = vsel %vm3944, %v3376, -inf
    %v4205 = vmax.f32 %v4203, %v4204
    %v4206 = vsel %vm3944, %v3327, -inf
    %v4207 = vsel %vm3944, %v3383, -inf
    %v4208 = vmax.f32 %v4206, %v4207
    %v4209 = vsel %vm3944, %v3390, -inf
    %v4210 = vsel %vm3944, %v3446, -inf
    %v4211 = vmax.f32 %v4209, %v4210
    %v4212 = vsel %vm3944, %v3397, -inf
    %v4213 = vsel %vm3944, %v3453, -inf
    %v4214 = vmax.f32 %v4212, %v4213
    %v4215 = vsel %vm3944, %v3404, -inf
    %v4216 = vsel %vm3944, %v3460, -inf
    %v4217 = vmax.f32 %v4215, %v4216
    %v4218 = vsel %vm3944, %v3411, -inf
    %v4219 = vsel %vm3944, %v3467, -inf
    %v4220 = vmax.f32 %v4218, %v4219
    %v4221 = vsel %vm3944, %v3418, -inf
    %v4222 = vsel %vm3944, %v3474, -inf
    %v4223 = vmax.f32 %v4221, %v4222
    %v4224 = vsel %vm3944, %v3425, -inf
    %v4225 = vsel %vm3944, %v3481, -inf
    %v4226 = vmax.f32 %v4224, %v4225
    %v4227 = vsel %vm3944, %v3432, -inf
    %v4228 = vsel %vm3944, %v3488, -inf
    %v4229 = vmax.f32 %v4227, %v4228
    %v4230 = vsel %vm3944, %v3439, -inf
    %v4231 = vsel %vm3944, %v3495, -inf
    %v4232 = vmax.f32 %v4230, %v4231
    %v4233 = vsel %vm3944, %v3502, -inf
    %v4234 = vsel %vm3944, %v3558, -inf
    %v4235 = vmax.f32 %v4233, %v4234
    %v4236 = vsel %vm3944, %v3509, -inf
    %v4237 = vsel %vm3944, %v3565, -inf
    %v4238 = vmax.f32 %v4236, %v4237
    %v4239 = vsel %vm3944, %v3516, -inf
    %v4240 = vsel %vm3944, %v3572, -inf
    %v4241 = vmax.f32 %v4239, %v4240
    %v4242 = vsel %vm3944, %v3523, -inf
    %v4243 = vsel %vm3944, %v3579, -inf
    %v4244 = vmax.f32 %v4242, %v4243
    %v4245 = vsel %vm3944, %v3530, -inf
    %v4246 = vsel %vm3944, %v3586, -inf
    %v4247 = vmax.f32 %v4245, %v4246
    %v4248 = vsel %vm3944, %v3537, -inf
    %v4249 = vsel %vm3944, %v3593, -inf
    %v4250 = vmax.f32 %v4248, %v4249
    %v4251 = vsel %vm3944, %v3544, -inf
    %v4252 = vsel %vm3944, %v3600, -inf
    %v4253 = vmax.f32 %v4251, %v4252
    %v4254 = vsel %vm3944, %v3551, -inf
    %v4255 = vsel %vm3944, %v3607, -inf
    %v4256 = vmax.f32 %v4254, %v4255
    %v4257 = vsel %vm3944, %v3614, -inf
    %v4258 = vsel %vm3944, %v3670, -inf
    %v4259 = vmax.f32 %v4257, %v4258
    %v4260 = vsel %vm3944, %v3621, -inf
    %v4261 = vsel %vm3944, %v3677, -inf
    %v4262 = vmax.f32 %v4260, %v4261
    %v4263 = vsel %vm3944, %v3628, -inf
    %v4264 = vsel %vm3944, %v3684, -inf
    %v4265 = vmax.f32 %v4263, %v4264
    %v4266 = vsel %vm3944, %v3635, -inf
    %v4267 = vsel %vm3944, %v3691, -inf
    %v4268 = vmax.f32 %v4266, %v4267
    %v4269 = vsel %vm3944, %v3642, -inf
    %v4270 = vsel %vm3944, %v3698, -inf
    %v4271 = vmax.f32 %v4269, %v4270
    %v4272 = vsel %vm3944, %v3649, -inf
    %v4273 = vsel %vm3944, %v3705, -inf
    %v4274 = vmax.f32 %v4272, %v4273
    %v4275 = vsel %vm3944, %v3656, -inf
    %v4276 = vsel %vm3944, %v3712, -inf
    %v4277 = vmax.f32 %v4275, %v4276
    %v4278 = vsel %vm3944, %v3663, -inf
    %v4279 = vsel %vm3944, %v3719, -inf
    %v4280 = vmax.f32 %v4278, %v4279
    %v4281 = vsel %vm3944, %v3726, -inf
    %v4282 = vsel %vm3944, %v3782, -inf
    %v4283 = vmax.f32 %v4281, %v4282
    %v4284 = vsel %vm3944, %v3733, -inf
    %v4285 = vsel %vm3944, %v3789, -inf
    %v4286 = vmax.f32 %v4284, %v4285
    %v4287 = vsel %vm3944, %v3740, -inf
    %v4288 = vsel %vm3944, %v3796, -inf
    %v4289 = vmax.f32 %v4287, %v4288
    %v4290 = vsel %vm3944, %v3747, -inf
    %v4291 = vsel %vm3944, %v3803, -inf
    %v4292 = vmax.f32 %v4290, %v4291
    %v4293 = vsel %vm3944, %v3754, -inf
    %v4294 = vsel %vm3944, %v3810, -inf
    %v4295 = vmax.f32 %v4293, %v4294
    %v4296 = vsel %vm3944, %v3761, -inf
    %v4297 = vsel %vm3944, %v3817, -inf
    %v4298 = vmax.f32 %v4296, %v4297
    %v4299 = vsel %vm3944, %v3768, -inf
    %v4300 = vsel %vm3944, %v3824, -inf
    %v4301 = vmax.f32 %v4299, %v4300
    %v4302 = vsel %vm3944, %v3775, -inf
    %v4303 = vsel %vm3944, %v3831, -inf
    %v4304 = vmax.f32 %v4302, %v4303
    %v4305 = vsel %vm3944, %v3838, -inf
    %v4306 = vsel %vm3944, %v3894, -inf
    %v4307 = vmax.f32 %v4305, %v4306
    %v4308 = vsel %vm3944, %v3845, -inf
    %v4309 = vsel %vm3944, %v3901, -inf
    %v4310 = vmax.f32 %v4308, %v4309
    %v4311 = vsel %vm3944, %v3852, -inf
    %v4312 = vsel %vm3944, %v3908, -inf
    %v4313 = vmax.f32 %v4311, %v4312
    %v4314 = vsel %vm3944, %v3859, -inf
    %v4315 = vsel %vm3944, %v3915, -inf
    %v4316 = vmax.f32 %v4314, %v4315
    %v4317 = vsel %vm3944, %v3866, -inf
    %v4318 = vsel %vm3944, %v3922, -inf
    %v4319 = vmax.f32 %v4317, %v4318
    %v4320 = vsel %vm3944, %v3873, -inf
    %v4321 = vsel %vm3944, %v3929, -inf
    %v4322 = vmax.f32 %v4320, %v4321
    %v4323 = vsel %vm3944, %v3880, -inf
    %v4324 = vsel %vm3944, %v3936, -inf
    %v4325 = vmax.f32 %v4323, %v4324
    %v4326 = vsel %vm3944, %v3887, -inf
    %v4327 = vsel %vm3944, %v3943, -inf
    %v4328 = vmax.f32 %v4326, %v4327
    %4329 = vst.msk [vmem:[#allocation2] sm:$0xff] %vm3944, 0.0
    %4330 = vst.msk [vmem:[#allocation2 + $0x8] sm:$0x3] %vm2151, 0.0
    %4331 = vst.msk [vmem:[#allocation2 + $0xa0] sm:$0xff] %vm3944, 0.0
    %4332 = vst.msk [vmem:[#allocation2 + $0xa8] sm:$0x3] %vm2151, 0.0
    %s4333 = scalar_lea.vmem [#allocation2], 144
    %4334 = vst.msk [vmem:[%s4333] sm:$0xff] %vm3944, 0.0
    %4335 = vst.msk [vmem:[%s4333 + $0x8] sm:$0x3] %vm2151, 0.0
    %4336 = vst.msk [vmem:[%s4333 + $0xa0] sm:$0xff] %vm3944, 0.0
    %4337 = vst.msk [vmem:[%s4333 + $0xa8] sm:$0x3] %vm2151, 0.0
    %s4338 = scalar_lea.vmem [#allocation2], 16
    %vm4339 = vcmask 253952
    %4340 = vst.msk [vmem:[%s4338] sm:$0x1] %vm4339, 0.0
    %4341 = vst.msk [vmem:[%s4338 + $0x10] sm:$0x1] %vm4339, 0.0
    %4342 = vst.msk [vmem:[%s4338 + $0x20] sm:$0x1] %vm4339, 0.0
    %4343 = vst.msk [vmem:[%s4338 + $0x30] sm:$0x1] %vm4339, 0.0
    %4344 = vst.msk [vmem:[%s4338 + $0x40] sm:$0x1] %vm4339, 0.0
    %4345 = vst.msk [vmem:[%s4338 + $0x50] sm:$0x1] %vm4339, 0.0
    %4346 = vst.msk [vmem:[%s4338 + $0x60] sm:$0x1] %vm4339, 0.0
    %4347 = vst.msk [vmem:[%s4338 + $0x70] sm:$0x1] %vm4339, 0.0
    %4348 = vst.msk [vmem:[%s4338 + $0xa0] sm:$0x1] %vm4339, 0.0
    %4349 = vst.msk [vmem:[%s4338 + $0xb0] sm:$0x1] %vm4339, 0.0
    %4350 = vst.msk [vmem:[%s4338 + $0xc0] sm:$0x1] %vm4339, 0.0
    %4351 = vst.msk [vmem:[%s4338 + $0xd0] sm:$0x1] %vm4339, 0.0
    %4352 = vst.msk [vmem:[%s4338 + $0xe0] sm:$0x1] %vm4339, 0.0
    %4353 = vst.msk [vmem:[%s4338 + $0xf0] sm:$0x1] %vm4339, 0.0
    %4354 = vst.msk [vmem:[%s4338 + $0x100] sm:$0x1] %vm4339, 0.0
    %4355 = vst.msk [vmem:[%s4338 + $0x110] sm:$0x1] %vm4339, 0.0
    %4356 = vst.msk [vmem:[%s4338 + $0x9] sm:$0x1] %vm4339, 0.0
    %4357 = vst.msk [vmem:[%s4338 + $0x19] sm:$0x1] %vm4339, 0.0
    %4358 = vst.msk [vmem:[%s4338 + $0x29] sm:$0x1] %vm4339, 0.0
    %4359 = vst.msk [vmem:[%s4338 + $0x39] sm:$0x1] %vm4339, 0.0
    %4360 = vst.msk [vmem:[%s4338 + $0x49] sm:$0x1] %vm4339, 0.0
    %4361 = vst.msk [vmem:[%s4338 + $0x59] sm:$0x1] %vm4339, 0.0
    %4362 = vst.msk [vmem:[%s4338 + $0x69] sm:$0x1] %vm4339, 0.0
    %4363 = vst.msk [vmem:[%s4338 + $0x79] sm:$0x1] %vm4339, 0.0
    %4364 = vst.msk [vmem:[%s4338 + $0xa9] sm:$0x1] %vm4339, 0.0
    %4365 = vst.msk [vmem:[%s4338 + $0xb9] sm:$0x1] %vm4339, 0.0
    %4366 = vst.msk [vmem:[%s4338 + $0xc9] sm:$0x1] %vm4339, 0.0
    %4367 = vst.msk [vmem:[%s4338 + $0xd9] sm:$0x1] %vm4339, 0.0
    %4368 = vst.msk [vmem:[%s4338 + $0xe9] sm:$0x1] %vm4339, 0.0
    %4369 = vst.msk [vmem:[%s4338 + $0xf9] sm:$0x1] %vm4339, 0.0
    %4370 = vst.msk [vmem:[%s4338 + $0x109] sm:$0x1] %vm4339, 0.0
    %4371 = vst.msk [vmem:[%s4338 + $0x119] sm:$0x1] %vm4339, 0.0
    %vm4500 = vcmask 1041409
    %v4501 = vsel %vm4500, %v3950, %v3947
    %vm4502 = vcmask 1042434
    %v4503 = vsel %vm4502, %v3953, %v4501
    %vm4504 = vcmask 1043459
    %v4505 = vsel %vm4504, %v3956, %v4503
    %vm4506 = vcmask 1044484
    %v4507 = vsel %vm4506, %v3959, %v4505
    %vm4508 = vcmask 1045509
    %v4509 = vsel %vm4508, %v3962, %v4507
    %vm4510 = vcmask 1046534
    %v4511 = vsel %vm4510, %v3965, %v4509
    %vm4512 = vcmask 1047559
    %v4513 = vsel %vm4512, %v3968, %v4511
    %v4514 = vsel %vm4500, %v3974, %v3971
    %v4515 = vsel %vm4502, %v3977, %v4514
    %v4516 = vsel %vm4504, %v3980, %v4515
    %v4517 = vsel %vm4506, %v3983, %v4516
    %v4518 = vsel %vm4508, %v3986, %v4517
    %v4519 = vsel %vm4510, %v3989, %v4518
    %v4520 = vsel %vm4512, %v3992, %v4519
    %v4521 = vsel %vm4500, %v3998, %v3995
    %v4522 = vsel %vm4502, %v4001, %v4521
    %v4523 = vsel %vm4504, %v4004, %v4522
    %v4524 = vsel %vm4506, %v4007, %v4523
    %v4525 = vsel %vm4508, %v4010, %v4524
    %v4526 = vsel %vm4510, %v4013, %v4525
    %v4527 = vsel %vm4512, %v4016, %v4526
    %v4528 = vsel %vm4500, %v4022, %v4019
    %v4529 = vsel %vm4502, %v4025, %v4528
    %v4530 = vsel %vm4504, %v4028, %v4529
    %v4531 = vsel %vm4506, %v4031, %v4530
    %v4532 = vsel %vm4508, %v4034, %v4531
    %v4533 = vsel %vm4510, %v4037, %v4532
    %v4534 = vsel %vm4512, %v4040, %v4533
    %v4535 = vsel %vm4500, %v4046, %v4043
    %v4536 = vsel %vm4502, %v4049, %v4535
    %v4537 = vsel %vm4504, %v4052, %v4536
    %v4538 = vsel %vm4506, %v4055, %v4537
    %v4539 = vsel %vm4508, %v4058, %v4538
    %v4540 = vsel %vm4510, %v4061, %v4539
    %v4541 = vsel %vm4512, %v4064, %v4540
    %v4542 = vsel %vm4500, %v4070, %v4067
    %v4543 = vsel %vm4502, %v4073, %v4542
    %v4544 = vsel %vm4504, %v4076, %v4543
    %v4545 = vsel %vm4506, %v4079, %v4544
    %v4546 = vsel %vm4508, %v4082, %v4545
    %v4547 = vsel %vm4510, %v4085, %v4546
    %v4548 = vsel %vm4512, %v4088, %v4547
    %v4549 = vsel %vm4500, %v4094, %v4091
    %v4550 = vsel %vm4502, %v4097, %v4549
    %v4551 = vsel %vm4504, %v4100, %v4550
    %v4552 = vsel %vm4506, %v4103, %v4551
    %v4553 = vsel %vm4508, %v4106, %v4552
    %v4554 = vsel %vm4510, %v4109, %v4553
    %v4555 = vsel %vm4512, %v4112, %v4554
    %v4556 = vsel %vm4500, %v4118, %v4115
    %v4557 = vsel %vm4502, %v4121, %v4556
    %v4558 = vsel %vm4504, %v4124, %v4557
    %v4559 = vsel %vm4506, %v4127, %v4558
    %v4560 = vsel %vm4508, %v4130, %v4559
    %v4561 = vsel %vm4510, %v4133, %v4560
    %v4562 = vsel %vm4512, %v4136, %v4561
    %v4563 = vsel %vm4500, %v4142, %v4139
    %v4564 = vsel %vm4502, %v4145, %v4563
    %v4565 = vsel %vm4504, %v4148, %v4564
    %v4566 = vsel %vm4506, %v4151, %v4565
    %v4567 = vsel %vm4508, %v4154, %v4566
    %v4568 = vsel %vm4510, %v4157, %v4567
    %v4569 = vsel %vm4512, %v4160, %v4568
    %v4570 = vsel %vm4500, %v4166, %v4163
    %v4571 = vsel %vm4502, %v4169, %v4570
    %v4572 = vsel %vm4504, %v4172, %v4571
    %v4573 = vsel %vm4506, %v4175, %v4572
    %v4574 = vsel %vm4508, %v4178, %v4573
    %v4575 = vsel %vm4510, %v4181, %v4574
    %v4576 = vsel %vm4512, %v4184, %v4575
    %v4577 = vsel %vm4500, %v4190, %v4187
    %v4578 = vsel %vm4502, %v4193, %v4577
    %v4579 = vsel %vm4504, %v4196, %v4578
    %v4580 = vsel %vm4506, %v4199, %v4579
    %v4581 = vsel %vm4508, %v4202, %v4580
    %v4582 = vsel %vm4510, %v4205, %v4581
    %v4583 = vsel %vm4512, %v4208, %v4582
    %v4584 = vsel %vm4500, %v4214, %v4211
    %v4585 = vsel %vm4502, %v4217, %v4584
    %v4586 = vsel %vm4504, %v4220, %v4585
    %v4587 = vsel %vm4506, %v4223, %v4586
    %v4588 = vsel %vm4508, %v4226, %v4587
    %v4589 = vsel %vm4510, %v4229, %v4588
    %v4590 = vsel %vm4512, %v4232, %v4589
    %v4591 = vsel %vm4500, %v4238, %v4235
    %v4592 = vsel %vm4502, %v4241, %v4591
    %v4593 = vsel %vm4504, %v4244, %v4592
    %v4594 = vsel %vm4506, %v4247, %v4593
    %v4595 = vsel %vm4508, %v4250, %v4594
    %v4596 = vsel %vm4510, %v4253, %v4595
    %v4597 = vsel %vm4512, %v4256, %v4596
    %v4598 = vsel %vm4500, %v4262, %v4259
    %v4599 = vsel %vm4502, %v4265, %v4598
    %v4600 = vsel %vm4504, %v4268, %v4599
    %v4601 = vsel %vm4506, %v4271, %v4600
    %v4602 = vsel %vm4508, %v4274, %v4601
    %v4603 = vsel %vm4510, %v4277, %v4602
    %v4604 = vsel %vm4512, %v4280, %v4603
    %v4605 = vsel %vm4500, %v4286, %v4283
    %v4606 = vsel %vm4502, %v4289, %v4605
    %v4607 = vsel %vm4504, %v4292, %v4606
    %v4608 = vsel %vm4506, %v4295, %v4607
    %v4609 = vsel %vm4508, %v4298, %v4608
    %v4610 = vsel %vm4510, %v4301, %v4609
    %v4611 = vsel %vm4512, %v4304, %v4610
    %v4612 = vsel %vm4500, %v4310, %v4307
    %v4613 = vsel %vm4502, %v4313, %v4612
    %v4614 = vsel %vm4504, %v4316, %v4613
    %v4615 = vsel %vm4506, %v4319, %v4614
    %v4616 = vsel %vm4508, %v4322, %v4615
    %v4617 = vsel %vm4510, %v4325, %v4616
    %v4618 = vsel %vm4512, %v4328, %v4617
    %4635 = vst.msk [vmem:[%s4338 + $0x1] sm:$0xff] %vm3944, %v4513
    %4636 = vst.msk [vmem:[%s4338 + $0x11] sm:$0xff] %vm3944, %v4520
    %4637 = vst.msk [vmem:[%s4338 + $0x21] sm:$0xff] %vm3944, %v4527
    %4638 = vst.msk [vmem:[%s4338 + $0x31] sm:$0xff] %vm3944, %v4534
    %4639 = vst.msk [vmem:[%s4338 + $0x41] sm:$0xff] %vm3944, %v4541
    %4640 = vst.msk [vmem:[%s4338 + $0x51] sm:$0xff] %vm3944, %v4548
    %4641 = vst.msk [vmem:[%s4338 + $0x61] sm:$0xff] %vm3944, %v4555
    %4642 = vst.msk [vmem:[%s4338 + $0x71] sm:$0xff] %vm3944, %v4562
    %4643 = vst.msk [vmem:[%s4338 + $0xa1] sm:$0xff] %vm3944, %v4569
    %4644 = vst.msk [vmem:[%s4338 + $0xb1] sm:$0xff] %vm3944, %v4576
    %4645 = vst.msk [vmem:[%s4338 + $0xc1] sm:$0xff] %vm3944, %v4583
    %4646 = vst.msk [vmem:[%s4338 + $0xd1] sm:$0xff] %vm3944, %v4590
    %4647 = vst.msk [vmem:[%s4338 + $0xe1] sm:$0xff] %vm3944, %v4597
    %4648 = vst.msk [vmem:[%s4338 + $0xf1] sm:$0xff] %vm3944, %v4604
    %4649 = vst.msk [vmem:[%s4338 + $0x101] sm:$0xff] %vm3944, %v4611
    %4650 = vst.msk [vmem:[%s4338 + $0x111] sm:$0xff] %vm3944, %v4618
    %v4651 = vld [vmem:[#allocation2] sm:$0xff]
    %v4652 = vld [vmem:[#allocation2 + $0x8] sm:$0x3]
    %v4653 = vld [vmem:[#allocation2 + $0x10] sm:$0xff]
    %v4654 = vld [vmem:[#allocation2 + $0x18] sm:$0x3]
    %v4655 = vld [vmem:[#allocation2 + $0x20] sm:$0xff]
    %v4656 = vld [vmem:[#allocation2 + $0x28] sm:$0x3]
    %v4657 = vld [vmem:[#allocation2 + $0x30] sm:$0xff]
    %v4658 = vld [vmem:[#allocation2 + $0x38] sm:$0x3]
    %v4659 = vld [vmem:[#allocation2 + $0x40] sm:$0xff]
    %v4660 = vld [vmem:[#allocation2 + $0x48] sm:$0x3]
    %v4661 = vld [vmem:[#allocation2 + $0x50] sm:$0xff]
    %v4662 = vld [vmem:[#allocation2 + $0x58] sm:$0x3]
    %v4663 = vld [vmem:[#allocation2 + $0x60] sm:$0xff]
    %v4664 = vld [vmem:[#allocation2 + $0x68] sm:$0x3]
    %v4665 = vld [vmem:[#allocation2 + $0x70] sm:$0xff]
    %v4666 = vld [vmem:[#allocation2 + $0x78] sm:$0x3]
    %v4667 = vld [vmem:[#allocation2 + $0x80] sm:$0xff]
    %v4668 = vld [vmem:[#allocation2 + $0x88] sm:$0x3]
    %v4669 = vld [vmem:[#allocation2 + $0x90] sm:$0xff]
    %v4670 = vld [vmem:[#allocation2 + $0x98] sm:$0x3]
    %v4671 = vld [vmem:[#allocation2 + $0xa0] sm:$0xff]
    %v4672 = vld [vmem:[#allocation2 + $0xa8] sm:$0x3]
    %v4673 = vld [vmem:[#allocation2 + $0xb0] sm:$0xff]
    %v4674 = vld [vmem:[#allocation2 + $0xb8] sm:$0x3]
    %v4675 = vld [vmem:[#allocation2 + $0xc0] sm:$0xff]
    %v4676 = vld [vmem:[#allocation2 + $0xc8] sm:$0x3]
    %v4677 = vld [vmem:[#allocation2 + $0xd0] sm:$0xff]
    %v4678 = vld [vmem:[#allocation2 + $0xd8] sm:$0x3]
    %v4679 = vld [vmem:[#allocation2 + $0xe0] sm:$0xff]
    %v4680 = vld [vmem:[#allocation2 + $0xe8] sm:$0x3]
    %v4681 = vld [vmem:[#allocation2 + $0xf0] sm:$0xff]
    %v4682 = vld [vmem:[#allocation2 + $0xf8] sm:$0x3]
    %v4683 = vld [vmem:[#allocation2 + $0x100] sm:$0xff]
    %v4684 = vld [vmem:[#allocation2 + $0x108] sm:$0x3]
    %v4685 = vld [vmem:[#allocation2 + $0x110] sm:$0xff]
    %v4686 = vld [vmem:[#allocation2 + $0x118] sm:$0x3]
    %v4687 = vld [vmem:[#allocation2 + $0x120] sm:$0xff]
    %v4688 = vld [vmem:[#allocation2 + $0x128] sm:$0x3]
    %v4689 = vld [vmem:[#allocation2 + $0x130] sm:$0xff]
    %v4690 = vld [vmem:[#allocation2 + $0x138] sm:$0x3]
    %v4691 = vpack.c.bf16 %v4653, %v4651
    %v4692 = vpack.c.bf16 %v4657, %v4655
    %v4693 = vpack.c.bf16 %v4661, %v4659
    %v4694 = vpack.c.bf16 %v4665, %v4663
    %v4695 = vpack.c.bf16 %v4673, %v4671
    %v4696 = vpack.c.bf16 %v4677, %v4675
    %v4697 = vpack.c.bf16 %v4681, %v4679
    %v4698 = vpack.c.bf16 %v4685, %v4683
    %v4699 = vld [vmem:[%s3] sm:$0xf]
    %v4700 = vld [vmem:[%s3 + $0x4] sm:$0xf]
    %v4701 = vld [vmem:[%s3 + $0x8] sm:$0xf]
    %v4702 = vld [vmem:[%s3 + $0xc] sm:$0xf]
    %vm4735 = vcmask 1046528
    %v4736 = vrot.slane %v4651, 1
    %v4737 = vrot.slane %v4652, 1
    %v4738 = vsel %vm4735, %v4736, %v4737
    %v4739 = vrot.slane %v4653, 1
    %v4740 = vrot.slane %v4654, 1
    %v4741 = vsel %vm4735, %v4739, %v4740
    %v4742 = vrot.slane %v4655, 1
    %v4743 = vrot.slane %v4656, 1
    %v4744 = vsel %vm4735, %v4742, %v4743
    %v4745 = vrot.slane %v4657, 1
    %v4746 = vrot.slane %v4658, 1
    %v4747 = vsel %vm4735, %v4745, %v4746
    %v4748 = vrot.slane %v4659, 1
    %v4749 = vrot.slane %v4660, 1
    %v4750 = vsel %vm4735, %v4748, %v4749
    %v4751 = vrot.slane %v4661, 1
    %v4752 = vrot.slane %v4662, 1
    %v4753 = vsel %vm4735, %v4751, %v4752
    %v4754 = vrot.slane %v4663, 1
    %v4755 = vrot.slane %v4664, 1
    %v4756 = vsel %vm4735, %v4754, %v4755
    %v4757 = vrot.slane %v4665, 1
    %v4758 = vrot.slane %v4666, 1
    %v4759 = vsel %vm4735, %v4757, %v4758
    %v4760 = vrot.slane %v4671, 1
    %v4761 = vrot.slane %v4672, 1
    %v4762 = vsel %vm4735, %v4760, %v4761
    %v4763 = vrot.slane %v4673, 1
    %v4764 = vrot.slane %v4674, 1
    %v4765 = vsel %vm4735, %v4763, %v4764
    %v4766 = vrot.slane %v4675, 1
    %v4767 = vrot.slane %v4676, 1
    %v4768 = vsel %vm4735, %v4766, %v4767
    %v4769 = vrot.slane %v4677, 1
    %v4770 = vrot.slane %v4678, 1
    %v4771 = vsel %vm4735, %v4769, %v4770
    %v4772 = vrot.slane %v4679, 1
    %v4773 = vrot.slane %v4680, 1
    %v4774 = vsel %vm4735, %v4772, %v4773
    %v4775 = vrot.slane %v4681, 1
    %v4776 = vrot.slane %v4682, 1
    %v4777 = vsel %vm4735, %v4775, %v4776
    %v4778 = vrot.slane %v4683, 1
    %v4779 = vrot.slane %v4684, 1
    %v4780 = vsel %vm4735, %v4778, %v4779
    %v4781 = vrot.slane %v4685, 1
    %v4782 = vrot.slane %v4686, 1
    %v4783 = vsel %vm4735, %v4781, %v4782
    %v4800 = vpack.c.bf16 %v4741, %v4738
    %v4801 = vpack.c.bf16 %v4747, %v4744
    %v4802 = vpack.c.bf16 %v4753, %v4750
    %v4803 = vpack.c.bf16 %v4759, %v4756
    %v4804 = vpack.c.bf16 %v4765, %v4762
    %v4805 = vpack.c.bf16 %v4771, %v4768
    %v4806 = vpack.c.bf16 %v4777, %v4774
    %v4807 = vpack.c.bf16 %v4783, %v4780
    %s4808 = scalar_lea.vmem %s3, 16
    %v4809 = vld [vmem:[%s4808] sm:$0xf]
    %v4810 = vld [vmem:[%s4808 + $0x4] sm:$0xf]
    %v4811 = vld [vmem:[%s4808 + $0x8] sm:$0xf]
    %v4812 = vld [vmem:[%s4808 + $0xc] sm:$0xf]
    %v4817 = vunpack.c.l.b16 %v4809
    %v4818 = vunpack.c.l.b16 %v4810
    %v4819 = vunpack.c.l.b16 %v4811
    %v4820 = vunpack.c.l.b16 %v4812
    %v4821 = vpack.c.b16 %v4818, %v4817
    %v4822 = vpack.c.b16 %v4820, %v4819
    %v4826 = vsel %vm3944, %v4800, 0
    %v4829 = vsel %vm3944, %v4801, 0
    %v4832 = vsel %vm3944, %v4802, 0
    %v4835 = vsel %vm3944, %v4803, 0
    %v4838 = vsel %vm3944, %v4804, 0
    %v4841 = vsel %vm3944, %v4805, 0
    %v4844 = vsel %vm3944, %v4806, 0
    %v4847 = vsel %vm3944, %v4807, 0
    %4849 = vmatprep.subr.bf16.mxu0 0
    %4850 = vmatpush1.bf16.msra.mxu0 0
    %4851 = vmatprep.subr.bf16.mxu0 0
    %4852 = vmatpush1.bf16.msra.mxu0 0
    %4853 = vmatprep.subr.bf16.mxu0 0
    %4854 = vmatpush1.bf16.msra.mxu0 0
    %4855 = vmatprep.subr.bf16.mxu0 0
    %4856 = vmatpush1.bf16.msra.mxu0 0
    %4857 = vmatprep.subr.bf16.mxu0 0
    %4858 = vmatpush1.bf16.msra.mxu0 0
    %4859 = vmatprep.subr.bf16.mxu0 0
    %4860 = vmatpush1.bf16.msra.mxu0 0
    %4861 = vmatprep.subr.bf16.mxu0 0
    %4862 = vmatpush1.bf16.msra.mxu0 %v4822
    %4863 = vmatprep.subr.bf16.mxu0 0
    %4864 = vmatpush1.bf16.msra.mxu0 %v4821
    %4865 = vmatprep.subr.bf16.mxu0 0
    %4866 = vmatpush2.bf16.msra.mxu0 0
    %4867 = vmatprep.subr.bf16.mxu0 0
    %4868 = vmatpush2.bf16.msra.mxu0 0
    %4869 = vmatprep.subr.bf16.mxu0 0
    %4870 = vmatpush2.bf16.msra.mxu0 0
    %4871 = vmatprep.subr.bf16.mxu0 0
    %4872 = vmatpush2.bf16.msra.mxu0 0
    %4873 = vmatprep.subr.bf16.mxu0 0
    %4874 = vmatpush2.bf16.msra.mxu0 0
    %4875 = vmatprep.subr.bf16.mxu0 0
    %4876 = vmatpush2.bf16.msra.mxu0 0
    %4877 = vmatprep.subr.bf16.mxu0 0
    %4878 = vmatpush2.bf16.msra.mxu0 0
    %4879 = vmatprep.subr.bf16.mxu0 0
    %4880 = vmatpush2.bf16.msra.mxu0 0
    %4881 = vmatprep.mubr.bf16.mxu0 0
    %4882 = vmatmul.mubr.bf16.gmra.mxu0 %v4826
    %v4883 = vpop.f32.mrf.mxu0
    %v4884 = vadd.f32 0.0, %v4883
    %v4885 = vpop.f32.mrf.mxu0
    %v4886 = vpop.f32.mrf.mxu0
    %v4887 = vadd.f32 0.0, %v4886
    %v4888 = vpop.f32.mrf.mxu0
    %4889 = vmatprep.mubr.bf16.mxu0 0
    %4890 = vmatmul.mubr.bf16.gmra.mxu0 %v4829
    %v4891 = vpop.f32.mrf.mxu0
    %v4892 = vadd.f32 0.0, %v4891
    %v4893 = vpop.f32.mrf.mxu0
    %v4894 = vpop.f32.mrf.mxu0
    %v4895 = vadd.f32 0.0, %v4894
    %v4896 = vpop.f32.mrf.mxu0
    %4897 = vmatprep.mubr.bf16.mxu0 0
    %4898 = vmatmul.mubr.bf16.gmra.mxu0 %v4832
    %v4899 = vpop.f32.mrf.mxu0
    %v4900 = vadd.f32 0.0, %v4899
    %v4901 = vpop.f32.mrf.mxu0
    %v4902 = vpop.f32.mrf.mxu0
    %v4903 = vadd.f32 0.0, %v4902
    %v4904 = vpop.f32.mrf.mxu0
    %4905 = vmatprep.mubr.bf16.mxu0 0
    %4906 = vmatmul.mubr.bf16.gmra.mxu0 %v4835
    %v4907 = vpop.f32.mrf.mxu0
    %v4908 = vadd.f32 0.0, %v4907
    %v4909 = vpop.f32.mrf.mxu0
    %v4910 = vpop.f32.mrf.mxu0
    %v4911 = vadd.f32 0.0, %v4910
    %v4912 = vpop.f32.mrf.mxu0
    %4913 = vmatprep.mubr.bf16.mxu0 0
    %4914 = vmatmul.mubr.bf16.gmra.mxu0 %v4838
    %v4915 = vpop.f32.mrf.mxu0
    %v4916 = vadd.f32 0.0, %v4915
    %v4917 = vpop.f32.mrf.mxu0
    %v4918 = vpop.f32.mrf.mxu0
    %v4919 = vadd.f32 0.0, %v4918
    %v4920 = vpop.f32.mrf.mxu0
    %4921 = vmatprep.mubr.bf16.mxu0 0
    %4922 = vmatmul.mubr.bf16.gmra.mxu0 %v4841
    %v4923 = vpop.f32.mrf.mxu0
    %v4924 = vadd.f32 0.0, %v4923
    %v4925 = vpop.f32.mrf.mxu0
    %v4926 = vpop.f32.mrf.mxu0
    %v4927 = vadd.f32 0.0, %v4926
    %v4928 = vpop.f32.mrf.mxu0
    %4929 = vmatprep.mubr.bf16.mxu0 0
    %4930 = vmatmul.mubr.bf16.gmra.mxu0 %v4844
    %v4931 = vpop.f32.mrf.mxu0
    %v4932 = vadd.f32 0.0, %v4931
    %v4933 = vpop.f32.mrf.mxu0
    %v4934 = vpop.f32.mrf.mxu0
    %v4935 = vadd.f32 0.0, %v4934
    %v4936 = vpop.f32.mrf.mxu0
    %4937 = vmatprep.mubr.bf16.mxu0 0
    %4938 = vmatmul.mubr.bf16.gmra.mxu0 %v4847
    %v4939 = vpop.f32.mrf.mxu0
    %v4940 = vadd.f32 0.0, %v4939
    %v4941 = vpop.f32.mrf.mxu0
    %v4942 = vpop.f32.mrf.mxu0
    %v4943 = vadd.f32 0.0, %v4942
    %v4944 = vpop.f32.mrf.mxu0
    %4945 = vdwg.mxu0
    %v4950 = vunpack.c.l.b16 %v4699
    %v4951 = vunpack.c.l.b16 %v4700
    %v4952 = vunpack.c.l.b16 %v4701
    %v4953 = vunpack.c.l.b16 %v4702
    %v4954 = vpack.c.b16 %v4951, %v4950
    %v4955 = vpack.c.b16 %v4953, %v4952
    %v4959 = vsel %vm3944, %v4691, 0
    %v4962 = vsel %vm3944, %v4692, 0
    %v4965 = vsel %vm3944, %v4693, 0
    %v4968 = vsel %vm3944, %v4694, 0
    %v4971 = vsel %vm3944, %v4695, 0
    %v4974 = vsel %vm3944, %v4696, 0
    %v4977 = vsel %vm3944, %v4697, 0
    %v4980 = vsel %vm3944, %v4698, 0
    %4982 = vmatprep.subr.bf16.mxu0 0
    %4983 = vmatpush1.bf16.msra.mxu0 0
    %4984 = vmatprep.subr.bf16.mxu0 0
    %4985 = vmatpush1.bf16.msra.mxu0 0
    %4986 = vmatprep.subr.bf16.mxu0 0
    %4987 = vmatpush1.bf16.msra.mxu0 0
    %4988 = vmatprep.subr.bf16.mxu0 0
    %4989 = vmatpush1.bf16.msra.mxu0 0
    %4990 = vmatprep.subr.bf16.mxu0 0
    %4991 = vmatpush1.bf16.msra.mxu0 0
    %4992 = vmatprep.subr.bf16.mxu0 0
    %4993 = vmatpush1.bf16.msra.mxu0 0
    %4994 = vmatprep.subr.bf16.mxu0 0
    %4995 = vmatpush1.bf16.msra.mxu0 %v4955
    %4996 = vmatprep.subr.bf16.mxu0 0
    %4997 = vmatpush1.bf16.msra.mxu0 %v4954
    %4998 = vmatprep.subr.bf16.mxu0 0
    %4999 = vmatpush2.bf16.msra.mxu0 0
    %5000 = vmatprep.subr.bf16.mxu0 0
    %5001 = vmatpush2.bf16.msra.mxu0 0
    %5002 = vmatprep.subr.bf16.mxu0 0
    %5003 = vmatpush2.bf16.msra.mxu0 0
    %5004 = vmatprep.subr.bf16.mxu0 0
    %5005 = vmatpush2.bf16.msra.mxu0 0
    %5006 = vmatprep.subr.bf16.mxu0 0
    %5007 = vmatpush2.bf16.msra.mxu0 0
    %5008 = vmatprep.subr.bf16.mxu0 0
    %5009 = vmatpush2.bf16.msra.mxu0 0
    %5010 = vmatprep.subr.bf16.mxu0 0
    %5011 = vmatpush2.bf16.msra.mxu0 0
    %5012 = vmatprep.subr.bf16.mxu0 0
    %5013 = vmatpush2.bf16.msra.mxu0 0
    %5014 = vmatprep.mubr.bf16.mxu0 0
    %5015 = vmatmul.mubr.bf16.gmra.mxu0 %v4959
    %v5016 = vpop.f32.mrf.mxu0
    %v5017 = vadd.f32 %v4884, %v5016
    %v5018 = vpop.f32.mrf.mxu0
    %v5019 = vpop.f32.mrf.mxu0
    %v5020 = vadd.f32 %v4887, %v5019
    %v5021 = vpop.f32.mrf.mxu0
    %5022 = vmatprep.mubr.bf16.mxu0 0
    %5023 = vmatmul.mubr.bf16.gmra.mxu0 %v4962
    %v5024 = vpop.f32.mrf.mxu0
    %v5025 = vadd.f32 %v4892, %v5024
    %v5026 = vpop.f32.mrf.mxu0
    %v5027 = vpop.f32.mrf.mxu0
    %v5028 = vadd.f32 %v4895, %v5027
    %v5029 = vpop.f32.mrf.mxu0
    %5030 = vmatprep.mubr.bf16.mxu0 0
    %5031 = vmatmul.mubr.bf16.gmra.mxu0 %v4965
    %v5032 = vpop.f32.mrf.mxu0
    %v5033 = vadd.f32 %v4900, %v5032
    %v5034 = vpop.f32.mrf.mxu0
    %v5035 = vpop.f32.mrf.mxu0
    %v5036 = vadd.f32 %v4903, %v5035
    %v5037 = vpop.f32.mrf.mxu0
    %5038 = vmatprep.mubr.bf16.mxu0 0
    %5039 = vmatmul.mubr.bf16.gmra.mxu0 %v4968
    %v5040 = vpop.f32.mrf.mxu0
    %v5041 = vadd.f32 %v4908, %v5040
    %v5042 = vpop.f32.mrf.mxu0
    %v5043 = vpop.f32.mrf.mxu0
    %v5044 = vadd.f32 %v4911, %v5043
    %v5045 = vpop.f32.mrf.mxu0
    %5046 = vmatprep.mubr.bf16.mxu0 0
    %5047 = vmatmul.mubr.bf16.gmra.mxu0 %v4971
    %v5048 = vpop.f32.mrf.mxu0
    %v5049 = vadd.f32 %v4916, %v5048
    %v5050 = vpop.f32.mrf.mxu0
    %v5051 = vpop.f32.mrf.mxu0
    %v5052 = vadd.f32 %v4919, %v5051
    %v5053 = vpop.f32.mrf.mxu0
    %5054 = vmatprep.mubr.bf16.mxu0 0
    %5055 = vmatmul.mubr.bf16.gmra.mxu0 %v4974
    %v5056 = vpop.f32.mrf.mxu0
    %v5057 = vadd.f32 %v4924, %v5056
    %v5058 = vpop.f32.mrf.mxu0
    %v5059 = vpop.f32.mrf.mxu0
    %v5060 = vadd.f32 %v4927, %v5059
    %v5061 = vpop.f32.mrf.mxu0
    %5062 = vmatprep.mubr.bf16.mxu0 0
    %5063 = vmatmul.mubr.bf16.gmra.mxu0 %v4977
    %v5064 = vpop.f32.mrf.mxu0
    %v5065 = vadd.f32 %v4932, %v5064
    %v5066 = vpop.f32.mrf.mxu0
    %v5067 = vpop.f32.mrf.mxu0
    %v5068 = vadd.f32 %v4935, %v5067
    %v5069 = vpop.f32.mrf.mxu0
    %5070 = vmatprep.mubr.bf16.mxu0 0
    %5071 = vmatmul.mubr.bf16.gmra.mxu0 %v4980
    %v5072 = vpop.f32.mrf.mxu0
    %v5073 = vadd.f32 %v4940, %v5072
    %v5074 = vpop.f32.mrf.mxu0
    %v5075 = vpop.f32.mrf.mxu0
    %v5076 = vadd.f32 %v4943, %v5075
    %v5077 = vpop.f32.mrf.mxu0
    %5078 = vdwg.mxu0
    %v5079 = vrot.slane %v4651, 2
    %v5080 = vrot.slane %v4652, 2
    %v5081 = vsel %vm384, %v5079, %v5080
    %v5082 = vrot.slane %v4653, 2
    %v5083 = vrot.slane %v4654, 2
    %v5084 = vsel %vm384, %v5082, %v5083
    %v5085 = vrot.slane %v4655, 2
    %v5086 = vrot.slane %v4656, 2
    %v5087 = vsel %vm384, %v5085, %v5086
    %v5088 = vrot.slane %v4657, 2
    %v5089 = vrot.slane %v4658, 2
    %v5090 = vsel %vm384, %v5088, %v5089
    %v5091 = vrot.slane %v4659, 2
    %v5092 = vrot.slane %v4660, 2
    %v5093 = vsel %vm384, %v5091, %v5092
    %v5094 = vrot.slane %v4661, 2
    %v5095 = vrot.slane %v4662, 2
    %v5096 = vsel %vm384, %v5094, %v5095
    %v5097 = vrot.slane %v4663, 2
    %v5098 = vrot.slane %v4664, 2
    %v5099 = vsel %vm384, %v5097, %v5098
    %v5100 = vrot.slane %v4665, 2
    %v5101 = vrot.slane %v4666, 2
    %v5102 = vsel %vm384, %v5100, %v5101
    %v5103 = vrot.slane %v4671, 2
    %v5104 = vrot.slane %v4672, 2
    %v5105 = vsel %vm384, %v5103, %v5104
    %v5106 = vrot.slane %v4673, 2
    %v5107 = vrot.slane %v4674, 2
    %v5108 = vsel %vm384, %v5106, %v5107
    %v5109 = vrot.slane %v4675, 2
    %v5110 = vrot.slane %v4676, 2
    %v5111 = vsel %vm384, %v5109, %v5110
    %v5112 = vrot.slane %v4677, 2
    %v5113 = vrot.slane %v4678, 2
    %v5114 = vsel %vm384, %v5112, %v5113
    %v5115 = vrot.slane %v4679, 2
    %v5116 = vrot.slane %v4680, 2
    %v5117 = vsel %vm384, %v5115, %v5116
    %v5118 = vrot.slane %v4681, 2
    %v5119 = vrot.slane %v4682, 2
    %v5120 = vsel %vm384, %v5118, %v5119
    %v5121 = vrot.slane %v4683, 2
    %v5122 = vrot.slane %v4684, 2
    %v5123 = vsel %vm384, %v5121, %v5122
    %v5124 = vrot.slane %v4685, 2
    %v5125 = vrot.slane %v4686, 2
    %v5126 = vsel %vm384, %v5124, %v5125
    %v5143 = vpack.c.bf16 %v5084, %v5081
    %v5144 = vpack.c.bf16 %v5090, %v5087
    %v5145 = vpack.c.bf16 %v5096, %v5093
    %v5146 = vpack.c.bf16 %v5102, %v5099
    %v5147 = vpack.c.bf16 %v5108, %v5105
    %v5148 = vpack.c.bf16 %v5114, %v5111
    %v5149 = vpack.c.bf16 %v5120, %v5117
    %v5150 = vpack.c.bf16 %v5126, %v5123
    %s5151 = scalar_lea.vmem %s3, 32
    %v5152 = vld [vmem:[%s5151] sm:$0xf]
    %v5153 = vld [vmem:[%s5151 + $0x4] sm:$0xf]
    %v5154 = vld [vmem:[%s5151 + $0x8] sm:$0xf]
    %v5155 = vld [vmem:[%s5151 + $0xc] sm:$0xf]
    %v5160 = vunpack.c.l.b16 %v5152
    %v5161 = vunpack.c.l.b16 %v5153
    %v5162 = vunpack.c.l.b16 %v5154
    %v5163 = vunpack.c.l.b16 %v5155
    %v5164 = vpack.c.b16 %v5161, %v5160
    %v5165 = vpack.c.b16 %v5163, %v5162
    %v5169 = vsel %vm3944, %v5143, 0
    %v5172 = vsel %vm3944, %v5144, 0
    %v5175 = vsel %vm3944, %v5145, 0
    %v5178 = vsel %vm3944, %v5146, 0
    %v5181 = vsel %vm3944, %v5147, 0
    %v5184 = vsel %vm3944, %v5148, 0
    %v5187 = vsel %vm3944, %v5149, 0
    %v5190 = vsel %vm3944, %v5150, 0
    %5192 = vmatprep.subr.bf16.mxu0 0
    %5193 = vmatpush1.bf16.msra.mxu0 0
    %5194 = vmatprep.subr.bf16.mxu0 0
    %5195 = vmatpush1.bf16.msra.mxu0 0
    %5196 = vmatprep.subr.bf16.mxu0 0
    %5197 = vmatpush1.bf16.msra.mxu0 0
    %5198 = vmatprep.subr.bf16.mxu0 0
    %5199 = vmatpush1.bf16.msra.mxu0 0
    %5200 = vmatprep.subr.bf16.mxu0 0
    %5201 = vmatpush1.bf16.msra.mxu0 0
    %5202 = vmatprep.subr.bf16.mxu0 0
    %5203 = vmatpush1.bf16.msra.mxu0 0
    %5204 = vmatprep.subr.bf16.mxu0 0
    %5205 = vmatpush1.bf16.msra.mxu0 %v5165
    %5206 = vmatprep.subr.bf16.mxu0 0
    %5207 = vmatpush1.bf16.msra.mxu0 %v5164
    %5208 = vmatprep.subr.bf16.mxu0 0
    %5209 = vmatpush2.bf16.msra.mxu0 0
    %5210 = vmatprep.subr.bf16.mxu0 0
    %5211 = vmatpush2.bf16.msra.mxu0 0
    %5212 = vmatprep.subr.bf16.mxu0 0
    %5213 = vmatpush2.bf16.msra.mxu0 0
    %5214 = vmatprep.subr.bf16.mxu0 0
    %5215 = vmatpush2.bf16.msra.mxu0 0
    %5216 = vmatprep.subr.bf16.mxu0 0
    %5217 = vmatpush2.bf16.msra.mxu0 0
    %5218 = vmatprep.subr.bf16.mxu0 0
    %5219 = vmatpush2.bf16.msra.mxu0 0
    %5220 = vmatprep.subr.bf16.mxu0 0
    %5221 = vmatpush2.bf16.msra.mxu0 0
    %5222 = vmatprep.subr.bf16.mxu0 0
    %5223 = vmatpush2.bf16.msra.mxu0 0
    %5224 = vmatprep.mubr.bf16.mxu0 0
    %5225 = vmatmul.mubr.bf16.gmra.mxu0 %v5169
    %v5226 = vpop.f32.mrf.mxu0
    %v5227 = vadd.f32 0.0, %v5226
    %v5228 = vpop.f32.mrf.mxu0
    %v5229 = vpop.f32.mrf.mxu0
    %v5230 = vadd.f32 0.0, %v5229
    %v5231 = vpop.f32.mrf.mxu0
    %5232 = vmatprep.mubr.bf16.mxu0 0
    %5233 = vmatmul.mubr.bf16.gmra.mxu0 %v5172
    %v5234 = vpop.f32.mrf.mxu0
    %v5235 = vadd.f32 0.0, %v5234
    %v5236 = vpop.f32.mrf.mxu0
    %v5237 = vpop.f32.mrf.mxu0
    %v5238 = vadd.f32 0.0, %v5237
    %v5239 = vpop.f32.mrf.mxu0
    %5240 = vmatprep.mubr.bf16.mxu0 0
    %5241 = vmatmul.mubr.bf16.gmra.mxu0 %v5175
    %v5242 = vpop.f32.mrf.mxu0
    %v5243 = vadd.f32 0.0, %v5242
    %v5244 = vpop.f32.mrf.mxu0
    %v5245 = vpop.f32.mrf.mxu0
    %v5246 = vadd.f32 0.0, %v5245
    %v5247 = vpop.f32.mrf.mxu0
    %5248 = vmatprep.mubr.bf16.mxu0 0
    %5249 = vmatmul.mubr.bf16.gmra.mxu0 %v5178
    %v5250 = vpop.f32.mrf.mxu0
    %v5251 = vadd.f32 0.0, %v5250
    %v5252 = vpop.f32.mrf.mxu0
    %v5253 = vpop.f32.mrf.mxu0
    %v5254 = vadd.f32 0.0, %v5253
    %v5255 = vpop.f32.mrf.mxu0
    %5256 = vmatprep.mubr.bf16.mxu0 0
    %5257 = vmatmul.mubr.bf16.gmra.mxu0 %v5181
    %v5258 = vpop.f32.mrf.mxu0
    %v5259 = vadd.f32 0.0, %v5258
    %v5260 = vpop.f32.mrf.mxu0
    %v5261 = vpop.f32.mrf.mxu0
    %v5262 = vadd.f32 0.0, %v5261
    %v5263 = vpop.f32.mrf.mxu0
    %5264 = vmatprep.mubr.bf16.mxu0 0
    %5265 = vmatmul.mubr.bf16.gmra.mxu0 %v5184
    %v5266 = vpop.f32.mrf.mxu0
    %v5267 = vadd.f32 0.0, %v5266
    %v5268 = vpop.f32.mrf.mxu0
    %v5269 = vpop.f32.mrf.mxu0
    %v5270 = vadd.f32 0.0, %v5269
    %v5271 = vpop.f32.mrf.mxu0
    %5272 = vmatprep.mubr.bf16.mxu0 0
    %5273 = vmatmul.mubr.bf16.gmra.mxu0 %v5187
    %v5274 = vpop.f32.mrf.mxu0
    %v5275 = vadd.f32 0.0, %v5274
    %v5276 = vpop.f32.mrf.mxu0
    %v5277 = vpop.f32.mrf.mxu0
    %v5278 = vadd.f32 0.0, %v5277
    %v5279 = vpop.f32.mrf.mxu0
    %5280 = vmatprep.mubr.bf16.mxu0 0
    %5281 = vmatmul.mubr.bf16.gmra.mxu0 %v5190
    %v5282 = vpop.f32.mrf.mxu0
    %v5283 = vadd.f32 0.0, %v5282
    %v5284 = vpop.f32.mrf.mxu0
    %v5285 = vpop.f32.mrf.mxu0
    %v5286 = vadd.f32 0.0, %v5285
    %v5287 = vpop.f32.mrf.mxu0
    %5288 = vdwg.mxu0
    %v5289 = vadd.f32 %v5017, %v5227
    %v5290 = vadd.f32 %v5020, %v5230
    %v5291 = vadd.f32 %v5025, %v5235
    %v5292 = vadd.f32 %v5028, %v5238
    %v5293 = vadd.f32 %v5033, %v5243
    %v5294 = vadd.f32 %v5036, %v5246
    %v5295 = vadd.f32 %v5041, %v5251
    %v5296 = vadd.f32 %v5044, %v5254
    %v5297 = vadd.f32 %v5049, %v5259
    %v5298 = vadd.f32 %v5052, %v5262
    %v5299 = vadd.f32 %v5057, %v5267
    %v5300 = vadd.f32 %v5060, %v5270
    %v5301 = vadd.f32 %v5065, %v5275
    %v5302 = vadd.f32 %v5068, %v5278
    %v5303 = vadd.f32 %v5073, %v5283
    %v5304 = vadd.f32 %v5076, %v5286
    %v5305 = vpack.c.bf16 %v4655, %v4653
    %v5306 = vpack.c.bf16 %v4659, %v4657
    %v5307 = vpack.c.bf16 %v4663, %v4661
    %v5308 = vpack.c.bf16 %v4667, %v4665
    %v5309 = vpack.c.bf16 %v4675, %v4673
    %v5310 = vpack.c.bf16 %v4679, %v4677
    %v5311 = vpack.c.bf16 %v4683, %v4681
    %v5312 = vpack.c.bf16 %v4687, %v4685
    %s5313 = scalar_lea.vmem %s3, 48
    %v5314 = vld [vmem:[%s5313] sm:$0xf]
    %v5315 = vld [vmem:[%s5313 + $0x4] sm:$0xf]
    %v5316 = vld [vmem:[%s5313 + $0x8] sm:$0xf]
    %v5317 = vld [vmem:[%s5313 + $0xc] sm:$0xf]
    %v5322 = vunpack.c.l.b16 %v5314
    %v5323 = vunpack.c.l.b16 %v5315
    %v5324 = vunpack.c.l.b16 %v5316
    %v5325 = vunpack.c.l.b16 %v5317
    %v5326 = vpack.c.b16 %v5323, %v5322
    %v5327 = vpack.c.b16 %v5325, %v5324
    %v5331 = vsel %vm3944, %v5305, 0
    %v5334 = vsel %vm3944, %v5306, 0
    %v5337 = vsel %vm3944, %v5307, 0
    %v5340 = vsel %vm3944, %v5308, 0
    %v5343 = vsel %vm3944, %v5309, 0
    %v5346 = vsel %vm3944, %v5310, 0
    %v5349 = vsel %vm3944, %v5311, 0
    %v5352 = vsel %vm3944, %v5312, 0
    %5354 = vmatprep.subr.bf16.mxu0 0
    %5355 = vmatpush1.bf16.msra.mxu0 0
    %5356 = vmatprep.subr.bf16.mxu0 0
    %5357 = vmatpush1.bf16.msra.mxu0 0
    %5358 = vmatprep.subr.bf16.mxu0 0
    %5359 = vmatpush1.bf16.msra.mxu0 0
    %5360 = vmatprep.subr.bf16.mxu0 0
    %5361 = vmatpush1.bf16.msra.mxu0 0
    %5362 = vmatprep.subr.bf16.mxu0 0
    %5363 = vmatpush1.bf16.msra.mxu0 0
    %5364 = vmatprep.subr.bf16.mxu0 0
    %5365 = vmatpush1.bf16.msra.mxu0 0
    %5366 = vmatprep.subr.bf16.mxu0 0
    %5367 = vmatpush1.bf16.msra.mxu0 %v5327
    %5368 = vmatprep.subr.bf16.mxu0 0
    %5369 = vmatpush1.bf16.msra.mxu0 %v5326
    %5370 = vmatprep.subr.bf16.mxu0 0
    %5371 = vmatpush2.bf16.msra.mxu0 0
    %5372 = vmatprep.subr.bf16.mxu0 0
    %5373 = vmatpush2.bf16.msra.mxu0 0
    %5374 = vmatprep.subr.bf16.mxu0 0
    %5375 = vmatpush2.bf16.msra.mxu0 0
    %5376 = vmatprep.subr.bf16.mxu0 0
    %5377 = vmatpush2.bf16.msra.mxu0 0
    %5378 = vmatprep.subr.bf16.mxu0 0
    %5379 = vmatpush2.bf16.msra.mxu0 0
    %5380 = vmatprep.subr.bf16.mxu0 0
    %5381 = vmatpush2.bf16.msra.mxu0 0
    %5382 = vmatprep.subr.bf16.mxu0 0
    %5383 = vmatpush2.bf16.msra.mxu0 0
    %5384 = vmatprep.subr.bf16.mxu0 0
    %5385 = vmatpush2.bf16.msra.mxu0 0
    %5386 = vmatprep.mubr.bf16.mxu0 0
    %5387 = vmatmul.mubr.bf16.gmra.mxu0 %v5331
    %v5388 = vpop.f32.mrf.mxu0
    %v5389 = vadd.f32 0.0, %v5388
    %v5390 = vpop.f32.mrf.mxu0
    %v5391 = vpop.f32.mrf.mxu0
    %v5392 = vadd.f32 0.0, %v5391
    %v5393 = vpop.f32.mrf.mxu0
    %5394 = vmatprep.mubr.bf16.mxu0 0
    %5395 = vmatmul.mubr.bf16.gmra.mxu0 %v5334
    %v5396 = vpop.f32.mrf.mxu0
    %v5397 = vadd.f32 0.0, %v5396
    %v5398 = vpop.f32.mrf.mxu0
    %v5399 = vpop.f32.mrf.mxu0
    %v5400 = vadd.f32 0.0, %v5399
    %v5401 = vpop.f32.mrf.mxu0
    %5402 = vmatprep.mubr.bf16.mxu0 0
    %5403 = vmatmul.mubr.bf16.gmra.mxu0 %v5337
    %v5404 = vpop.f32.mrf.mxu0
    %v5405 = vadd.f32 0.0, %v5404
    %v5406 = vpop.f32.mrf.mxu0
    %v5407 = vpop.f32.mrf.mxu0
    %v5408 = vadd.f32 0.0, %v5407
    %v5409 = vpop.f32.mrf.mxu0
    %5410 = vmatprep.mubr.bf16.mxu0 0
    %5411 = vmatmul.mubr.bf16.gmra.mxu0 %v5340
    %v5412 = vpop.f32.mrf.mxu0
    %v5413 = vadd.f32 0.0, %v5412
    %v5414 = vpop.f32.mrf.mxu0
    %v5415 = vpop.f32.mrf.mxu0
    %v5416 = vadd.f32 0.0, %v5415
    %v5417 = vpop.f32.mrf.mxu0
    %5418 = vmatprep.mubr.bf16.mxu0 0
    %5419 = vmatmul.mubr.bf16.gmra.mxu0 %v5343
    %v5420 = vpop.f32.mrf.mxu0
    %v5421 = vadd.f32 0.0, %v5420
    %v5422 = vpop.f32.mrf.mxu0
    %v5423 = vpop.f32.mrf.mxu0
    %v5424 = vadd.f32 0.0, %v5423
    %v5425 = vpop.f32.mrf.mxu0
    %5426 = vmatprep.mubr.bf16.mxu0 0
    %5427 = vmatmul.mubr.bf16.gmra.mxu0 %v5346
    %v5428 = vpop.f32.mrf.mxu0
    %v5429 = vadd.f32 0.0, %v5428
    %v5430 = vpop.f32.mrf.mxu0
    %v5431 = vpop.f32.mrf.mxu0
    %v5432 = vadd.f32 0.0, %v5431
    %v5433 = vpop.f32.mrf.mxu0
    %5434 = vmatprep.mubr.bf16.mxu0 0
    %5435 = vmatmul.mubr.bf16.gmra.mxu0 %v5349
    %v5436 = vpop.f32.mrf.mxu0
    %v5437 = vadd.f32 0.0, %v5436
    %v5438 = vpop.f32.mrf.mxu0
    %v5439 = vpop.f32.mrf.mxu0
    %v5440 = vadd.f32 0.0, %v5439
    %v5441 = vpop.f32.mrf.mxu0
    %5442 = vmatprep.mubr.bf16.mxu0 0
    %5443 = vmatmul.mubr.bf16.gmra.mxu0 %v5352
    %v5444 = vpop.f32.mrf.mxu0
    %v5445 = vadd.f32 0.0, %v5444
    %v5446 = vpop.f32.mrf.mxu0
    %v5447 = vpop.f32.mrf.mxu0
    %v5448 = vadd.f32 0.0, %v5447
    %v5449 = vpop.f32.mrf.mxu0
    %5450 = vdwg.mxu0
    %v5451 = vadd.f32 %v5289, %v5389
    %v5452 = vadd.f32 %v5290, %v5392
    %v5453 = vadd.f32 %v5291, %v5397
    %v5454 = vadd.f32 %v5292, %v5400
    %v5455 = vadd.f32 %v5293, %v5405
    %v5456 = vadd.f32 %v5294, %v5408
    %v5457 = vadd.f32 %v5295, %v5413
    %v5458 = vadd.f32 %v5296, %v5416
    %v5459 = vadd.f32 %v5297, %v5421
    %v5460 = vadd.f32 %v5298, %v5424
    %v5461 = vadd.f32 %v5299, %v5429
    %v5462 = vadd.f32 %v5300, %v5432
    %v5463 = vadd.f32 %v5301, %v5437
    %v5464 = vadd.f32 %v5302, %v5440
    %v5465 = vadd.f32 %v5303, %v5445
    %v5466 = vadd.f32 %v5304, %v5448
    %v5471 = vrot.slane %v4667, 1
    %v5472 = vrot.slane %v4668, 1
    %v5473 = vsel %vm4735, %v5471, %v5472
    %v5474 = vrot.slane %v4687, 1
    %v5475 = vrot.slane %v4688, 1
    %v5476 = vsel %vm4735, %v5474, %v5475
    %v5479 = vpack.c.bf16 %v4744, %v4741
    %v5480 = vpack.c.bf16 %v4750, %v4747
    %v5481 = vpack.c.bf16 %v4756, %v4753
    %v5482 = vpack.c.bf16 %v5473, %v4759
    %v5483 = vpack.c.bf16 %v4768, %v4765
    %v5484 = vpack.c.bf16 %v4774, %v4771
    %v5485 = vpack.c.bf16 %v4780, %v4777
    %v5486 = vpack.c.bf16 %v5476, %v4783
    %s5487 = scalar_lea.vmem %s3, 64
    %v5488 = vld [vmem:[%s5487] sm:$0xf]
    %v5489 = vld [vmem:[%s5487 + $0x4] sm:$0xf]
    %v5490 = vld [vmem:[%s5487 + $0x8] sm:$0xf]
    %v5491 = vld [vmem:[%s5487 + $0xc] sm:$0xf]
    %v5496 = vunpack.c.l.b16 %v5488
    %v5497 = vunpack.c.l.b16 %v5489
    %v5498 = vunpack.c.l.b16 %v5490
    %v5499 = vunpack.c.l.b16 %v5491
    %v5500 = vpack.c.b16 %v5497, %v5496
    %v5501 = vpack.c.b16 %v5499, %v5498
    %v5505 = vsel %vm3944, %v5479, 0
    %v5508 = vsel %vm3944, %v5480, 0
    %v5511 = vsel %vm3944, %v5481, 0
    %v5514 = vsel %vm3944, %v5482, 0
    %v5517 = vsel %vm3944, %v5483, 0
    %v5520 = vsel %vm3944, %v5484, 0
    %v5523 = vsel %vm3944, %v5485, 0
    %v5526 = vsel %vm3944, %v5486, 0
    %5528 = vmatprep.subr.bf16.mxu0 0
    %5529 = vmatpush1.bf16.msra.mxu0 0
    %5530 = vmatprep.subr.bf16.mxu0 0
    %5531 = vmatpush1.bf16.msra.mxu0 0
    %5532 = vmatprep.subr.bf16.mxu0 0
    %5533 = vmatpush1.bf16.msra.mxu0 0
    %5534 = vmatprep.subr.bf16.mxu0 0
    %5535 = vmatpush1.bf16.msra.mxu0 0
    %5536 = vmatprep.subr.bf16.mxu0 0
    %5537 = vmatpush1.bf16.msra.mxu0 0
    %5538 = vmatprep.subr.bf16.mxu0 0
    %5539 = vmatpush1.bf16.msra.mxu0 0
    %5540 = vmatprep.subr.bf16.mxu0 0
    %5541 = vmatpush1.bf16.msra.mxu0 %v5501
    %5542 = vmatprep.subr.bf16.mxu0 0
    %5543 = vmatpush1.bf16.msra.mxu0 %v5500
    %5544 = vmatprep.subr.bf16.mxu0 0
    %5545 = vmatpush2.bf16.msra.mxu0 0
    %5546 = vmatprep.subr.bf16.mxu0 0
    %5547 = vmatpush2.bf16.msra.mxu0 0
    %5548 = vmatprep.subr.bf16.mxu0 0
    %5549 = vmatpush2.bf16.msra.mxu0 0
    %5550 = vmatprep.subr.bf16.mxu0 0
    %5551 = vmatpush2.bf16.msra.mxu0 0
    %5552 = vmatprep.subr.bf16.mxu0 0
    %5553 = vmatpush2.bf16.msra.mxu0 0
    %5554 = vmatprep.subr.bf16.mxu0 0
    %5555 = vmatpush2.bf16.msra.mxu0 0
    %5556 = vmatprep.subr.bf16.mxu0 0
    %5557 = vmatpush2.bf16.msra.mxu0 0
    %5558 = vmatprep.subr.bf16.mxu0 0
    %5559 = vmatpush2.bf16.msra.mxu0 0
    %5560 = vmatprep.mubr.bf16.mxu0 0
    %5561 = vmatmul.mubr.bf16.gmra.mxu0 %v5505
    %v5562 = vpop.f32.mrf.mxu0
    %v5563 = vadd.f32 0.0, %v5562
    %v5564 = vpop.f32.mrf.mxu0
    %v5565 = vpop.f32.mrf.mxu0
    %v5566 = vadd.f32 0.0, %v5565
    %v5567 = vpop.f32.mrf.mxu0
    %5568 = vmatprep.mubr.bf16.mxu0 0
    %5569 = vmatmul.mubr.bf16.gmra.mxu0 %v5508
    %v5570 = vpop.f32.mrf.mxu0
    %v5571 = vadd.f32 0.0, %v5570
    %v5572 = vpop.f32.mrf.mxu0
    %v5573 = vpop.f32.mrf.mxu0
    %v5574 = vadd.f32 0.0, %v5573
    %v5575 = vpop.f32.mrf.mxu0
    %5576 = vmatprep.mubr.bf16.mxu0 0
    %5577 = vmatmul.mubr.bf16.gmra.mxu0 %v5511
    %v5578 = vpop.f32.mrf.mxu0
    %v5579 = vadd.f32 0.0, %v5578
    %v5580 = vpop.f32.mrf.mxu0
    %v5581 = vpop.f32.mrf.mxu0
    %v5582 = vadd.f32 0.0, %v5581
    %v5583 = vpop.f32.mrf.mxu0
    %5584 = vmatprep.mubr.bf16.mxu0 0
    %5585 = vmatmul.mubr.bf16.gmra.mxu0 %v5514
    %v5586 = vpop.f32.mrf.mxu0
    %v5587 = vadd.f32 0.0, %v5586
    %v5588 = vpop.f32.mrf.mxu0
    %v5589 = vpop.f32.mrf.mxu0
    %v5590 = vadd.f32 0.0, %v5589
    %v5591 = vpop.f32.mrf.mxu0
    %5592 = vmatprep.mubr.bf16.mxu0 0
    %5593 = vmatmul.mubr.bf16.gmra.mxu0 %v5517
    %v5594 = vpop.f32.mrf.mxu0
    %v5595 = vadd.f32 0.0, %v5594
    %v5596 = vpop.f32.mrf.mxu0
    %v5597 = vpop.f32.mrf.mxu0
    %v5598 = vadd.f32 0.0, %v5597
    %v5599 = vpop.f32.mrf.mxu0
    %5600 = vmatprep.mubr.bf16.mxu0 0
    %5601 = vmatmul.mubr.bf16.gmra.mxu0 %v5520
    %v5602 = vpop.f32.mrf.mxu0
    %v5603 = vadd.f32 0.0, %v5602
    %v5604 = vpop.f32.mrf.mxu0
    %v5605 = vpop.f32.mrf.mxu0
    %v5606 = vadd.f32 0.0, %v5605
    %v5607 = vpop.f32.mrf.mxu0
    %5608 = vmatprep.mubr.bf16.mxu0 0
    %5609 = vmatmul.mubr.bf16.gmra.mxu0 %v5523
    %v5610 = vpop.f32.mrf.mxu0
    %v5611 = vadd.f32 0.0, %v5610
    %v5612 = vpop.f32.mrf.mxu0
    %v5613 = vpop.f32.mrf.mxu0
    %v5614 = vadd.f32 0.0, %v5613
    %v5615 = vpop.f32.mrf.mxu0
    %5616 = vmatprep.mubr.bf16.mxu0 0
    %5617 = vmatmul.mubr.bf16.gmra.mxu0 %v5526
    %v5618 = vpop.f32.mrf.mxu0
    %v5619 = vadd.f32 0.0, %v5618
    %v5620 = vpop.f32.mrf.mxu0
    %v5621 = vpop.f32.mrf.mxu0
    %v5622 = vadd.f32 0.0, %v5621
    %v5623 = vpop.f32.mrf.mxu0
    %5624 = vdwg.mxu0
    %v5625 = vadd.f32 %v5451, %v5563
    %v5626 = vadd.f32 %v5452, %v5566
    %v5627 = vadd.f32 %v5453, %v5571
    %v5628 = vadd.f32 %v5454, %v5574
    %v5629 = vadd.f32 %v5455, %v5579
    %v5630 = vadd.f32 %v5456, %v5582
    %v5631 = vadd.f32 %v5457, %v5587
    %v5632 = vadd.f32 %v5458, %v5590
    %v5633 = vadd.f32 %v5459, %v5595
    %v5634 = vadd.f32 %v5460, %v5598
    %v5635 = vadd.f32 %v5461, %v5603
    %v5636 = vadd.f32 %v5462, %v5606
    %v5637 = vadd.f32 %v5463, %v5611
    %v5638 = vadd.f32 %v5464, %v5614
    %v5639 = vadd.f32 %v5465, %v5619
    %v5640 = vadd.f32 %v5466, %v5622
    %v5641 = vrot.slane %v4667, 2
    %v5642 = vrot.slane %v4668, 2
    %v5643 = vsel %vm384, %v5641, %v5642
    %v5644 = vrot.slane %v4687, 2
    %v5645 = vrot.slane %v4688, 2
    %v5646 = vsel %vm384, %v5644, %v5645
    %v5649 = vpack.c.bf16 %v5087, %v5084
    %v5650 = vpack.c.bf16 %v5093, %v5090
    %v5651 = vpack.c.bf16 %v5099, %v5096
    %v5652 = vpack.c.bf16 %v5643, %v5102
    %v5653 = vpack.c.bf16 %v5111, %v5108
    %v5654 = vpack.c.bf16 %v5117, %v5114
    %v5655 = vpack.c.bf16 %v5123, %v5120
    %v5656 = vpack.c.bf16 %v5646, %v5126
    %s5657 = scalar_lea.vmem %s3, 80
    %v5658 = vld [vmem:[%s5657] sm:$0xf]
    %v5659 = vld [vmem:[%s5657 + $0x4] sm:$0xf]
    %v5660 = vld [vmem:[%s5657 + $0x8] sm:$0xf]
    %v5661 = vld [vmem:[%s5657 + $0xc] sm:$0xf]
    %v5666 = vunpack.c.l.b16 %v5658
    %v5667 = vunpack.c.l.b16 %v5659
    %v5668 = vunpack.c.l.b16 %v5660
    %v5669 = vunpack.c.l.b16 %v5661
    %v5670 = vpack.c.b16 %v5667, %v5666
    %v5671 = vpack.c.b16 %v5669, %v5668
    %v5675 = vsel %vm3944, %v5649, 0
    %v5678 = vsel %vm3944, %v5650, 0
    %v5681 = vsel %vm3944, %v5651, 0
    %v5684 = vsel %vm3944, %v5652, 0
    %v5687 = vsel %vm3944, %v5653, 0
    %v5690 = vsel %vm3944, %v5654, 0
    %v5693 = vsel %vm3944, %v5655, 0
    %v5696 = vsel %vm3944, %v5656, 0
    %5698 = vmatprep.subr.bf16.mxu0 0
    %5699 = vmatpush1.bf16.msra.mxu0 0
    %5700 = vmatprep.subr.bf16.mxu0 0
    %5701 = vmatpush1.bf16.msra.mxu0 0
    %5702 = vmatprep.subr.bf16.mxu0 0
    %5703 = vmatpush1.bf16.msra.mxu0 0
    %5704 = vmatprep.subr.bf16.mxu0 0
    %5705 = vmatpush1.bf16.msra.mxu0 0
    %5706 = vmatprep.subr.bf16.mxu0 0
    %5707 = vmatpush1.bf16.msra.mxu0 0
    %5708 = vmatprep.subr.bf16.mxu0 0
    %5709 = vmatpush1.bf16.msra.mxu0 0
    %5710 = vmatprep.subr.bf16.mxu0 0
    %5711 = vmatpush1.bf16.msra.mxu0 %v5671
    %5712 = vmatprep.subr.bf16.mxu0 0
    %5713 = vmatpush1.bf16.msra.mxu0 %v5670
    %5714 = vmatprep.subr.bf16.mxu0 0
    %5715 = vmatpush2.bf16.msra.mxu0 0
    %5716 = vmatprep.subr.bf16.mxu0 0
    %5717 = vmatpush2.bf16.msra.mxu0 0
    %5718 = vmatprep.subr.bf16.mxu0 0
    %5719 = vmatpush2.bf16.msra.mxu0 0
    %5720 = vmatprep.subr.bf16.mxu0 0
    %5721 = vmatpush2.bf16.msra.mxu0 0
    %5722 = vmatprep.subr.bf16.mxu0 0
    %5723 = vmatpush2.bf16.msra.mxu0 0
    %5724 = vmatprep.subr.bf16.mxu0 0
    %5725 = vmatpush2.bf16.msra.mxu0 0
    %5726 = vmatprep.subr.bf16.mxu0 0
    %5727 = vmatpush2.bf16.msra.mxu0 0
    %5728 = vmatprep.subr.bf16.mxu0 0
    %5729 = vmatpush2.bf16.msra.mxu0 0
    %5730 = vmatprep.mubr.bf16.mxu0 0
    %5731 = vmatmul.mubr.bf16.gmra.mxu0 %v5675
    %v5732 = vpop.f32.mrf.mxu0
    %v5733 = vadd.f32 0.0, %v5732
    %v5734 = vpop.f32.mrf.mxu0
    %v5735 = vpop.f32.mrf.mxu0
    %v5736 = vadd.f32 0.0, %v5735
    %v5737 = vpop.f32.mrf.mxu0
    %5738 = vmatprep.mubr.bf16.mxu0 0
    %5739 = vmatmul.mubr.bf16.gmra.mxu0 %v5678
    %v5740 = vpop.f32.mrf.mxu0
    %v5741 = vadd.f32 0.0, %v5740
    %v5742 = vpop.f32.mrf.mxu0
    %v5743 = vpop.f32.mrf.mxu0
    %v5744 = vadd.f32 0.0, %v5743
    %v5745 = vpop.f32.mrf.mxu0
    %5746 = vmatprep.mubr.bf16.mxu0 0
    %5747 = vmatmul.mubr.bf16.gmra.mxu0 %v5681
    %v5748 = vpop.f32.mrf.mxu0
    %v5749 = vadd.f32 0.0, %v5748
    %v5750 = vpop.f32.mrf.mxu0
    %v5751 = vpop.f32.mrf.mxu0
    %v5752 = vadd.f32 0.0, %v5751
    %v5753 = vpop.f32.mrf.mxu0
    %5754 = vmatprep.mubr.bf16.mxu0 0
    %5755 = vmatmul.mubr.bf16.gmra.mxu0 %v5684
    %v5756 = vpop.f32.mrf.mxu0
    %v5757 = vadd.f32 0.0, %v5756
    %v5758 = vpop.f32.mrf.mxu0
    %v5759 = vpop.f32.mrf.mxu0
    %v5760 = vadd.f32 0.0, %v5759
    %v5761 = vpop.f32.mrf.mxu0
    %5762 = vmatprep.mubr.bf16.mxu0 0
    %5763 = vmatmul.mubr.bf16.gmra.mxu0 %v5687
    %v5764 = vpop.f32.mrf.mxu0
    %v5765 = vadd.f32 0.0, %v5764
    %v5766 = vpop.f32.mrf.mxu0
    %v5767 = vpop.f32.mrf.mxu0
    %v5768 = vadd.f32 0.0, %v5767
    %v5769 = vpop.f32.mrf.mxu0
    %5770 = vmatprep.mubr.bf16.mxu0 0
    %5771 = vmatmul.mubr.bf16.gmra.mxu0 %v5690
    %v5772 = vpop.f32.mrf.mxu0
    %v5773 = vadd.f32 0.0, %v5772
    %v5774 = vpop.f32.mrf.mxu0
    %v5775 = vpop.f32.mrf.mxu0
    %v5776 = vadd.f32 0.0, %v5775
    %v5777 = vpop.f32.mrf.mxu0
    %5778 = vmatprep.mubr.bf16.mxu0 0
    %5779 = vmatmul.mubr.bf16.gmra.mxu0 %v5693
    %v5780 = vpop.f32.mrf.mxu0
    %v5781 = vadd.f32 0.0, %v5780
    %v5782 = vpop.f32.mrf.mxu0
    %v5783 = vpop.f32.mrf.mxu0
    %v5784 = vadd.f32 0.0, %v5783
    %v5785 = vpop.f32.mrf.mxu0
    %5786 = vmatprep.mubr.bf16.mxu0 0
    %5787 = vmatmul.mubr.bf16.gmra.mxu0 %v5696
    %v5788 = vpop.f32.mrf.mxu0
    %v5789 = vadd.f32 0.0, %v5788
    %v5790 = vpop.f32.mrf.mxu0
    %v5791 = vpop.f32.mrf.mxu0
    %v5792 = vadd.f32 0.0, %v5791
    %v5793 = vpop.f32.mrf.mxu0
    %5794 = vdwg.mxu0
    %v5795 = vadd.f32 %v5625, %v5733
    %v5796 = vadd.f32 %v5626, %v5736
    %v5797 = vadd.f32 %v5627, %v5741
    %v5798 = vadd.f32 %v5628, %v5744
    %v5799 = vadd.f32 %v5629, %v5749
    %v5800 = vadd.f32 %v5630, %v5752
    %v5801 = vadd.f32 %v5631, %v5757
    %v5802 = vadd.f32 %v5632, %v5760
    %v5803 = vadd.f32 %v5633, %v5765
    %v5804 = vadd.f32 %v5634, %v5768
    %v5805 = vadd.f32 %v5635, %v5773
    %v5806 = vadd.f32 %v5636, %v5776
    %v5807 = vadd.f32 %v5637, %v5781
    %v5808 = vadd.f32 %v5638, %v5784
    %v5809 = vadd.f32 %v5639, %v5789
    %v5810 = vadd.f32 %v5640, %v5792
    %v5811 = vpack.c.bf16 %v4669, %v4667
    %v5812 = vpack.c.bf16 %v4689, %v4687
    %s5813 = scalar_lea.vmem %s3, 96
    %v5814 = vld [vmem:[%s5813] sm:$0xf]
    %v5815 = vld [vmem:[%s5813 + $0x4] sm:$0xf]
    %v5816 = vld [vmem:[%s5813 + $0x8] sm:$0xf]
    %v5817 = vld [vmem:[%s5813 + $0xc] sm:$0xf]
    %v5822 = vunpack.c.l.b16 %v5814
    %v5823 = vunpack.c.l.b16 %v5815
    %v5824 = vunpack.c.l.b16 %v5816
    %v5825 = vunpack.c.l.b16 %v5817
    %v5826 = vpack.c.b16 %v5823, %v5822
    %v5827 = vpack.c.b16 %v5825, %v5824
    %v5831 = vsel %vm3944, %v5811, 0
    %v5834 = vsel %vm3944, %v5812, 0
    %5836 = vmatprep.subr.bf16.mxu0 0
    %5837 = vmatpush1.bf16.msra.mxu0 0
    %5838 = vmatprep.subr.bf16.mxu0 0
    %5839 = vmatpush1.bf16.msra.mxu0 0
    %5840 = vmatprep.subr.bf16.mxu0 0
    %5841 = vmatpush1.bf16.msra.mxu0 0
    %5842 = vmatprep.subr.bf16.mxu0 0
    %5843 = vmatpush1.bf16.msra.mxu0 0
    %5844 = vmatprep.subr.bf16.mxu0 0
    %5845 = vmatpush1.bf16.msra.mxu0 0
    %5846 = vmatprep.subr.bf16.mxu0 0
    %5847 = vmatpush1.bf16.msra.mxu0 0
    %5848 = vmatprep.subr.bf16.mxu0 0
    %5849 = vmatpush1.bf16.msra.mxu0 %v5827
    %5850 = vmatprep.subr.bf16.mxu0 0
    %5851 = vmatpush1.bf16.msra.mxu0 %v5826
    %5852 = vmatprep.subr.bf16.mxu0 0
    %5853 = vmatpush2.bf16.msra.mxu0 0
    %5854 = vmatprep.subr.bf16.mxu0 0
    %5855 = vmatpush2.bf16.msra.mxu0 0
    %5856 = vmatprep.subr.bf16.mxu0 0
    %5857 = vmatpush2.bf16.msra.mxu0 0
    %5858 = vmatprep.subr.bf16.mxu0 0
    %5859 = vmatpush2.bf16.msra.mxu0 0
    %5860 = vmatprep.subr.bf16.mxu0 0
    %5861 = vmatpush2.bf16.msra.mxu0 0
    %5862 = vmatprep.subr.bf16.mxu0 0
    %5863 = vmatpush2.bf16.msra.mxu0 0
    %5864 = vmatprep.subr.bf16.mxu0 0
    %5865 = vmatpush2.bf16.msra.mxu0 0
    %5866 = vmatprep.subr.bf16.mxu0 0
    %5867 = vmatpush2.bf16.msra.mxu0 0
    %5868 = vmatprep.mubr.bf16.mxu0 0
    %5869 = vmatmul.mubr.bf16.gmra.mxu0 %v4962
    %v5870 = vpop.f32.mrf.mxu0
    %v5871 = vadd.f32 0.0, %v5870
    %v5872 = vpop.f32.mrf.mxu0
    %v5873 = vpop.f32.mrf.mxu0
    %v5874 = vadd.f32 0.0, %v5873
    %v5875 = vpop.f32.mrf.mxu0
    %5876 = vmatprep.mubr.bf16.mxu0 0
    %5877 = vmatmul.mubr.bf16.gmra.mxu0 %v4965
    %v5878 = vpop.f32.mrf.mxu0
    %v5879 = vadd.f32 0.0, %v5878
    %v5880 = vpop.f32.mrf.mxu0
    %v5881 = vpop.f32.mrf.mxu0
    %v5882 = vadd.f32 0.0, %v5881
    %v5883 = vpop.f32.mrf.mxu0
    %5884 = vmatprep.mubr.bf16.mxu0 0
    %5885 = vmatmul.mubr.bf16.gmra.mxu0 %v4968
    %v5886 = vpop.f32.mrf.mxu0
    %v5887 = vadd.f32 0.0, %v5886
    %v5888 = vpop.f32.mrf.mxu0
    %v5889 = vpop.f32.mrf.mxu0
    %v5890 = vadd.f32 0.0, %v5889
    %v5891 = vpop.f32.mrf.mxu0
    %5892 = vmatprep.mubr.bf16.mxu0 0
    %5893 = vmatmul.mubr.bf16.gmra.mxu0 %v5831
    %v5894 = vpop.f32.mrf.mxu0
    %v5895 = vadd.f32 0.0, %v5894
    %v5896 = vpop.f32.mrf.mxu0
    %v5897 = vpop.f32.mrf.mxu0
    %v5898 = vadd.f32 0.0, %v5897
    %v5899 = vpop.f32.mrf.mxu0
    %5900 = vmatprep.mubr.bf16.mxu0 0
    %5901 = vmatmul.mubr.bf16.gmra.mxu0 %v4974
    %v5902 = vpop.f32.mrf.mxu0
    %v5903 = vadd.f32 0.0, %v5902
    %v5904 = vpop.f32.mrf.mxu0
    %v5905 = vpop.f32.mrf.mxu0
    %v5906 = vadd.f32 0.0, %v5905
    %v5907 = vpop.f32.mrf.mxu0
    %5908 = vmatprep.mubr.bf16.mxu0 0
    %5909 = vmatmul.mubr.bf16.gmra.mxu0 %v4977
    %v5910 = vpop.f32.mrf.mxu0
    %v5911 = vadd.f32 0.0, %v5910
    %v5912 = vpop.f32.mrf.mxu0
    %v5913 = vpop.f32.mrf.mxu0
    %v5914 = vadd.f32 0.0, %v5913
    %v5915 = vpop.f32.mrf.mxu0
    %5916 = vmatprep.mubr.bf16.mxu0 0
    %5917 = vmatmul.mubr.bf16.gmra.mxu0 %v4980
    %v5918 = vpop.f32.mrf.mxu0
    %v5919 = vadd.f32 0.0, %v5918
    %v5920 = vpop.f32.mrf.mxu0
    %v5921 = vpop.f32.mrf.mxu0
    %v5922 = vadd.f32 0.0, %v5921
    %v5923 = vpop.f32.mrf.mxu0
    %5924 = vmatprep.mubr.bf16.mxu0 0
    %5925 = vmatmul.mubr.bf16.gmra.mxu0 %v5834
    %v5926 = vpop.f32.mrf.mxu0
    %v5927 = vadd.f32 0.0, %v5926
    %v5928 = vpop.f32.mrf.mxu0
    %v5929 = vpop.f32.mrf.mxu0
    %v5930 = vadd.f32 0.0, %v5929
    %v5931 = vpop.f32.mrf.mxu0
    %5932 = vdwg.mxu0
    %v5933 = vadd.f32 %v5795, %v5871
    %v5934 = vadd.f32 %v5796, %v5874
    %v5935 = vadd.f32 %v5797, %v5879
    %v5936 = vadd.f32 %v5798, %v5882
    %v5937 = vadd.f32 %v5799, %v5887
    %v5938 = vadd.f32 %v5800, %v5890
    %v5939 = vadd.f32 %v5801, %v5895
    %v5940 = vadd.f32 %v5802, %v5898
    %v5941 = vadd.f32 %v5803, %v5903
    %v5942 = vadd.f32 %v5804, %v5906
    %v5943 = vadd.f32 %v5805, %v5911
    %v5944 = vadd.f32 %v5806, %v5914
    %v5945 = vadd.f32 %v5807, %v5919
    %v5946 = vadd.f32 %v5808, %v5922
    %v5947 = vadd.f32 %v5809, %v5927
    %v5948 = vadd.f32 %v5810, %v5930
    %v5953 = vrot.slane %v4669, 1
    %v5954 = vrot.slane %v4670, 1
    %v5955 = vsel %vm4735, %v5953, %v5954
    %v5956 = vrot.slane %v4689, 1
    %v5957 = vrot.slane %v4690, 1
    %v5958 = vsel %vm4735, %v5956, %v5957
    %v5961 = vpack.c.bf16 %v5955, %v5473
    %v5962 = vpack.c.bf16 %v5958, %v5476
    %s5963 = scalar_lea.vmem %s3, 112
    %v5964 = vld [vmem:[%s5963] sm:$0xf]
    %v5965 = vld [vmem:[%s5963 + $0x4] sm:$0xf]
    %v5966 = vld [vmem:[%s5963 + $0x8] sm:$0xf]
    %v5967 = vld [vmem:[%s5963 + $0xc] sm:$0xf]
    %v5972 = vunpack.c.l.b16 %v5964
    %v5973 = vunpack.c.l.b16 %v5965
    %v5974 = vunpack.c.l.b16 %v5966
    %v5975 = vunpack.c.l.b16 %v5967
    %v5976 = vpack.c.b16 %v5973, %v5972
    %v5977 = vpack.c.b16 %v5975, %v5974
    %v5981 = vsel %vm3944, %v5961, 0
    %v5984 = vsel %vm3944, %v5962, 0
    %5986 = vmatprep.subr.bf16.mxu0 0
    %5987 = vmatpush1.bf16.msra.mxu0 0
    %5988 = vmatprep.subr.bf16.mxu0 0
    %5989 = vmatpush1.bf16.msra.mxu0 0
    %5990 = vmatprep.subr.bf16.mxu0 0
    %5991 = vmatpush1.bf16.msra.mxu0 0
    %5992 = vmatprep.subr.bf16.mxu0 0
    %5993 = vmatpush1.bf16.msra.mxu0 0
    %5994 = vmatprep.subr.bf16.mxu0 0
    %5995 = vmatpush1.bf16.msra.mxu0 0
    %5996 = vmatprep.subr.bf16.mxu0 0
    %5997 = vmatpush1.bf16.msra.mxu0 0
    %5998 = vmatprep.subr.bf16.mxu0 0
    %5999 = vmatpush1.bf16.msra.mxu0 %v5977
    %6000 = vmatprep.subr.bf16.mxu0 0
    %6001 = vmatpush1.bf16.msra.mxu0 %v5976
    %6002 = vmatprep.subr.bf16.mxu0 0
    %6003 = vmatpush2.bf16.msra.mxu0 0
    %6004 = vmatprep.subr.bf16.mxu0 0
    %6005 = vmatpush2.bf16.msra.mxu0 0
    %6006 = vmatprep.subr.bf16.mxu0 0
    %6007 = vmatpush2.bf16.msra.mxu0 0
    %6008 = vmatprep.subr.bf16.mxu0 0
    %6009 = vmatpush2.bf16.msra.mxu0 0
    %6010 = vmatprep.subr.bf16.mxu0 0
    %6011 = vmatpush2.bf16.msra.mxu0 0
    %6012 = vmatprep.subr.bf16.mxu0 0
    %6013 = vmatpush2.bf16.msra.mxu0 0
    %6014 = vmatprep.subr.bf16.mxu0 0
    %6015 = vmatpush2.bf16.msra.mxu0 0
    %6016 = vmatprep.subr.bf16.mxu0 0
    %6017 = vmatpush2.bf16.msra.mxu0 0
    %6018 = vmatprep.mubr.bf16.mxu0 0
    %6019 = vmatmul.mubr.bf16.gmra.mxu0 %v4829
    %v6020 = vpop.f32.mrf.mxu0
    %v6021 = vadd.f32 0.0, %v6020
    %v6022 = vpop.f32.mrf.mxu0
    %v6023 = vpop.f32.mrf.mxu0
    %v6024 = vadd.f32 0.0, %v6023
    %v6025 = vpop.f32.mrf.mxu0
    %6026 = vmatprep.mubr.bf16.mxu0 0
    %6027 = vmatmul.mubr.bf16.gmra.mxu0 %v4832
    %v6028 = vpop.f32.mrf.mxu0
    %v6029 = vadd.f32 0.0, %v6028
    %v6030 = vpop.f32.mrf.mxu0
    %v6031 = vpop.f32.mrf.mxu0
    %v6032 = vadd.f32 0.0, %v6031
    %v6033 = vpop.f32.mrf.mxu0
    %6034 = vmatprep.mubr.bf16.mxu0 0
    %6035 = vmatmul.mubr.bf16.gmra.mxu0 %v4835
    %v6036 = vpop.f32.mrf.mxu0
    %v6037 = vadd.f32 0.0, %v6036
    %v6038 = vpop.f32.mrf.mxu0
    %v6039 = vpop.f32.mrf.mxu0
    %v6040 = vadd.f32 0.0, %v6039
    %v6041 = vpop.f32.mrf.mxu0
    %6042 = vmatprep.mubr.bf16.mxu0 0
    %6043 = vmatmul.mubr.bf16.gmra.mxu0 %v5981
    %v6044 = vpop.f32.mrf.mxu0
    %v6045 = vadd.f32 0.0, %v6044
    %v6046 = vpop.f32.mrf.mxu0
    %v6047 = vpop.f32.mrf.mxu0
    %v6048 = vadd.f32 0.0, %v6047
    %v6049 = vpop.f32.mrf.mxu0
    %6050 = vmatprep.mubr.bf16.mxu0 0
    %6051 = vmatmul.mubr.bf16.gmra.mxu0 %v4841
    %v6052 = vpop.f32.mrf.mxu0
    %v6053 = vadd.f32 0.0, %v6052
    %v6054 = vpop.f32.mrf.mxu0
    %v6055 = vpop.f32.mrf.mxu0
    %v6056 = vadd.f32 0.0, %v6055
    %v6057 = vpop.f32.mrf.mxu0
    %6058 = vmatprep.mubr.bf16.mxu0 0
    %6059 = vmatmul.mubr.bf16.gmra.mxu0 %v4844
    %v6060 = vpop.f32.mrf.mxu0
    %v6061 = vadd.f32 0.0, %v6060
    %v6062 = vpop.f32.mrf.mxu0
    %v6063 = vpop.f32.mrf.mxu0
    %v6064 = vadd.f32 0.0, %v6063
    %v6065 = vpop.f32.mrf.mxu0
    %6066 = vmatprep.mubr.bf16.mxu0 0
    %6067 = vmatmul.mubr.bf16.gmra.mxu0 %v4847
    %v6068 = vpop.f32.mrf.mxu0
    %v6069 = vadd.f32 0.0, %v6068
    %v6070 = vpop.f32.mrf.mxu0
    %v6071 = vpop.f32.mrf.mxu0
    %v6072 = vadd.f32 0.0, %v6071
    %v6073 = vpop.f32.mrf.mxu0
    %6074 = vmatprep.mubr.bf16.mxu0 0
    %6075 = vmatmul.mubr.bf16.gmra.mxu0 %v5984
    %v6076 = vpop.f32.mrf.mxu0
    %v6077 = vadd.f32 0.0, %v6076
    %v6078 = vpop.f32.mrf.mxu0
    %v6079 = vpop.f32.mrf.mxu0
    %v6080 = vadd.f32 0.0, %v6079
    %v6081 = vpop.f32.mrf.mxu0
    %6082 = vdwg.mxu0
    %v6083 = vadd.f32 %v5933, %v6021
    %v6084 = vadd.f32 %v5934, %v6024
    %v6085 = vadd.f32 %v5935, %v6029
    %v6086 = vadd.f32 %v5936, %v6032
    %v6087 = vadd.f32 %v5937, %v6037
    %v6088 = vadd.f32 %v5938, %v6040
    %v6089 = vadd.f32 %v5939, %v6045
    %v6090 = vadd.f32 %v5940, %v6048
    %v6091 = vadd.f32 %v5941, %v6053
    %v6092 = vadd.f32 %v5942, %v6056
    %v6093 = vadd.f32 %v5943, %v6061
    %v6094 = vadd.f32 %v5944, %v6064
    %v6095 = vadd.f32 %v5945, %v6069
    %v6096 = vadd.f32 %v5946, %v6072
    %v6097 = vadd.f32 %v5947, %v6077
    %v6098 = vadd.f32 %v5948, %v6080
    %v6099 = vrot.slane %v4669, 2
    %v6100 = vrot.slane %v4670, 2
    %v6101 = vsel %vm384, %v6099, %v6100
    %v6102 = vrot.slane %v4689, 2
    %v6103 = vrot.slane %v4690, 2
    %v6104 = vsel %vm384, %v6102, %v6103
    %v6107 = vpack.c.bf16 %v6101, %v5643
    %v6108 = vpack.c.bf16 %v6104, %v5646
    %s6109 = scalar_lea.vmem %s3, 128
    %v6110 = vld [vmem:[%s6109] sm:$0xf]
    %v6111 = vld [vmem:[%s6109 + $0x4] sm:$0xf]
    %v6112 = vld [vmem:[%s6109 + $0x8] sm:$0xf]
    %v6113 = vld [vmem:[%s6109 + $0xc] sm:$0xf]
    %v6118 = vunpack.c.l.b16 %v6110
    %v6119 = vunpack.c.l.b16 %v6111
    %v6120 = vunpack.c.l.b16 %v6112
    %v6121 = vunpack.c.l.b16 %v6113
    %v6122 = vpack.c.b16 %v6119, %v6118
    %v6123 = vpack.c.b16 %v6121, %v6120
    %v6127 = vsel %vm3944, %v6107, 0
    %v6130 = vsel %vm3944, %v6108, 0
    %6132 = vmatprep.subr.bf16.mxu0 0
    %6133 = vmatpush1.bf16.msra.mxu0 0
    %6134 = vmatprep.subr.bf16.mxu0 0
    %6135 = vmatpush1.bf16.msra.mxu0 0
    %6136 = vmatprep.subr.bf16.mxu0 0
    %6137 = vmatpush1.bf16.msra.mxu0 0
    %6138 = vmatprep.subr.bf16.mxu0 0
    %6139 = vmatpush1.bf16.msra.mxu0 0
    %6140 = vmatprep.subr.bf16.mxu0 0
    %6141 = vmatpush1.bf16.msra.mxu0 0
    %6142 = vmatprep.subr.bf16.mxu0 0
    %6143 = vmatpush1.bf16.msra.mxu0 0
    %6144 = vmatprep.subr.bf16.mxu0 0
    %6145 = vmatpush1.bf16.msra.mxu0 %v6123
    %6146 = vmatprep.subr.bf16.mxu0 0
    %6147 = vmatpush1.bf16.msra.mxu0 %v6122
    %6148 = vmatprep.subr.bf16.mxu0 0
    %6149 = vmatpush2.bf16.msra.mxu0 0
    %6150 = vmatprep.subr.bf16.mxu0 0
    %6151 = vmatpush2.bf16.msra.mxu0 0
    %6152 = vmatprep.subr.bf16.mxu0 0
    %6153 = vmatpush2.bf16.msra.mxu0 0
    %6154 = vmatprep.subr.bf16.mxu0 0
    %6155 = vmatpush2.bf16.msra.mxu0 0
    %6156 = vmatprep.subr.bf16.mxu0 0
    %6157 = vmatpush2.bf16.msra.mxu0 0
    %6158 = vmatprep.subr.bf16.mxu0 0
    %6159 = vmatpush2.bf16.msra.mxu0 0
    %6160 = vmatprep.subr.bf16.mxu0 0
    %6161 = vmatpush2.bf16.msra.mxu0 0
    %6162 = vmatprep.subr.bf16.mxu0 0
    %6163 = vmatpush2.bf16.msra.mxu0 0
    %6164 = vmatprep.mubr.bf16.mxu0 0
    %6165 = vmatmul.mubr.bf16.gmra.mxu0 %v5172
    %v6166 = vpop.f32.mrf.mxu0
    %v6167 = vadd.f32 0.0, %v6166
    %v6168 = vpop.f32.mrf.mxu0
    %v6169 = vpop.f32.mrf.mxu0
    %v6170 = vadd.f32 0.0, %v6169
    %v6171 = vpop.f32.mrf.mxu0
    %6172 = vmatprep.mubr.bf16.mxu0 0
    %6173 = vmatmul.mubr.bf16.gmra.mxu0 %v5175
    %v6174 = vpop.f32.mrf.mxu0
    %v6175 = vadd.f32 0.0, %v6174
    %v6176 = vpop.f32.mrf.mxu0
    %v6177 = vpop.f32.mrf.mxu0
    %v6178 = vadd.f32 0.0, %v6177
    %v6179 = vpop.f32.mrf.mxu0
    %6180 = vmatprep.mubr.bf16.mxu0 0
    %6181 = vmatmul.mubr.bf16.gmra.mxu0 %v5178
    %v6182 = vpop.f32.mrf.mxu0
    %v6183 = vadd.f32 0.0, %v6182
    %v6184 = vpop.f32.mrf.mxu0
    %v6185 = vpop.f32.mrf.mxu0
    %v6186 = vadd.f32 0.0, %v6185
    %v6187 = vpop.f32.mrf.mxu0
    %6188 = vmatprep.mubr.bf16.mxu0 0
    %6189 = vmatmul.mubr.bf16.gmra.mxu0 %v6127
    %v6190 = vpop.f32.mrf.mxu0
    %v6191 = vadd.f32 0.0, %v6190
    %v6192 = vpop.f32.mrf.mxu0
    %v6193 = vpop.f32.mrf.mxu0
    %v6194 = vadd.f32 0.0, %v6193
    %v6195 = vpop.f32.mrf.mxu0
    %6196 = vmatprep.mubr.bf16.mxu0 0
    %6197 = vmatmul.mubr.bf16.gmra.mxu0 %v5184
    %v6198 = vpop.f32.mrf.mxu0
    %v6199 = vadd.f32 0.0, %v6198
    %v6200 = vpop.f32.mrf.mxu0
    %v6201 = vpop.f32.mrf.mxu0
    %v6202 = vadd.f32 0.0, %v6201
    %v6203 = vpop.f32.mrf.mxu0
    %6204 = vmatprep.mubr.bf16.mxu0 0
    %6205 = vmatmul.mubr.bf16.gmra.mxu0 %v5187
    %v6206 = vpop.f32.mrf.mxu0
    %v6207 = vadd.f32 0.0, %v6206
    %v6208 = vpop.f32.mrf.mxu0
    %v6209 = vpop.f32.mrf.mxu0
    %v6210 = vadd.f32 0.0, %v6209
    %v6211 = vpop.f32.mrf.mxu0
    %6212 = vmatprep.mubr.bf16.mxu0 0
    %6213 = vmatmul.mubr.bf16.gmra.mxu0 %v5190
    %v6214 = vpop.f32.mrf.mxu0
    %v6215 = vadd.f32 0.0, %v6214
    %v6216 = vpop.f32.mrf.mxu0
    %v6217 = vpop.f32.mrf.mxu0
    %v6218 = vadd.f32 0.0, %v6217
    %v6219 = vpop.f32.mrf.mxu0
    %6220 = vmatprep.mubr.bf16.mxu0 0
    %6221 = vmatmul.mubr.bf16.gmra.mxu0 %v6130
    %v6222 = vpop.f32.mrf.mxu0
    %v6223 = vadd.f32 0.0, %v6222
    %v6224 = vpop.f32.mrf.mxu0
    %v6225 = vpop.f32.mrf.mxu0
    %v6226 = vadd.f32 0.0, %v6225
    %v6227 = vpop.f32.mrf.mxu0
    %6228 = vdwg.mxu0
    %v6229 = vadd.f32 %v6083, %v6167
    %v6230 = vadd.f32 %v6084, %v6170
    %v6231 = vadd.f32 %v6085, %v6175
    %v6232 = vadd.f32 %v6086, %v6178
    %v6233 = vadd.f32 %v6087, %v6183
    %v6234 = vadd.f32 %v6088, %v6186
    %v6235 = vadd.f32 %v6089, %v6191
    %v6236 = vadd.f32 %v6090, %v6194
    %v6237 = vadd.f32 %v6091, %v6199
    %v6238 = vadd.f32 %v6092, %v6202
    %v6239 = vadd.f32 %v6093, %v6207
    %v6240 = vadd.f32 %v6094, %v6210
    %v6241 = vadd.f32 %v6095, %v6215
    %v6242 = vadd.f32 %v6096, %v6218
    %v6243 = vadd.f32 %v6097, %v6223
    %v6244 = vadd.f32 %v6098, %v6226
    %v6245 = vld [vmem:[%s4] sm:$0x1]
    %v6247 = vlaneseq
    %v6248 = vshrl.u32 %v6247, 7
    %v6249 = vsub.s32 0, %v6248
    %v6250 = vrot.slane %v6245, %v6249
    %v6252 = vadd.f32 %v6229, %v6250
    %v6253 = vadd.f32 %v6230, %v6250
    %v6254 = vadd.f32 %v6231, %v6250
    %v6255 = vadd.f32 %v6232, %v6250
    %v6256 = vadd.f32 %v6233, %v6250
    %v6257 = vadd.f32 %v6234, %v6250
    %v6258 = vadd.f32 %v6235, %v6250
    %v6259 = vadd.f32 %v6236, %v6250
    %v6260 = vadd.f32 %v6237, %v6250
    %v6261 = vadd.f32 %v6238, %v6250
    %v6262 = vadd.f32 %v6239, %v6250
    %v6263 = vadd.f32 %v6240, %v6250
    %v6264 = vadd.f32 %v6241, %v6250
    %v6265 = vadd.f32 %v6242, %v6250
    %v6266 = vadd.f32 %v6243, %v6250
    %v6267 = vadd.f32 %v6244, %v6250
    %v6268 = vmax.f32 %v6252, 0.0
    %v6269 = vmax.f32 %v6253, 0.0
    %v6270 = vmax.f32 %v6254, 0.0
    %v6271 = vmax.f32 %v6255, 0.0
    %v6272 = vmax.f32 %v6256, 0.0
    %v6273 = vmax.f32 %v6257, 0.0
    %v6274 = vmax.f32 %v6258, 0.0
    %v6275 = vmax.f32 %v6259, 0.0
    %v6276 = vmax.f32 %v6260, 0.0
    %v6277 = vmax.f32 %v6261, 0.0
    %v6278 = vmax.f32 %v6262, 0.0
    %v6279 = vmax.f32 %v6263, 0.0
    %v6280 = vmax.f32 %v6264, 0.0
    %v6281 = vmax.f32 %v6265, 0.0
    %v6282 = vmax.f32 %v6266, 0.0
    %v6283 = vmax.f32 %v6267, 0.0
    %v6300 = vcombine.high %v6268, %v6268
    %v6302 = vunpack.c.l.s4 1983009808
    %v6303 = vunpack.c.0.s8 %v6302
    %v6304 = vlaneseq
    %v6305 = vshrl.u32 %v6304, 7
    %v6306 = vsub.s32 %v6303, %v6305
    %v6307 = vrot.slane %v6268, %v6306
    %v6309 = vunpack.c.l.s4 1983009808
    %v6310 = vunpack.c.0.s8 %v6309
    %v6311 = vlaneseq
    %v6312 = vshrl.u32 %v6311, 7
    %v6313 = vsub.s32 %v6310, %v6312
    %v6314 = vrot.slane %v6300, %v6313
    %v6315 = vcombine.high %v6307, %v6307
    %v6316 = vcombine.high %v6314, %v6314
    %v6317 = vcombine.high %v6269, %v6269
    %v6319 = vunpack.c.l.s4 1983009808
    %v6320 = vunpack.c.0.s8 %v6319
    %v6321 = vlaneseq
    %v6322 = vshrl.u32 %v6321, 7
    %v6323 = vsub.s32 %v6320, %v6322
    %v6324 = vrot.slane %v6269, %v6323
    %v6326 = vunpack.c.l.s4 1983009808
    %v6327 = vunpack.c.0.s8 %v6326
    %v6328 = vlaneseq
    %v6329 = vshrl.u32 %v6328, 7
    %v6330 = vsub.s32 %v6327, %v6329
    %v6331 = vrot.slane %v6317, %v6330
    %v6332 = vcombine.high %v6324, %v6324
    %v6333 = vcombine.high %v6331, %v6331
    %v6334 = vcombine.high %v6270, %v6270
    %v6336 = vunpack.c.l.s4 1983009808
    %v6337 = vunpack.c.0.s8 %v6336
    %v6338 = vlaneseq
    %v6339 = vshrl.u32 %v6338, 7
    %v6340 = vsub.s32 %v6337, %v6339
    %v6341 = vrot.slane %v6270, %v6340
    %v6343 = vunpack.c.l.s4 1983009808
    %v6344 = vunpack.c.0.s8 %v6343
    %v6345 = vlaneseq
    %v6346 = vshrl.u32 %v6345, 7
    %v6347 = vsub.s32 %v6344, %v6346
    %v6348 = vrot.slane %v6334, %v6347
    %v6349 = vcombine.high %v6341, %v6341
    %v6350 = vcombine.high %v6348, %v6348
    %v6351 = vcombine.high %v6271, %v6271
    %v6353 = vunpack.c.l.s4 1983009808
    %v6354 = vunpack.c.0.s8 %v6353
    %v6355 = vlaneseq
    %v6356 = vshrl.u32 %v6355, 7
    %v6357 = vsub.s32 %v6354, %v6356
    %v6358 = vrot.slane %v6271, %v6357
    %v6360 = vunpack.c.l.s4 1983009808
    %v6361 = vunpack.c.0.s8 %v6360
    %v6362 = vlaneseq
    %v6363 = vshrl.u32 %v6362, 7
    %v6364 = vsub.s32 %v6361, %v6363
    %v6365 = vrot.slane %v6351, %v6364
    %v6366 = vcombine.high %v6358, %v6358
    %v6367 = vcombine.high %v6365, %v6365
    %v6368 = vcombine.high %v6272, %v6272
    %v6370 = vunpack.c.l.s4 1983009808
    %v6371 = vunpack.c.0.s8 %v6370
    %v6372 = vlaneseq
    %v6373 = vshrl.u32 %v6372, 7
    %v6374 = vsub.s32 %v6371, %v6373
    %v6375 = vrot.slane %v6272, %v6374
    %v6377 = vunpack.c.l.s4 1983009808
    %v6378 = vunpack.c.0.s8 %v6377
    %v6379 = vlaneseq
    %v6380 = vshrl.u32 %v6379, 7
    %v6381 = vsub.s32 %v6378, %v6380
    %v6382 = vrot.slane %v6368, %v6381
    %v6383 = vcombine.high %v6375, %v6375
    %v6384 = vcombine.high %v6382, %v6382
    %v6385 = vcombine.high %v6273, %v6273
    %v6387 = vunpack.c.l.s4 1983009808
    %v6388 = vunpack.c.0.s8 %v6387
    %v6389 = vlaneseq
    %v6390 = vshrl.u32 %v6389, 7
    %v6391 = vsub.s32 %v6388, %v6390
    %v6392 = vrot.slane %v6273, %v6391
    %v6394 = vunpack.c.l.s4 1983009808
    %v6395 = vunpack.c.0.s8 %v6394
    %v6396 = vlaneseq
    %v6397 = vshrl.u32 %v6396, 7
    %v6398 = vsub.s32 %v6395, %v6397
    %v6399 = vrot.slane %v6385, %v6398
    %v6400 = vcombine.high %v6392, %v6392
    %v6401 = vcombine.high %v6399, %v6399
    %v6402 = vcombine.high %v6274, %v6274
    %v6404 = vunpack.c.l.s4 1983009808
    %v6405 = vunpack.c.0.s8 %v6404
    %v6406 = vlaneseq
    %v6407 = vshrl.u32 %v6406, 7
    %v6408 = vsub.s32 %v6405, %v6407
    %v6409 = vrot.slane %v6274, %v6408
    %v6411 = vunpack.c.l.s4 1983009808
    %v6412 = vunpack.c.0.s8 %v6411
    %v6413 = vlaneseq
    %v6414 = vshrl.u32 %v6413, 7
    %v6415 = vsub.s32 %v6412, %v6414
    %v6416 = vrot.slane %v6402, %v6415
    %v6417 = vcombine.high %v6409, %v6409
    %v6418 = vcombine.high %v6416, %v6416
    %v6419 = vcombine.high %v6275, %v6275
    %v6421 = vunpack.c.l.s4 1983009808
    %v6422 = vunpack.c.0.s8 %v6421
    %v6423 = vlaneseq
    %v6424 = vshrl.u32 %v6423, 7
    %v6425 = vsub.s32 %v6422, %v6424
    %v6426 = vrot.slane %v6275, %v6425
    %v6428 = vunpack.c.l.s4 1983009808
    %v6429 = vunpack.c.0.s8 %v6428
    %v6430 = vlaneseq
    %v6431 = vshrl.u32 %v6430, 7
    %v6432 = vsub.s32 %v6429, %v6431
    %v6433 = vrot.slane %v6419, %v6432
    %v6434 = vcombine.high %v6426, %v6426
    %v6435 = vcombine.high %v6433, %v6433
    %v6436 = vcombine.high %v6276, %v6276
    %v6438 = vunpack.c.l.s4 1983009808
    %v6439 = vunpack.c.0.s8 %v6438
    %v6440 = vlaneseq
    %v6441 = vshrl.u32 %v6440, 7
    %v6442 = vsub.s32 %v6439, %v6441
    %v6443 = vrot.slane %v6276, %v6442
    %v6445 = vunpack.c.l.s4 1983009808
    %v6446 = vunpack.c.0.s8 %v6445
    %v6447 = vlaneseq
    %v6448 = vshrl.u32 %v6447, 7
    %v6449 = vsub.s32 %v6446, %v6448
    %v6450 = vrot.slane %v6436, %v6449
    %v6451 = vcombine.high %v6443, %v6443
    %v6452 = vcombine.high %v6450, %v6450
    %v6453 = vcombine.high %v6277, %v6277
    %v6455 = vunpack.c.l.s4 1983009808
    %v6456 = vunpack.c.0.s8 %v6455
    %v6457 = vlaneseq
    %v6458 = vshrl.u32 %v6457, 7
    %v6459 = vsub.s32 %v6456, %v6458
    %v6460 = vrot.slane %v6277, %v6459
    %v6462 = vunpack.c.l.s4 1983009808
    %v6463 = vunpack.c.0.s8 %v6462
    %v6464 = vlaneseq
    %v6465 = vshrl.u32 %v6464, 7
    %v6466 = vsub.s32 %v6463, %v6465
    %v6467 = vrot.slane %v6453, %v6466
    %v6468 = vcombine.high %v6460, %v6460
    %v6469 = vcombine.high %v6467, %v6467
    %v6470 = vcombine.high %v6278, %v6278
    %v6472 = vunpack.c.l.s4 1983009808
    %v6473 = vunpack.c.0.s8 %v6472
    %v6474 = vlaneseq
    %v6475 = vshrl.u32 %v6474, 7
    %v6476 = vsub.s32 %v6473, %v6475
    %v6477 = vrot.slane %v6278, %v6476
    %v6479 = vunpack.c.l.s4 1983009808
    %v6480 = vunpack.c.0.s8 %v6479
    %v6481 = vlaneseq
    %v6482 = vshrl.u32 %v6481, 7
    %v6483 = vsub.s32 %v6480, %v6482
    %v6484 = vrot.slane %v6470, %v6483
    %v6485 = vcombine.high %v6477, %v6477
    %v6486 = vcombine.high %v6484, %v6484
    %v6487 = vcombine.high %v6279, %v6279
    %v6489 = vunpack.c.l.s4 1983009808
    %v6490 = vunpack.c.0.s8 %v6489
    %v6491 = vlaneseq
    %v6492 = vshrl.u32 %v6491, 7
    %v6493 = vsub.s32 %v6490, %v6492
    %v6494 = vrot.slane %v6279, %v6493
    %v6496 = vunpack.c.l.s4 1983009808
    %v6497 = vunpack.c.0.s8 %v6496
    %v6498 = vlaneseq
    %v6499 = vshrl.u32 %v6498, 7
    %v6500 = vsub.s32 %v6497, %v6499
    %v6501 = vrot.slane %v6487, %v6500
    %v6502 = vcombine.high %v6494, %v6494
    %v6503 = vcombine.high %v6501, %v6501
    %v6504 = vcombine.high %v6280, %v6280
    %v6506 = vunpack.c.l.s4 1983009808
    %v6507 = vunpack.c.0.s8 %v6506
    %v6508 = vlaneseq
    %v6509 = vshrl.u32 %v6508, 7
    %v6510 = vsub.s32 %v6507, %v6509
    %v6511 = vrot.slane %v6280, %v6510
    %v6513 = vunpack.c.l.s4 1983009808
    %v6514 = vunpack.c.0.s8 %v6513
    %v6515 = vlaneseq
    %v6516 = vshrl.u32 %v6515, 7
    %v6517 = vsub.s32 %v6514, %v6516
    %v6518 = vrot.slane %v6504, %v6517
    %v6519 = vcombine.high %v6511, %v6511
    %v6520 = vcombine.high %v6518, %v6518
    %v6521 = vcombine.high %v6281, %v6281
    %v6523 = vunpack.c.l.s4 1983009808
    %v6524 = vunpack.c.0.s8 %v6523
    %v6525 = vlaneseq
    %v6526 = vshrl.u32 %v6525, 7
    %v6527 = vsub.s32 %v6524, %v6526
    %v6528 = vrot.slane %v6281, %v6527
    %v6530 = vunpack.c.l.s4 1983009808
    %v6531 = vunpack.c.0.s8 %v6530
    %v6532 = vlaneseq
    %v6533 = vshrl.u32 %v6532, 7
    %v6534 = vsub.s32 %v6531, %v6533
    %v6535 = vrot.slane %v6521, %v6534
    %v6536 = vcombine.high %v6528, %v6528
    %v6537 = vcombine.high %v6535, %v6535
    %v6538 = vcombine.high %v6282, %v6282
    %v6540 = vunpack.c.l.s4 1983009808
    %v6541 = vunpack.c.0.s8 %v6540
    %v6542 = vlaneseq
    %v6543 = vshrl.u32 %v6542, 7
    %v6544 = vsub.s32 %v6541, %v6543
    %v6545 = vrot.slane %v6282, %v6544
    %v6547 = vunpack.c.l.s4 1983009808
    %v6548 = vunpack.c.0.s8 %v6547
    %v6549 = vlaneseq
    %v6550 = vshrl.u32 %v6549, 7
    %v6551 = vsub.s32 %v6548, %v6550
    %v6552 = vrot.slane %v6538, %v6551
    %v6553 = vcombine.high %v6545, %v6545
    %v6554 = vcombine.high %v6552, %v6552
    %v6555 = vcombine.high %v6283, %v6283
    %v6557 = vunpack.c.l.s4 1983009808
    %v6558 = vunpack.c.0.s8 %v6557
    %v6559 = vlaneseq
    %v6560 = vshrl.u32 %v6559, 7
    %v6561 = vsub.s32 %v6558, %v6560
    %v6562 = vrot.slane %v6283, %v6561
    %v6564 = vunpack.c.l.s4 1983009808
    %v6565 = vunpack.c.0.s8 %v6564
    %v6566 = vlaneseq
    %v6567 = vshrl.u32 %v6566, 7
    %v6568 = vsub.s32 %v6565, %v6567
    %v6569 = vrot.slane %v6555, %v6568
    %v6570 = vcombine.high %v6562, %v6562
    %v6571 = vcombine.high %v6569, %v6569
    %vm6636 = vcmask 517120
    %v6637 = vsel %vm6636, %v6307, -inf
    %v6638 = vrot.slane %v6637, 4
    %v6639 = vmax.f32 %v6637, %v6638
    %v6640 = vrot.slane %v6639, 2
    %v6641 = vmax.f32 %v6639, %v6640
    %v6642 = vrot.slane %v6641, 1
    %v6643 = vmax.f32 %v6641, %v6642
    %v6644 = vsel %vm6636, %v6315, -inf
    %v6645 = vrot.slane %v6644, 4
    %v6646 = vmax.f32 %v6644, %v6645
    %v6647 = vrot.slane %v6646, 2
    %v6648 = vmax.f32 %v6646, %v6647
    %v6649 = vrot.slane %v6648, 1
    %v6650 = vmax.f32 %v6648, %v6649
    %v6651 = vsel %vm6636, %v6314, -inf
    %v6652 = vrot.slane %v6651, 4
    %v6653 = vmax.f32 %v6651, %v6652
    %v6654 = vrot.slane %v6653, 2
    %v6655 = vmax.f32 %v6653, %v6654
    %v6656 = vrot.slane %v6655, 1
    %v6657 = vmax.f32 %v6655, %v6656
    %v6658 = vsel %vm6636, %v6316, -inf
    %v6659 = vrot.slane %v6658, 4
    %v6660 = vmax.f32 %v6658, %v6659
    %v6661 = vrot.slane %v6660, 2
    %v6662 = vmax.f32 %v6660, %v6661
    %v6663 = vrot.slane %v6662, 1
    %v6664 = vmax.f32 %v6662, %v6663
    %v6665 = vsel %vm6636, %v6324, -inf
    %v6666 = vrot.slane %v6665, 4
    %v6667 = vmax.f32 %v6665, %v6666
    %v6668 = vrot.slane %v6667, 2
    %v6669 = vmax.f32 %v6667, %v6668
    %v6670 = vrot.slane %v6669, 1
    %v6671 = vmax.f32 %v6669, %v6670
    %v6672 = vsel %vm6636, %v6332, -inf
    %v6673 = vrot.slane %v6672, 4
    %v6674 = vmax.f32 %v6672, %v6673
    %v6675 = vrot.slane %v6674, 2
    %v6676 = vmax.f32 %v6674, %v6675
    %v6677 = vrot.slane %v6676, 1
    %v6678 = vmax.f32 %v6676, %v6677
    %v6679 = vsel %vm6636, %v6331, -inf
    %v6680 = vrot.slane %v6679, 4
    %v6681 = vmax.f32 %v6679, %v6680
    %v6682 = vrot.slane %v6681, 2
    %v6683 = vmax.f32 %v6681, %v6682
    %v6684 = vrot.slane %v6683, 1
    %v6685 = vmax.f32 %v6683, %v6684
    %v6686 = vsel %vm6636, %v6333, -inf
    %v6687 = vrot.slane %v6686, 4
    %v6688 = vmax.f32 %v6686, %v6687
    %v6689 = vrot.slane %v6688, 2
    %v6690 = vmax.f32 %v6688, %v6689
    %v6691 = vrot.slane %v6690, 1
    %v6692 = vmax.f32 %v6690, %v6691
    %v6693 = vsel %vm6636, %v6341, -inf
    %v6694 = vrot.slane %v6693, 4
    %v6695 = vmax.f32 %v6693, %v6694
    %v6696 = vrot.slane %v6695, 2
    %v6697 = vmax.f32 %v6695, %v6696
    %v6698 = vrot.slane %v6697, 1
    %v6699 = vmax.f32 %v6697, %v6698
    %v6700 = vsel %vm6636, %v6349, -inf
    %v6701 = vrot.slane %v6700, 4
    %v6702 = vmax.f32 %v6700, %v6701
    %v6703 = vrot.slane %v6702, 2
    %v6704 = vmax.f32 %v6702, %v6703
    %v6705 = vrot.slane %v6704, 1
    %v6706 = vmax.f32 %v6704, %v6705
    %v6707 = vsel %vm6636, %v6348, -inf
    %v6708 = vrot.slane %v6707, 4
    %v6709 = vmax.f32 %v6707, %v6708
    %v6710 = vrot.slane %v6709, 2
    %v6711 = vmax.f32 %v6709, %v6710
    %v6712 = vrot.slane %v6711, 1
    %v6713 = vmax.f32 %v6711, %v6712
    %v6714 = vsel %vm6636, %v6350, -inf
    %v6715 = vrot.slane %v6714, 4
    %v6716 = vmax.f32 %v6714, %v6715
    %v6717 = vrot.slane %v6716, 2
    %v6718 = vmax.f32 %v6716, %v6717
    %v6719 = vrot.slane %v6718, 1
    %v6720 = vmax.f32 %v6718, %v6719
    %v6721 = vsel %vm6636, %v6358, -inf
    %v6722 = vrot.slane %v6721, 4
    %v6723 = vmax.f32 %v6721, %v6722
    %v6724 = vrot.slane %v6723, 2
    %v6725 = vmax.f32 %v6723, %v6724
    %v6726 = vrot.slane %v6725, 1
    %v6727 = vmax.f32 %v6725, %v6726
    %v6728 = vsel %vm6636, %v6366, -inf
    %v6729 = vrot.slane %v6728, 4
    %v6730 = vmax.f32 %v6728, %v6729
    %v6731 = vrot.slane %v6730, 2
    %v6732 = vmax.f32 %v6730, %v6731
    %v6733 = vrot.slane %v6732, 1
    %v6734 = vmax.f32 %v6732, %v6733
    %v6735 = vsel %vm6636, %v6365, -inf
    %v6736 = vrot.slane %v6735, 4
    %v6737 = vmax.f32 %v6735, %v6736
    %v6738 = vrot.slane %v6737, 2
    %v6739 = vmax.f32 %v6737, %v6738
    %v6740 = vrot.slane %v6739, 1
    %v6741 = vmax.f32 %v6739, %v6740
    %v6742 = vsel %vm6636, %v6367, -inf
    %v6743 = vrot.slane %v6742, 4
    %v6744 = vmax.f32 %v6742, %v6743
    %v6745 = vrot.slane %v6744, 2
    %v6746 = vmax.f32 %v6744, %v6745
    %v6747 = vrot.slane %v6746, 1
    %v6748 = vmax.f32 %v6746, %v6747
    %v6749 = vsel %vm6636, %v6375, -inf
    %v6750 = vrot.slane %v6749, 4
    %v6751 = vmax.f32 %v6749, %v6750
    %v6752 = vrot.slane %v6751, 2
    %v6753 = vmax.f32 %v6751, %v6752
    %v6754 = vrot.slane %v6753, 1
    %v6755 = vmax.f32 %v6753, %v6754
    %v6756 = vsel %vm6636, %v6383, -inf
    %v6757 = vrot.slane %v6756, 4
    %v6758 = vmax.f32 %v6756, %v6757
    %v6759 = vrot.slane %v6758, 2
    %v6760 = vmax.f32 %v6758, %v6759
    %v6761 = vrot.slane %v6760, 1
    %v6762 = vmax.f32 %v6760, %v6761
    %v6763 = vsel %vm6636, %v6382, -inf
    %v6764 = vrot.slane %v6763, 4
    %v6765 = vmax.f32 %v6763, %v6764
    %v6766 = vrot.slane %v6765, 2
    %v6767 = vmax.f32 %v6765, %v6766
    %v6768 = vrot.slane %v6767, 1
    %v6769 = vmax.f32 %v6767, %v6768
    %v6770 = vsel %vm6636, %v6384, -inf
    %v6771 = vrot.slane %v6770, 4
    %v6772 = vmax.f32 %v6770, %v6771
    %v6773 = vrot.slane %v6772, 2
    %v6774 = vmax.f32 %v6772, %v6773
    %v6775 = vrot.slane %v6774, 1
    %v6776 = vmax.f32 %v6774, %v6775
    %v6777 = vsel %vm6636, %v6392, -inf
    %v6778 = vrot.slane %v6777, 4
    %v6779 = vmax.f32 %v6777, %v6778
    %v6780 = vrot.slane %v6779, 2
    %v6781 = vmax.f32 %v6779, %v6780
    %v6782 = vrot.slane %v6781, 1
    %v6783 = vmax.f32 %v6781, %v6782
    %v6784 = vsel %vm6636, %v6400, -inf
    %v6785 = vrot.slane %v6784, 4
    %v6786 = vmax.f32 %v6784, %v6785
    %v6787 = vrot.slane %v6786, 2
    %v6788 = vmax.f32 %v6786, %v6787
    %v6789 = vrot.slane %v6788, 1
    %v6790 = vmax.f32 %v6788, %v6789
    %v6791 = vsel %vm6636, %v6399, -inf
    %v6792 = vrot.slane %v6791, 4
    %v6793 = vmax.f32 %v6791, %v6792
    %v6794 = vrot.slane %v6793, 2
    %v6795 = vmax.f32 %v6793, %v6794
    %v6796 = vrot.slane %v6795, 1
    %v6797 = vmax.f32 %v6795, %v6796
    %v6798 = vsel %vm6636, %v6401, -inf
    %v6799 = vrot.slane %v6798, 4
    %v6800 = vmax.f32 %v6798, %v6799
    %v6801 = vrot.slane %v6800, 2
    %v6802 = vmax.f32 %v6800, %v6801
    %v6803 = vrot.slane %v6802, 1
    %v6804 = vmax.f32 %v6802, %v6803
    %v6805 = vsel %vm6636, %v6409, -inf
    %v6806 = vrot.slane %v6805, 4
    %v6807 = vmax.f32 %v6805, %v6806
    %v6808 = vrot.slane %v6807, 2
    %v6809 = vmax.f32 %v6807, %v6808
    %v6810 = vrot.slane %v6809, 1
    %v6811 = vmax.f32 %v6809, %v6810
    %v6812 = vsel %vm6636, %v6417, -inf
    %v6813 = vrot.slane %v6812, 4
    %v6814 = vmax.f32 %v6812, %v6813
    %v6815 = vrot.slane %v6814, 2
    %v6816 = vmax.f32 %v6814, %v6815
    %v6817 = vrot.slane %v6816, 1
    %v6818 = vmax.f32 %v6816, %v6817
    %v6819 = vsel %vm6636, %v6416, -inf
    %v6820 = vrot.slane %v6819, 4
    %v6821 = vmax.f32 %v6819, %v6820
    %v6822 = vrot.slane %v6821, 2
    %v6823 = vmax.f32 %v6821, %v6822
    %v6824 = vrot.slane %v6823, 1
    %v6825 = vmax.f32 %v6823, %v6824
    %v6826 = vsel %vm6636, %v6418, -inf
    %v6827 = vrot.slane %v6826, 4
    %v6828 = vmax.f32 %v6826, %v6827
    %v6829 = vrot.slane %v6828, 2
    %v6830 = vmax.f32 %v6828, %v6829
    %v6831 = vrot.slane %v6830, 1
    %v6832 = vmax.f32 %v6830, %v6831
    %v6833 = vsel %vm6636, %v6426, -inf
    %v6834 = vrot.slane %v6833, 4
    %v6835 = vmax.f32 %v6833, %v6834
    %v6836 = vrot.slane %v6835, 2
    %v6837 = vmax.f32 %v6835, %v6836
    %v6838 = vrot.slane %v6837, 1
    %v6839 = vmax.f32 %v6837, %v6838
    %v6840 = vsel %vm6636, %v6434, -inf
    %v6841 = vrot.slane %v6840, 4
    %v6842 = vmax.f32 %v6840, %v6841
    %v6843 = vrot.slane %v6842, 2
    %v6844 = vmax.f32 %v6842, %v6843
    %v6845 = vrot.slane %v6844, 1
    %v6846 = vmax.f32 %v6844, %v6845
    %v6847 = vsel %vm6636, %v6433, -inf
    %v6848 = vrot.slane %v6847, 4
    %v6849 = vmax.f32 %v6847, %v6848
    %v6850 = vrot.slane %v6849, 2
    %v6851 = vmax.f32 %v6849, %v6850
    %v6852 = vrot.slane %v6851, 1
    %v6853 = vmax.f32 %v6851, %v6852
    %v6854 = vsel %vm6636, %v6435, -inf
    %v6855 = vrot.slane %v6854, 4
    %v6856 = vmax.f32 %v6854, %v6855
    %v6857 = vrot.slane %v6856, 2
    %v6858 = vmax.f32 %v6856, %v6857
    %v6859 = vrot.slane %v6858, 1
    %v6860 = vmax.f32 %v6858, %v6859
    %v6861 = vsel %vm6636, %v6443, -inf
    %v6862 = vrot.slane %v6861, 4
    %v6863 = vmax.f32 %v6861, %v6862
    %v6864 = vrot.slane %v6863, 2
    %v6865 = vmax.f32 %v6863, %v6864
    %v6866 = vrot.slane %v6865, 1
    %v6867 = vmax.f32 %v6865, %v6866
    %v6868 = vsel %vm6636, %v6451, -inf
    %v6869 = vrot.slane %v6868, 4
    %v6870 = vmax.f32 %v6868, %v6869
    %v6871 = vrot.slane %v6870, 2
    %v6872 = vmax.f32 %v6870, %v6871
    %v6873 = vrot.slane %v6872, 1
    %v6874 = vmax.f32 %v6872, %v6873
    %v6875 = vsel %vm6636, %v6450, -inf
    %v6876 = vrot.slane %v6875, 4
    %v6877 = vmax.f32 %v6875, %v6876
    %v6878 = vrot.slane %v6877, 2
    %v6879 = vmax.f32 %v6877, %v6878
    %v6880 = vrot.slane %v6879, 1
    %v6881 = vmax.f32 %v6879, %v6880
    %v6882 = vsel %vm6636, %v6452, -inf
    %v6883 = vrot.slane %v6882, 4
    %v6884 = vmax.f32 %v6882, %v6883
    %v6885 = vrot.slane %v6884, 2
    %v6886 = vmax.f32 %v6884, %v6885
    %v6887 = vrot.slane %v6886, 1
    %v6888 = vmax.f32 %v6886, %v6887
    %v6889 = vsel %vm6636, %v6460, -inf
    %v6890 = vrot.slane %v6889, 4
    %v6891 = vmax.f32 %v6889, %v6890
    %v6892 = vrot.slane %v6891, 2
    %v6893 = vmax.f32 %v6891, %v6892
    %v6894 = vrot.slane %v6893, 1
    %v6895 = vmax.f32 %v6893, %v6894
    %v6896 = vsel %vm6636, %v6468, -inf
    %v6897 = vrot.slane %v6896, 4
    %v6898 = vmax.f32 %v6896, %v6897
    %v6899 = vrot.slane %v6898, 2
    %v6900 = vmax.f32 %v6898, %v6899
    %v6901 = vrot.slane %v6900, 1
    %v6902 = vmax.f32 %v6900, %v6901
    %v6903 = vsel %vm6636, %v6467, -inf
    %v6904 = vrot.slane %v6903, 4
    %v6905 = vmax.f32 %v6903, %v6904
    %v6906 = vrot.slane %v6905, 2
    %v6907 = vmax.f32 %v6905, %v6906
    %v6908 = vrot.slane %v6907, 1
    %v6909 = vmax.f32 %v6907, %v6908
    %v6910 = vsel %vm6636, %v6469, -inf
    %v6911 = vrot.slane %v6910, 4
    %v6912 = vmax.f32 %v6910, %v6911
    %v6913 = vrot.slane %v6912, 2
    %v6914 = vmax.f32 %v6912, %v6913
    %v6915 = vrot.slane %v6914, 1
    %v6916 = vmax.f32 %v6914, %v6915
    %v6917 = vsel %vm6636, %v6477, -inf
    %v6918 = vrot.slane %v6917, 4
    %v6919 = vmax.f32 %v6917, %v6918
    %v6920 = vrot.slane %v6919, 2
    %v6921 = vmax.f32 %v6919, %v6920
    %v6922 = vrot.slane %v6921, 1
    %v6923 = vmax.f32 %v6921, %v6922
    %v6924 = vsel %vm6636, %v6485, -inf
    %v6925 = vrot.slane %v6924, 4
    %v6926 = vmax.f32 %v6924, %v6925
    %v6927 = vrot.slane %v6926, 2
    %v6928 = vmax.f32 %v6926, %v6927
    %v6929 = vrot.slane %v6928, 1
    %v6930 = vmax.f32 %v6928, %v6929
    %v6931 = vsel %vm6636, %v6484, -inf
    %v6932 = vrot.slane %v6931, 4
    %v6933 = vmax.f32 %v6931, %v6932
    %v6934 = vrot.slane %v6933, 2
    %v6935 = vmax.f32 %v6933, %v6934
    %v6936 = vrot.slane %v6935, 1
    %v6937 = vmax.f32 %v6935, %v6936
    %v6938 = vsel %vm6636, %v6486, -inf
    %v6939 = vrot.slane %v6938, 4
    %v6940 = vmax.f32 %v6938, %v6939
    %v6941 = vrot.slane %v6940, 2
    %v6942 = vmax.f32 %v6940, %v6941
    %v6943 = vrot.slane %v6942, 1
    %v6944 = vmax.f32 %v6942, %v6943
    %v6945 = vsel %vm6636, %v6494, -inf
    %v6946 = vrot.slane %v6945, 4
    %v6947 = vmax.f32 %v6945, %v6946
    %v6948 = vrot.slane %v6947, 2
    %v6949 = vmax.f32 %v6947, %v6948
    %v6950 = vrot.slane %v6949, 1
    %v6951 = vmax.f32 %v6949, %v6950
    %v6952 = vsel %vm6636, %v6502, -inf
    %v6953 = vrot.slane %v6952, 4
    %v6954 = vmax.f32 %v6952, %v6953
    %v6955 = vrot.slane %v6954, 2
    %v6956 = vmax.f32 %v6954, %v6955
    %v6957 = vrot.slane %v6956, 1
    %v6958 = vmax.f32 %v6956, %v6957
    %v6959 = vsel %vm6636, %v6501, -inf
    %v6960 = vrot.slane %v6959, 4
    %v6961 = vmax.f32 %v6959, %v6960
    %v6962 = vrot.slane %v6961, 2
    %v6963 = vmax.f32 %v6961, %v6962
    %v6964 = vrot.slane %v6963, 1
    %v6965 = vmax.f32 %v6963, %v6964
    %v6966 = vsel %vm6636, %v6503, -inf
    %v6967 = vrot.slane %v6966, 4
    %v6968 = vmax.f32 %v6966, %v6967
    %v6969 = vrot.slane %v6968, 2
    %v6970 = vmax.f32 %v6968, %v6969
    %v6971 = vrot.slane %v6970, 1
    %v6972 = vmax.f32 %v6970, %v6971
    %v6973 = vsel %vm6636, %v6511, -inf
    %v6974 = vrot.slane %v6973, 4
    %v6975 = vmax.f32 %v6973, %v6974
    %v6976 = vrot.slane %v6975, 2
    %v6977 = vmax.f32 %v6975, %v6976
    %v6978 = vrot.slane %v6977, 1
    %v6979 = vmax.f32 %v6977, %v6978
    %v6980 = vsel %vm6636, %v6519, -inf
    %v6981 = vrot.slane %v6980, 4
    %v6982 = vmax.f32 %v6980, %v6981
    %v6983 = vrot.slane %v6982, 2
    %v6984 = vmax.f32 %v6982, %v6983
    %v6985 = vrot.slane %v6984, 1
    %v6986 = vmax.f32 %v6984, %v6985
    %v6987 = vsel %vm6636, %v6518, -inf
    %v6988 = vrot.slane %v6987, 4
    %v6989 = vmax.f32 %v6987, %v6988
    %v6990 = vrot.slane %v6989, 2
    %v6991 = vmax.f32 %v6989, %v6990
    %v6992 = vrot.slane %v6991, 1
    %v6993 = vmax.f32 %v6991, %v6992
    %v6994 = vsel %vm6636, %v6520, -inf
    %v6995 = vrot.slane %v6994, 4
    %v6996 = vmax.f32 %v6994, %v6995
    %v6997 = vrot.slane %v6996, 2
    %v6998 = vmax.f32 %v6996, %v6997
    %v6999 = vrot.slane %v6998, 1
    %v7000 = vmax.f32 %v6998, %v6999
    %v7001 = vsel %vm6636, %v6528, -inf
    %v7002 = vrot.slane %v7001, 4
    %v7003 = vmax.f32 %v7001, %v7002
    %v7004 = vrot.slane %v7003, 2
    %v7005 = vmax.f32 %v7003, %v7004
    %v7006 = vrot.slane %v7005, 1
    %v7007 = vmax.f32 %v7005, %v7006
    %v7008 = vsel %vm6636, %v6536, -inf
    %v7009 = vrot.slane %v7008, 4
    %v7010 = vmax.f32 %v7008, %v7009
    %v7011 = vrot.slane %v7010, 2
    %v7012 = vmax.f32 %v7010, %v7011
    %v7013 = vrot.slane %v7012, 1
    %v7014 = vmax.f32 %v7012, %v7013
    %v7015 = vsel %vm6636, %v6535, -inf
    %v7016 = vrot.slane %v7015, 4
    %v7017 = vmax.f32 %v7015, %v7016
    %v7018 = vrot.slane %v7017, 2
    %v7019 = vmax.f32 %v7017, %v7018
    %v7020 = vrot.slane %v7019, 1
    %v7021 = vmax.f32 %v7019, %v7020
    %v7022 = vsel %vm6636, %v6537, -inf
    %v7023 = vrot.slane %v7022, 4
    %v7024 = vmax.f32 %v7022, %v7023
    %v7025 = vrot.slane %v7024, 2
    %v7026 = vmax.f32 %v7024, %v7025
    %v7027 = vrot.slane %v7026, 1
    %v7028 = vmax.f32 %v7026, %v7027
    %v7029 = vsel %vm6636, %v6545, -inf
    %v7030 = vrot.slane %v7029, 4
    %v7031 = vmax.f32 %v7029, %v7030
    %v7032 = vrot.slane %v7031, 2
    %v7033 = vmax.f32 %v7031, %v7032
    %v7034 = vrot.slane %v7033, 1
    %v7035 = vmax.f32 %v7033, %v7034
    %v7036 = vsel %vm6636, %v6553, -inf
    %v7037 = vrot.slane %v7036, 4
    %v7038 = vmax.f32 %v7036, %v7037
    %v7039 = vrot.slane %v7038, 2
    %v7040 = vmax.f32 %v7038, %v7039
    %v7041 = vrot.slane %v7040, 1
    %v7042 = vmax.f32 %v7040, %v7041
    %v7043 = vsel %vm6636, %v6552, -inf
    %v7044 = vrot.slane %v7043, 4
    %v7045 = vmax.f32 %v7043, %v7044
    %v7046 = vrot.slane %v7045, 2
    %v7047 = vmax.f32 %v7045, %v7046
    %v7048 = vrot.slane %v7047, 1
    %v7049 = vmax.f32 %v7047, %v7048
    %v7050 = vsel %vm6636, %v6554, -inf
    %v7051 = vrot.slane %v7050, 4
    %v7052 = vmax.f32 %v7050, %v7051
    %v7053 = vrot.slane %v7052, 2
    %v7054 = vmax.f32 %v7052, %v7053
    %v7055 = vrot.slane %v7054, 1
    %v7056 = vmax.f32 %v7054, %v7055
    %v7057 = vsel %vm6636, %v6562, -inf
    %v7058 = vrot.slane %v7057, 4
    %v7059 = vmax.f32 %v7057, %v7058
    %v7060 = vrot.slane %v7059, 2
    %v7061 = vmax.f32 %v7059, %v7060
    %v7062 = vrot.slane %v7061, 1
    %v7063 = vmax.f32 %v7061, %v7062
    %v7064 = vsel %vm6636, %v6570, -inf
    %v7065 = vrot.slane %v7064, 4
    %v7066 = vmax.f32 %v7064, %v7065
    %v7067 = vrot.slane %v7066, 2
    %v7068 = vmax.f32 %v7066, %v7067
    %v7069 = vrot.slane %v7068, 1
    %v7070 = vmax.f32 %v7068, %v7069
    %v7071 = vsel %vm6636, %v6569, -inf
    %v7072 = vrot.slane %v7071, 4
    %v7073 = vmax.f32 %v7071, %v7072
    %v7074 = vrot.slane %v7073, 2
    %v7075 = vmax.f32 %v7073, %v7074
    %v7076 = vrot.slane %v7075, 1
    %v7077 = vmax.f32 %v7075, %v7076
    %v7078 = vsel %vm6636, %v6571, -inf
    %v7079 = vrot.slane %v7078, 4
    %v7080 = vmax.f32 %v7078, %v7079
    %v7081 = vrot.slane %v7080, 2
    %v7082 = vmax.f32 %v7080, %v7081
    %v7083 = vrot.slane %v7082, 1
    %v7084 = vmax.f32 %v7082, %v7083
    %vm7085 = vcmask 523264
    %v7086 = vsel %vm7085, %v6643, -inf
    %v7087 = vsel %vm7085, %v6671, -inf
    %v7088 = vmax.f32 %v7086, %v7087
    %v7089 = vsel %vm7085, %v6650, -inf
    %v7090 = vsel %vm7085, %v6678, -inf
    %v7091 = vmax.f32 %v7089, %v7090
    %v7092 = vsel %vm7085, %v6657, -inf
    %v7093 = vsel %vm7085, %v6685, -inf
    %v7094 = vmax.f32 %v7092, %v7093
    %v7095 = vsel %vm7085, %v6664, -inf
    %v7096 = vsel %vm7085, %v6692, -inf
    %v7097 = vmax.f32 %v7095, %v7096
    %v7098 = vsel %vm7085, %v6699, -inf
    %v7099 = vsel %vm7085, %v6727, -inf
    %v7100 = vmax.f32 %v7098, %v7099
    %v7101 = vsel %vm7085, %v6706, -inf
    %v7102 = vsel %vm7085, %v6734, -inf
    %v7103 = vmax.f32 %v7101, %v7102
    %v7104 = vsel %vm7085, %v6713, -inf
    %v7105 = vsel %vm7085, %v6741, -inf
    %v7106 = vmax.f32 %v7104, %v7105
    %v7107 = vsel %vm7085, %v6720, -inf
    %v7108 = vsel %vm7085, %v6748, -inf
    %v7109 = vmax.f32 %v7107, %v7108
    %v7110 = vsel %vm7085, %v6755, -inf
    %v7111 = vsel %vm7085, %v6783, -inf
    %v7112 = vmax.f32 %v7110, %v7111
    %v7113 = vsel %vm7085, %v6762, -inf
    %v7114 = vsel %vm7085, %v6790, -inf
    %v7115 = vmax.f32 %v7113, %v7114
    %v7116 = vsel %vm7085, %v6769, -inf
    %v7117 = vsel %vm7085, %v6797, -inf
    %v7118 = vmax.f32 %v7116, %v7117
    %v7119 = vsel %vm7085, %v6776, -inf
    %v7120 = vsel %vm7085, %v6804, -inf
    %v7121 = vmax.f32 %v7119, %v7120
    %v7122 = vsel %vm7085, %v6811, -inf
    %v7123 = vsel %vm7085, %v6839, -inf
    %v7124 = vmax.f32 %v7122, %v7123
    %v7125 = vsel %vm7085, %v6818, -inf
    %v7126 = vsel %vm7085, %v6846, -inf
    %v7127 = vmax.f32 %v7125, %v7126
    %v7128 = vsel %vm7085, %v6825, -inf
    %v7129 = vsel %vm7085, %v6853, -inf
    %v7130 = vmax.f32 %v7128, %v7129
    %v7131 = vsel %vm7085, %v6832, -inf
    %v7132 = vsel %vm7085, %v6860, -inf
    %v7133 = vmax.f32 %v7131, %v7132
    %v7134 = vsel %vm7085, %v6867, -inf
    %v7135 = vsel %vm7085, %v6895, -inf
    %v7136 = vmax.f32 %v7134, %v7135
    %v7137 = vsel %vm7085, %v6874, -inf
    %v7138 = vsel %vm7085, %v6902, -inf
    %v7139 = vmax.f32 %v7137, %v7138
    %v7140 = vsel %vm7085, %v6881, -inf
    %v7141 = vsel %vm7085, %v6909, -inf
    %v7142 = vmax.f32 %v7140, %v7141
    %v7143 = vsel %vm7085, %v6888, -inf
    %v7144 = vsel %vm7085, %v6916, -inf
    %v7145 = vmax.f32 %v7143, %v7144
    %v7146 = vsel %vm7085, %v6923, -inf
    %v7147 = vsel %vm7085, %v6951, -inf
    %v7148 = vmax.f32 %v7146, %v7147
    %v7149 = vsel %vm7085, %v6930, -inf
    %v7150 = vsel %vm7085, %v6958, -inf
    %v7151 = vmax.f32 %v7149, %v7150
    %v7152 = vsel %vm7085, %v6937, -inf
    %v7153 = vsel %vm7085, %v6965, -inf
    %v7154 = vmax.f32 %v7152, %v7153
    %v7155 = vsel %vm7085, %v6944, -inf
    %v7156 = vsel %vm7085, %v6972, -inf
    %v7157 = vmax.f32 %v7155, %v7156
    %v7158 = vsel %vm7085, %v6979, -inf
    %v7159 = vsel %vm7085, %v7007, -inf
    %v7160 = vmax.f32 %v7158, %v7159
    %v7161 = vsel %vm7085, %v6986, -inf
    %v7162 = vsel %vm7085, %v7014, -inf
    %v7163 = vmax.f32 %v7161, %v7162
    %v7164 = vsel %vm7085, %v6993, -inf
    %v7165 = vsel %vm7085, %v7021, -inf
    %v7166 = vmax.f32 %v7164, %v7165
    %v7167 = vsel %vm7085, %v7000, -inf
    %v7168 = vsel %vm7085, %v7028, -inf
    %v7169 = vmax.f32 %v7167, %v7168
    %v7170 = vsel %vm7085, %v7035, -inf
    %v7171 = vsel %vm7085, %v7063, -inf
    %v7172 = vmax.f32 %v7170, %v7171
    %v7173 = vsel %vm7085, %v7042, -inf
    %v7174 = vsel %vm7085, %v7070, -inf
    %v7175 = vmax.f32 %v7173, %v7174
    %v7176 = vsel %vm7085, %v7049, -inf
    %v7177 = vsel %vm7085, %v7077, -inf
    %v7178 = vmax.f32 %v7176, %v7177
    %v7179 = vsel %vm7085, %v7056, -inf
    %v7180 = vsel %vm7085, %v7084, -inf
    %v7181 = vmax.f32 %v7179, %v7180
    %vm7182 = vcmask 521216
    %7183 = vst.msk [vmem:[#allocation3] sm:$0x3f] %vm7182, 0.0
    %7184 = vst.msk [vmem:[#allocation3 + $0x30] sm:$0x3f] %vm7182, 0.0
    %s7185 = scalar_lea.vmem [#allocation3], 40
    %7186 = vst.msk [vmem:[%s7185] sm:$0x3f] %vm7182, 0.0
    %7187 = vst.msk [vmem:[%s7185 + $0x30] sm:$0x3f] %vm7182, 0.0
    %s7188 = scalar_lea.vmem [#allocation3], 8
    %vm7189 = vcmask 516096
    %7190 = vst.msk [vmem:[%s7188] sm:$0x1] %vm7189, 0.0
    %7191 = vst.msk [vmem:[%s7188 + $0x8] sm:$0x1] %vm7189, 0.0
    %7192 = vst.msk [vmem:[%s7188 + $0x10] sm:$0x1] %vm7189, 0.0
    %7193 = vst.msk [vmem:[%s7188 + $0x18] sm:$0x1] %vm7189, 0.0
    %7194 = vst.msk [vmem:[%s7188 + $0x30] sm:$0x1] %vm7189, 0.0
    %7195 = vst.msk [vmem:[%s7188 + $0x38] sm:$0x1] %vm7189, 0.0
    %7196 = vst.msk [vmem:[%s7188 + $0x40] sm:$0x1] %vm7189, 0.0
    %7197 = vst.msk [vmem:[%s7188 + $0x48] sm:$0x1] %vm7189, 0.0
    %7198 = vst.msk [vmem:[%s7188 + $0x5] sm:$0x1] %vm7189, 0.0
    %7199 = vst.msk [vmem:[%s7188 + $0xd] sm:$0x1] %vm7189, 0.0
    %7200 = vst.msk [vmem:[%s7188 + $0x15] sm:$0x1] %vm7189, 0.0
    %7201 = vst.msk [vmem:[%s7188 + $0x1d] sm:$0x1] %vm7189, 0.0
    %7202 = vst.msk [vmem:[%s7188 + $0x35] sm:$0x1] %vm7189, 0.0
    %7203 = vst.msk [vmem:[%s7188 + $0x3d] sm:$0x1] %vm7189, 0.0
    %7204 = vst.msk [vmem:[%s7188 + $0x45] sm:$0x1] %vm7189, 0.0
    %7205 = vst.msk [vmem:[%s7188 + $0x4d] sm:$0x1] %vm7189, 0.0
    %v7238 = vsel %vm4500, %v7091, %v7088
    %v7239 = vsel %vm4502, %v7094, %v7238
    %v7240 = vsel %vm4504, %v7097, %v7239
    %v7241 = vsel %vm4500, %v7103, %v7100
    %v7242 = vsel %vm4502, %v7106, %v7241
    %v7243 = vsel %vm4504, %v7109, %v7242
    %v7244 = vsel %vm4500, %v7115, %v7112
    %v7245 = vsel %vm4502, %v7118, %v7244
    %v7246 = vsel %vm4504, %v7121, %v7245
    %v7247 = vsel %vm4500, %v7127, %v7124
    %v7248 = vsel %vm4502, %v7130, %v7247
    %v7249 = vsel %vm4504, %v7133, %v7248
    %v7250 = vsel %vm4500, %v7139, %v7136
    %v7251 = vsel %vm4502, %v7142, %v7250
    %v7252 = vsel %vm4504, %v7145, %v7251
    %v7253 = vsel %vm4500, %v7151, %v7148
    %v7254 = vsel %vm4502, %v7154, %v7253
    %v7255 = vsel %vm4504, %v7157, %v7254
    %v7256 = vsel %vm4500, %v7163, %v7160
    %v7257 = vsel %vm4502, %v7166, %v7256
    %v7258 = vsel %vm4504, %v7169, %v7257
    %v7259 = vsel %vm4500, %v7175, %v7172
    %v7260 = vsel %vm4502, %v7178, %v7259
    %v7261 = vsel %vm4504, %v7181, %v7260
    %vm7270 = vcmask 519168
    %7271 = vst.msk [vmem:[%s7188 + $0x1] sm:$0xf] %vm7270, %v7240
    %7272 = vst.msk [vmem:[%s7188 + $0x9] sm:$0xf] %vm7270, %v7243
    %7273 = vst.msk [vmem:[%s7188 + $0x11] sm:$0xf] %vm7270, %v7246
    %7274 = vst.msk [vmem:[%s7188 + $0x19] sm:$0xf] %vm7270, %v7249
    %7275 = vst.msk [vmem:[%s7188 + $0x31] sm:$0xf] %vm7270, %v7252
    %7276 = vst.msk [vmem:[%s7188 + $0x39] sm:$0xf] %vm7270, %v7255
    %7277 = vst.msk [vmem:[%s7188 + $0x41] sm:$0xf] %vm7270, %v7258
    %7278 = vst.msk [vmem:[%s7188 + $0x49] sm:$0xf] %vm7270, %v7261
    %v7279 = vld [vmem:[#allocation3] sm:$0x3f]
    %v7280 = vld [vmem:[#allocation3 + $0x8] sm:$0x3f]
    %v7281 = vld [vmem:[#allocation3 + $0x10] sm:$0x3f]
    %v7282 = vld [vmem:[#allocation3 + $0x18] sm:$0x3f]
    %v7283 = vld [vmem:[#allocation3 + $0x20] sm:$0x3f]
    %v7284 = vld [vmem:[#allocation3 + $0x28] sm:$0x3f]
    %v7285 = vld [vmem:[#allocation3 + $0x30] sm:$0x3f]
    %v7286 = vld [vmem:[#allocation3 + $0x38] sm:$0x3f]
    %v7287 = vld [vmem:[#allocation3 + $0x40] sm:$0x3f]
    %v7288 = vld [vmem:[#allocation3 + $0x48] sm:$0x3f]
    %v7289 = vld [vmem:[#allocation3 + $0x50] sm:$0x3f]
    %v7290 = vld [vmem:[#allocation3 + $0x58] sm:$0x3f]
    %v7299 = vcombine.low %v7279, %v7280
    %v7300 = vcombine.low %v7281, %v7282
    %v7301 = vcombine.low %v7285, %v7286
    %v7302 = vcombine.low %v7287, %v7288
    %v7307 = vpack.c.bf16 %v7300, %v7299
    %v7308 = vpack.c.bf16 %v7302, %v7301
    %v7309 = vld [vmem:[%s5] sm:$0xf]
    %v7310 = vld [vmem:[%s5 + $0x4] sm:$0xf]
    %v7311 = vld [vmem:[%s5 + $0x8] sm:$0xf]
    %v7312 = vld [vmem:[%s5 + $0xc] sm:$0xf]
    %v7313 = vld [vmem:[%s5 + $0x10] sm:$0xf]
    %v7314 = vld [vmem:[%s5 + $0x14] sm:$0xf]
    %v7315 = vld [vmem:[%s5 + $0x18] sm:$0xf]
    %v7316 = vld [vmem:[%s5 + $0x1c] sm:$0xf]
    %v7317 = vcombine.high %v7279, %v7279
    %v7318 = vcombine.high %v7280, %v7280
    %v7319 = vcombine.high %v7281, %v7281
    %v7320 = vcombine.high %v7282, %v7282
    %v7321 = vcombine.high %v7285, %v7285
    %v7322 = vcombine.high %v7286, %v7286
    %v7323 = vcombine.high %v7287, %v7287
    %v7324 = vcombine.high %v7288, %v7288
    %vm7325 = vcmask 1042432
    %vm7326 = vcmask 1046532
    %vm7327 = vmor %vm7325, %vm7326
    %v7328 = vrot.slane %v7279, 5
    %v7329 = vrot.slane %v7328, 4
    %v7330 = vrot.slane %v7317, 5
    %v7331 = vsel %vm7327, %v7329, %v7330
    %v7332 = vrot.slane %v7280, 5
    %v7333 = vrot.slane %v7332, 4
    %v7334 = vrot.slane %v7318, 5
    %v7335 = vsel %vm7327, %v7333, %v7334
    %v7336 = vrot.slane %v7281, 5
    %v7337 = vrot.slane %v7336, 4
    %v7338 = vrot.slane %v7319, 5
    %v7339 = vsel %vm7327, %v7337, %v7338
    %v7340 = vrot.slane %v7282, 5
    %v7341 = vrot.slane %v7340, 4
    %v7342 = vrot.slane %v7320, 5
    %v7343 = vsel %vm7327, %v7341, %v7342
    %v7344 = vrot.slane %v7285, 5
    %v7345 = vrot.slane %v7344, 4
    %v7346 = vrot.slane %v7321, 5
    %v7347 = vsel %vm7327, %v7345, %v7346
    %v7348 = vrot.slane %v7286, 5
    %v7349 = vrot.slane %v7348, 4
    %v7350 = vrot.slane %v7322, 5
    %v7351 = vsel %vm7327, %v7349, %v7350
    %v7352 = vrot.slane %v7287, 5
    %v7353 = vrot.slane %v7352, 4
    %v7354 = vrot.slane %v7323, 5
    %v7355 = vsel %vm7327, %v7353, %v7354
    %v7356 = vrot.slane %v7288, 5
    %v7357 = vrot.slane %v7356, 4
    %v7358 = vrot.slane %v7324, 5
    %v7359 = vsel %vm7327, %v7357, %v7358
    %v7360 = vcombine.low %v7331, %v7335
    %v7361 = vcombine.low %v7339, %v7343
    %v7362 = vcombine.low %v7347, %v7351
    %v7363 = vcombine.low %v7355, %v7359
    %v7368 = vpack.c.bf16 %v7361, %v7360
    %v7369 = vpack.c.bf16 %v7363, %v7362
    %s7370 = scalar_lea.vmem %s5, 32
    %v7371 = vld [vmem:[%s7370] sm:$0xf]
    %v7372 = vld [vmem:[%s7370 + $0x4] sm:$0xf]
    %v7373 = vld [vmem:[%s7370 + $0x8] sm:$0xf]
    %v7374 = vld [vmem:[%s7370 + $0xc] sm:$0xf]
    %v7375 = vld [vmem:[%s7370 + $0x10] sm:$0xf]
    %v7376 = vld [vmem:[%s7370 + $0x14] sm:$0xf]
    %v7377 = vld [vmem:[%s7370 + $0x18] sm:$0xf]
    %v7378 = vld [vmem:[%s7370 + $0x1c] sm:$0xf]
    %v7387 = vunpack.c.l.b16 %v7371
    %v7388 = vunpack.c.l.b16 %v7372
    %v7389 = vunpack.c.l.b16 %v7373
    %v7390 = vunpack.c.l.b16 %v7374
    %v7391 = vunpack.c.l.b16 %v7375
    %v7392 = vunpack.c.l.b16 %v7376
    %v7393 = vunpack.c.l.b16 %v7377
    %v7394 = vunpack.c.l.b16 %v7378
    %v7395 = vpack.c.b16 %v7388, %v7387
    %v7396 = vpack.c.b16 %v7390, %v7389
    %v7397 = vpack.c.b16 %v7392, %v7391
    %v7398 = vpack.c.b16 %v7394, %v7393
    %v7404 = vsel %vm7085, %v7368, 0
    %v7407 = vsel %vm7085, %v7369, 0
    %7409 = vmatprep.subr.bf16.mxu0 0
    %7410 = vmatpush1.bf16.msra.mxu0 0
    %7411 = vmatprep.subr.bf16.mxu0 0
    %7412 = vmatpush1.bf16.msra.mxu0 0
    %7413 = vmatprep.subr.bf16.mxu0 0
    %7414 = vmatpush1.bf16.msra.mxu0 0
    %7415 = vmatprep.subr.bf16.mxu0 0
    %7416 = vmatpush1.bf16.msra.mxu0 0
    %7417 = vmatprep.subr.bf16.mxu0 0
    %7418 = vmatpush1.bf16.msra.mxu0 %v7398
    %7419 = vmatprep.subr.bf16.mxu0 0
    %7420 = vmatpush1.bf16.msra.mxu0 %v7397
    %7421 = vmatprep.subr.bf16.mxu0 0
    %7422 = vmatpush1.bf16.msra.mxu0 %v7396
    %7423 = vmatprep.subr.bf16.mxu0 0
    %7424 = vmatpush1.bf16.msra.mxu0 %v7395
    %7425 = vmatprep.subr.bf16.mxu0 0
    %7426 = vmatpush2.bf16.msra.mxu0 0
    %7427 = vmatprep.subr.bf16.mxu0 0
    %7428 = vmatpush2.bf16.msra.mxu0 0
    %7429 = vmatprep.subr.bf16.mxu0 0
    %7430 = vmatpush2.bf16.msra.mxu0 0
    %7431 = vmatprep.subr.bf16.mxu0 0
    %7432 = vmatpush2.bf16.msra.mxu0 0
    %7433 = vmatprep.subr.bf16.mxu0 0
    %7434 = vmatpush2.bf16.msra.mxu0 0
    %7435 = vmatprep.subr.bf16.mxu0 0
    %7436 = vmatpush2.bf16.msra.mxu0 0
    %7437 = vmatprep.subr.bf16.mxu0 0
    %7438 = vmatpush2.bf16.msra.mxu0 0
    %7439 = vmatprep.subr.bf16.mxu0 0
    %7440 = vmatpush2.bf16.msra.mxu0 0
    %7441 = vmatprep.mubr.bf16.mxu0 0
    %7442 = vmatmul.mubr.bf16.gmra.mxu0 %v7404
    %v7443 = vpop.f32.mrf.mxu0
    %v7444 = vadd.f32 0.0, %v7443
    %v7445 = vpop.f32.mrf.mxu0
    %v7446 = vpop.f32.mrf.mxu0
    %v7447 = vadd.f32 0.0, %v7446
    %v7448 = vpop.f32.mrf.mxu0
    %7449 = vmatprep.mubr.bf16.mxu0 0
    %7450 = vmatmul.mubr.bf16.gmra.mxu0 %v7407
    %v7451 = vpop.f32.mrf.mxu0
    %v7452 = vadd.f32 0.0, %v7451
    %v7453 = vpop.f32.mrf.mxu0
    %v7454 = vpop.f32.mrf.mxu0
    %v7455 = vadd.f32 0.0, %v7454
    %v7456 = vpop.f32.mrf.mxu0
    %7457 = vdwg.mxu0
    %v7466 = vunpack.c.l.b16 %v7309
    %v7467 = vunpack.c.l.b16 %v7310
    %v7468 = vunpack.c.l.b16 %v7311
    %v7469 = vunpack.c.l.b16 %v7312
    %v7470 = vunpack.c.l.b16 %v7313
    %v7471 = vunpack.c.l.b16 %v7314
    %v7472 = vunpack.c.l.b16 %v7315
    %v7473 = vunpack.c.l.b16 %v7316
    %v7474 = vpack.c.b16 %v7467, %v7466
    %v7475 = vpack.c.b16 %v7469, %v7468
    %v7476 = vpack.c.b16 %v7471, %v7470
    %v7477 = vpack.c.b16 %v7473, %v7472
    %v7483 = vsel %vm7085, %v7307, 0
    %v7486 = vsel %vm7085, %v7308, 0
    %7488 = vmatprep.subr.bf16.mxu0 0
    %7489 = vmatpush1.bf16.msra.mxu0 0
    %7490 = vmatprep.subr.bf16.mxu0 0
    %7491 = vmatpush1.bf16.msra.mxu0 0
    %7492 = vmatprep.subr.bf16.mxu0 0
    %7493 = vmatpush1.bf16.msra.mxu0 0
    %7494 = vmatprep.subr.bf16.mxu0 0
    %7495 = vmatpush1.bf16.msra.mxu0 0
    %7496 = vmatprep.subr.bf16.mxu0 0
    %7497 = vmatpush1.bf16.msra.mxu0 %v7477
    %7498 = vmatprep.subr.bf16.mxu0 0
    %7499 = vmatpush1.bf16.msra.mxu0 %v7476
    %7500 = vmatprep.subr.bf16.mxu0 0
    %7501 = vmatpush1.bf16.msra.mxu0 %v7475
    %7502 = vmatprep.subr.bf16.mxu0 0
    %7503 = vmatpush1.bf16.msra.mxu0 %v7474
    %7504 = vmatprep.subr.bf16.mxu0 0
    %7505 = vmatpush2.bf16.msra.mxu0 0
    %7506 = vmatprep.subr.bf16.mxu0 0
    %7507 = vmatpush2.bf16.msra.mxu0 0
    %7508 = vmatprep.subr.bf16.mxu0 0
    %7509 = vmatpush2.bf16.msra.mxu0 0
    %7510 = vmatprep.subr.bf16.mxu0 0
    %7511 = vmatpush2.bf16.msra.mxu0 0
    %7512 = vmatprep.subr.bf16.mxu0 0
    %7513 = vmatpush2.bf16.msra.mxu0 0
    %7514 = vmatprep.subr.bf16.mxu0 0
    %7515 = vmatpush2.bf16.msra.mxu0 0
    %7516 = vmatprep.subr.bf16.mxu0 0
    %7517 = vmatpush2.bf16.msra.mxu0 0
    %7518 = vmatprep.subr.bf16.mxu0 0
    %7519 = vmatpush2.bf16.msra.mxu0 0
    %7520 = vmatprep.mubr.bf16.mxu0 0
    %7521 = vmatmul.mubr.bf16.gmra.mxu0 %v7483
    %v7522 = vpop.f32.mrf.mxu0
    %v7523 = vadd.f32 %v7444, %v7522
    %v7524 = vpop.f32.mrf.mxu0
    %v7525 = vpop.f32.mrf.mxu0
    %v7526 = vadd.f32 %v7447, %v7525
    %v7527 = vpop.f32.mrf.mxu0
    %7528 = vmatprep.mubr.bf16.mxu0 0
    %7529 = vmatmul.mubr.bf16.gmra.mxu0 %v7486
    %v7530 = vpop.f32.mrf.mxu0
    %v7531 = vadd.f32 %v7452, %v7530
    %v7532 = vpop.f32.mrf.mxu0
    %v7533 = vpop.f32.mrf.mxu0
    %v7534 = vadd.f32 %v7455, %v7533
    %v7535 = vpop.f32.mrf.mxu0
    %7536 = vdwg.mxu0
    %vm7537 = vcmask 1041408
    %vm7538 = vcmask 1045508
    %vm7539 = vmor %vm7537, %vm7538
    %v7540 = vrot.slane %v7279, 6
    %v7541 = vrot.slane %v7540, 4
    %v7542 = vrot.slane %v7317, 6
    %v7543 = vsel %vm7539, %v7541, %v7542
    %v7544 = vrot.slane %v7280, 6
    %v7545 = vrot.slane %v7544, 4
    %v7546 = vrot.slane %v7318, 6
    %v7547 = vsel %vm7539, %v7545, %v7546
    %v7548 = vrot.slane %v7281, 6
    %v7549 = vrot.slane %v7548, 4
    %v7550 = vrot.slane %v7319, 6
    %v7551 = vsel %vm7539, %v7549, %v7550
    %v7552 = vrot.slane %v7282, 6
    %v7553 = vrot.slane %v7552, 4
    %v7554 = vrot.slane %v7320, 6
    %v7555 = vsel %vm7539, %v7553, %v7554
    %v7556 = vrot.slane %v7285, 6
    %v7557 = vrot.slane %v7556, 4
    %v7558 = vrot.slane %v7321, 6
    %v7559 = vsel %vm7539, %v7557, %v7558
    %v7560 = vrot.slane %v7286, 6
    %v7561 = vrot.slane %v7560, 4
    %v7562 = vrot.slane %v7322, 6
    %v7563 = vsel %vm7539, %v7561, %v7562
    %v7564 = vrot.slane %v7287, 6
    %v7565 = vrot.slane %v7564, 4
    %v7566 = vrot.slane %v7323, 6
    %v7567 = vsel %vm7539, %v7565, %v7566
    %v7568 = vrot.slane %v7288, 6
    %v7569 = vrot.slane %v7568, 4
    %v7570 = vrot.slane %v7324, 6
    %v7571 = vsel %vm7539, %v7569, %v7570
    %v7572 = vcombine.low %v7543, %v7547
    %v7573 = vcombine.low %v7551, %v7555
    %v7574 = vcombine.low %v7559, %v7563
    %v7575 = vcombine.low %v7567, %v7571
    %v7580 = vpack.c.bf16 %v7573, %v7572
    %v7581 = vpack.c.bf16 %v7575, %v7574
    %s7582 = scalar_lea.vmem %s5, 64
    %v7583 = vld [vmem:[%s7582] sm:$0xf]
    %v7584 = vld [vmem:[%s7582 + $0x4] sm:$0xf]
    %v7585 = vld [vmem:[%s7582 + $0x8] sm:$0xf]
    %v7586 = vld [vmem:[%s7582 + $0xc] sm:$0xf]
    %v7587 = vld [vmem:[%s7582 + $0x10] sm:$0xf]
    %v7588 = vld [vmem:[%s7582 + $0x14] sm:$0xf]
    %v7589 = vld [vmem:[%s7582 + $0x18] sm:$0xf]
    %v7590 = vld [vmem:[%s7582 + $0x1c] sm:$0xf]
    %v7599 = vunpack.c.l.b16 %v7583
    %v7600 = vunpack.c.l.b16 %v7584
    %v7601 = vunpack.c.l.b16 %v7585
    %v7602 = vunpack.c.l.b16 %v7586
    %v7603 = vunpack.c.l.b16 %v7587
    %v7604 = vunpack.c.l.b16 %v7588
    %v7605 = vunpack.c.l.b16 %v7589
    %v7606 = vunpack.c.l.b16 %v7590
    %v7607 = vpack.c.b16 %v7600, %v7599
    %v7608 = vpack.c.b16 %v7602, %v7601
    %v7609 = vpack.c.b16 %v7604, %v7603
    %v7610 = vpack.c.b16 %v7606, %v7605
    %v7616 = vsel %vm7085, %v7580, 0
    %v7619 = vsel %vm7085, %v7581, 0
    %7621 = vmatprep.subr.bf16.mxu0 0
    %7622 = vmatpush1.bf16.msra.mxu0 0
    %7623 = vmatprep.subr.bf16.mxu0 0
    %7624 = vmatpush1.bf16.msra.mxu0 0
    %7625 = vmatprep.subr.bf16.mxu0 0
    %7626 = vmatpush1.bf16.msra.mxu0 0
    %7627 = vmatprep.subr.bf16.mxu0 0
    %7628 = vmatpush1.bf16.msra.mxu0 0
    %7629 = vmatprep.subr.bf16.mxu0 0
    %7630 = vmatpush1.bf16.msra.mxu0 %v7610
    %7631 = vmatprep.subr.bf16.mxu0 0
    %7632 = vmatpush1.bf16.msra.mxu0 %v7609
    %7633 = vmatprep.subr.bf16.mxu0 0
    %7634 = vmatpush1.bf16.msra.mxu0 %v7608
    %7635 = vmatprep.subr.bf16.mxu0 0
    %7636 = vmatpush1.bf16.msra.mxu0 %v7607
    %7637 = vmatprep.subr.bf16.mxu0 0
    %7638 = vmatpush2.bf16.msra.mxu0 0
    %7639 = vmatprep.subr.bf16.mxu0 0
    %7640 = vmatpush2.bf16.msra.mxu0 0
    %7641 = vmatprep.subr.bf16.mxu0 0
    %7642 = vmatpush2.bf16.msra.mxu0 0
    %7643 = vmatprep.subr.bf16.mxu0 0
    %7644 = vmatpush2.bf16.msra.mxu0 0
    %7645 = vmatprep.subr.bf16.mxu0 0
    %7646 = vmatpush2.bf16.msra.mxu0 0
    %7647 = vmatprep.subr.bf16.mxu0 0
    %7648 = vmatpush2.bf16.msra.mxu0 0
    %7649 = vmatprep.subr.bf16.mxu0 0
    %7650 = vmatpush2.bf16.msra.mxu0 0
    %7651 = vmatprep.subr.bf16.mxu0 0
    %7652 = vmatpush2.bf16.msra.mxu0 0
    %7653 = vmatprep.mubr.bf16.mxu0 0
    %7654 = vmatmul.mubr.bf16.gmra.mxu0 %v7616
    %v7655 = vpop.f32.mrf.mxu0
    %v7656 = vadd.f32 0.0, %v7655
    %v7657 = vpop.f32.mrf.mxu0
    %v7658 = vpop.f32.mrf.mxu0
    %v7659 = vadd.f32 0.0, %v7658
    %v7660 = vpop.f32.mrf.mxu0
    %7661 = vmatprep.mubr.bf16.mxu0 0
    %7662 = vmatmul.mubr.bf16.gmra.mxu0 %v7619
    %v7663 = vpop.f32.mrf.mxu0
    %v7664 = vadd.f32 0.0, %v7663
    %v7665 = vpop.f32.mrf.mxu0
    %v7666 = vpop.f32.mrf.mxu0
    %v7667 = vadd.f32 0.0, %v7666
    %v7668 = vpop.f32.mrf.mxu0
    %7669 = vdwg.mxu0
    %v7670 = vadd.f32 %v7523, %v7656
    %v7671 = vadd.f32 %v7526, %v7659
    %v7672 = vadd.f32 %v7531, %v7664
    %v7673 = vadd.f32 %v7534, %v7667
    %v7676 = vcombine.low %v7280, %v7281
    %v7677 = vcombine.low %v7282, %v7283
    %v7678 = vcombine.low %v7286, %v7287
    %v7679 = vcombine.low %v7288, %v7289
    %v7684 = vpack.c.bf16 %v7677, %v7676
    %v7685 = vpack.c.bf16 %v7679, %v7678
    %s7686 = scalar_lea.vmem %s5, 96
    %v7687 = vld [vmem:[%s7686] sm:$0xf]
    %v7688 = vld [vmem:[%s7686 + $0x4] sm:$0xf]
    %v7689 = vld [vmem:[%s7686 + $0x8] sm:$0xf]
    %v7690 = vld [vmem:[%s7686 + $0xc] sm:$0xf]
    %v7691 = vld [vmem:[%s7686 + $0x10] sm:$0xf]
    %v7692 = vld [vmem:[%s7686 + $0x14] sm:$0xf]
    %v7693 = vld [vmem:[%s7686 + $0x18] sm:$0xf]
    %v7694 = vld [vmem:[%s7686 + $0x1c] sm:$0xf]
    %v7703 = vunpack.c.l.b16 %v7687
    %v7704 = vunpack.c.l.b16 %v7688
    %v7705 = vunpack.c.l.b16 %v7689
    %v7706 = vunpack.c.l.b16 %v7690
    %v7707 = vunpack.c.l.b16 %v7691
    %v7708 = vunpack.c.l.b16 %v7692
    %v7709 = vunpack.c.l.b16 %v7693
    %v7710 = vunpack.c.l.b16 %v7694
    %v7711 = vpack.c.b16 %v7704, %v7703
    %v7712 = vpack.c.b16 %v7706, %v7705
    %v7713 = vpack.c.b16 %v7708, %v7707
    %v7714 = vpack.c.b16 %v7710, %v7709
    %v7720 = vsel %vm7085, %v7684, 0
    %v7723 = vsel %vm7085, %v7685, 0
    %7725 = vmatprep.subr.bf16.mxu0 0
    %7726 = vmatpush1.bf16.msra.mxu0 0
    %7727 = vmatprep.subr.bf16.mxu0 0
    %7728 = vmatpush1.bf16.msra.mxu0 0
    %7729 = vmatprep.subr.bf16.mxu0 0
    %7730 = vmatpush1.bf16.msra.mxu0 0
    %7731 = vmatprep.subr.bf16.mxu0 0
    %7732 = vmatpush1.bf16.msra.mxu0 0
    %7733 = vmatprep.subr.bf16.mxu0 0
    %7734 = vmatpush1.bf16.msra.mxu0 %v7714
    %7735 = vmatprep.subr.bf16.mxu0 0
    %7736 = vmatpush1.bf16.msra.mxu0 %v7713
    %7737 = vmatprep.subr.bf16.mxu0 0
    %7738 = vmatpush1.bf16.msra.mxu0 %v7712
    %7739 = vmatprep.subr.bf16.mxu0 0
    %7740 = vmatpush1.bf16.msra.mxu0 %v7711
    %7741 = vmatprep.subr.bf16.mxu0 0
    %7742 = vmatpush2.bf16.msra.mxu0 0
    %7743 = vmatprep.subr.bf16.mxu0 0
    %7744 = vmatpush2.bf16.msra.mxu0 0
    %7745 = vmatprep.subr.bf16.mxu0 0
    %7746 = vmatpush2.bf16.msra.mxu0 0
    %7747 = vmatprep.subr.bf16.mxu0 0
    %7748 = vmatpush2.bf16.msra.mxu0 0
    %7749 = vmatprep.subr.bf16.mxu0 0
    %7750 = vmatpush2.bf16.msra.mxu0 0
    %7751 = vmatprep.subr.bf16.mxu0 0
    %7752 = vmatpush2.bf16.msra.mxu0 0
    %7753 = vmatprep.subr.bf16.mxu0 0
    %7754 = vmatpush2.bf16.msra.mxu0 0
    %7755 = vmatprep.subr.bf16.mxu0 0
    %7756 = vmatpush2.bf16.msra.mxu0 0
    %7757 = vmatprep.mubr.bf16.mxu0 0
    %7758 = vmatmul.mubr.bf16.gmra.mxu0 %v7720
    %v7759 = vpop.f32.mrf.mxu0
    %v7760 = vadd.f32 0.0, %v7759
    %v7761 = vpop.f32.mrf.mxu0
    %v7762 = vpop.f32.mrf.mxu0
    %v7763 = vadd.f32 0.0, %v7762
    %v7764 = vpop.f32.mrf.mxu0
    %7765 = vmatprep.mubr.bf16.mxu0 0
    %7766 = vmatmul.mubr.bf16.gmra.mxu0 %v7723
    %v7767 = vpop.f32.mrf.mxu0
    %v7768 = vadd.f32 0.0, %v7767
    %v7769 = vpop.f32.mrf.mxu0
    %v7770 = vpop.f32.mrf.mxu0
    %v7771 = vadd.f32 0.0, %v7770
    %v7772 = vpop.f32.mrf.mxu0
    %7773 = vdwg.mxu0
    %v7774 = vadd.f32 %v7670, %v7760
    %v7775 = vadd.f32 %v7671, %v7763
    %v7776 = vadd.f32 %v7672, %v7768
    %v7777 = vadd.f32 %v7673, %v7771
    %v7778 = vcombine.high %v7283, %v7283
    %v7779 = vcombine.high %v7289, %v7289
    %v7780 = vrot.slane %v7283, 5
    %v7781 = vrot.slane %v7780, 4
    %v7782 = vrot.slane %v7778, 5
    %v7783 = vsel %vm7327, %v7781, %v7782
    %v7784 = vrot.slane %v7289, 5
    %v7785 = vrot.slane %v7784, 4
    %v7786 = vrot.slane %v7779, 5
    %v7787 = vsel %vm7327, %v7785, %v7786
    %v7788 = vcombine.low %v7335, %v7339
    %v7789 = vcombine.low %v7343, %v7783
    %v7790 = vcombine.low %v7351, %v7355
    %v7791 = vcombine.low %v7359, %v7787
    %v7796 = vpack.c.bf16 %v7789, %v7788
    %v7797 = vpack.c.bf16 %v7791, %v7790
    %s7798 = scalar_lea.vmem %s5, 128
    %v7799 = vld [vmem:[%s7798] sm:$0xf]
    %v7800 = vld [vmem:[%s7798 + $0x4] sm:$0xf]
    %v7801 = vld [vmem:[%s7798 + $0x8] sm:$0xf]
    %v7802 = vld [vmem:[%s7798 + $0xc] sm:$0xf]
    %v7803 = vld [vmem:[%s7798 + $0x10] sm:$0xf]
    %v7804 = vld [vmem:[%s7798 + $0x14] sm:$0xf]
    %v7805 = vld [vmem:[%s7798 + $0x18] sm:$0xf]
    %v7806 = vld [vmem:[%s7798 + $0x1c] sm:$0xf]
    %v7815 = vunpack.c.l.b16 %v7799
    %v7816 = vunpack.c.l.b16 %v7800
    %v7817 = vunpack.c.l.b16 %v7801
    %v7818 = vunpack.c.l.b16 %v7802
    %v7819 = vunpack.c.l.b16 %v7803
    %v7820 = vunpack.c.l.b16 %v7804
    %v7821 = vunpack.c.l.b16 %v7805
    %v7822 = vunpack.c.l.b16 %v7806
    %v7823 = vpack.c.b16 %v7816, %v7815
    %v7824 = vpack.c.b16 %v7818, %v7817
    %v7825 = vpack.c.b16 %v7820, %v7819
    %v7826 = vpack.c.b16 %v7822, %v7821
    %v7832 = vsel %vm7085, %v7796, 0
    %v7835 = vsel %vm7085, %v7797, 0
    %7837 = vmatprep.subr.bf16.mxu0 0
    %7838 = vmatpush1.bf16.msra.mxu0 0
    %7839 = vmatprep.subr.bf16.mxu0 0
    %7840 = vmatpush1.bf16.msra.mxu0 0
    %7841 = vmatprep.subr.bf16.mxu0 0
    %7842 = vmatpush1.bf16.msra.mxu0 0
    %7843 = vmatprep.subr.bf16.mxu0 0
    %7844 = vmatpush1.bf16.msra.mxu0 0
    %7845 = vmatprep.subr.bf16.mxu0 0
    %7846 = vmatpush1.bf16.msra.mxu0 %v7826
    %7847 = vmatprep.subr.bf16.mxu0 0
    %7848 = vmatpush1.bf16.msra.mxu0 %v7825
    %7849 = vmatprep.subr.bf16.mxu0 0
    %7850 = vmatpush1.bf16.msra.mxu0 %v7824
    %7851 = vmatprep.subr.bf16.mxu0 0
    %7852 = vmatpush1.bf16.msra.mxu0 %v7823
    %7853 = vmatprep.subr.bf16.mxu0 0
    %7854 = vmatpush2.bf16.msra.mxu0 0
    %7855 = vmatprep.subr.bf16.mxu0 0
    %7856 = vmatpush2.bf16.msra.mxu0 0
    %7857 = vmatprep.subr.bf16.mxu0 0
    %7858 = vmatpush2.bf16.msra.mxu0 0
    %7859 = vmatprep.subr.bf16.mxu0 0
    %7860 = vmatpush2.bf16.msra.mxu0 0
    %7861 = vmatprep.subr.bf16.mxu0 0
    %7862 = vmatpush2.bf16.msra.mxu0 0
    %7863 = vmatprep.subr.bf16.mxu0 0
    %7864 = vmatpush2.bf16.msra.mxu0 0
    %7865 = vmatprep.subr.bf16.mxu0 0
    %7866 = vmatpush2.bf16.msra.mxu0 0
    %7867 = vmatprep.subr.bf16.mxu0 0
    %7868 = vmatpush2.bf16.msra.mxu0 0
    %7869 = vmatprep.mubr.bf16.mxu0 0
    %7870 = vmatmul.mubr.bf16.gmra.mxu0 %v7832
    %v7871 = vpop.f32.mrf.mxu0
    %v7872 = vadd.f32 0.0, %v7871
    %v7873 = vpop.f32.mrf.mxu0
    %v7874 = vpop.f32.mrf.mxu0
    %v7875 = vadd.f32 0.0, %v7874
    %v7876 = vpop.f32.mrf.mxu0
    %7877 = vmatprep.mubr.bf16.mxu0 0
    %7878 = vmatmul.mubr.bf16.gmra.mxu0 %v7835
    %v7879 = vpop.f32.mrf.mxu0
    %v7880 = vadd.f32 0.0, %v7879
    %v7881 = vpop.f32.mrf.mxu0
    %v7882 = vpop.f32.mrf.mxu0
    %v7883 = vadd.f32 0.0, %v7882
    %v7884 = vpop.f32.mrf.mxu0
    %7885 = vdwg.mxu0
    %v7886 = vadd.f32 %v7774, %v7872
    %v7887 = vadd.f32 %v7775, %v7875
    %v7888 = vadd.f32 %v7776, %v7880
    %v7889 = vadd.f32 %v7777, %v7883
    %v7890 = vrot.slane %v7283, 6
    %v7891 = vrot.slane %v7890, 4
    %v7892 = vrot.slane %v7778, 6
    %v7893 = vsel %vm7539, %v7891, %v7892
    %v7894 = vrot.slane %v7289, 6
    %v7895 = vrot.slane %v7894, 4
    %v7896 = vrot.slane %v7779, 6
    %v7897 = vsel %vm7539, %v7895, %v7896
    %v7898 = vcombine.low %v7547, %v7551
    %v7899 = vcombine.low %v7555, %v7893
    %v7900 = vcombine.low %v7563, %v7567
    %v7901 = vcombine.low %v7571, %v7897
    %v7906 = vpack.c.bf16 %v7899, %v7898
    %v7907 = vpack.c.bf16 %v7901, %v7900
    %s7908 = scalar_lea.vmem %s5, 160
    %v7909 = vld [vmem:[%s7908] sm:$0xf]
    %v7910 = vld [vmem:[%s7908 + $0x4] sm:$0xf]
    %v7911 = vld [vmem:[%s7908 + $0x8] sm:$0xf]
    %v7912 = vld [vmem:[%s7908 + $0xc] sm:$0xf]
    %v7913 = vld [vmem:[%s7908 + $0x10] sm:$0xf]
    %v7914 = vld [vmem:[%s7908 + $0x14] sm:$0xf]
    %v7915 = vld [vmem:[%s7908 + $0x18] sm:$0xf]
    %v7916 = vld [vmem:[%s7908 + $0x1c] sm:$0xf]
    %v7925 = vunpack.c.l.b16 %v7909
    %v7926 = vunpack.c.l.b16 %v7910
    %v7927 = vunpack.c.l.b16 %v7911
    %v7928 = vunpack.c.l.b16 %v7912
    %v7929 = vunpack.c.l.b16 %v7913
    %v7930 = vunpack.c.l.b16 %v7914
    %v7931 = vunpack.c.l.b16 %v7915
    %v7932 = vunpack.c.l.b16 %v7916
    %v7933 = vpack.c.b16 %v7926, %v7925
    %v7934 = vpack.c.b16 %v7928, %v7927
    %v7935 = vpack.c.b16 %v7930, %v7929
    %v7936 = vpack.c.b16 %v7932, %v7931
    %v7942 = vsel %vm7085, %v7906, 0
    %v7945 = vsel %vm7085, %v7907, 0
    %7947 = vmatprep.subr.bf16.mxu0 0
    %7948 = vmatpush1.bf16.msra.mxu0 0
    %7949 = vmatprep.subr.bf16.mxu0 0
    %7950 = vmatpush1.bf16.msra.mxu0 0
    %7951 = vmatprep.subr.bf16.mxu0 0
    %7952 = vmatpush1.bf16.msra.mxu0 0
    %7953 = vmatprep.subr.bf16.mxu0 0
    %7954 = vmatpush1.bf16.msra.mxu0 0
    %7955 = vmatprep.subr.bf16.mxu0 0
    %7956 = vmatpush1.bf16.msra.mxu0 %v7936
    %7957 = vmatprep.subr.bf16.mxu0 0
    %7958 = vmatpush1.bf16.msra.mxu0 %v7935
    %7959 = vmatprep.subr.bf16.mxu0 0
    %7960 = vmatpush1.bf16.msra.mxu0 %v7934
    %7961 = vmatprep.subr.bf16.mxu0 0
    %7962 = vmatpush1.bf16.msra.mxu0 %v7933
    %7963 = vmatprep.subr.bf16.mxu0 0
    %7964 = vmatpush2.bf16.msra.mxu0 0
    %7965 = vmatprep.subr.bf16.mxu0 0
    %7966 = vmatpush2.bf16.msra.mxu0 0
    %7967 = vmatprep.subr.bf16.mxu0 0
    %7968 = vmatpush2.bf16.msra.mxu0 0
    %7969 = vmatprep.subr.bf16.mxu0 0
    %7970 = vmatpush2.bf16.msra.mxu0 0
    %7971 = vmatprep.subr.bf16.mxu0 0
    %7972 = vmatpush2.bf16.msra.mxu0 0
    %7973 = vmatprep.subr.bf16.mxu0 0
    %7974 = vmatpush2.bf16.msra.mxu0 0
    %7975 = vmatprep.subr.bf16.mxu0 0
    %7976 = vmatpush2.bf16.msra.mxu0 0
    %7977 = vmatprep.subr.bf16.mxu0 0
    %7978 = vmatpush2.bf16.msra.mxu0 0
    %7979 = vmatprep.mubr.bf16.mxu0 0
    %7980 = vmatmul.mubr.bf16.gmra.mxu0 %v7942
    %v7981 = vpop.f32.mrf.mxu0
    %v7982 = vadd.f32 0.0, %v7981
    %v7983 = vpop.f32.mrf.mxu0
    %v7984 = vpop.f32.mrf.mxu0
    %v7985 = vadd.f32 0.0, %v7984
    %v7986 = vpop.f32.mrf.mxu0
    %7987 = vmatprep.mubr.bf16.mxu0 0
    %7988 = vmatmul.mubr.bf16.gmra.mxu0 %v7945
    %v7989 = vpop.f32.mrf.mxu0
    %v7990 = vadd.f32 0.0, %v7989
    %v7991 = vpop.f32.mrf.mxu0
    %v7992 = vpop.f32.mrf.mxu0
    %v7993 = vadd.f32 0.0, %v7992
    %v7994 = vpop.f32.mrf.mxu0
    %7995 = vdwg.mxu0
    %v7996 = vadd.f32 %v7886, %v7982
    %v7997 = vadd.f32 %v7887, %v7985
    %v7998 = vadd.f32 %v7888, %v7990
    %v7999 = vadd.f32 %v7889, %v7993
    %v8002 = vcombine.low %v7283, %v7284
    %v8003 = vcombine.low %v7289, %v7290
    %v8006 = vpack.c.bf16 %v8002, %v7300
    %v8007 = vpack.c.bf16 %v8003, %v7302
    %s8008 = scalar_lea.vmem %s5, 192
    %v8009 = vld [vmem:[%s8008] sm:$0xf]
    %v8010 = vld [vmem:[%s8008 + $0x4] sm:$0xf]
    %v8011 = vld [vmem:[%s8008 + $0x8] sm:$0xf]
    %v8012 = vld [vmem:[%s8008 + $0xc] sm:$0xf]
    %v8013 = vld [vmem:[%s8008 + $0x10] sm:$0xf]
    %v8014 = vld [vmem:[%s8008 + $0x14] sm:$0xf]
    %v8015 = vld [vmem:[%s8008 + $0x18] sm:$0xf]
    %v8016 = vld [vmem:[%s8008 + $0x1c] sm:$0xf]
    %v8025 = vunpack.c.l.b16 %v8009
    %v8026 = vunpack.c.l.b16 %v8010
    %v8027 = vunpack.c.l.b16 %v8011
    %v8028 = vunpack.c.l.b16 %v8012
    %v8029 = vunpack.c.l.b16 %v8013
    %v8030 = vunpack.c.l.b16 %v8014
    %v8031 = vunpack.c.l.b16 %v8015
    %v8032 = vunpack.c.l.b16 %v8016
    %v8033 = vpack.c.b16 %v8026, %v8025
    %v8034 = vpack.c.b16 %v8028, %v8027
    %v8035 = vpack.c.b16 %v8030, %v8029
    %v8036 = vpack.c.b16 %v8032, %v8031
    %v8042 = vsel %vm7085, %v8006, 0
    %v8045 = vsel %vm7085, %v8007, 0
    %8047 = vmatprep.subr.bf16.mxu0 0
    %8048 = vmatpush1.bf16.msra.mxu0 0
    %8049 = vmatprep.subr.bf16.mxu0 0
    %8050 = vmatpush1.bf16.msra.mxu0 0
    %8051 = vmatprep.subr.bf16.mxu0 0
    %8052 = vmatpush1.bf16.msra.mxu0 0
    %8053 = vmatprep.subr.bf16.mxu0 0
    %8054 = vmatpush1.bf16.msra.mxu0 0
    %8055 = vmatprep.subr.bf16.mxu0 0
    %8056 = vmatpush1.bf16.msra.mxu0 %v8036
    %8057 = vmatprep.subr.bf16.mxu0 0
    %8058 = vmatpush1.bf16.msra.mxu0 %v8035
    %8059 = vmatprep.subr.bf16.mxu0 0
    %8060 = vmatpush1.bf16.msra.mxu0 %v8034
    %8061 = vmatprep.subr.bf16.mxu0 0
    %8062 = vmatpush1.bf16.msra.mxu0 %v8033
    %8063 = vmatprep.subr.bf16.mxu0 0
    %8064 = vmatpush2.bf16.msra.mxu0 0
    %8065 = vmatprep.subr.bf16.mxu0 0
    %8066 = vmatpush2.bf16.msra.mxu0 0
    %8067 = vmatprep.subr.bf16.mxu0 0
    %8068 = vmatpush2.bf16.msra.mxu0 0
    %8069 = vmatprep.subr.bf16.mxu0 0
    %8070 = vmatpush2.bf16.msra.mxu0 0
    %8071 = vmatprep.subr.bf16.mxu0 0
    %8072 = vmatpush2.bf16.msra.mxu0 0
    %8073 = vmatprep.subr.bf16.mxu0 0
    %8074 = vmatpush2.bf16.msra.mxu0 0
    %8075 = vmatprep.subr.bf16.mxu0 0
    %8076 = vmatpush2.bf16.msra.mxu0 0
    %8077 = vmatprep.subr.bf16.mxu0 0
    %8078 = vmatpush2.bf16.msra.mxu0 0
    %8079 = vmatprep.mubr.bf16.mxu0 0
    %8080 = vmatmul.mubr.bf16.gmra.mxu0 %v8042
    %v8081 = vpop.f32.mrf.mxu0
    %v8082 = vadd.f32 0.0, %v8081
    %v8083 = vpop.f32.mrf.mxu0
    %v8084 = vpop.f32.mrf.mxu0
    %v8085 = vadd.f32 0.0, %v8084
    %v8086 = vpop.f32.mrf.mxu0
    %8087 = vmatprep.mubr.bf16.mxu0 0
    %8088 = vmatmul.mubr.bf16.gmra.mxu0 %v8045
    %v8089 = vpop.f32.mrf.mxu0
    %v8090 = vadd.f32 0.0, %v8089
    %v8091 = vpop.f32.mrf.mxu0
    %v8092 = vpop.f32.mrf.mxu0
    %v8093 = vadd.f32 0.0, %v8092
    %v8094 = vpop.f32.mrf.mxu0
    %8095 = vdwg.mxu0
    %v8096 = vadd.f32 %v7996, %v8082
    %v8097 = vadd.f32 %v7997, %v8085
    %v8098 = vadd.f32 %v7998, %v8090
    %v8099 = vadd.f32 %v7999, %v8093
    %v8100 = vcombine.high %v7284, %v7284
    %v8101 = vcombine.high %v7290, %v7290
    %v8102 = vrot.slane %v7284, 5
    %v8103 = vrot.slane %v8102, 4
    %v8104 = vrot.slane %v8100, 5
    %v8105 = vsel %vm7327, %v8103, %v8104
    %v8106 = vrot.slane %v7290, 5
    %v8107 = vrot.slane %v8106, 4
    %v8108 = vrot.slane %v8101, 5
    %v8109 = vsel %vm7327, %v8107, %v8108
    %v8110 = vcombine.low %v7783, %v8105
    %v8111 = vcombine.low %v7787, %v8109
    %v8114 = vpack.c.bf16 %v8110, %v7361
    %v8115 = vpack.c.bf16 %v8111, %v7363
    %s8116 = scalar_lea.vmem %s5, 224
    %v8117 = vld [vmem:[%s8116] sm:$0xf]
    %v8118 = vld [vmem:[%s8116 + $0x4] sm:$0xf]
    %v8119 = vld [vmem:[%s8116 + $0x8] sm:$0xf]
    %v8120 = vld [vmem:[%s8116 + $0xc] sm:$0xf]
    %v8121 = vld [vmem:[%s8116 + $0x10] sm:$0xf]
    %v8122 = vld [vmem:[%s8116 + $0x14] sm:$0xf]
    %v8123 = vld [vmem:[%s8116 + $0x18] sm:$0xf]
    %v8124 = vld [vmem:[%s8116 + $0x1c] sm:$0xf]
    %v8133 = vunpack.c.l.b16 %v8117
    %v8134 = vunpack.c.l.b16 %v8118
    %v8135 = vunpack.c.l.b16 %v8119
    %v8136 = vunpack.c.l.b16 %v8120
    %v8137 = vunpack.c.l.b16 %v8121
    %v8138 = vunpack.c.l.b16 %v8122
    %v8139 = vunpack.c.l.b16 %v8123
    %v8140 = vunpack.c.l.b16 %v8124
    %v8141 = vpack.c.b16 %v8134, %v8133
    %v8142 = vpack.c.b16 %v8136, %v8135
    %v8143 = vpack.c.b16 %v8138, %v8137
    %v8144 = vpack.c.b16 %v8140, %v8139
    %v8150 = vsel %vm7085, %v8114, 0
    %v8153 = vsel %vm7085, %v8115, 0
    %8155 = vmatprep.subr.bf16.mxu0 0
    %8156 = vmatpush1.bf16.msra.mxu0 0
    %8157 = vmatprep.subr.bf16.mxu0 0
    %8158 = vmatpush1.bf16.msra.mxu0 0
    %8159 = vmatprep.subr.bf16.mxu0 0
    %8160 = vmatpush1.bf16.msra.mxu0 0
    %8161 = vmatprep.subr.bf16.mxu0 0
    %8162 = vmatpush1.bf16.msra.mxu0 0
    %8163 = vmatprep.subr.bf16.mxu0 0
    %8164 = vmatpush1.bf16.msra.mxu0 %v8144
    %8165 = vmatprep.subr.bf16.mxu0 0
    %8166 = vmatpush1.bf16.msra.mxu0 %v8143
    %8167 = vmatprep.subr.bf16.mxu0 0
    %8168 = vmatpush1.bf16.msra.mxu0 %v8142
    %8169 = vmatprep.subr.bf16.mxu0 0
    %8170 = vmatpush1.bf16.msra.mxu0 %v8141
    %8171 = vmatprep.subr.bf16.mxu0 0
    %8172 = vmatpush2.bf16.msra.mxu0 0
    %8173 = vmatprep.subr.bf16.mxu0 0
    %8174 = vmatpush2.bf16.msra.mxu0 0
    %8175 = vmatprep.subr.bf16.mxu0 0
    %8176 = vmatpush2.bf16.msra.mxu0 0
    %8177 = vmatprep.subr.bf16.mxu0 0
    %8178 = vmatpush2.bf16.msra.mxu0 0
    %8179 = vmatprep.subr.bf16.mxu0 0
    %8180 = vmatpush2.bf16.msra.mxu0 0
    %8181 = vmatprep.subr.bf16.mxu0 0
    %8182 = vmatpush2.bf16.msra.mxu0 0
    %8183 = vmatprep.subr.bf16.mxu0 0
    %8184 = vmatpush2.bf16.msra.mxu0 0
    %8185 = vmatprep.subr.bf16.mxu0 0
    %8186 = vmatpush2.bf16.msra.mxu0 0
    %8187 = vmatprep.mubr.bf16.mxu0 0
    %8188 = vmatmul.mubr.bf16.gmra.mxu0 %v8150
    %v8189 = vpop.f32.mrf.mxu0
    %v8190 = vadd.f32 0.0, %v8189
    %v8191 = vpop.f32.mrf.mxu0
    %v8192 = vpop.f32.mrf.mxu0
    %v8193 = vadd.f32 0.0, %v8192
    %v8194 = vpop.f32.mrf.mxu0
    %8195 = vmatprep.mubr.bf16.mxu0 0
    %8196 = vmatmul.mubr.bf16.gmra.mxu0 %v8153
    %v8197 = vpop.f32.mrf.mxu0
    %v8198 = vadd.f32 0.0, %v8197
    %v8199 = vpop.f32.mrf.mxu0
    %v8200 = vpop.f32.mrf.mxu0
    %v8201 = vadd.f32 0.0, %v8200
    %v8202 = vpop.f32.mrf.mxu0
    %8203 = vdwg.mxu0
    %v8204 = vadd.f32 %v8096, %v8190
    %v8205 = vadd.f32 %v8097, %v8193
    %v8206 = vadd.f32 %v8098, %v8198
    %v8207 = vadd.f32 %v8099, %v8201
    %v8208 = vrot.slane %v7284, 6
    %v8209 = vrot.slane %v8208, 4
    %v8210 = vrot.slane %v8100, 6
    %v8211 = vsel %vm7539, %v8209, %v8210
    %v8212 = vrot.slane %v7290, 6
    %v8213 = vrot.slane %v8212, 4
    %v8214 = vrot.slane %v8101, 6
    %v8215 = vsel %vm7539, %v8213, %v8214
    %v8216 = vcombine.low %v7893, %v8211
    %v8217 = vcombine.low %v7897, %v8215
    %v8220 = vpack.c.bf16 %v8216, %v7573
    %v8221 = vpack.c.bf16 %v8217, %v7575
    %s8222 = scalar_lea.vmem %s5, 256
    %v8223 = vld [vmem:[%s8222] sm:$0xf]
    %v8224 = vld [vmem:[%s8222 + $0x4] sm:$0xf]
    %v8225 = vld [vmem:[%s8222 + $0x8] sm:$0xf]
    %v8226 = vld [vmem:[%s8222 + $0xc] sm:$0xf]
    %v8227 = vld [vmem:[%s8222 + $0x10] sm:$0xf]
    %v8228 = vld [vmem:[%s8222 + $0x14] sm:$0xf]
    %v8229 = vld [vmem:[%s8222 + $0x18] sm:$0xf]
    %v8230 = vld [vmem:[%s8222 + $0x1c] sm:$0xf]
    %v8239 = vunpack.c.l.b16 %v8223
    %v8240 = vunpack.c.l.b16 %v8224
    %v8241 = vunpack.c.l.b16 %v8225
    %v8242 = vunpack.c.l.b16 %v8226
    %v8243 = vunpack.c.l.b16 %v8227
    %v8244 = vunpack.c.l.b16 %v8228
    %v8245 = vunpack.c.l.b16 %v8229
    %v8246 = vunpack.c.l.b16 %v8230
    %v8247 = vpack.c.b16 %v8240, %v8239
    %v8248 = vpack.c.b16 %v8242, %v8241
    %v8249 = vpack.c.b16 %v8244, %v8243
    %v8250 = vpack.c.b16 %v8246, %v8245
    %v8256 = vsel %vm7085, %v8220, 0
    %v8259 = vsel %vm7085, %v8221, 0
    %8261 = vmatprep.subr.bf16.mxu0 0
    %8262 = vmatpush1.bf16.msra.mxu0 0
    %8263 = vmatprep.subr.bf16.mxu0 0
    %8264 = vmatpush1.bf16.msra.mxu0 0
    %8265 = vmatprep.subr.bf16.mxu0 0
    %8266 = vmatpush1.bf16.msra.mxu0 0
    %8267 = vmatprep.subr.bf16.mxu0 0
    %8268 = vmatpush1.bf16.msra.mxu0 0
    %8269 = vmatprep.subr.bf16.mxu0 0
    %8270 = vmatpush1.bf16.msra.mxu0 %v8250
    %8271 = vmatprep.subr.bf16.mxu0 0
    %8272 = vmatpush1.bf16.msra.mxu0 %v8249
    %8273 = vmatprep.subr.bf16.mxu0 0
    %8274 = vmatpush1.bf16.msra.mxu0 %v8248
    %8275 = vmatprep.subr.bf16.mxu0 0
    %8276 = vmatpush1.bf16.msra.mxu0 %v8247
    %8277 = vmatprep.subr.bf16.mxu0 0
    %8278 = vmatpush2.bf16.msra.mxu0 0
    %8279 = vmatprep.subr.bf16.mxu0 0
    %8280 = vmatpush2.bf16.msra.mxu0 0
    %8281 = vmatprep.subr.bf16.mxu0 0
    %8282 = vmatpush2.bf16.msra.mxu0 0
    %8283 = vmatprep.subr.bf16.mxu0 0
    %8284 = vmatpush2.bf16.msra.mxu0 0
    %8285 = vmatprep.subr.bf16.mxu0 0
    %8286 = vmatpush2.bf16.msra.mxu0 0
    %8287 = vmatprep.subr.bf16.mxu0 0
    %8288 = vmatpush2.bf16.msra.mxu0 0
    %8289 = vmatprep.subr.bf16.mxu0 0
    %8290 = vmatpush2.bf16.msra.mxu0 0
    %8291 = vmatprep.subr.bf16.mxu0 0
    %8292 = vmatpush2.bf16.msra.mxu0 0
    %8293 = vmatprep.mubr.bf16.mxu0 0
    %8294 = vmatmul.mubr.bf16.gmra.mxu0 %v8256
    %v8295 = vpop.f32.mrf.mxu0
    %v8296 = vadd.f32 0.0, %v8295
    %v8297 = vpop.f32.mrf.mxu0
    %v8298 = vpop.f32.mrf.mxu0
    %v8299 = vadd.f32 0.0, %v8298
    %v8300 = vpop.f32.mrf.mxu0
    %8301 = vmatprep.mubr.bf16.mxu0 0
    %8302 = vmatmul.mubr.bf16.gmra.mxu0 %v8259
    %v8303 = vpop.f32.mrf.mxu0
    %v8304 = vadd.f32 0.0, %v8303
    %v8305 = vpop.f32.mrf.mxu0
    %v8306 = vpop.f32.mrf.mxu0
    %v8307 = vadd.f32 0.0, %v8306
    %v8308 = vpop.f32.mrf.mxu0
    %8309 = vdwg.mxu0
    %v8310 = vadd.f32 %v8204, %v8296
    %v8311 = vadd.f32 %v8205, %v8299
    %v8312 = vadd.f32 %v8206, %v8304
    %v8313 = vadd.f32 %v8207, %v8307
    %v8314 = vld [vmem:[%s6] sm:$0x1]
    %v8316 = vlaneseq
    %v8317 = vshrl.u32 %v8316, 7
    %v8318 = vsub.s32 0, %v8317
    %v8319 = vrot.slane %v8314, %v8318
    %v8321 = vadd.f32 %v8310, %v8319
    %v8322 = vadd.f32 %v8311, %v8319
    %v8323 = vadd.f32 %v8312, %v8319
    %v8324 = vadd.f32 %v8313, %v8319
    %v8325 = vmax.f32 %v8321, 0.0
    %v8326 = vmax.f32 %v8322, 0.0
    %v8327 = vmax.f32 %v8323, 0.0
    %v8328 = vmax.f32 %v8324, 0.0
    %v8333 = vcombine.high %v8325, %v8325
    %v8335 = vunpack.c.l.s4 1983009808
    %v8336 = vunpack.c.0.s8 %v8335
    %v8337 = vlaneseq
    %v8338 = vshrl.u32 %v8337, 7
    %v8339 = vsub.s32 %v8336, %v8338
    %v8340 = vrot.slane %v8325, %v8339
    %v8342 = vunpack.c.l.s4 1983009808
    %v8343 = vunpack.c.0.s8 %v8342
    %v8344 = vlaneseq
    %v8345 = vshrl.u32 %v8344, 7
    %v8346 = vsub.s32 %v8343, %v8345
    %v8347 = vrot.slane %v8333, %v8346
    %v8348 = vcombine.high %v8340, %v8340
    %v8349 = vcombine.high %v8347, %v8347
    %v8350 = vcombine.high %v8326, %v8326
    %v8352 = vunpack.c.l.s4 1983009808
    %v8353 = vunpack.c.0.s8 %v8352
    %v8354 = vlaneseq
    %v8355 = vshrl.u32 %v8354, 7
    %v8356 = vsub.s32 %v8353, %v8355
    %v8357 = vrot.slane %v8326, %v8356
    %v8359 = vunpack.c.l.s4 1983009808
    %v8360 = vunpack.c.0.s8 %v8359
    %v8361 = vlaneseq
    %v8362 = vshrl.u32 %v8361, 7
    %v8363 = vsub.s32 %v8360, %v8362
    %v8364 = vrot.slane %v8350, %v8363
    %v8365 = vcombine.high %v8357, %v8357
    %v8366 = vcombine.high %v8364, %v8364
    %v8367 = vcombine.high %v8327, %v8327
    %v8369 = vunpack.c.l.s4 1983009808
    %v8370 = vunpack.c.0.s8 %v8369
    %v8371 = vlaneseq
    %v8372 = vshrl.u32 %v8371, 7
    %v8373 = vsub.s32 %v8370, %v8372
    %v8374 = vrot.slane %v8327, %v8373
    %v8376 = vunpack.c.l.s4 1983009808
    %v8377 = vunpack.c.0.s8 %v8376
    %v8378 = vlaneseq
    %v8379 = vshrl.u32 %v8378, 7
    %v8380 = vsub.s32 %v8377, %v8379
    %v8381 = vrot.slane %v8367, %v8380
    %v8382 = vcombine.high %v8374, %v8374
    %v8383 = vcombine.high %v8381, %v8381
    %v8384 = vcombine.high %v8328, %v8328
    %v8386 = vunpack.c.l.s4 1983009808
    %v8387 = vunpack.c.0.s8 %v8386
    %v8388 = vlaneseq
    %v8389 = vshrl.u32 %v8388, 7
    %v8390 = vsub.s32 %v8387, %v8389
    %v8391 = vrot.slane %v8328, %v8390
    %v8393 = vunpack.c.l.s4 1983009808
    %v8394 = vunpack.c.0.s8 %v8393
    %v8395 = vlaneseq
    %v8396 = vshrl.u32 %v8395, 7
    %v8397 = vsub.s32 %v8394, %v8396
    %v8398 = vrot.slane %v8384, %v8397
    %v8399 = vcombine.high %v8391, %v8391
    %v8400 = vcombine.high %v8398, %v8398
    %v8417 = vsel %vm7537, %v8340, -inf
    %v8418 = vrot.slane %v8417, 4
    %v8419 = vmax.f32 %v8417, %v8418
    %v8420 = vrot.slane %v8419, 2
    %v8421 = vmax.f32 %v8419, %v8420
    %v8422 = vrot.slane %v8421, 1
    %v8423 = vmax.f32 %v8421, %v8422
    %v8424 = vsel %vm7537, %v8348, -inf
    %v8425 = vrot.slane %v8424, 4
    %v8426 = vmax.f32 %v8424, %v8425
    %v8427 = vrot.slane %v8426, 2
    %v8428 = vmax.f32 %v8426, %v8427
    %v8429 = vrot.slane %v8428, 1
    %v8430 = vmax.f32 %v8428, %v8429
    %v8431 = vsel %vm7537, %v8347, -inf
    %v8432 = vrot.slane %v8431, 4
    %v8433 = vmax.f32 %v8431, %v8432
    %v8434 = vrot.slane %v8433, 2
    %v8435 = vmax.f32 %v8433, %v8434
    %v8436 = vrot.slane %v8435, 1
    %v8437 = vmax.f32 %v8435, %v8436
    %v8438 = vsel %vm7537, %v8349, -inf
    %v8439 = vrot.slane %v8438, 4
    %v8440 = vmax.f32 %v8438, %v8439
    %v8441 = vrot.slane %v8440, 2
    %v8442 = vmax.f32 %v8440, %v8441
    %v8443 = vrot.slane %v8442, 1
    %v8444 = vmax.f32 %v8442, %v8443
    %v8445 = vsel %vm7537, %v8357, -inf
    %v8446 = vrot.slane %v8445, 4
    %v8447 = vmax.f32 %v8445, %v8446
    %v8448 = vrot.slane %v8447, 2
    %v8449 = vmax.f32 %v8447, %v8448
    %v8450 = vrot.slane %v8449, 1
    %v8451 = vmax.f32 %v8449, %v8450
    %v8452 = vsel %vm7537, %v8365, -inf
    %v8453 = vrot.slane %v8452, 4
    %v8454 = vmax.f32 %v8452, %v8453
    %v8455 = vrot.slane %v8454, 2
    %v8456 = vmax.f32 %v8454, %v8455
    %v8457 = vrot.slane %v8456, 1
    %v8458 = vmax.f32 %v8456, %v8457
    %v8459 = vsel %vm7537, %v8364, -inf
    %v8460 = vrot.slane %v8459, 4
    %v8461 = vmax.f32 %v8459, %v8460
    %v8462 = vrot.slane %v8461, 2
    %v8463 = vmax.f32 %v8461, %v8462
    %v8464 = vrot.slane %v8463, 1
    %v8465 = vmax.f32 %v8463, %v8464
    %v8466 = vsel %vm7537, %v8366, -inf
    %v8467 = vrot.slane %v8466, 4
    %v8468 = vmax.f32 %v8466, %v8467
    %v8469 = vrot.slane %v8468, 2
    %v8470 = vmax.f32 %v8468, %v8469
    %v8471 = vrot.slane %v8470, 1
    %v8472 = vmax.f32 %v8470, %v8471
    %v8473 = vsel %vm7537, %v8374, -inf
    %v8474 = vrot.slane %v8473, 4
    %v8475 = vmax.f32 %v8473, %v8474
    %v8476 = vrot.slane %v8475, 2
    %v8477 = vmax.f32 %v8475, %v8476
    %v8478 = vrot.slane %v8477, 1
    %v8479 = vmax.f32 %v8477, %v8478
    %v8480 = vsel %vm7537, %v8382, -inf
    %v8481 = vrot.slane %v8480, 4
    %v8482 = vmax.f32 %v8480, %v8481
    %v8483 = vrot.slane %v8482, 2
    %v8484 = vmax.f32 %v8482, %v8483
    %v8485 = vrot.slane %v8484, 1
    %v8486 = vmax.f32 %v8484, %v8485
    %v8487 = vsel %vm7537, %v8381, -inf
    %v8488 = vrot.slane %v8487, 4
    %v8489 = vmax.f32 %v8487, %v8488
    %v8490 = vrot.slane %v8489, 2
    %v8491 = vmax.f32 %v8489, %v8490
    %v8492 = vrot.slane %v8491, 1
    %v8493 = vmax.f32 %v8491, %v8492
    %v8494 = vsel %vm7537, %v8383, -inf
    %v8495 = vrot.slane %v8494, 4
    %v8496 = vmax.f32 %v8494, %v8495
    %v8497 = vrot.slane %v8496, 2
    %v8498 = vmax.f32 %v8496, %v8497
    %v8499 = vrot.slane %v8498, 1
    %v8500 = vmax.f32 %v8498, %v8499
    %v8501 = vsel %vm7537, %v8391, -inf
    %v8502 = vrot.slane %v8501, 4
    %v8503 = vmax.f32 %v8501, %v8502
    %v8504 = vrot.slane %v8503, 2
    %v8505 = vmax.f32 %v8503, %v8504
    %v8506 = vrot.slane %v8505, 1
    %v8507 = vmax.f32 %v8505, %v8506
    %v8508 = vsel %vm7537, %v8399, -inf
    %v8509 = vrot.slane %v8508, 4
    %v8510 = vmax.f32 %v8508, %v8509
    %v8511 = vrot.slane %v8510, 2
    %v8512 = vmax.f32 %v8510, %v8511
    %v8513 = vrot.slane %v8512, 1
    %v8514 = vmax.f32 %v8512, %v8513
    %v8515 = vsel %vm7537, %v8398, -inf
    %v8516 = vrot.slane %v8515, 4
    %v8517 = vmax.f32 %v8515, %v8516
    %v8518 = vrot.slane %v8517, 2
    %v8519 = vmax.f32 %v8517, %v8518
    %v8520 = vrot.slane %v8519, 1
    %v8521 = vmax.f32 %v8519, %v8520
    %v8522 = vsel %vm7537, %v8400, -inf
    %v8523 = vrot.slane %v8522, 4
    %v8524 = vmax.f32 %v8522, %v8523
    %v8525 = vrot.slane %v8524, 2
    %v8526 = vmax.f32 %v8524, %v8525
    %v8527 = vrot.slane %v8526, 1
    %v8528 = vmax.f32 %v8526, %v8527
    %v8529 = vmax.f32 %v8423, %v8437
    %v8530 = vmax.f32 %v8430, %v8444
    %v8531 = vmax.f32 %v8451, %v8465
    %v8532 = vmax.f32 %v8458, %v8472
    %v8533 = vmax.f32 %v8479, %v8493
    %v8534 = vmax.f32 %v8486, %v8500
    %v8535 = vmax.f32 %v8507, %v8521
    %v8536 = vmax.f32 %v8514, %v8528
    %v8539 = vsel %vm4500, %v8533, %v8529
    %v8543 = vsel %vm4500, %v8534, %v8530
    %v8547 = vsel %vm4500, %v8535, %v8531
    %v8551 = vsel %vm4500, %v8536, %v8532
    %v8553 = vpack.c.bf16 %v8539, %v8539
    %v8554 = vpack.c.bf16 %v8543, %v8543
    %v8555 = vpack.c.bf16 %v8547, %v8547
    %v8556 = vpack.c.bf16 %v8551, %v8551
    %v8557 = vld [vmem:[%s7] sm:$0xf]
    %v8558 = vld [vmem:[%s7 + $0x4] sm:$0xf]
    %v8559 = vld [vmem:[%s7 + $0x8] sm:$0xf]
    %v8560 = vld [vmem:[%s7 + $0xc] sm:$0xf]
    %v8561 = vld [vmem:[%s7 + $0x10] sm:$0xf]
    %v8562 = vld [vmem:[%s7 + $0x14] sm:$0xf]
    %v8563 = vld [vmem:[%s7 + $0x18] sm:$0xf]
    %v8564 = vld [vmem:[%s7 + $0x1c] sm:$0xf]
    %v8565 = vld [vmem:[%s7 + $0x20] sm:$0xf]
    %v8566 = vld [vmem:[%s7 + $0x24] sm:$0xf]
    %v8567 = vld [vmem:[%s7 + $0x28] sm:$0xf]
    %v8568 = vld [vmem:[%s7 + $0x2c] sm:$0xf]
    %v8569 = vld [vmem:[%s7 + $0x30] sm:$0xf]
    %v8570 = vld [vmem:[%s7 + $0x34] sm:$0xf]
    %v8571 = vld [vmem:[%s7 + $0x38] sm:$0xf]
    %v8572 = vld [vmem:[%s7 + $0x3c] sm:$0xf]
    %v8573 = vld [vmem:[%s7 + $0x40] sm:$0xf]
    %v8574 = vld [vmem:[%s7 + $0x44] sm:$0xf]
    %v8575 = vld [vmem:[%s7 + $0x48] sm:$0xf]
    %v8576 = vld [vmem:[%s7 + $0x4c] sm:$0xf]
    %v8577 = vld [vmem:[%s7 + $0x50] sm:$0xf]
    %v8578 = vld [vmem:[%s7 + $0x54] sm:$0xf]
    %v8579 = vld [vmem:[%s7 + $0x58] sm:$0xf]
    %v8580 = vld [vmem:[%s7 + $0x5c] sm:$0xf]
    %v8581 = vld [vmem:[%s7 + $0x60] sm:$0xf]
    %v8582 = vld [vmem:[%s7 + $0x64] sm:$0xf]
    %v8583 = vld [vmem:[%s7 + $0x68] sm:$0xf]
    %v8584 = vld [vmem:[%s7 + $0x6c] sm:$0xf]
    %v8585 = vld [vmem:[%s7 + $0x70] sm:$0xf]
    %v8586 = vld [vmem:[%s7 + $0x74] sm:$0xf]
    %v8587 = vld [vmem:[%s7 + $0x78] sm:$0xf]
    %v8588 = vld [vmem:[%s7 + $0x7c] sm:$0xf]
    %v8589 = vld [vmem:[%s7 + $0x80] sm:$0xf]
    %v8590 = vld [vmem:[%s7 + $0x84] sm:$0xf]
    %v8591 = vld [vmem:[%s7 + $0x88] sm:$0xf]
    %v8592 = vld [vmem:[%s7 + $0x8c] sm:$0xf]
    %v8593 = vld [vmem:[%s7 + $0x90] sm:$0xf]
    %v8594 = vld [vmem:[%s7 + $0x94] sm:$0xf]
    %v8595 = vld [vmem:[%s7 + $0x98] sm:$0xf]
    %v8596 = vld [vmem:[%s7 + $0x9c] sm:$0xf]
    %v8597 = vld [vmem:[%s7 + $0xa0] sm:$0xf]
    %v8598 = vld [vmem:[%s7 + $0xa4] sm:$0xf]
    %v8599 = vld [vmem:[%s7 + $0xa8] sm:$0xf]
    %v8600 = vld [vmem:[%s7 + $0xac] sm:$0xf]
    %v8601 = vld [vmem:[%s7 + $0xb0] sm:$0xf]
    %v8602 = vld [vmem:[%s7 + $0xb4] sm:$0xf]
    %v8603 = vld [vmem:[%s7 + $0xb8] sm:$0xf]
    %v8604 = vld [vmem:[%s7 + $0xbc] sm:$0xf]
    %v8605 = vld [vmem:[%s7 + $0xc0] sm:$0xf]
    %v8606 = vld [vmem:[%s7 + $0xc4] sm:$0xf]
    %v8607 = vld [vmem:[%s7 + $0xc8] sm:$0xf]
    %v8608 = vld [vmem:[%s7 + $0xcc] sm:$0xf]
    %v8609 = vld [vmem:[%s7 + $0xd0] sm:$0xf]
    %v8610 = vld [vmem:[%s7 + $0xd4] sm:$0xf]
    %v8611 = vld [vmem:[%s7 + $0xd8] sm:$0xf]
    %v8612 = vld [vmem:[%s7 + $0xdc] sm:$0xf]
    %v8613 = vld [vmem:[%s7 + $0xe0] sm:$0xf]
    %v8614 = vld [vmem:[%s7 + $0xe4] sm:$0xf]
    %v8615 = vld [vmem:[%s7 + $0xe8] sm:$0xf]
    %v8616 = vld [vmem:[%s7 + $0xec] sm:$0xf]
    %v8617 = vld [vmem:[%s7 + $0xf0] sm:$0xf]
    %v8618 = vld [vmem:[%s7 + $0xf4] sm:$0xf]
    %v8619 = vld [vmem:[%s7 + $0xf8] sm:$0xf]
    %v8620 = vld [vmem:[%s7 + $0xfc] sm:$0xf]
    %v8621 = vld [vmem:[%s8] sm:$0x1]
    %v8623 = vlaneseq
    %v8624 = vshrl.u32 %v8623, 7
    %v8625 = vsub.s32 0, %v8624
    %v8626 = vrot.slane %v8621, %v8625
    %v8692 = vunpack.c.l.b16 %v8557
    %v8693 = vunpack.c.l.b16 %v8558
    %v8694 = vunpack.c.l.b16 %v8559
    %v8695 = vunpack.c.l.b16 %v8560
    %v8696 = vunpack.c.l.b16 %v8561
    %v8697 = vunpack.c.l.b16 %v8562
    %v8698 = vunpack.c.l.b16 %v8563
    %v8699 = vunpack.c.l.b16 %v8564
    %v8700 = vunpack.c.l.b16 %v8565
    %v8701 = vunpack.c.l.b16 %v8566
    %v8702 = vunpack.c.l.b16 %v8567
    %v8703 = vunpack.c.l.b16 %v8568
    %v8704 = vunpack.c.l.b16 %v8569
    %v8705 = vunpack.c.l.b16 %v8570
    %v8706 = vunpack.c.l.b16 %v8571
    %v8707 = vunpack.c.l.b16 %v8572
    %v8708 = vunpack.c.l.b16 %v8573
    %v8709 = vunpack.c.l.b16 %v8574
    %v8710 = vunpack.c.l.b16 %v8575
    %v8711 = vunpack.c.l.b16 %v8576
    %v8712 = vunpack.c.l.b16 %v8577
    %v8713 = vunpack.c.l.b16 %v8578
    %v8714 = vunpack.c.l.b16 %v8579
    %v8715 = vunpack.c.l.b16 %v8580
    %v8716 = vunpack.c.l.b16 %v8581
    %v8717 = vunpack.c.l.b16 %v8582
    %v8718 = vunpack.c.l.b16 %v8583
    %v8719 = vunpack.c.l.b16 %v8584
    %v8720 = vunpack.c.l.b16 %v8585
    %v8721 = vunpack.c.l.b16 %v8586
    %v8722 = vunpack.c.l.b16 %v8587
    %v8723 = vunpack.c.l.b16 %v8588
    %v8724 = vunpack.c.l.b16 %v8589
    %v8725 = vunpack.c.l.b16 %v8590
    %v8726 = vunpack.c.l.b16 %v8591
    %v8727 = vunpack.c.l.b16 %v8592
    %v8728 = vunpack.c.l.b16 %v8593
    %v8729 = vunpack.c.l.b16 %v8594
    %v8730 = vunpack.c.l.b16 %v8595
    %v8731 = vunpack.c.l.b16 %v8596
    %v8732 = vunpack.c.l.b16 %v8597
    %v8733 = vunpack.c.l.b16 %v8598
    %v8734 = vunpack.c.l.b16 %v8599
    %v8735 = vunpack.c.l.b16 %v8600
    %v8736 = vunpack.c.l.b16 %v8601
    %v8737 = vunpack.c.l.b16 %v8602
    %v8738 = vunpack.c.l.b16 %v8603
    %v8739 = vunpack.c.l.b16 %v8604
    %v8740 = vunpack.c.l.b16 %v8605
    %v8741 = vunpack.c.l.b16 %v8606
    %v8742 = vunpack.c.l.b16 %v8607
    %v8743 = vunpack.c.l.b16 %v8608
    %v8744 = vunpack.c.l.b16 %v8609
    %v8745 = vunpack.c.l.b16 %v8610
    %v8746 = vunpack.c.l.b16 %v8611
    %v8747 = vunpack.c.l.b16 %v8612
    %v8748 = vunpack.c.l.b16 %v8613
    %v8749 = vunpack.c.l.b16 %v8614
    %v8750 = vunpack.c.l.b16 %v8615
    %v8751 = vunpack.c.l.b16 %v8616
    %v8752 = vunpack.c.l.b16 %v8617
    %v8753 = vunpack.c.l.b16 %v8618
    %v8754 = vunpack.c.l.b16 %v8619
    %v8755 = vunpack.c.l.b16 %v8620
    %v8756 = vpack.c.b16 %v8693, %v8692
    %v8757 = vpack.c.b16 %v8695, %v8694
    %v8758 = vpack.c.b16 %v8697, %v8696
    %v8759 = vpack.c.b16 %v8699, %v8698
    %v8760 = vpack.c.b16 %v8701, %v8700
    %v8761 = vpack.c.b16 %v8703, %v8702
    %v8762 = vpack.c.b16 %v8705, %v8704
    %v8763 = vpack.c.b16 %v8707, %v8706
    %v8764 = vpack.c.b16 %v8709, %v8708
    %v8765 = vpack.c.b16 %v8711, %v8710
    %v8766 = vpack.c.b16 %v8713, %v8712
    %v8767 = vpack.c.b16 %v8715, %v8714
    %v8768 = vpack.c.b16 %v8717, %v8716
    %v8769 = vpack.c.b16 %v8719, %v8718
    %v8770 = vpack.c.b16 %v8721, %v8720
    %v8771 = vpack.c.b16 %v8723, %v8722
    %v8772 = vpack.c.b16 %v8725, %v8724
    %v8773 = vpack.c.b16 %v8727, %v8726
    %v8774 = vpack.c.b16 %v8729, %v8728
    %v8775 = vpack.c.b16 %v8731, %v8730
    %v8776 = vpack.c.b16 %v8733, %v8732
    %v8777 = vpack.c.b16 %v8735, %v8734
    %v8778 = vpack.c.b16 %v8737, %v8736
    %v8779 = vpack.c.b16 %v8739, %v8738
    %v8780 = vpack.c.b16 %v8741, %v8740
    %v8781 = vpack.c.b16 %v8743, %v8742
    %v8782 = vpack.c.b16 %v8745, %v8744
    %v8783 = vpack.c.b16 %v8747, %v8746
    %v8784 = vpack.c.b16 %v8749, %v8748
    %v8785 = vpack.c.b16 %v8751, %v8750
    %v8786 = vpack.c.b16 %v8753, %v8752
    %v8787 = vpack.c.b16 %v8755, %v8754
    %8820 = vmatprep.subr.bf16.mxu0 0
    %8821 = vmatpush1.bf16.msra.mxu0 %v8763
    %8822 = vmatprep.subr.bf16.mxu0 0
    %8823 = vmatpush1.bf16.msra.mxu0 %v8762
    %8824 = vmatprep.subr.bf16.mxu0 0
    %8825 = vmatpush1.bf16.msra.mxu0 %v8761
    %8826 = vmatprep.subr.bf16.mxu0 0
    %8827 = vmatpush1.bf16.msra.mxu0 %v8760
    %8828 = vmatprep.subr.bf16.mxu0 0
    %8829 = vmatpush1.bf16.msra.mxu0 %v8759
    %8830 = vmatprep.subr.bf16.mxu0 0
    %8831 = vmatpush1.bf16.msra.mxu0 %v8758
    %8832 = vmatprep.subr.bf16.mxu0 0
    %8833 = vmatpush1.bf16.msra.mxu0 %v8757
    %8834 = vmatprep.subr.bf16.mxu0 0
    %8835 = vmatpush1.bf16.msra.mxu0 %v8756
    %8836 = vmatprep.subr.bf16.mxu0 0
    %8837 = vmatpush2.bf16.msra.mxu0 %v8771
    %8838 = vmatprep.subr.bf16.mxu0 0
    %8839 = vmatpush2.bf16.msra.mxu0 %v8770
    %8840 = vmatprep.subr.bf16.mxu0 0
    %8841 = vmatpush2.bf16.msra.mxu0 %v8769
    %8842 = vmatprep.subr.bf16.mxu0 0
    %8843 = vmatpush2.bf16.msra.mxu0 %v8768
    %8844 = vmatprep.subr.bf16.mxu0 0
    %8845 = vmatpush2.bf16.msra.mxu0 %v8767
    %8846 = vmatprep.subr.bf16.mxu0 0
    %8847 = vmatpush2.bf16.msra.mxu0 %v8766
    %8848 = vmatprep.subr.bf16.mxu0 0
    %8849 = vmatpush2.bf16.msra.mxu0 %v8765
    %8850 = vmatprep.subr.bf16.mxu0 0
    %8851 = vmatpush2.bf16.msra.mxu0 %v8764
    %8852 = vmatprep.mubr.bf16.mxu0 %v8554
    %8853 = vmatmul.mubr.bf16.gmra.mxu0 %v8553
    %v8854 = vpop.f32.mrf.mxu0
    %v8855 = vadd.f32 %v8626, %v8854
    %v8856 = vpop.f32.mrf.mxu0
    %v8857 = vpop.f32.mrf.mxu0
    %v8858 = vpop.f32.mrf.mxu0
    %8859 = vdwg.mxu0
    %8860 = vmatprep.subr.bf16.mxu0 0
    %8861 = vmatpush1.bf16.msra.mxu0 %v8779
    %8862 = vmatprep.subr.bf16.mxu0 0
    %8863 = vmatpush1.bf16.msra.mxu0 %v8778
    %8864 = vmatprep.subr.bf16.mxu0 0
    %8865 = vmatpush1.bf16.msra.mxu0 %v8777
    %8866 = vmatprep.subr.bf16.mxu0 0
    %8867 = vmatpush1.bf16.msra.mxu0 %v8776
    %8868 = vmatprep.subr.bf16.mxu0 0
    %8869 = vmatpush1.bf16.msra.mxu0 %v8775
    %8870 = vmatprep.subr.bf16.mxu0 0
    %8871 = vmatpush1.bf16.msra.mxu0 %v8774
    %8872 = vmatprep.subr.bf16.mxu0 0
    %8873 = vmatpush1.bf16.msra.mxu0 %v8773
    %8874 = vmatprep.subr.bf16.mxu0 0
    %8875 = vmatpush1.bf16.msra.mxu0 %v8772
    %8876 = vmatprep.subr.bf16.mxu0 0
    %8877 = vmatpush2.bf16.msra.mxu0 %v8787
    %8878 = vmatprep.subr.bf16.mxu0 0
    %8879 = vmatpush2.bf16.msra.mxu0 %v8786
    %8880 = vmatprep.subr.bf16.mxu0 0
    %8881 = vmatpush2.bf16.msra.mxu0 %v8785
    %8882 = vmatprep.subr.bf16.mxu0 0
    %8883 = vmatpush2.bf16.msra.mxu0 %v8784
    %8884 = vmatprep.subr.bf16.mxu0 0
    %8885 = vmatpush2.bf16.msra.mxu0 %v8783
    %8886 = vmatprep.subr.bf16.mxu0 0
    %8887 = vmatpush2.bf16.msra.mxu0 %v8782
    %8888 = vmatprep.subr.bf16.mxu0 0
    %8889 = vmatpush2.bf16.msra.mxu0 %v8781
    %8890 = vmatprep.subr.bf16.mxu0 0
    %8891 = vmatpush2.bf16.msra.mxu0 %v8780
    %8892 = vmatprep.mubr.bf16.mxu0 %v8556
    %8893 = vmatmul.mubr.bf16.gmra.mxu0 %v8555
    %v8894 = vpop.f32.mrf.mxu0
    %v8895 = vadd.f32 %v8855, %v8894
    %v8896 = vpop.f32.mrf.mxu0
    %v8897 = vpop.f32.mrf.mxu0
    %v8898 = vpop.f32.mrf.mxu0
    %8899 = vdwg.mxu0
    %v8900 = vmax.f32 %v8895, 0.0
    %v8901 = vpack.c.bf16 %v8900, %v8900
    %v8902 = vld [vmem:[%s9] sm:$0xf]
    %v8903 = vld [vmem:[%s9 + $0x4] sm:$0xf]
    %v8904 = vld [vmem:[%s9 + $0x8] sm:$0xf]
    %v8905 = vld [vmem:[%s9 + $0xc] sm:$0xf]
    %v8906 = vld [vmem:[%s9 + $0x10] sm:$0xf]
    %v8907 = vld [vmem:[%s9 + $0x14] sm:$0xf]
    %v8908 = vld [vmem:[%s9 + $0x18] sm:$0xf]
    %v8909 = vld [vmem:[%s9 + $0x1c] sm:$0xf]
    %v8910 = vld [vmem:[%s10] sm:$0x1]
    %v8912 = vlaneseq
    %v8913 = vshrl.u32 %v8912, 7
    %v8914 = vsub.s32 0, %v8913
    %v8915 = vrot.slane %v8910, %v8914
    %v8925 = vunpack.c.l.b16 %v8902
    %v8926 = vunpack.c.l.b16 %v8903
    %v8927 = vunpack.c.l.b16 %v8904
    %v8928 = vunpack.c.l.b16 %v8905
    %v8929 = vunpack.c.l.b16 %v8906
    %v8930 = vunpack.c.l.b16 %v8907
    %v8931 = vunpack.c.l.b16 %v8908
    %v8932 = vunpack.c.l.b16 %v8909
    %v8933 = vpack.c.b16 %v8926, %v8925
    %v8934 = vpack.c.b16 %v8928, %v8927
    %v8935 = vpack.c.b16 %v8930, %v8929
    %v8936 = vpack.c.b16 %v8932, %v8931
    %v8942 = vsel %vm7085, %v8901, 0
    %8944 = vmatprep.subr.bf16.mxu0 0
    %8945 = vmatpush1.bf16.msra.mxu0 0
    %8946 = vmatprep.subr.bf16.mxu0 0
    %8947 = vmatpush1.bf16.msra.mxu0 0
    %8948 = vmatprep.subr.bf16.mxu0 0
    %8949 = vmatpush1.bf16.msra.mxu0 0
    %8950 = vmatprep.subr.bf16.mxu0 0
    %8951 = vmatpush1.bf16.msra.mxu0 0
    %8952 = vmatprep.subr.bf16.mxu0 0
    %8953 = vmatpush1.bf16.msra.mxu0 %v8936
    %8954 = vmatprep.subr.bf16.mxu0 0
    %8955 = vmatpush1.bf16.msra.mxu0 %v8935
    %8956 = vmatprep.subr.bf16.mxu0 0
    %8957 = vmatpush1.bf16.msra.mxu0 %v8934
    %8958 = vmatprep.subr.bf16.mxu0 0
    %8959 = vmatpush1.bf16.msra.mxu0 %v8933
    %8960 = vmatprep.subr.bf16.mxu0 0
    %8961 = vmatpush2.bf16.msra.mxu0 0
    %8962 = vmatprep.subr.bf16.mxu0 0
    %8963 = vmatpush2.bf16.msra.mxu0 0
    %8964 = vmatprep.subr.bf16.mxu0 0
    %8965 = vmatpush2.bf16.msra.mxu0 0
    %8966 = vmatprep.subr.bf16.mxu0 0
    %8967 = vmatpush2.bf16.msra.mxu0 0
    %8968 = vmatprep.subr.bf16.mxu0 0
    %8969 = vmatpush2.bf16.msra.mxu0 0
    %8970 = vmatprep.subr.bf16.mxu0 0
    %8971 = vmatpush2.bf16.msra.mxu0 0
    %8972 = vmatprep.subr.bf16.mxu0 0
    %8973 = vmatpush2.bf16.msra.mxu0 0
    %8974 = vmatprep.subr.bf16.mxu0 0
    %8975 = vmatpush2.bf16.msra.mxu0 0
    %8976 = vmatprep.mubr.bf16.mxu0 0
    %8977 = vmatmul.mubr.bf16.gmra.mxu0 %v8942
    %v8978 = vpop.f32.mrf.mxu0
    %v8979 = vadd.f32 %v8915, %v8978
    %v8980 = vpop.f32.mrf.mxu0
    %v8981 = vpop.f32.mrf.mxu0
    %v8982 = vpop.f32.mrf.mxu0
    %8983 = vdwg.mxu0
    %vm8984 = vcmask 9216
    %8985 = vst.msk [vmem:[#allocation4] sm:$0x3] %vm8984, %v8979
    // Predicated region
    $region46: #{cnn_forward.1} parent=1 // pred_check
      _
    $region47: #{cnn_forward.1} parent=1 // pred_check_branch
      %8987 = sbr.rel (0) target = $region49
    $region48: #{cnn_forward.1} parent=1 // pred_region
      %s8989 = ssub.s32 32, 32
      %8990 = vsyncadd [#allocation5], %s8989
      %s8992 = sshll.u32 [#allocation4], 4
      %s8993 = int_to_ptr.vmem [resolvable:$true] %s8992
      %8995 = dma.vmem_to_hbm [thread:$0]  %s8993, 32, %s11, [#allocation5]
    $region49: #{cnn_forward.1} parent=1 // pred_fallthru
      _
    // Predicated region
    $region50: #{cnn_forward.1} parent=1 // pred_check
      _
    $region51: #{cnn_forward.1} parent=1 // pred_check_branch
      %8997 = sbr.rel (0) target = $region53
    $region52: #{cnn_forward.1} parent=1 // pred_region
      %8998 = dma.done [#allocation5], 32
    $region53: #{cnn_forward.1} parent=1 // pred_fallthru
      _
    %8999 = vsyncpa [#allocation5], 1

</llo_original>
